<compile_context>
chip_gen: v6e
topology: v6e:2x2x1
jax: 0.10.0
libtpu: 0.0.40
codegen_flags: <defaults>
</compile_context>

<pallas_src>
import functools
import math

import jax
import jax.numpy as jnp
from jax import lax
from jax.experimental import pallas as pl
from jax.experimental.pallas import tpu as pltpu

# Small, module-consistent toy config (real model: n_mels=128, n_state=1280,
# n_head=20 -> head_dim=64, n_layer=6).  head_dim stays 64 because the RoPE
# table in the PyTorch module is hard-coded to dim=64.
N_MELS = 16
N_STATE = 128
N_HEAD = 2              # head_dim = 64
N_LAYER = 2
FSMN_KSIZE = 31
CONV_KSIZE = 3
_SQRT_HALF = 1.0 / math.sqrt(2.0)

# heads processed per attention grid step: chosen so the FSMN output column
# block is a multiple of 128 lanes (dh=64 -> 2 heads / 128 lanes).
HEADS_PER_BLOCK = max(1, 128 // (N_STATE // N_HEAD))
assert N_HEAD % HEADS_PER_BLOCK == 0
assert (HEADS_PER_BLOCK * (N_STATE // N_HEAD)) % 128 == 0 or \
       HEADS_PER_BLOCK * (N_STATE // N_HEAD) == N_STATE


# --------------------------------------------------------------------------
# small helpers
# --------------------------------------------------------------------------
def _bf16(x):
    return x.astype(jnp.bfloat16)


def _round_up(x, m):
    return ((x + m - 1) // m) * m


def _const_spec(a):
    nd = a.ndim
    return pl.BlockSpec(a.shape, lambda *_args, _nd=nd: (0,) * _nd)


@functools.lru_cache(maxsize=None)
def _vmem_limit_bytes():
    # Per-generation VMEM budget (75% of physical capacity) instead of a
    # hard-coded 64 MiB which equals all of a v7x core's VMEM.
    try:
        return int(pltpu.get_tpu_info().vmem_capacity_bytes) * 3 // 4
    except Exception:  # unknown chip / interpret mode: use the compiler default
        return None


def _cparams(*sem):
    kw = dict(dimension_semantics=sem)
    lim = _vmem_limit_bytes()
    if lim is not None:
        kw["vmem_limit_bytes"] = lim
    return pltpu.CompilerParams(**kw)


def _non_pad_mask(lengths, max_len):
    return (jnp.arange(max_len)[None, :] < lengths[:, None]).astype(jnp.float32)


def _erf(x):
    # Abramowitz & Stegun 7.1.26 polynomial erf, |err| < 1.5e-7 (f32-exact for
    # our purposes) — avoids depending on a backend erf lowering.
    a1, a2, a3, a4, a5 = (0.254829592, -0.284496736, 1.421413741,
                          -1.453152027, 1.061405429)
    p_ = 0.3275911
    ax = jnp.abs(x)
    t = 1.0 / (1.0 + p_ * ax)
    poly = ((((a5 * t + a4) * t + a3) * t + a2) * t + a1) * t
    y = 1.0 - poly * jnp.exp(-ax * ax)
    return jnp.where(x >= 0.0, y, -y)


def _gelu(x):
    # exact (erf) GELU, matching torch.nn.GELU(approximate='none') / F.gelu
    return 0.5 * x * (1.0 + _erf(x * _SQRT_HALF))


# --------------------------------------------------------------------------
# Kernel 1: fused Conv1d(k=3, padding=1, stride=2) + bias + exact GELU.
#   The stride-2 gather is done by an even/odd time split in the wrapper;
#   the kernel is 3 contiguous slices + 3 accumulated bf16 matmuls.  Output
#   channels are tiled so conv weights stream as small pipelined blocks.
# --------------------------------------------------------------------------
def _conv_gelu_kernel(xe_ref, xo_ref, w_ref, b_ref, o_ref):
    t_out = o_ref.shape[1]
    e = xe_ref[0]                              # (t_out + 1, C_in)
    o = xo_ref[0]                              # (t_out, C_in)
    acc = jnp.dot(_bf16(e[:t_out]), w_ref[0], preferred_element_type=jnp.float32)
    acc = acc + jnp.dot(_bf16(o), w_ref[1], preferred_element_type=jnp.float32)
    acc = acc + jnp.dot(_bf16(e[1:t_out + 1]), w_ref[2],
                        preferred_element_type=jnp.float32)
    o_ref[0] = _gelu(acc + b_ref[...]).astype(o_ref.dtype)


def conv1d_gelu_stride2(x_ntc, lengths, w, b):
    B, T, C = x_ntc.shape
    c_out = w.shape[-1]
    mask = _non_pad_mask(lengths, T).astype(x_ntc.dtype)
    xp = jnp.pad(x_ntc * mask[:, :, None], ((0, 0), (1, 1), (0, 0)))
    t_out = (T + 2 - CONV_KSIZE) // 2 + 1
    # even/odd time split (done once in XLA) replaces strided in-kernel reads:
    #   out[t] = xp[2t] @ w0 + xp[2t+1] @ w1 + xp[2t+2] @ w2
    xe = xp[:, 0::2, :][:, :t_out + 1, :]
    xo = xp[:, 1::2, :][:, :t_out, :]
    tco = 256 if c_out % 256 == 0 else c_out
    out = pl.pallas_call(
        _conv_gelu_kernel,
        grid=(B, c_out // tco),
        in_specs=[pl.BlockSpec((1, t_out + 1, C), lambda i, c: (i, 0, 0)),
                  pl.BlockSpec((1, t_out, C), lambda i, c: (i, 0, 0)),
                  pl.BlockSpec((CONV_KSIZE, C, tco), lambda i, c: (0, 0, c)),
                  pl.BlockSpec((1, tco), lambda i, c: (0, c))],
        out_specs=pl.BlockSpec((1, t_out, tco), lambda i, c: (i, 0, c)),
        out_shape=jax.ShapeDtypeStruct((B, t_out, c_out), jnp.bfloat16),
        compiler_params=_cparams("parallel", "parallel"),
    )(xe, xo, w, b)
    new_len = (lengths + 2 - CONV_KSIZE) // 2 + 1
    return out, new_len


# --------------------------------------------------------------------------
# Kernel 2: attention half of a ResidualAttentionBlock, gridded over
#   (batch, head-group).  Outputs:
#     attn_out = x + out(attn) + b_out      (accumulated across head groups)
#     fsm_out  = fsmn(v)                    (per-group 128-lane column blocks)
# --------------------------------------------------------------------------
def _attn_block_kernel(x_ref, cos_ref, sin_ref, bias_ref, mpad_ref,
                       g1_ref, b1_ref, wqkv_ref, bqkv_ref, wo_ref, bo_ref,
                       fsmn_ref, o_ref, fsm_ref, xln_scr, acc_scr, fpad_scr,
                       *, heads_per_block, fsmn_ksize):
    g = pl.program_id(1)
    T, D = acc_scr.shape
    dh = cos_ref.shape[1]
    half = dh // 2
    pad_l = (fsmn_ksize - 1) // 2
    pad_r = fsmn_ksize - 1 - pad_l

    # ---- attn_ln (eps=1e-6) + residual/bias init, once per batch row ----
    @pl.when(g == 0)
    def _():
        xf = x_ref[0].astype(jnp.float32)
        mu = jnp.mean(xf, axis=-1, keepdims=True)
        xc = xf - mu
        var = jnp.mean(xc * xc, axis=-1, keepdims=True)
        xln = (xc * lax.rsqrt(var + 1e-6)) * g1_ref[...] + b1_ref[...]
        xln_scr[...] = xln.astype(jnp.bfloat16)
        acc_scr[...] = xf + bo_ref[...]          # residual + out-proj bias

    # zero the halo rows of the FSMN scratch (centre rows rewritten per head)
    fpad_scr[pl.ds(0, pad_l), :] = jnp.zeros((pad_l, dh), jnp.float32)
    fpad_scr[pl.ds(pad_l + T, pad_r), :] = jnp.zeros((pad_r, dh), jnp.float32)

    xln = xln_scr[...]                           # (T, D) bf16
    mpad = mpad_ref[0]                           # (T, 1) 1=valid / 0=pad
    bias = bias_ref[0]                           # (1, T) key-pad bias
    cos = cos_ref[...]                           # (T, dh), dh**-0.25 folded in
    sin = sin_ref[...]

    fsm_parts = []
    for hh in range(heads_per_block):
        # fused q|k|v projection for this head (K = D contraction, 3*dh lanes)
        qkv = jnp.dot(xln, wqkv_ref[hh],
                      preferred_element_type=jnp.float32) + bqkv_ref[hh]
        q = qkv[:, 0:dh]
        k = qkv[:, dh:2 * dh]
        v = qkv[:, 2 * dh:3 * dh]

        # RoPE (rotate-half within the head); scale folded into cos/sin
        def rope(t):
            rot = jnp.concatenate([-t[:, half:], t[:, :half]], axis=-1)
            return t * cos + rot * sin
        q = rope(q)
        k = rope(k)

        # FSMN memory: depthwise conv over time via zero-haloed scratch reads
        v_m = v * mpad
        fpad_scr[pl.ds(pad_l, T), :] = v_m
        fw = fsmn_ref[hh]                        # (K, dh)
        fsm = v_m                                # "+ inputs" residual
        for kk in range(fsmn_ksize):
            fsm = fsm + fpad_scr[pl.ds(kk, T), :] * fw[kk:kk + 1, :]
        fsm_parts.append(fsm * mpad)

        # attention core (bf16 MXU operands, f32 accumulation)
        logits = lax.dot_general(_bf16(q), _bf16(k), (((1,), (1,)), ((), ())),
                                 preferred_element_type=jnp.float32)
        logits = logits + bias
        m = jnp.max(logits, axis=-1, keepdims=True)
        p = jnp.exp(logits - m)
        p = p / jnp.sum(p, axis=-1, keepdims=True)
        ctx = jnp.dot(_bf16(p), _bf16(v), preferred_element_type=jnp.float32)
        acc_scr[...] += jnp.dot(_bf16(ctx), wo_ref[hh],
                                preferred_element_type=jnp.float32)

    # per-group FSMN columns go out through their own lane-aligned block
    fsm_ref[0] = jnp.concatenate(fsm_parts, axis=-1).astype(fsm_ref.dtype)

    @pl.when(g == pl.num_programs(1) - 1)
    def _():
        o_ref[0] = acc_scr[...].astype(o_ref.dtype)


def attention_block(x, rope_cos, rope_sin, bias, mpad, p):
    B, T, D = x.shape
    dh = D // N_HEAD
    hp = HEADS_PER_BLOCK
    G = N_HEAD // hp
    kernel = functools.partial(_attn_block_kernel, heads_per_block=hp,
                               fsmn_ksize=FSMN_KSIZE)
    out, fsm = pl.pallas_call(
        kernel,
        grid=(B, G),
        in_specs=[pl.BlockSpec((1, T, D), lambda b, g: (b, 0, 0)),
                  _const_spec(rope_cos), _const_spec(rope_sin),
                  pl.BlockSpec((1, 1, T), lambda b, g: (b, 0, 0)),
                  pl.BlockSpec((1, T, 1), lambda b, g: (b, 0, 0)),
                  _const_spec(p["ln1_g"]), _const_spec(p["ln1_b"]),
                  pl.BlockSpec((hp, D, 3 * dh), lambda b, g: (g, 0, 0)),
                  pl.BlockSpec((hp, 1, 3 * dh), lambda b, g: (g, 0, 0)),
                  pl.BlockSpec((hp, dh, D), lambda b, g: (g, 0, 0)),
                  _const_spec(p["bo"]),
                  pl.BlockSpec((hp, FSMN_KSIZE, dh), lambda b, g: (g, 0, 0))],
        out_specs=(pl.BlockSpec((1, T, D), lambda b, g: (b, 0, 0)),
                   pl.BlockSpec((1, T, hp * dh), lambda b, g: (b, 0, g))),
        out_shape=(jax.ShapeDtypeStruct((B, T, D), jnp.bfloat16),
                   jax.ShapeDtypeStruct((B, T, D), jnp.bfloat16)),
        scratch_shapes=[pltpu.VMEM((T, D), jnp.bfloat16),             # ln(x)
                        pltpu.VMEM((T, D), jnp.float32),              # attn acc
                        pltpu.VMEM((T + FSMN_KSIZE - 1, dh), jnp.float32)],
        compiler_params=_cparams("parallel", "arbitrary"),
    )(x, rope_cos, rope_sin, bias, mpad,
      p["ln1_g"], p["ln1_b"], p["wqkv"], p["bqkv"], p["wo"], p["bo"],
      p["fsmn_w"])
    return out, fsm


# --------------------------------------------------------------------------
# Kernel 3: MLP half of a ResidualAttentionBlock, tiled over row blocks of
#   the flattened (B*T, D) activations AND over hidden-dim blocks (weights
#   stream as small pipelined tiles; the 4D intermediate never materializes).
#   On the last layer the full FSQ encode is fused in (codes as int32).
# --------------------------------------------------------------------------
def _mlp_block_kernel(a_ref, f_ref, g2_ref, b2_ref, wm1_ref, bm1_ref,
                      wm2_ref, bm2_ref, *rest, with_fsq):
    if with_fsq:
        pdw_ref, pdb_ref, pw_ref, o_ref, code_ref, yln_scr, acc_scr = rest
    else:
        o_ref, yln_scr, acc_scr = rest
    j = pl.program_id(1)

    @pl.when(j == 0)
    def _():
        y = a_ref[...].astype(jnp.float32) + f_ref[...].astype(jnp.float32)
        mu = jnp.mean(y, axis=-1, keepdims=True)
        yc = y - mu
        var = jnp.mean(yc * yc, axis=-1, keepdims=True)
        yln = (yc * lax.rsqrt(var + 1e-5)) * g2_ref[...] + b2_ref[...]
        yln_scr[...] = yln.astype(jnp.bfloat16)
        acc_scr[...] = y + bm2_ref[...]          # residual + second-lin bias

    h1 = jnp.dot(yln_scr[...], wm1_ref[...],
                 preferred_element_type=jnp.float32) + bm1_ref[...]
    acc_scr[...] += jnp.dot(_bf16(_gelu(h1)), wm2_ref[...],
                            preferred_element_type=jnp.float32)

    @pl.when(j == pl.num_programs(1) - 1)
    def _():
        out = acc_scr[...]
        o_ref[...] = out.astype(o_ref.dtype)
        if with_fsq:
            # FSQ in f32 (precision-sensitive round); base-3 pack fused here.
            hq = jnp.dot(out, pdw_ref[...],
                         preferred_element_type=jnp.float32) + pdb_ref[...]
            dig = jnp.round(jnp.tanh(hq) * 0.9990000128746033) + 1.0
            code_ref[...] = jnp.sum(dig * pw_ref[...], axis=-1,
                                    keepdims=True).astype(jnp.int32)


def mlp_block(a, f, p, fsq=None):
    B, T, D = a.shape
    M = B * T
    H4 = p["wm1"].shape[-1]
    tm = 256 if M >= 256 else _round_up(M, 8)
    m_pad = _round_up(M, tm)
    tn = 512 if H4 % 512 == 0 else H4
    a2 = jnp.pad(a.reshape(M, D), ((0, m_pad - M), (0, 0)))
    f2 = jnp.pad(f.reshape(M, D), ((0, m_pad - M), (0, 0)))
    grid = (m_pad // tm, H4 // tn)
    row_spec = pl.BlockSpec((tm, D), lambda i, j: (i, 0))
    in_specs = [row_spec, row_spec,
                _const_spec(p["ln2_g"]), _const_spec(p["ln2_b"]),
                pl.BlockSpec((D, tn), lambda i, j: (0, j)),
                pl.BlockSpec((1, tn), lambda i, j: (0, j)),
                pl.BlockSpec((tn, D), lambda i, j: (j, 0)),
                _const_spec(p["bm2"])]
    inputs = [a2, f2, p["ln2_g"], p["ln2_b"], p["wm1"], p["bm1"], p["wm2"],
              p["bm2"]]
    scratch = [pltpu.VMEM((tm, D), jnp.bfloat16),
               pltpu.VMEM((tm, D), jnp.float32)]
    if fsq is None:
        out = pl.pallas_call(
            functools.partial(_mlp_block_kernel, with_fsq=False),
            grid=grid, in_specs=in_specs, out_specs=row_spec,
            out_shape=jax.ShapeDtypeStruct((m_pad, D), jnp.bfloat16),
            scratch_shapes=scratch,
            compiler_params=_cparams("parallel", "arbitrary"),
        )(*inputs)
        return out[:M].reshape(B, T, D), None
    pd_w, pd_b, powers = fsq
    in_specs += [_const_spec(pd_w), _const_spec(pd_b), _const_spec(powers)]
    inputs += [pd_w, pd_b, powers]
    out, codes = pl.pallas_call(
        functools.partial(_mlp_block_kernel, with_fsq=True),
        grid=grid, in_specs=in_specs,
        out_specs=(row_spec, pl.BlockSpec((tm, 1), lambda i, j: (i, 0))),
        out_shape=(jax.ShapeDtypeStruct((m_pad, D), jnp.bfloat16),
                   jax.ShapeDtypeStruct((m_pad, 1), jnp.int32)),
        scratch_shapes=scratch,
        compiler_params=_cparams("parallel", "arbitrary"),
    )(*inputs)
    return out[:M].reshape(B, T, D), codes[:M].reshape(B, T)


# --------------------------------------------------------------------------
# Glue: RoPE tables (dh**-0.25 scale folded in) and the full forward pass
# --------------------------------------------------------------------------
def precompute_rope_tables(T, dh):
    half = dh // 2
    scale = float(dh) ** -0.25
    inv = 1.0 / (10000.0 ** (jnp.arange(0, dh, 2, dtype=jnp.float32)[:half] / dh))
    ang = jnp.outer(jnp.arange(T, dtype=jnp.float32), inv)          # (T, half)
    cos = jnp.concatenate([jnp.cos(ang), jnp.cos(ang)], axis=-1) * scale
    sin = jnp.concatenate([jnp.sin(ang), jnp.sin(ang)], axis=-1) * scale
    return cos, sin


def s3_tokenizer_v2_forward(mel, mel_len, params):
    # mel: (B, n_mels, T) like PyTorch; mel_len: (B,)
    x = jnp.transpose(mel, (0, 2, 1))                               # NCT -> NTC
    x, x_len = conv1d_gelu_stride2(x, mel_len, params["conv1_w"], params["conv1_b"])
    x, x_len = conv1d_gelu_stride2(x, x_len, params["conv2_w"], params["conv2_b"])

    B, T, D = x.shape
    mask = _non_pad_mask(x_len, T)                                  # (B, T)
    bias = ((1.0 - mask) * -1.0e10).reshape(B, 1, T)                # mask_to_bias
    mpad = mask.reshape(B, T, 1)                                    # mask_pad
    cos_t, sin_t = precompute_rope_tables(T, D // N_HEAD)
    powers = (3.0 ** jnp.arange(8, dtype=jnp.float32)).reshape(1, 8)

    codes = None
    n_blocks = len(params["blocks"])
    for i, blk in enumerate(params["blocks"]):
        a, f = attention_block(x, cos_t, sin_t, bias, mpad, blk)
        if i + 1 == n_blocks:
            x, codes = mlp_block(a, f, blk,
                                 fsq=(params["pd_w"], params["pd_b"], powers))
        else:
            x, _ = mlp_block(a, f, blk)
    return codes, x_len


# --------------------------------------------------------------------------
# Deterministic synthetic parameter init.  Layouts are kernel-friendly
# repackings of the torch module's parameters (per-head packed q|k|v with a
# zero key bias, head-sliced out-projection, per-head depthwise FSMN taps,
# per-tap conv weights); matmul weights bf16, everything else f32.
# --------------------------------------------------------------------------
def init_params(key):
    keys = iter(jax.random.split(key, 256))
    bf = jnp.bfloat16
    dh = N_STATE // N_HEAD

    def nrm(shape, scale=0.05, dtype=jnp.float32):
        return (scale * jax.random.normal(next(keys), shape,
                                          dtype=jnp.float32)).astype(dtype)

    params = {
        # conv weights stored per-tap as (K, C_in, C_out) in bf16
        "conv1_w": nrm((CONV_KSIZE, N_MELS, N_STATE), dtype=bf),
        "conv1_b": nrm((1, N_STATE), 0.01),
        "conv2_w": nrm((CONV_KSIZE, N_STATE, N_STATE), dtype=bf),
        "conv2_b": nrm((1, N_STATE), 0.01),
        # FSQ project_down: Linear(n_state, 8), kept f32 (precision-sensitive)
        "pd_w": nrm((N_STATE, 8)),
        "pd_b": nrm((1, 8), 0.01),
        "blocks": [],
    }
    for _ in range(N_LAYER):
        bq = nrm((N_HEAD, 1, dh), 0.01)
        bv = nrm((N_HEAD, 1, dh), 0.01)
        bqkv = jnp.concatenate(
            [bq, jnp.zeros((N_HEAD, 1, dh), jnp.float32), bv], axis=-1)
        params["blocks"].append({
            "ln1_g": jnp.ones((1, N_STATE), jnp.float32),
            "ln1_b": jnp.zeros((1, N_STATE), jnp.float32),
            # fused per-head q|k|v projection: (H, D, 3*dh) bf16
            "wqkv": nrm((N_HEAD, N_STATE, 3 * dh), dtype=bf),
            "bqkv": bqkv,                                       # key bias = 0
            # out projection stored per-head: (H, dh, D) bf16
            "wo": nrm((N_HEAD, dh, N_STATE), dtype=bf),
            "bo": nrm((1, N_STATE), 0.01),
            # depthwise FSMN taps per head: (H, K, dh) f32
            "fsmn_w": nrm((N_HEAD, FSMN_KSIZE, dh)),
            "ln2_g": jnp.ones((1, N_STATE), jnp.float32),
            "ln2_b": jnp.zeros((1, N_STATE), jnp.float32),
            "wm1": nrm((N_STATE, 4 * N_STATE), dtype=bf),
            "bm1": nrm((1, 4 * N_STATE), 0.01),
            "wm2": nrm((4 * N_STATE, N_STATE), dtype=bf),
            "bm2": nrm((1, N_STATE), 0.01),
        })
    return params


if __name__ == "__main__":
    key = jax.random.PRNGKey(0)
    pkey, mkey = jax.random.split(key)
    params = init_params(pkey)

    B, T_MEL = 2, 32
    mel = jax.random.normal(mkey, (B, N_MELS, T_MEL), dtype=jnp.float32)
    mel_len = jnp.array([32, 24], dtype=jnp.int32)

    codes, code_len = jax.jit(s3_tokenizer_v2_forward)(mel, mel_len, params)
    jax.block_until_ready(codes)
    jax.block_until_ready(code_len)
    assert codes.shape == (B, 8) and code_len.shape == (B,)
    print("KERNEL_OK")
</pallas_src>

<mosaic_0001>
module attributes {stable_mosaic.version = 11 : i64} {
  func.func @_conv_gelu_kernel(%arg0: i32, %arg1: i32, %arg2: memref<1x17x16xf32, #tpu.memory_space<vmem>>, %arg3: memref<1x16x16xf32, #tpu.memory_space<vmem>>, %arg4: memref<3x16x128xbf16, #tpu.memory_space<vmem>>, %arg5: memref<1x128xf32, #tpu.memory_space<vmem>>, %arg6: memref<1x16x128xbf16, #tpu.memory_space<vmem>>) attributes {dimension_semantics = [#tpu.dimension_semantics<parallel>, #tpu.dimension_semantics<parallel>], iteration_bounds = array<i64: 2, 1>, scalar_prefetch = 0 : i64, scratch_operands = 0 : i64, tpu.core_type = #tpu.core_type<tc>, window_params = [{transform_indices = @transform_0, window_bounds = array<i64: 1, 17, 16>}, {transform_indices = @transform_1, window_bounds = array<i64: 1, 16, 16>}, {transform_indices = @transform_2, window_bounds = array<i64: 3, 16, 128>}, {transform_indices = @transform_3, window_bounds = array<i64: 1, 128>}, {transform_indices = @transform_4, window_bounds = array<i64: 1, 16, 128>}]} {
    %c0 = arith.constant 0 : index
    %c0_0 = arith.constant 0 : index
    %c0_1 = arith.constant 0 : index
    %0 = vector.load %arg2[%c0, %c0_0, %c0_1] : memref<1x17x16xf32, #tpu.memory_space<vmem>>, vector<1x17x16xf32>
    %1 = vector.shape_cast %0 : vector<1x17x16xf32> to vector<17x16xf32>
    %c0_2 = arith.constant 0 : index
    %c0_3 = arith.constant 0 : index
    %c0_4 = arith.constant 0 : index
    %2 = vector.load %arg3[%c0_2, %c0_3, %c0_4] : memref<1x16x16xf32, #tpu.memory_space<vmem>>, vector<1x16x16xf32>
    %3 = vector.shape_cast %2 : vector<1x16x16xf32> to vector<16x16xf32>
    %4 = vector.extract_strided_slice %1 {offsets = [0, 0], sizes = [16, 16], strides = [1, 1]} : vector<17x16xf32> to vector<16x16xf32>
    %5 = arith.truncf %4 : vector<16x16xf32> to vector<16x16xbf16>
    %c0_5 = arith.constant 0 : index
    %c0_6 = arith.constant 0 : index
    %c0_7 = arith.constant 0 : index
    %6 = vector.load %arg4[%c0_5, %c0_6, %c0_7] : memref<3x16x128xbf16, #tpu.memory_space<vmem>>, vector<1x16x128xbf16>
    %7 = vector.shape_cast %6 : vector<1x16x128xbf16> to vector<16x128xbf16>
    %cst = arith.constant dense<0.000000e+00> : vector<16x128xf32>
    %8 = tpu.matmul %5, %7, %cst {dimension_numbers = #tpu.dot_dimension_numbers<[1], [0], [0], [1], [0, 0, 1, 1], [], []>} : vector<16x16xbf16>, vector<16x128xbf16>, vector<16x128xf32> -> vector<16x128xf32>
    %9 = arith.truncf %3 : vector<16x16xf32> to vector<16x16xbf16>
    %c1 = arith.constant 1 : index
    %c0_8 = arith.constant 0 : index
    %c0_9 = arith.constant 0 : index
    %10 = vector.load %arg4[%c1, %c0_8, %c0_9] : memref<3x16x128xbf16, #tpu.memory_space<vmem>>, vector<1x16x128xbf16>
    %11 = vector.shape_cast %10 : vector<1x16x128xbf16> to vector<16x128xbf16>
    %cst_10 = arith.constant dense<0.000000e+00> : vector<16x128xf32>
    %12 = tpu.matmul %9, %11, %cst_10 {dimension_numbers = #tpu.dot_dimension_numbers<[1], [0], [0], [1], [0, 0, 1, 1], [], []>} : vector<16x16xbf16>, vector<16x128xbf16>, vector<16x128xf32> -> vector<16x128xf32>
    %13 = arith.addf %8, %12 : vector<16x128xf32>
    %14 = vector.extract_strided_slice %1 {offsets = [1, 0], sizes = [16, 16], strides = [1, 1]} : vector<17x16xf32> to vector<16x16xf32>
    %15 = arith.truncf %14 : vector<16x16xf32> to vector<16x16xbf16>
    %c2 = arith.constant 2 : index
    %c0_11 = arith.constant 0 : index
    %c0_12 = arith.constant 0 : index
    %16 = vector.load %arg4[%c2, %c0_11, %c0_12] : memref<3x16x128xbf16, #tpu.memory_space<vmem>>, vector<1x16x128xbf16>
    %17 = vector.shape_cast %16 : vector<1x16x128xbf16> to vector<16x128xbf16>
    %cst_13 = arith.constant dense<0.000000e+00> : vector<16x128xf32>
    %18 = tpu.matmul %15, %17, %cst_13 {dimension_numbers = #tpu.dot_dimension_numbers<[1], [0], [0], [1], [0, 0, 1, 1], [], []>} : vector<16x16xbf16>, vector<16x128xbf16>, vector<16x128xf32> -> vector<16x128xf32>
    %19 = arith.addf %13, %18 : vector<16x128xf32>
    %c0_14 = arith.constant 0 : index
    %c0_15 = arith.constant 0 : index
    %20 = vector.load %arg5[%c0_14, %c0_15] : memref<1x128xf32, #tpu.memory_space<vmem>>, vector<1x128xf32>
    %21 = vector.broadcast %20 : vector<1x128xf32> to vector<16x128xf32>
    %22 = arith.addf %19, %21 : vector<16x128xf32>
    %cst_16 = arith.constant 5.000000e-01 : f32
    %23 = vector.broadcast %cst_16 : f32 to vector<16x128xf32>
    %24 = arith.mulf %23, %22 : vector<16x128xf32>
    %cst_17 = arith.constant 0.707106769 : f32
    %25 = vector.broadcast %cst_17 : f32 to vector<16x128xf32>
    %26 = arith.mulf %22, %25 : vector<16x128xf32>
    %27 = math.absf %26 : vector<16x128xf32>
    %cst_18 = arith.constant 0.327591091 : f32
    %28 = vector.broadcast %cst_18 : f32 to vector<16x128xf32>
    %29 = arith.mulf %28, %27 : vector<16x128xf32>
    %cst_19 = arith.constant 1.000000e+00 : f32
    %30 = vector.broadcast %cst_19 : f32 to vector<16x128xf32>
    %31 = arith.addf %30, %29 : vector<16x128xf32>
    %cst_20 = arith.constant 1.000000e+00 : f32
    %32 = vector.broadcast %cst_20 : f32 to vector<16x128xf32>
    %33 = arith.divf %32, %31 : vector<16x128xf32>
    %cst_21 = arith.constant 1.06140542 : f32
    %34 = vector.broadcast %cst_21 : f32 to vector<16x128xf32>
    %35 = arith.mulf %34, %33 : vector<16x128xf32>
    %cst_22 = arith.constant -1.45315206 : f32
    %36 = vector.broadcast %cst_22 : f32 to vector<16x128xf32>
    %37 = arith.addf %35, %36 : vector<16x128xf32>
    %38 = arith.mulf %37, %33 : vector<16x128xf32>
    %cst_23 = arith.constant 1.42141378 : f32
    %39 = vector.broadcast %cst_23 : f32 to vector<16x128xf32>
    %40 = arith.addf %38, %39 : vector<16x128xf32>
    %41 = arith.mulf %40, %33 : vector<16x128xf32>
    %cst_24 = arith.constant -0.284496725 : f32
    %42 = vector.broadcast %cst_24 : f32 to vector<16x128xf32>
    %43 = arith.addf %41, %42 : vector<16x128xf32>
    %44 = arith.mulf %43, %33 : vector<16x128xf32>
    %cst_25 = arith.constant 0.254829586 : f32
    %45 = vector.broadcast %cst_25 : f32 to vector<16x128xf32>
    %46 = arith.addf %44, %45 : vector<16x128xf32>
    %47 = arith.mulf %46, %33 : vector<16x128xf32>
    %cst_26 = arith.constant 0.000000e+00 : f32
    %48 = vector.broadcast %cst_26 : f32 to vector<16x128xf32>
    %49 = arith.subf %48, %27 : vector<16x128xf32>
    %50 = arith.mulf %49, %27 : vector<16x128xf32>
    %51 = math.exp %50 : vector<16x128xf32>
    %52 = arith.mulf %47, %51 : vector<16x128xf32>
    %cst_27 = arith.constant 1.000000e+00 : f32
    %53 = vector.broadcast %cst_27 : f32 to vector<16x128xf32>
    %54 = arith.subf %53, %52 : vector<16x128xf32>
    %cst_28 = arith.constant 0.000000e+00 : f32
    %55 = vector.broadcast %cst_28 : f32 to vector<16x128xf32>
    %56 = arith.cmpf oge, %26, %55 : vector<16x128xf32>
    %cst_29 = arith.constant 0.000000e+00 : f32
    %57 = vector.broadcast %cst_29 : f32 to vector<16x128xf32>
    %58 = arith.subf %57, %54 : vector<16x128xf32>
    %59 = arith.select %56, %54, %58 : vector<16x128xi1>, vector<16x128xf32>
    %cst_30 = arith.constant 1.000000e+00 : f32
    %60 = vector.broadcast %cst_30 : f32 to vector<16x128xf32>
    %61 = arith.addf %60, %59 : vector<16x128xf32>
    %62 = arith.mulf %24, %61 : vector<16x128xf32>
    %63 = arith.truncf %62 : vector<16x128xf32> to vector<16x128xbf16>
    %c0_31 = arith.constant 0 : index
    %c0_32 = arith.constant 0 : index
    %c0_33 = arith.constant 0 : index
    %64 = vector.load %arg6[%c0_31, %c0_32, %c0_33] : memref<1x16x128xbf16, #tpu.memory_space<vmem>>, vector<1x16x128xbf16>
    %65 = vector.shape_cast %64 : vector<1x16x128xbf16> to vector<16x128xbf16>
    %66 = vector.shape_cast %63 : vector<16x128xbf16> to vector<1x16x128xbf16>
    tpu.vector_store %arg6[%c0_31, %c0_32, %c0_33], %66 {strides = array<i32>} : memref<1x16x128xbf16, #tpu.memory_space<vmem>>, vector<1x16x128xbf16>,
    return
  }
  func.func @transform_0(%arg0: i32, %arg1: i32) -> (i32, i32, i32) {
    %c0_i32 = arith.constant 0 : i32
    %c0_i32_0 = arith.constant 0 : i32
    %c0_i32_1 = arith.constant 0 : i32
    return %arg0, %c0_i32, %c0_i32_0 : i32, i32, i32
  }
  func.func @transform_1(%arg0: i32, %arg1: i32) -> (i32, i32, i32) {
    %c0_i32 = arith.constant 0 : i32
    %c0_i32_0 = arith.constant 0 : i32
    %c0_i32_1 = arith.constant 0 : i32
    return %arg0, %c0_i32, %c0_i32_0 : i32, i32, i32
  }
  func.func @transform_2(%arg0: i32, %arg1: i32) -> (i32, i32, i32) {
    %c0_i32 = arith.constant 0 : i32
    %c0_i32_0 = arith.constant 0 : i32
    %c0_i32_1 = arith.constant 0 : i32
    return %c0_i32, %c0_i32_0, %arg1 : i32, i32, i32
  }
  func.func @transform_3(%arg0: i32, %arg1: i32) -> (i32, i32) {
    %c0_i32 = arith.constant 0 : i32
    %c0_i32_0 = arith.constant 0 : i32
    return %c0_i32, %arg1 : i32, i32
  }
  func.func @transform_4(%arg0: i32, %arg1: i32) -> (i32, i32, i32) {
    %c0_i32 = arith.constant 0 : i32
    %c0_i32_0 = arith.constant 0 : i32
    return %arg0, %c0_i32, %arg1 : i32, i32, i32
  }
}

module attributes {stable_mosaic.version = 11 : i64} {
  func.func @_conv_gelu_kernel(%arg0: i32, %arg1: i32, %arg2: memref<1x9x128xbf16, #tpu.memory_space<vmem>>, %arg3: memref<1x8x128xbf16, #tpu.memory_space<vmem>>, %arg4: memref<3x128x128xbf16, #tpu.memory_space<vmem>>, %arg5: memref<1x128xf32, #tpu.memory_space<vmem>>, %arg6: memref<1x8x128xbf16, #tpu.memory_space<vmem>>) attributes {dimension_semantics = [#tpu.dimension_semantics<parallel>, #tpu.dimension_semantics<parallel>], iteration_bounds = array<i64: 2, 1>, scalar_prefetch = 0 : i64, scratch_operands = 0 : i64, tpu.core_type = #tpu.core_type<tc>, window_params = [{transform_indices = @transform_0, window_bounds = array<i64: 1, 9, 128>}, {transform_indices = @transform_1, window_bounds = array<i64: 1, 8, 128>}, {transform_indices = @transform_2, window_bounds = array<i64: 3, 128, 128>}, {transform_indices = @transform_3, window_bounds = array<i64: 1, 128>}, {transform_indices = @transform_4, window_bounds = array<i64: 1, 8, 128>}]} {
    %c0 = arith.constant 0 : index
    %c0_0 = arith.constant 0 : index
    %c0_1 = arith.constant 0 : index
    %0 = vector.load %arg2[%c0, %c0_0, %c0_1] : memref<1x9x128xbf16, #tpu.memory_space<vmem>>, vector<1x9x128xbf16>
    %1 = vector.shape_cast %0 : vector<1x9x128xbf16> to vector<9x128xbf16>
    %c0_2 = arith.constant 0 : index
    %c0_3 = arith.constant 0 : index
    %c0_4 = arith.constant 0 : index
    %2 = vector.load %arg3[%c0_2, %c0_3, %c0_4] : memref<1x8x128xbf16, #tpu.memory_space<vmem>>, vector<1x8x128xbf16>
    %3 = vector.shape_cast %2 : vector<1x8x128xbf16> to vector<8x128xbf16>
    %4 = vector.extract_strided_slice %1 {offsets = [0, 0], sizes = [8, 128], strides = [1, 1]} : vector<9x128xbf16> to vector<8x128xbf16>
    %c0_5 = arith.constant 0 : index
    %c0_6 = arith.constant 0 : index
    %c0_7 = arith.constant 0 : index
    %5 = vector.load %arg4[%c0_5, %c0_6, %c0_7] : memref<3x128x128xbf16, #tpu.memory_space<vmem>>, vector<1x128x128xbf16>
    %6 = vector.shape_cast %5 : vector<1x128x128xbf16> to vector<128x128xbf16>
    %cst = arith.constant dense<0.000000e+00> : vector<8x128xf32>
    %7 = tpu.matmul %4, %6, %cst {dimension_numbers = #tpu.dot_dimension_numbers<[1], [0], [0], [1], [0, 0, 1, 1], [], []>} : vector<8x128xbf16>, vector<128x128xbf16>, vector<8x128xf32> -> vector<8x128xf32>
    %c1 = arith.constant 1 : index
    %c0_8 = arith.constant 0 : index
    %c0_9 = arith.constant 0 : index
    %8 = vector.load %arg4[%c1, %c0_8, %c0_9] : memref<3x128x128xbf16, #tpu.memory_space<vmem>>, vector<1x128x128xbf16>
    %9 = vector.shape_cast %8 : vector<1x128x128xbf16> to vector<128x128xbf16>
    %cst_10 = arith.constant dense<0.000000e+00> : vector<8x128xf32>
    %10 = tpu.matmul %3, %9, %cst_10 {dimension_numbers = #tpu.dot_dimension_numbers<[1], [0], [0], [1], [0, 0, 1, 1], [], []>} : vector<8x128xbf16>, vector<128x128xbf16>, vector<8x128xf32> -> vector<8x128xf32>
    %11 = arith.addf %7, %10 : vector<8x128xf32>
    %12 = vector.extract_strided_slice %1 {offsets = [1, 0], sizes = [8, 128], strides = [1, 1]} : vector<9x128xbf16> to vector<8x128xbf16>
    %c2 = arith.constant 2 : index
    %c0_11 = arith.constant 0 : index
    %c0_12 = arith.constant 0 : index
    %13 = vector.load %arg4[%c2, %c0_11, %c0_12] : memref<3x128x128xbf16, #tpu.memory_space<vmem>>, vector<1x128x128xbf16>
    %14 = vector.shape_cast %13 : vector<1x128x128xbf16> to vector<128x128xbf16>
    %cst_13 = arith.constant dense<0.000000e+00> : vector<8x128xf32>
    %15 = tpu.matmul %12, %14, %cst_13 {dimension_numbers = #tpu.dot_dimension_numbers<[1], [0], [0], [1], [0, 0, 1, 1], [], []>} : vector<8x128xbf16>, vector<128x128xbf16>, vector<8x128xf32> -> vector<8x128xf32>
    %16 = arith.addf %11, %15 : vector<8x128xf32>
    %c0_14 = arith.constant 0 : index
    %c0_15 = arith.constant 0 : index
    %17 = vector.load %arg5[%c0_14, %c0_15] : memref<1x128xf32, #tpu.memory_space<vmem>>, vector<1x128xf32>
    %18 = vector.broadcast %17 : vector<1x128xf32> to vector<8x128xf32>
    %19 = arith.addf %16, %18 : vector<8x128xf32>
    %cst_16 = arith.constant 5.000000e-01 : f32
    %20 = vector.broadcast %cst_16 : f32 to vector<8x128xf32>
    %21 = arith.mulf %20, %19 : vector<8x128xf32>
    %cst_17 = arith.constant 0.707106769 : f32
    %22 = vector.broadcast %cst_17 : f32 to vector<8x128xf32>
    %23 = arith.mulf %19, %22 : vector<8x128xf32>
    %24 = math.absf %23 : vector<8x128xf32>
    %cst_18 = arith.constant 0.327591091 : f32
    %25 = vector.broadcast %cst_18 : f32 to vector<8x128xf32>
    %26 = arith.mulf %25, %24 : vector<8x128xf32>
    %cst_19 = arith.constant 1.000000e+00 : f32
    %27 = vector.broadcast %cst_19 : f32 to vector<8x128xf32>
    %28 = arith.addf %27, %26 : vector<8x128xf32>
    %cst_20 = arith.constant 1.000000e+00 : f32
    %29 = vector.broadcast %cst_20 : f32 to vector<8x128xf32>
    %30 = arith.divf %29, %28 : vector<8x128xf32>
    %cst_21 = arith.constant 1.06140542 : f32
    %31 = vector.broadcast %cst_21 : f32 to vector<8x128xf32>
    %32 = arith.mulf %31, %30 : vector<8x128xf32>
    %cst_22 = arith.constant -1.45315206 : f32
    %33 = vector.broadcast %cst_22 : f32 to vector<8x128xf32>
    %34 = arith.addf %32, %33 : vector<8x128xf32>
    %35 = arith.mulf %34, %30 : vector<8x128xf32>
    %cst_23 = arith.constant 1.42141378 : f32
    %36 = vector.broadcast %cst_23 : f32 to vector<8x128xf32>
    %37 = arith.addf %35, %36 : vector<8x128xf32>
    %38 = arith.mulf %37, %30 : vector<8x128xf32>
    %cst_24 = arith.constant -0.284496725 : f32
    %39 = vector.broadcast %cst_24 : f32 to vector<8x128xf32>
    %40 = arith.addf %38, %39 : vector<8x128xf32>
    %41 = arith.mulf %40, %30 : vector<8x128xf32>
    %cst_25 = arith.constant 0.254829586 : f32
    %42 = vector.broadcast %cst_25 : f32 to vector<8x128xf32>
    %43 = arith.addf %41, %42 : vector<8x128xf32>
    %44 = arith.mulf %43, %30 : vector<8x128xf32>
    %cst_26 = arith.constant 0.000000e+00 : f32
    %45 = vector.broadcast %cst_26 : f32 to vector<8x128xf32>
    %46 = arith.subf %45, %24 : vector<8x128xf32>
    %47 = arith.mulf %46, %24 : vector<8x128xf32>
    %48 = math.exp %47 : vector<8x128xf32>
    %49 = arith.mulf %44, %48 : vector<8x128xf32>
    %cst_27 = arith.constant 1.000000e+00 : f32
    %50 = vector.broadcast %cst_27 : f32 to vector<8x128xf32>
    %51 = arith.subf %50, %49 : vector<8x128xf32>
    %cst_28 = arith.constant 0.000000e+00 : f32
    %52 = vector.broadcast %cst_28 : f32 to vector<8x128xf32>
    %53 = arith.cmpf oge, %23, %52 : vector<8x128xf32>
    %cst_29 = arith.constant 0.000000e+00 : f32
    %54 = vector.broadcast %cst_29 : f32 to vector<8x128xf32>
    %55 = arith.subf %54, %51 : vector<8x128xf32>
    %56 = arith.select %53, %51, %55 : vector<8x128xi1>, vector<8x128xf32>
    %cst_30 = arith.constant 1.000000e+00 : f32
    %57 = vector.broadcast %cst_30 : f32 to vector<8x128xf32>
    %58 = arith.addf %57, %56 : vector<8x128xf32>
    %59 = arith.mulf %21, %58 : vector<8x128xf32>
    %60 = arith.truncf %59 : vector<8x128xf32> to vector<8x128xbf16>
    %c0_31 = arith.constant 0 : index
    %c0_32 = arith.constant 0 : index
    %c0_33 = arith.constant 0 : index
    %61 = vector.load %arg6[%c0_31, %c0_32, %c0_33] : memref<1x8x128xbf16, #tpu.memory_space<vmem>>, vector<1x8x128xbf16>
    %62 = vector.shape_cast %61 : vector<1x8x128xbf16> to vector<8x128xbf16>
    %63 = vector.shape_cast %60 : vector<8x128xbf16> to vector<1x8x128xbf16>
    tpu.vector_store %arg6[%c0_31, %c0_32, %c0_33], %63 {strides = array<i32>} : memref<1x8x128xbf16, #tpu.memory_space<vmem>>, vector<1x8x128xbf16>,
    return
  }
  func.func @transform_0(%arg0: i32, %arg1: i32) -> (i32, i32, i32) {
    %c0_i32 = arith.constant 0 : i32
    %c0_i32_0 = arith.constant 0 : i32
    %c0_i32_1 = arith.constant 0 : i32
    return %arg0, %c0_i32, %c0_i32_0 : i32, i32, i32
  }
  func.func @transform_1(%arg0: i32, %arg1: i32) -> (i32, i32, i32) {
    %c0_i32 = arith.constant 0 : i32
    %c0_i32_0 = arith.constant 0 : i32
    %c0_i32_1 = arith.constant 0 : i32
    return %arg0, %c0_i32, %c0_i32_0 : i32, i32, i32
  }
  func.func @transform_2(%arg0: i32, %arg1: i32) -> (i32, i32, i32) {
    %c0_i32 = arith.constant 0 : i32
    %c0_i32_0 = arith.constant 0 : i32
    %c0_i32_1 = arith.constant 0 : i32
    return %c0_i32, %c0_i32_0, %arg1 : i32, i32, i32
  }
  func.func @transform_3(%arg0: i32, %arg1: i32) -> (i32, i32) {
    %c0_i32 = arith.constant 0 : i32
    %c0_i32_0 = arith.constant 0 : i32
    return %c0_i32, %arg1 : i32, i32
  }
  func.func @transform_4(%arg0: i32, %arg1: i32) -> (i32, i32, i32) {
    %c0_i32 = arith.constant 0 : i32
    %c0_i32_0 = arith.constant 0 : i32
    return %arg0, %c0_i32, %arg1 : i32, i32, i32
  }
}

module attributes {stable_mosaic.version = 11 : i64} {
  func.func @_attn_block_kernel(%arg0: i32, %arg1: i32, %arg2: memref<1x8x128xbf16, #tpu.memory_space<vmem>>, %arg3: memref<8x64xf32, #tpu.memory_space<vmem>>, %arg4: memref<8x64xf32, #tpu.memory_space<vmem>>, %arg5: memref<1x1x8xf32, #tpu.memory_space<vmem>>, %arg6: memref<1x8x1xf32, #tpu.memory_space<vmem>>, %arg7: memref<1x128xf32, #tpu.memory_space<vmem>>, %arg8: memref<1x128xf32, #tpu.memory_space<vmem>>, %arg9: memref<2x128x192xbf16, #tpu.memory_space<vmem>>, %arg10: memref<2x1x192xf32, #tpu.memory_space<vmem>>, %arg11: memref<2x64x128xbf16, #tpu.memory_space<vmem>>, %arg12: memref<1x128xf32, #tpu.memory_space<vmem>>, %arg13: memref<2x31x64xf32, #tpu.memory_space<vmem>>, %arg14: memref<1x8x128xbf16, #tpu.memory_space<vmem>>, %arg15: memref<1x8x128xbf16, #tpu.memory_space<vmem>>, %arg16: memref<8x128xbf16, #tpu.memory_space<vmem>>, %arg17: memref<8x128xf32, #tpu.memory_space<vmem>>, %arg18: memref<38x64xf32, #tpu.memory_space<vmem>>) attributes {dimension_semantics = [#tpu.dimension_semantics<parallel>, #tpu.dimension_semantics<arbitrary>], iteration_bounds = array<i64: 2, 1>, scalar_prefetch = 0 : i64, scratch_operands = 3 : i64, tpu.core_type = #tpu.core_type<tc>, window_params = [{transform_indices = @transform_0, window_bounds = array<i64: 1, 8, 128>}, {pipeline_mode = #tpu.pipeline_mode<synchronous>, transform_indices = @transform_1, window_bounds = array<i64: 8, 64>}, {pipeline_mode = #tpu.pipeline_mode<synchronous>, transform_indices = @transform_2, window_bounds = array<i64: 8, 64>}, {transform_indices = @transform_3, window_bounds = array<i64: 1, 1, 8>}, {transform_indices = @transform_4, window_bounds = array<i64: 1, 8, 1>}, {pipeline_mode = #tpu.pipeline_mode<synchronous>, transform_indices = @transform_5, window_bounds = array<i64: 1, 128>}, {pipeline_mode = #tpu.pipeline_mode<synchronous>, transform_indices = @transform_6, window_bounds = array<i64: 1, 128>}, {transform_indices = @transform_7, window_bounds = array<i64: 2, 128, 192>}, {transform_indices = @transform_8, window_bounds = array<i64: 2, 1, 192>}, {transform_indices = @transform_9, window_bounds = array<i64: 2, 64, 128>}, {pipeline_mode = #tpu.pipeline_mode<synchronous>, transform_indices = @transform_10, window_bounds = array<i64: 1, 128>}, {transform_indices = @transform_11, window_bounds = array<i64: 2, 31, 64>}, {transform_indices = @transform_12, window_bounds = array<i64: 1, 8, 128>}, {transform_indices = @transform_13, window_bounds = array<i64: 1, 8, 128>}]} {
    %c0_i32 = arith.constant 0 : i32
    %0 = arith.cmpi eq, %arg1, %c0_i32 : i32
    %1 = arith.extui %0 : i1 to i32
    %c0_i32_0 = arith.constant 0 : i32
    %2 = arith.cmpi ne, %1, %c0_i32_0 : i32
    scf.if %2 {
      %c0_168 = arith.constant 0 : index
      %c0_169 = arith.constant 0 : index
      %c0_170 = arith.constant 0 : index
      %446 = vector.load %arg2[%c0_168, %c0_169, %c0_170] : memref<1x8x128xbf16, #tpu.memory_space<vmem>>, vector<1x8x128xbf16>
      %447 = vector.shape_cast %446 : vector<1x8x128xbf16> to vector<8x128xbf16>
      %448 = arith.extf %447 : vector<8x128xbf16> to vector<8x128xf32>
      %cst_171 = arith.constant dense<0.000000e+00> : vector<8xf32>
      %449 = vector.multi_reduction <add>, %448, %cst_171 [1] : vector<8x128xf32> to vector<8xf32>
      %450 = vector.shape_cast %449 : vector<8xf32> to vector<8x1xf32>
      %cst_172 = arith.constant 1.280000e+02 : f32
      %451 = vector.broadcast %cst_172 : f32 to vector<8x1xf32>
      %452 = arith.divf %450, %451 : vector<8x1xf32>
      %453 = vector.broadcast %452 : vector<8x1xf32> to vector<8x128xf32>
      %454 = arith.subf %448, %453 : vector<8x128xf32>
      %455 = arith.mulf %454, %454 : vector<8x128xf32>
      %cst_173 = arith.constant dense<0.000000e+00> : vector<8xf32>
      %456 = vector.multi_reduction <add>, %455, %cst_173 [1] : vector<8x128xf32> to vector<8xf32>
      %457 = vector.shape_cast %456 : vector<8xf32> to vector<8x1xf32>
      %cst_174 = arith.constant 1.280000e+02 : f32
      %458 = vector.broadcast %cst_174 : f32 to vector<8x1xf32>
      %459 = arith.divf %457, %458 : vector<8x1xf32>
      %cst_175 = arith.constant 9.99999997E-7 : f32
      %460 = vector.broadcast %cst_175 : f32 to vector<8x1xf32>
      %461 = arith.addf %459, %460 : vector<8x1xf32>
      %462 = math.rsqrt %461 : vector<8x1xf32>
      %463 = vector.broadcast %462 : vector<8x1xf32> to vector<8x128xf32>
      %464 = arith.mulf %454, %463 : vector<8x128xf32>
      %c0_176 = arith.constant 0 : index
      %c0_177 = arith.constant 0 : index
      %465 = vector.load %arg7[%c0_176, %c0_177] : memref<1x128xf32, #tpu.memory_space<vmem>>, vector<1x128xf32>
      %466 = vector.broadcast %465 : vector<1x128xf32> to vector<8x128xf32>
      %467 = arith.mulf %464, %466 : vector<8x128xf32>
      %c0_178 = arith.constant 0 : index
      %c0_179 = arith.constant 0 : index
      %468 = vector.load %arg8[%c0_178, %c0_179] : memref<1x128xf32, #tpu.memory_space<vmem>>, vector<1x128xf32>
      %469 = vector.broadcast %468 : vector<1x128xf32> to vector<8x128xf32>
      %470 = arith.addf %467, %469 : vector<8x128xf32>
      %471 = arith.truncf %470 : vector<8x128xf32> to vector<8x128xbf16>
      %c0_180 = arith.constant 0 : index
      %c0_181 = arith.constant 0 : index
      %472 = vector.load %arg16[%c0_180, %c0_181] : memref<8x128xbf16, #tpu.memory_space<vmem>>, vector<8x128xbf16>
      tpu.vector_store %arg16[%c0_180, %c0_181], %471 {strides = array<i32>} : memref<8x128xbf16, #tpu.memory_space<vmem>>, vector<8x128xbf16>,
      %c0_182 = arith.constant 0 : index
      %c0_183 = arith.constant 0 : index
      %473 = vector.load %arg12[%c0_182, %c0_183] : memref<1x128xf32, #tpu.memory_space<vmem>>, vector<1x128xf32>
      %474 = vector.broadcast %473 : vector<1x128xf32> to vector<8x128xf32>
      %475 = arith.addf %448, %474 : vector<8x128xf32>
      %c0_184 = arith.constant 0 : index
      %c0_185 = arith.constant 0 : index
      %476 = vector.load %arg17[%c0_184, %c0_185] : memref<8x128xf32, #tpu.memory_space<vmem>>, vector<8x128xf32>
      tpu.vector_store %arg17[%c0_184, %c0_185], %475 {strides = array<i32>} : memref<8x128xf32, #tpu.memory_space<vmem>>, vector<8x128xf32>,
    } else {
    }
    %cst = arith.constant 0.000000e+00 : f32
    %3 = vector.broadcast %cst : f32 to vector<15x64xf32>
    %c0 = arith.constant 0 : index
    %c0_1 = arith.constant 0 : index
    %4 = vector.load %arg18[%c0, %c0_1] : memref<38x64xf32, #tpu.memory_space<vmem>>, vector<15x64xf32>
    tpu.vector_store %arg18[%c0, %c0_1], %3 {strides = array<i32>} : memref<38x64xf32, #tpu.memory_space<vmem>>, vector<15x64xf32>,
    %cst_2 = arith.constant 0.000000e+00 : f32
    %5 = vector.broadcast %cst_2 : f32 to vector<15x64xf32>
    %c23 = arith.constant 23 : index
    %c0_3 = arith.constant 0 : index
    %6 = vector.load %arg18[%c23, %c0_3] : memref<38x64xf32, #tpu.memory_space<vmem>>, vector<15x64xf32>
    tpu.vector_store %arg18[%c23, %c0_3], %5 {strides = array<i32>} : memref<38x64xf32, #tpu.memory_space<vmem>>, vector<15x64xf32>,
    %c0_4 = arith.constant 0 : index
    %c0_5 = arith.constant 0 : index
    %7 = vector.load %arg16[%c0_4, %c0_5] : memref<8x128xbf16, #tpu.memory_space<vmem>>, vector<8x128xbf16>
    %c0_6 = arith.constant 0 : index
    %c0_7 = arith.constant 0 : index
    %c0_8 = arith.constant 0 : index
    %8 = vector.load %arg6[%c0_6, %c0_7, %c0_8] : memref<1x8x1xf32, #tpu.memory_space<vmem>>, vector<1x8x1xf32>
    %9 = vector.shape_cast %8 : vector<1x8x1xf32> to vector<8x1xf32>
    %c0_9 = arith.constant 0 : index
    %c0_10 = arith.constant 0 : index
    %c0_11 = arith.constant 0 : index
    %10 = vector.load %arg5[%c0_9, %c0_10, %c0_11] : memref<1x1x8xf32, #tpu.memory_space<vmem>>, vector<1x1x8xf32>
    %11 = vector.shape_cast %10 : vector<1x1x8xf32> to vector<1x8xf32>
    %c0_12 = arith.constant 0 : index
    %c0_13 = arith.constant 0 : index
    %12 = vector.load %arg3[%c0_12, %c0_13] : memref<8x64xf32, #tpu.memory_space<vmem>>, vector<8x64xf32>
    %c0_14 = arith.constant 0 : index
    %c0_15 = arith.constant 0 : index
    %13 = vector.load %arg4[%c0_14, %c0_15] : memref<8x64xf32, #tpu.memory_space<vmem>>, vector<8x64xf32>
    %c0_16 = arith.constant 0 : index
    %c0_17 = arith.constant 0 : index
    %c0_18 = arith.constant 0 : index
    %14 = vector.load %arg9[%c0_16, %c0_17, %c0_18] : memref<2x128x192xbf16, #tpu.memory_space<vmem>>, vector<1x128x192xbf16>
    %15 = vector.shape_cast %14 : vector<1x128x192xbf16> to vector<128x192xbf16>
    %cst_19 = arith.constant dense<0.000000e+00> : vector<8x192xf32>
    %16 = tpu.matmul %7, %15, %cst_19 {dimension_numbers = #tpu.dot_dimension_numbers<[1], [0], [0], [1], [0, 0, 1, 1], [], []>} : vector<8x128xbf16>, vector<128x192xbf16>, vector<8x192xf32> -> vector<8x192xf32>
    %c0_20 = arith.constant 0 : index
    %c0_21 = arith.constant 0 : index
    %c0_22 = arith.constant 0 : index
    %17 = vector.load %arg10[%c0_20, %c0_21, %c0_22] : memref<2x1x192xf32, #tpu.memory_space<vmem>>, vector<1x1x192xf32>
    %18 = vector.shape_cast %17 : vector<1x1x192xf32> to vector<1x192xf32>
    %19 = vector.broadcast %18 : vector<1x192xf32> to vector<8x192xf32>
    %20 = arith.addf %16, %19 : vector<8x192xf32>
    %21 = vector.extract_strided_slice %20 {offsets = [0, 0], sizes = [8, 64], strides = [1, 1]} : vector<8x192xf32> to vector<8x64xf32>
    %22 = vector.extract_strided_slice %20 {offsets = [0, 64], sizes = [8, 64], strides = [1, 1]} : vector<8x192xf32> to vector<8x64xf32>
    %23 = vector.extract_strided_slice %20 {offsets = [0, 128], sizes = [8, 64], strides = [1, 1]} : vector<8x192xf32> to vector<8x64xf32>
    %24 = vector.extract_strided_slice %21 {offsets = [0, 32], sizes = [8, 32], strides = [1, 1]} : vector<8x64xf32> to vector<8x32xf32>
    %cst_23 = arith.constant 0.000000e+00 : f32
    %25 = vector.broadcast %cst_23 : f32 to vector<8x32xf32>
    %26 = arith.subf %25, %24 : vector<8x32xf32>
    %27 = vector.extract_strided_slice %21 {offsets = [0, 0], sizes = [8, 32], strides = [1, 1]} : vector<8x64xf32> to vector<8x32xf32>
    %28 = tpu.concatenate %26, %27 in 1 : vector<8x32xf32>, vector<8x32xf32> -> vector<8x64xf32>
    %29 = arith.mulf %21, %12 : vector<8x64xf32>
    %30 = arith.mulf %28, %13 : vector<8x64xf32>
    %31 = arith.addf %29, %30 : vector<8x64xf32>
    %32 = vector.extract_strided_slice %22 {offsets = [0, 32], sizes = [8, 32], strides = [1, 1]} : vector<8x64xf32> to vector<8x32xf32>
    %cst_24 = arith.constant 0.000000e+00 : f32
    %33 = vector.broadcast %cst_24 : f32 to vector<8x32xf32>
    %34 = arith.subf %33, %32 : vector<8x32xf32>
    %35 = vector.extract_strided_slice %22 {offsets = [0, 0], sizes = [8, 32], strides = [1, 1]} : vector<8x64xf32> to vector<8x32xf32>
    %36 = tpu.concatenate %34, %35 in 1 : vector<8x32xf32>, vector<8x32xf32> -> vector<8x64xf32>
    %37 = arith.mulf %22, %12 : vector<8x64xf32>
    %38 = arith.mulf %36, %13 : vector<8x64xf32>
    %39 = arith.addf %37, %38 : vector<8x64xf32>
    %40 = vector.broadcast %9 : vector<8x1xf32> to vector<8x64xf32>
    %41 = arith.mulf %23, %40 : vector<8x64xf32>
    %c15 = arith.constant 15 : index
    %c0_25 = arith.constant 0 : index
    %42 = vector.load %arg18[%c15, %c0_25] : memref<38x64xf32, #tpu.memory_space<vmem>>, vector<8x64xf32>
    tpu.vector_store %arg18[%c15, %c0_25], %41 {strides = array<i32>} : memref<38x64xf32, #tpu.memory_space<vmem>>, vector<8x64xf32>,
    %c0_26 = arith.constant 0 : index
    %c0_27 = arith.constant 0 : index
    %c0_28 = arith.constant 0 : index
    %43 = vector.load %arg13[%c0_26, %c0_27, %c0_28] : memref<2x31x64xf32, #tpu.memory_space<vmem>>, vector<1x31x64xf32>
    %44 = vector.shape_cast %43 : vector<1x31x64xf32> to vector<31x64xf32>
    %c0_29 = arith.constant 0 : index
    %c0_30 = arith.constant 0 : index
    %45 = vector.load %arg18[%c0_29, %c0_30] : memref<38x64xf32, #tpu.memory_space<vmem>>, vector<8x64xf32>
    %46 = vector.extract_strided_slice %44 {offsets = [0, 0], sizes = [1, 64], strides = [1, 1]} : vector<31x64xf32> to vector<1x64xf32>
    %47 = vector.broadcast %46 : vector<1x64xf32> to vector<8x64xf32>
    %48 = arith.mulf %45, %47 : vector<8x64xf32>
    %49 = arith.addf %41, %48 : vector<8x64xf32>
    %c1 = arith.constant 1 : index
    %c0_31 = arith.constant 0 : index
    %50 = vector.load %arg18[%c1, %c0_31] : memref<38x64xf32, #tpu.memory_space<vmem>>, vector<8x64xf32>
    %51 = vector.extract_strided_slice %44 {offsets = [1, 0], sizes = [1, 64], strides = [1, 1]} : vector<31x64xf32> to vector<1x64xf32>
    %52 = vector.broadcast %51 : vector<1x64xf32> to vector<8x64xf32>
    %53 = arith.mulf %50, %52 : vector<8x64xf32>
    %54 = arith.addf %49, %53 : vector<8x64xf32>
    %c2 = arith.constant 2 : index
    %c0_32 = arith.constant 0 : index
    %55 = vector.load %arg18[%c2, %c0_32] : memref<38x64xf32, #tpu.memory_space<vmem>>, vector<8x64xf32>
    %56 = vector.extract_strided_slice %44 {offsets = [2, 0], sizes = [1, 64], strides = [1, 1]} : vector<31x64xf32> to vector<1x64xf32>
    %57 = vector.broadcast %56 : vector<1x64xf32> to vector<8x64xf32>
    %58 = arith.mulf %55, %57 : vector<8x64xf32>
    %59 = arith.addf %54, %58 : vector<8x64xf32>
    %c3 = arith.constant 3 : index
    %c0_33 = arith.constant 0 : index
    %60 = vector.load %arg18[%c3, %c0_33] : memref<38x64xf32, #tpu.memory_space<vmem>>, vector<8x64xf32>
    %61 = vector.extract_strided_slice %44 {offsets = [3, 0], sizes = [1, 64], strides = [1, 1]} : vector<31x64xf32> to vector<1x64xf32>
    %62 = vector.broadcast %61 : vector<1x64xf32> to vector<8x64xf32>
    %63 = arith.mulf %60, %62 : vector<8x64xf32>
    %64 = arith.addf %59, %63 : vector<8x64xf32>
    %c4 = arith.constant 4 : index
    %c0_34 = arith.constant 0 : index
    %65 = vector.load %arg18[%c4, %c0_34] : memref<38x64xf32, #tpu.memory_space<vmem>>, vector<8x64xf32>
    %66 = vector.extract_strided_slice %44 {offsets = [4, 0], sizes = [1, 64], strides = [1, 1]} : vector<31x64xf32> to vector<1x64xf32>
    %67 = vector.broadcast %66 : vector<1x64xf32> to vector<8x64xf32>
    %68 = arith.mulf %65, %67 : vector<8x64xf32>
    %69 = arith.addf %64, %68 : vector<8x64xf32>
    %c5 = arith.constant 5 : index
    %c0_35 = arith.constant 0 : index
    %70 = vector.load %arg18[%c5, %c0_35] : memref<38x64xf32, #tpu.memory_space<vmem>>, vector<8x64xf32>
    %71 = vector.extract_strided_slice %44 {offsets = [5, 0], sizes = [1, 64], strides = [1, 1]} : vector<31x64xf32> to vector<1x64xf32>
    %72 = vector.broadcast %71 : vector<1x64xf32> to vector<8x64xf32>
    %73 = arith.mulf %70, %72 : vector<8x64xf32>
    %74 = arith.addf %69, %73 : vector<8x64xf32>
    %c6 = arith.constant 6 : index
    %c0_36 = arith.constant 0 : index
    %75 = vector.load %arg18[%c6, %c0_36] : memref<38x64xf32, #tpu.memory_space<vmem>>, vector<8x64xf32>
    %76 = vector.extract_strided_slice %44 {offsets = [6, 0], sizes = [1, 64], strides = [1, 1]} : vector<31x64xf32> to vector<1x64xf32>
    %77 = vector.broadcast %76 : vector<1x64xf32> to vector<8x64xf32>
    %78 = arith.mulf %75, %77 : vector<8x64xf32>
    %79 = arith.addf %74, %78 : vector<8x64xf32>
    %c7 = arith.constant 7 : index
    %c0_37 = arith.constant 0 : index
    %80 = vector.load %arg18[%c7, %c0_37] : memref<38x64xf32, #tpu.memory_space<vmem>>, vector<8x64xf32>
    %81 = vector.extract_strided_slice %44 {offsets = [7, 0], sizes = [1, 64], strides = [1, 1]} : vector<31x64xf32> to vector<1x64xf32>
    %82 = vector.broadcast %81 : vector<1x64xf32> to vector<8x64xf32>
    %83 = arith.mulf %80, %82 : vector<8x64xf32>
    %84 = arith.addf %79, %83 : vector<8x64xf32>
    %c8 = arith.constant 8 : index
    %c0_38 = arith.constant 0 : index
    %85 = vector.load %arg18[%c8, %c0_38] : memref<38x64xf32, #tpu.memory_space<vmem>>, vector<8x64xf32>
    %86 = vector.extract_strided_slice %44 {offsets = [8, 0], sizes = [1, 64], strides = [1, 1]} : vector<31x64xf32> to vector<1x64xf32>
    %87 = vector.broadcast %86 : vector<1x64xf32> to vector<8x64xf32>
    %88 = arith.mulf %85, %87 : vector<8x64xf32>
    %89 = arith.addf %84, %88 : vector<8x64xf32>
    %c9 = arith.constant 9 : index
    %c0_39 = arith.constant 0 : index
    %90 = vector.load %arg18[%c9, %c0_39] : memref<38x64xf32, #tpu.memory_space<vmem>>, vector<8x64xf32>
    %91 = vector.extract_strided_slice %44 {offsets = [9, 0], sizes = [1, 64], strides = [1, 1]} : vector<31x64xf32> to vector<1x64xf32>
    %92 = vector.broadcast %91 : vector<1x64xf32> to vector<8x64xf32>
    %93 = arith.mulf %90, %92 : vector<8x64xf32>
    %94 = arith.addf %89, %93 : vector<8x64xf32>
    %c10 = arith.constant 10 : index
    %c0_40 = arith.constant 0 : index
    %95 = vector.load %arg18[%c10, %c0_40] : memref<38x64xf32, #tpu.memory_space<vmem>>, vector<8x64xf32>
    %96 = vector.extract_strided_slice %44 {offsets = [10, 0], sizes = [1, 64], strides = [1, 1]} : vector<31x64xf32> to vector<1x64xf32>
    %97 = vector.broadcast %96 : vector<1x64xf32> to vector<8x64xf32>
    %98 = arith.mulf %95, %97 : vector<8x64xf32>
    %99 = arith.addf %94, %98 : vector<8x64xf32>
    %c11 = arith.constant 11 : index
    %c0_41 = arith.constant 0 : index
    %100 = vector.load %arg18[%c11, %c0_41] : memref<38x64xf32, #tpu.memory_space<vmem>>, vector<8x64xf32>
    %101 = vector.extract_strided_slice %44 {offsets = [11, 0], sizes = [1, 64], strides = [1, 1]} : vector<31x64xf32> to vector<1x64xf32>
    %102 = vector.broadcast %101 : vector<1x64xf32> to vector<8x64xf32>
    %103 = arith.mulf %100, %102 : vector<8x64xf32>
    %104 = arith.addf %99, %103 : vector<8x64xf32>
    %c12 = arith.constant 12 : index
    %c0_42 = arith.constant 0 : index
    %105 = vector.load %arg18[%c12, %c0_42] : memref<38x64xf32, #tpu.memory_space<vmem>>, vector<8x64xf32>
    %106 = vector.extract_strided_slice %44 {offsets = [12, 0], sizes = [1, 64], strides = [1, 1]} : vector<31x64xf32> to vector<1x64xf32>
    %107 = vector.broadcast %106 : vector<1x64xf32> to vector<8x64xf32>
    %108 = arith.mulf %105, %107 : vector<8x64xf32>
    %109 = arith.addf %104, %108 : vector<8x64xf32>
    %c13 = arith.constant 13 : index
    %c0_43 = arith.constant 0 : index
    %110 = vector.load %arg18[%c13, %c0_43] : memref<38x64xf32, #tpu.memory_space<vmem>>, vector<8x64xf32>
    %111 = vector.extract_strided_slice %44 {offsets = [13, 0], sizes = [1, 64], strides = [1, 1]} : vector<31x64xf32> to vector<1x64xf32>
    %112 = vector.broadcast %111 : vector<1x64xf32> to vector<8x64xf32>
    %113 = arith.mulf %110, %112 : vector<8x64xf32>
    %114 = arith.addf %109, %113 : vector<8x64xf32>
    %c14 = arith.constant 14 : index
    %c0_44 = arith.constant 0 : index
    %115 = vector.load %arg18[%c14, %c0_44] : memref<38x64xf32, #tpu.memory_space<vmem>>, vector<8x64xf32>
    %116 = vector.extract_strided_slice %44 {offsets = [14, 0], sizes = [1, 64], strides = [1, 1]} : vector<31x64xf32> to vector<1x64xf32>
    %117 = vector.broadcast %116 : vector<1x64xf32> to vector<8x64xf32>
    %118 = arith.mulf %115, %117 : vector<8x64xf32>
    %119 = arith.addf %114, %118 : vector<8x64xf32>
    %c15_45 = arith.constant 15 : index
    %c0_46 = arith.constant 0 : index
    %120 = vector.load %arg18[%c15_45, %c0_46] : memref<38x64xf32, #tpu.memory_space<vmem>>, vector<8x64xf32>
    %121 = vector.extract_strided_slice %44 {offsets = [15, 0], sizes = [1, 64], strides = [1, 1]} : vector<31x64xf32> to vector<1x64xf32>
    %122 = vector.broadcast %121 : vector<1x64xf32> to vector<8x64xf32>
    %123 = arith.mulf %120, %122 : vector<8x64xf32>
    %124 = arith.addf %119, %123 : vector<8x64xf32>
    %c16 = arith.constant 16 : index
    %c0_47 = arith.constant 0 : index
    %125 = vector.load %arg18[%c16, %c0_47] : memref<38x64xf32, #tpu.memory_space<vmem>>, vector<8x64xf32>
    %126 = vector.extract_strided_slice %44 {offsets = [16, 0], sizes = [1, 64], strides = [1, 1]} : vector<31x64xf32> to vector<1x64xf32>
    %127 = vector.broadcast %126 : vector<1x64xf32> to vector<8x64xf32>
    %128 = arith.mulf %125, %127 : vector<8x64xf32>
    %129 = arith.addf %124, %128 : vector<8x64xf32>
    %c17 = arith.constant 17 : index
    %c0_48 = arith.constant 0 : index
    %130 = vector.load %arg18[%c17, %c0_48] : memref<38x64xf32, #tpu.memory_space<vmem>>, vector<8x64xf32>
    %131 = vector.extract_strided_slice %44 {offsets = [17, 0], sizes = [1, 64], strides = [1, 1]} : vector<31x64xf32> to vector<1x64xf32>
    %132 = vector.broadcast %131 : vector<1x64xf32> to vector<8x64xf32>
    %133 = arith.mulf %130, %132 : vector<8x64xf32>
    %134 = arith.addf %129, %133 : vector<8x64xf32>
    %c18 = arith.constant 18 : index
    %c0_49 = arith.constant 0 : index
    %135 = vector.load %arg18[%c18, %c0_49] : memref<38x64xf32, #tpu.memory_space<vmem>>, vector<8x64xf32>
    %136 = vector.extract_strided_slice %44 {offsets = [18, 0], sizes = [1, 64], strides = [1, 1]} : vector<31x64xf32> to vector<1x64xf32>
    %137 = vector.broadcast %136 : vector<1x64xf32> to vector<8x64xf32>
    %138 = arith.mulf %135, %137 : vector<8x64xf32>
    %139 = arith.addf %134, %138 : vector<8x64xf32>
    %c19 = arith.constant 19 : index
    %c0_50 = arith.constant 0 : index
    %140 = vector.load %arg18[%c19, %c0_50] : memref<38x64xf32, #tpu.memory_space<vmem>>, vector<8x64xf32>
    %141 = vector.extract_strided_slice %44 {offsets = [19, 0], sizes = [1, 64], strides = [1, 1]} : vector<31x64xf32> to vector<1x64xf32>
    %142 = vector.broadcast %141 : vector<1x64xf32> to vector<8x64xf32>
    %143 = arith.mulf %140, %142 : vector<8x64xf32>
    %144 = arith.addf %139, %143 : vector<8x64xf32>
    %c20 = arith.constant 20 : index
    %c0_51 = arith.constant 0 : index
    %145 = vector.load %arg18[%c20, %c0_51] : memref<38x64xf32, #tpu.memory_space<vmem>>, vector<8x64xf32>
    %146 = vector.extract_strided_slice %44 {offsets = [20, 0], sizes = [1, 64], strides = [1, 1]} : vector<31x64xf32> to vector<1x64xf32>
    %147 = vector.broadcast %146 : vector<1x64xf32> to vector<8x64xf32>
    %148 = arith.mulf %145, %147 : vector<8x64xf32>
    %149 = arith.addf %144, %148 : vector<8x64xf32>
    %c21 = arith.constant 21 : index
    %c0_52 = arith.constant 0 : index
    %150 = vector.load %arg18[%c21, %c0_52] : memref<38x64xf32, #tpu.memory_space<vmem>>, vector<8x64xf32>
    %151 = vector.extract_strided_slice %44 {offsets = [21, 0], sizes = [1, 64], strides = [1, 1]} : vector<31x64xf32> to vector<1x64xf32>
    %152 = vector.broadcast %151 : vector<1x64xf32> to vector<8x64xf32>
    %153 = arith.mulf %150, %152 : vector<8x64xf32>
    %154 = arith.addf %149, %153 : vector<8x64xf32>
    %c22 = arith.constant 22 : index
    %c0_53 = arith.constant 0 : index
    %155 = vector.load %arg18[%c22, %c0_53] : memref<38x64xf32, #tpu.memory_space<vmem>>, vector<8x64xf32>
    %156 = vector.extract_strided_slice %44 {offsets = [22, 0], sizes = [1, 64], strides = [1, 1]} : vector<31x64xf32> to vector<1x64xf32>
    %157 = vector.broadcast %156 : vector<1x64xf32> to vector<8x64xf32>
    %158 = arith.mulf %155, %157 : vector<8x64xf32>
    %159 = arith.addf %154, %158 : vector<8x64xf32>
    %c23_54 = arith.constant 23 : index
    %c0_55 = arith.constant 0 : index
    %160 = vector.load %arg18[%c23_54, %c0_55] : memref<38x64xf32, #tpu.memory_space<vmem>>, vector<8x64xf32>
    %161 = vector.extract_strided_slice %44 {offsets = [23, 0], sizes = [1, 64], strides = [1, 1]} : vector<31x64xf32> to vector<1x64xf32>
    %162 = vector.broadcast %161 : vector<1x64xf32> to vector<8x64xf32>
    %163 = arith.mulf %160, %162 : vector<8x64xf32>
    %164 = arith.addf %159, %163 : vector<8x64xf32>
    %c24 = arith.constant 24 : index
    %c0_56 = arith.constant 0 : index
    %165 = vector.load %arg18[%c24, %c0_56] : memref<38x64xf32, #tpu.memory_space<vmem>>, vector<8x64xf32>
    %166 = vector.extract_strided_slice %44 {offsets = [24, 0], sizes = [1, 64], strides = [1, 1]} : vector<31x64xf32> to vector<1x64xf32>
    %167 = vector.broadcast %166 : vector<1x64xf32> to vector<8x64xf32>
    %168 = arith.mulf %165, %167 : vector<8x64xf32>
    %169 = arith.addf %164, %168 : vector<8x64xf32>
    %c25 = arith.constant 25 : index
    %c0_57 = arith.constant 0 : index
    %170 = vector.load %arg18[%c25, %c0_57] : memref<38x64xf32, #tpu.memory_space<vmem>>, vector<8x64xf32>
    %171 = vector.extract_strided_slice %44 {offsets = [25, 0], sizes = [1, 64], strides = [1, 1]} : vector<31x64xf32> to vector<1x64xf32>
    %172 = vector.broadcast %171 : vector<1x64xf32> to vector<8x64xf32>
    %173 = arith.mulf %170, %172 : vector<8x64xf32>
    %174 = arith.addf %169, %173 : vector<8x64xf32>
    %c26 = arith.constant 26 : index
    %c0_58 = arith.constant 0 : index
    %175 = vector.load %arg18[%c26, %c0_58] : memref<38x64xf32, #tpu.memory_space<vmem>>, vector<8x64xf32>
    %176 = vector.extract_strided_slice %44 {offsets = [26, 0], sizes = [1, 64], strides = [1, 1]} : vector<31x64xf32> to vector<1x64xf32>
    %177 = vector.broadcast %176 : vector<1x64xf32> to vector<8x64xf32>
    %178 = arith.mulf %175, %177 : vector<8x64xf32>
    %179 = arith.addf %174, %178 : vector<8x64xf32>
    %c27 = arith.constant 27 : index
    %c0_59 = arith.constant 0 : index
    %180 = vector.load %arg18[%c27, %c0_59] : memref<38x64xf32, #tpu.memory_space<vmem>>, vector<8x64xf32>
    %181 = vector.extract_strided_slice %44 {offsets = [27, 0], sizes = [1, 64], strides = [1, 1]} : vector<31x64xf32> to vector<1x64xf32>
    %182 = vector.broadcast %181 : vector<1x64xf32> to vector<8x64xf32>
    %183 = arith.mulf %180, %182 : vector<8x64xf32>
    %184 = arith.addf %179, %183 : vector<8x64xf32>
    %c28 = arith.constant 28 : index
    %c0_60 = arith.constant 0 : index
    %185 = vector.load %arg18[%c28, %c0_60] : memref<38x64xf32, #tpu.memory_space<vmem>>, vector<8x64xf32>
    %186 = vector.extract_strided_slice %44 {offsets = [28, 0], sizes = [1, 64], strides = [1, 1]} : vector<31x64xf32> to vector<1x64xf32>
    %187 = vector.broadcast %186 : vector<1x64xf32> to vector<8x64xf32>
    %188 = arith.mulf %185, %187 : vector<8x64xf32>
    %189 = arith.addf %184, %188 : vector<8x64xf32>
    %c29 = arith.constant 29 : index
    %c0_61 = arith.constant 0 : index
    %190 = vector.load %arg18[%c29, %c0_61] : memref<38x64xf32, #tpu.memory_space<vmem>>, vector<8x64xf32>
    %191 = vector.extract_strided_slice %44 {offsets = [29, 0], sizes = [1, 64], strides = [1, 1]} : vector<31x64xf32> to vector<1x64xf32>
    %192 = vector.broadcast %191 : vector<1x64xf32> to vector<8x64xf32>
    %193 = arith.mulf %190, %192 : vector<8x64xf32>
    %194 = arith.addf %189, %193 : vector<8x64xf32>
    %c30 = arith.constant 30 : index
    %c0_62 = arith.constant 0 : index
    %195 = vector.load %arg18[%c30, %c0_62] : memref<38x64xf32, #tpu.memory_space<vmem>>, vector<8x64xf32>
    %196 = vector.extract_strided_slice %44 {offsets = [30, 0], sizes = [1, 64], strides = [1, 1]} : vector<31x64xf32> to vector<1x64xf32>
    %197 = vector.broadcast %196 : vector<1x64xf32> to vector<8x64xf32>
    %198 = arith.mulf %195, %197 : vector<8x64xf32>
    %199 = arith.addf %194, %198 : vector<8x64xf32>
    %200 = vector.broadcast %9 : vector<8x1xf32> to vector<8x64xf32>
    %201 = arith.mulf %199, %200 : vector<8x64xf32>
    %202 = arith.truncf %31 : vector<8x64xf32> to vector<8x64xbf16>
    %203 = arith.truncf %39 : vector<8x64xf32> to vector<8x64xbf16>
    %cst_63 = arith.constant dense<0.000000e+00> : vector<8x8xf32>
    %204 = tpu.matmul %202, %203, %cst_63 {dimension_numbers = #tpu.dot_dimension_numbers<[1], [1], [0], [0], [0, 0, 1, 0], [], []>} : vector<8x64xbf16>, vector<8x64xbf16>, vector<8x8xf32> -> vector<8x8xf32>
    %205 = vector.broadcast %11 : vector<1x8xf32> to vector<8x8xf32>
    %206 = arith.addf %204, %205 : vector<8x8xf32>
    %cst_64 = arith.constant dense<0xFF800000> : vector<8xf32>
    %207 = vector.multi_reduction <maximumf>, %206, %cst_64 [1] : vector<8x8xf32> to vector<8xf32>
    %208 = vector.shape_cast %207 : vector<8xf32> to vector<8x1xf32>
    %209 = vector.broadcast %208 : vector<8x1xf32> to vector<8x8xf32>
    %210 = arith.subf %206, %209 : vector<8x8xf32>
    %211 = math.exp %210 : vector<8x8xf32>
    %cst_65 = arith.constant dense<0.000000e+00> : vector<8xf32>
    %212 = vector.multi_reduction <add>, %211, %cst_65 [1] : vector<8x8xf32> to vector<8xf32>
    %213 = vector.shape_cast %212 : vector<8xf32> to vector<8x1xf32>
    %214 = vector.broadcast %213 : vector<8x1xf32> to vector<8x8xf32>
    %215 = arith.divf %211, %214 : vector<8x8xf32>
    %216 = arith.truncf %215 : vector<8x8xf32> to vector<8x8xbf16>
    %217 = arith.truncf %23 : vector<8x64xf32> to vector<8x64xbf16>
    %cst_66 = arith.constant dense<0.000000e+00> : vector<8x64xf32>
    %218 = tpu.matmul %216, %217, %cst_66 {dimension_numbers = #tpu.dot_dimension_numbers<[1], [0], [0], [1], [0, 0, 1, 1], [], []>} : vector<8x8xbf16>, vector<8x64xbf16>, vector<8x64xf32> -> vector<8x64xf32>
    %c0_67 = arith.constant 0 : index
    %c0_68 = arith.constant 0 : index
    %219 = vector.load %arg17[%c0_67, %c0_68] : memref<8x128xf32, #tpu.memory_space<vmem>>, vector<8x128xf32>
    %220 = arith.truncf %218 : vector<8x64xf32> to vector<8x64xbf16>
    %c0_69 = arith.constant 0 : index
    %c0_70 = arith.constant 0 : index
    %c0_71 = arith.constant 0 : index
    %221 = vector.load %arg11[%c0_69, %c0_70, %c0_71] : memref<2x64x128xbf16, #tpu.memory_space<vmem>>, vector<1x64x128xbf16>
    %222 = vector.shape_cast %221 : vector<1x64x128xbf16> to vector<64x128xbf16>
    %cst_72 = arith.constant dense<0.000000e+00> : vector<8x128xf32>
    %223 = tpu.matmul %220, %222, %cst_72 {dimension_numbers = #tpu.dot_dimension_numbers<[1], [0], [0], [1], [0, 0, 1, 1], [], []>} : vector<8x64xbf16>, vector<64x128xbf16>, vector<8x128xf32> -> vector<8x128xf32>
    %224 = arith.addf %219, %223 : vector<8x128xf32>
    %c0_73 = arith.constant 0 : index
    %c0_74 = arith.constant 0 : index
    %225 = vector.load %arg17[%c0_73, %c0_74] : memref<8x128xf32, #tpu.memory_space<vmem>>, vector<8x128xf32>
    tpu.vector_store %arg17[%c0_73, %c0_74], %224 {strides = array<i32>} : memref<8x128xf32, #tpu.memory_space<vmem>>, vector<8x128xf32>,
    %c1_75 = arith.constant 1 : index
    %c0_76 = arith.constant 0 : index
    %c0_77 = arith.constant 0 : index
    %226 = vector.load %arg9[%c1_75, %c0_76, %c0_77] : memref<2x128x192xbf16, #tpu.memory_space<vmem>>, vector<1x128x192xbf16>
    %227 = vector.shape_cast %226 : vector<1x128x192xbf16> to vector<128x192xbf16>
    %cst_78 = arith.constant dense<0.000000e+00> : vector<8x192xf32>
    %228 = tpu.matmul %7, %227, %cst_78 {dimension_numbers = #tpu.dot_dimension_numbers<[1], [0], [0], [1], [0, 0, 1, 1], [], []>} : vector<8x128xbf16>, vector<128x192xbf16>, vector<8x192xf32> -> vector<8x192xf32>
    %c1_79 = arith.constant 1 : index
    %c0_80 = arith.constant 0 : index
    %c0_81 = arith.constant 0 : index
    %229 = vector.load %arg10[%c1_79, %c0_80, %c0_81] : memref<2x1x192xf32, #tpu.memory_space<vmem>>, vector<1x1x192xf32>
    %230 = vector.shape_cast %229 : vector<1x1x192xf32> to vector<1x192xf32>
    %231 = vector.broadcast %230 : vector<1x192xf32> to vector<8x192xf32>
    %232 = arith.addf %228, %231 : vector<8x192xf32>
    %233 = vector.extract_strided_slice %232 {offsets = [0, 0], sizes = [8, 64], strides = [1, 1]} : vector<8x192xf32> to vector<8x64xf32>
    %234 = vector.extract_strided_slice %232 {offsets = [0, 64], sizes = [8, 64], strides = [1, 1]} : vector<8x192xf32> to vector<8x64xf32>
    %235 = vector.extract_strided_slice %232 {offsets = [0, 128], sizes = [8, 64], strides = [1, 1]} : vector<8x192xf32> to vector<8x64xf32>
    %236 = vector.extract_strided_slice %233 {offsets = [0, 32], sizes = [8, 32], strides = [1, 1]} : vector<8x64xf32> to vector<8x32xf32>
    %cst_82 = arith.constant 0.000000e+00 : f32
    %237 = vector.broadcast %cst_82 : f32 to vector<8x32xf32>
    %238 = arith.subf %237, %236 : vector<8x32xf32>
    %239 = vector.extract_strided_slice %233 {offsets = [0, 0], sizes = [8, 32], strides = [1, 1]} : vector<8x64xf32> to vector<8x32xf32>
    %240 = tpu.concatenate %238, %239 in 1 : vector<8x32xf32>, vector<8x32xf32> -> vector<8x64xf32>
    %241 = arith.mulf %233, %12 : vector<8x64xf32>
    %242 = arith.mulf %240, %13 : vector<8x64xf32>
    %243 = arith.addf %241, %242 : vector<8x64xf32>
    %244 = vector.extract_strided_slice %234 {offsets = [0, 32], sizes = [8, 32], strides = [1, 1]} : vector<8x64xf32> to vector<8x32xf32>
    %cst_83 = arith.constant 0.000000e+00 : f32
    %245 = vector.broadcast %cst_83 : f32 to vector<8x32xf32>
    %246 = arith.subf %245, %244 : vector<8x32xf32>
    %247 = vector.extract_strided_slice %234 {offsets = [0, 0], sizes = [8, 32], strides = [1, 1]} : vector<8x64xf32> to vector<8x32xf32>
    %248 = tpu.concatenate %246, %247 in 1 : vector<8x32xf32>, vector<8x32xf32> -> vector<8x64xf32>
    %249 = arith.mulf %234, %12 : vector<8x64xf32>
    %250 = arith.mulf %248, %13 : vector<8x64xf32>
    %251 = arith.addf %249, %250 : vector<8x64xf32>
    %252 = vector.broadcast %9 : vector<8x1xf32> to vector<8x64xf32>
    %253 = arith.mulf %235, %252 : vector<8x64xf32>
    %c15_84 = arith.constant 15 : index
    %c0_85 = arith.constant 0 : index
    %254 = vector.load %arg18[%c15_84, %c0_85] : memref<38x64xf32, #tpu.memory_space<vmem>>, vector<8x64xf32>
    tpu.vector_store %arg18[%c15_84, %c0_85], %253 {strides = array<i32>} : memref<38x64xf32, #tpu.memory_space<vmem>>, vector<8x64xf32>,
    %c1_86 = arith.constant 1 : index
    %c0_87 = arith.constant 0 : index
    %c0_88 = arith.constant 0 : index
    %255 = vector.load %arg13[%c1_86, %c0_87, %c0_88] : memref<2x31x64xf32, #tpu.memory_space<vmem>>, vector<1x31x64xf32>
    %256 = vector.shape_cast %255 : vector<1x31x64xf32> to vector<31x64xf32>
    %c0_89 = arith.constant 0 : index
    %c0_90 = arith.constant 0 : index
    %257 = vector.load %arg18[%c0_89, %c0_90] : memref<38x64xf32, #tpu.memory_space<vmem>>, vector<8x64xf32>
    %258 = vector.extract_strided_slice %256 {offsets = [0, 0], sizes = [1, 64], strides = [1, 1]} : vector<31x64xf32> to vector<1x64xf32>
    %259 = vector.broadcast %258 : vector<1x64xf32> to vector<8x64xf32>
    %260 = arith.mulf %257, %259 : vector<8x64xf32>
    %261 = arith.addf %253, %260 : vector<8x64xf32>
    %c1_91 = arith.constant 1 : index
    %c0_92 = arith.constant 0 : index
    %262 = vector.load %arg18[%c1_91, %c0_92] : memref<38x64xf32, #tpu.memory_space<vmem>>, vector<8x64xf32>
    %263 = vector.extract_strided_slice %256 {offsets = [1, 0], sizes = [1, 64], strides = [1, 1]} : vector<31x64xf32> to vector<1x64xf32>
    %264 = vector.broadcast %263 : vector<1x64xf32> to vector<8x64xf32>
    %265 = arith.mulf %262, %264 : vector<8x64xf32>
    %266 = arith.addf %261, %265 : vector<8x64xf32>
    %c2_93 = arith.constant 2 : index
    %c0_94 = arith.constant 0 : index
    %267 = vector.load %arg18[%c2_93, %c0_94] : memref<38x64xf32, #tpu.memory_space<vmem>>, vector<8x64xf32>
    %268 = vector.extract_strided_slice %256 {offsets = [2, 0], sizes = [1, 64], strides = [1, 1]} : vector<31x64xf32> to vector<1x64xf32>
    %269 = vector.broadcast %268 : vector<1x64xf32> to vector<8x64xf32>
    %270 = arith.mulf %267, %269 : vector<8x64xf32>
    %271 = arith.addf %266, %270 : vector<8x64xf32>
    %c3_95 = arith.constant 3 : index
    %c0_96 = arith.constant 0 : index
    %272 = vector.load %arg18[%c3_95, %c0_96] : memref<38x64xf32, #tpu.memory_space<vmem>>, vector<8x64xf32>
    %273 = vector.extract_strided_slice %256 {offsets = [3, 0], sizes = [1, 64], strides = [1, 1]} : vector<31x64xf32> to vector<1x64xf32>
    %274 = vector.broadcast %273 : vector<1x64xf32> to vector<8x64xf32>
    %275 = arith.mulf %272, %274 : vector<8x64xf32>
    %276 = arith.addf %271, %275 : vector<8x64xf32>
    %c4_97 = arith.constant 4 : index
    %c0_98 = arith.constant 0 : index
    %277 = vector.load %arg18[%c4_97, %c0_98] : memref<38x64xf32, #tpu.memory_space<vmem>>, vector<8x64xf32>
    %278 = vector.extract_strided_slice %256 {offsets = [4, 0], sizes = [1, 64], strides = [1, 1]} : vector<31x64xf32> to vector<1x64xf32>
    %279 = vector.broadcast %278 : vector<1x64xf32> to vector<8x64xf32>
    %280 = arith.mulf %277, %279 : vector<8x64xf32>
    %281 = arith.addf %276, %280 : vector<8x64xf32>
    %c5_99 = arith.constant 5 : index
    %c0_100 = arith.constant 0 : index
    %282 = vector.load %arg18[%c5_99, %c0_100] : memref<38x64xf32, #tpu.memory_space<vmem>>, vector<8x64xf32>
    %283 = vector.extract_strided_slice %256 {offsets = [5, 0], sizes = [1, 64], strides = [1, 1]} : vector<31x64xf32> to vector<1x64xf32>
    %284 = vector.broadcast %283 : vector<1x64xf32> to vector<8x64xf32>
    %285 = arith.mulf %282, %284 : vector<8x64xf32>
    %286 = arith.addf %281, %285 : vector<8x64xf32>
    %c6_101 = arith.constant 6 : index
    %c0_102 = arith.constant 0 : index
    %287 = vector.load %arg18[%c6_101, %c0_102] : memref<38x64xf32, #tpu.memory_space<vmem>>, vector<8x64xf32>
    %288 = vector.extract_strided_slice %256 {offsets = [6, 0], sizes = [1, 64], strides = [1, 1]} : vector<31x64xf32> to vector<1x64xf32>
    %289 = vector.broadcast %288 : vector<1x64xf32> to vector<8x64xf32>
    %290 = arith.mulf %287, %289 : vector<8x64xf32>
    %291 = arith.addf %286, %290 : vector<8x64xf32>
    %c7_103 = arith.constant 7 : index
    %c0_104 = arith.constant 0 : index
    %292 = vector.load %arg18[%c7_103, %c0_104] : memref<38x64xf32, #tpu.memory_space<vmem>>, vector<8x64xf32>
    %293 = vector.extract_strided_slice %256 {offsets = [7, 0], sizes = [1, 64], strides = [1, 1]} : vector<31x64xf32> to vector<1x64xf32>
    %294 = vector.broadcast %293 : vector<1x64xf32> to vector<8x64xf32>
    %295 = arith.mulf %292, %294 : vector<8x64xf32>
    %296 = arith.addf %291, %295 : vector<8x64xf32>
    %c8_105 = arith.constant 8 : index
    %c0_106 = arith.constant 0 : index
    %297 = vector.load %arg18[%c8_105, %c0_106] : memref<38x64xf32, #tpu.memory_space<vmem>>, vector<8x64xf32>
    %298 = vector.extract_strided_slice %256 {offsets = [8, 0], sizes = [1, 64], strides = [1, 1]} : vector<31x64xf32> to vector<1x64xf32>
    %299 = vector.broadcast %298 : vector<1x64xf32> to vector<8x64xf32>
    %300 = arith.mulf %297, %299 : vector<8x64xf32>
    %301 = arith.addf %296, %300 : vector<8x64xf32>
    %c9_107 = arith.constant 9 : index
    %c0_108 = arith.constant 0 : index
    %302 = vector.load %arg18[%c9_107, %c0_108] : memref<38x64xf32, #tpu.memory_space<vmem>>, vector<8x64xf32>
    %303 = vector.extract_strided_slice %256 {offsets = [9, 0], sizes = [1, 64], strides = [1, 1]} : vector<31x64xf32> to vector<1x64xf32>
    %304 = vector.broadcast %303 : vector<1x64xf32> to vector<8x64xf32>
    %305 = arith.mulf %302, %304 : vector<8x64xf32>
    %306 = arith.addf %301, %305 : vector<8x64xf32>
    %c10_109 = arith.constant 10 : index
    %c0_110 = arith.constant 0 : index
    %307 = vector.load %arg18[%c10_109, %c0_110] : memref<38x64xf32, #tpu.memory_space<vmem>>, vector<8x64xf32>
    %308 = vector.extract_strided_slice %256 {offsets = [10, 0], sizes = [1, 64], strides = [1, 1]} : vector<31x64xf32> to vector<1x64xf32>
    %309 = vector.broadcast %308 : vector<1x64xf32> to vector<8x64xf32>
    %310 = arith.mulf %307, %309 : vector<8x64xf32>
    %311 = arith.addf %306, %310 : vector<8x64xf32>
    %c11_111 = arith.constant 11 : index
    %c0_112 = arith.constant 0 : index
    %312 = vector.load %arg18[%c11_111, %c0_112] : memref<38x64xf32, #tpu.memory_space<vmem>>, vector<8x64xf32>
    %313 = vector.extract_strided_slice %256 {offsets = [11, 0], sizes = [1, 64], strides = [1, 1]} : vector<31x64xf32> to vector<1x64xf32>
    %314 = vector.broadcast %313 : vector<1x64xf32> to vector<8x64xf32>
    %315 = arith.mulf %312, %314 : vector<8x64xf32>
    %316 = arith.addf %311, %315 : vector<8x64xf32>
    %c12_113 = arith.constant 12 : index
    %c0_114 = arith.constant 0 : index
    %317 = vector.load %arg18[%c12_113, %c0_114] : memref<38x64xf32, #tpu.memory_space<vmem>>, vector<8x64xf32>
    %318 = vector.extract_strided_slice %256 {offsets = [12, 0], sizes = [1, 64], strides = [1, 1]} : vector<31x64xf32> to vector<1x64xf32>
    %319 = vector.broadcast %318 : vector<1x64xf32> to vector<8x64xf32>
    %320 = arith.mulf %317, %319 : vector<8x64xf32>
    %321 = arith.addf %316, %320 : vector<8x64xf32>
    %c13_115 = arith.constant 13 : index
    %c0_116 = arith.constant 0 : index
    %322 = vector.load %arg18[%c13_115, %c0_116] : memref<38x64xf32, #tpu.memory_space<vmem>>, vector<8x64xf32>
    %323 = vector.extract_strided_slice %256 {offsets = [13, 0], sizes = [1, 64], strides = [1, 1]} : vector<31x64xf32> to vector<1x64xf32>
    %324 = vector.broadcast %323 : vector<1x64xf32> to vector<8x64xf32>
    %325 = arith.mulf %322, %324 : vector<8x64xf32>
    %326 = arith.addf %321, %325 : vector<8x64xf32>
    %c14_117 = arith.constant 14 : index
    %c0_118 = arith.constant 0 : index
    %327 = vector.load %arg18[%c14_117, %c0_118] : memref<38x64xf32, #tpu.memory_space<vmem>>, vector<8x64xf32>
    %328 = vector.extract_strided_slice %256 {offsets = [14, 0], sizes = [1, 64], strides = [1, 1]} : vector<31x64xf32> to vector<1x64xf32>
    %329 = vector.broadcast %328 : vector<1x64xf32> to vector<8x64xf32>
    %330 = arith.mulf %327, %329 : vector<8x64xf32>
    %331 = arith.addf %326, %330 : vector<8x64xf32>
    %c15_119 = arith.constant 15 : index
    %c0_120 = arith.constant 0 : index
    %332 = vector.load %arg18[%c15_119, %c0_120] : memref<38x64xf32, #tpu.memory_space<vmem>>, vector<8x64xf32>
    %333 = vector.extract_strided_slice %256 {offsets = [15, 0], sizes = [1, 64], strides = [1, 1]} : vector<31x64xf32> to vector<1x64xf32>
    %334 = vector.broadcast %333 : vector<1x64xf32> to vector<8x64xf32>
    %335 = arith.mulf %332, %334 : vector<8x64xf32>
    %336 = arith.addf %331, %335 : vector<8x64xf32>
    %c16_121 = arith.constant 16 : index
    %c0_122 = arith.constant 0 : index
    %337 = vector.load %arg18[%c16_121, %c0_122] : memref<38x64xf32, #tpu.memory_space<vmem>>, vector<8x64xf32>
    %338 = vector.extract_strided_slice %256 {offsets = [16, 0], sizes = [1, 64], strides = [1, 1]} : vector<31x64xf32> to vector<1x64xf32>
    %339 = vector.broadcast %338 : vector<1x64xf32> to vector<8x64xf32>
    %340 = arith.mulf %337, %339 : vector<8x64xf32>
    %341 = arith.addf %336, %340 : vector<8x64xf32>
    %c17_123 = arith.constant 17 : index
    %c0_124 = arith.constant 0 : index
    %342 = vector.load %arg18[%c17_123, %c0_124] : memref<38x64xf32, #tpu.memory_space<vmem>>, vector<8x64xf32>
    %343 = vector.extract_strided_slice %256 {offsets = [17, 0], sizes = [1, 64], strides = [1, 1]} : vector<31x64xf32> to vector<1x64xf32>
    %344 = vector.broadcast %343 : vector<1x64xf32> to vector<8x64xf32>
    %345 = arith.mulf %342, %344 : vector<8x64xf32>
    %346 = arith.addf %341, %345 : vector<8x64xf32>
    %c18_125 = arith.constant 18 : index
    %c0_126 = arith.constant 0 : index
    %347 = vector.load %arg18[%c18_125, %c0_126] : memref<38x64xf32, #tpu.memory_space<vmem>>, vector<8x64xf32>
    %348 = vector.extract_strided_slice %256 {offsets = [18, 0], sizes = [1, 64], strides = [1, 1]} : vector<31x64xf32> to vector<1x64xf32>
    %349 = vector.broadcast %348 : vector<1x64xf32> to vector<8x64xf32>
    %350 = arith.mulf %347, %349 : vector<8x64xf32>
    %351 = arith.addf %346, %350 : vector<8x64xf32>
    %c19_127 = arith.constant 19 : index
    %c0_128 = arith.constant 0 : index
    %352 = vector.load %arg18[%c19_127, %c0_128] : memref<38x64xf32, #tpu.memory_space<vmem>>, vector<8x64xf32>
    %353 = vector.extract_strided_slice %256 {offsets = [19, 0], sizes = [1, 64], strides = [1, 1]} : vector<31x64xf32> to vector<1x64xf32>
    %354 = vector.broadcast %353 : vector<1x64xf32> to vector<8x64xf32>
    %355 = arith.mulf %352, %354 : vector<8x64xf32>
    %356 = arith.addf %351, %355 : vector<8x64xf32>
    %c20_129 = arith.constant 20 : index
    %c0_130 = arith.constant 0 : index
    %357 = vector.load %arg18[%c20_129, %c0_130] : memref<38x64xf32, #tpu.memory_space<vmem>>, vector<8x64xf32>
    %358 = vector.extract_strided_slice %256 {offsets = [20, 0], sizes = [1, 64], strides = [1, 1]} : vector<31x64xf32> to vector<1x64xf32>
    %359 = vector.broadcast %358 : vector<1x64xf32> to vector<8x64xf32>
    %360 = arith.mulf %357, %359 : vector<8x64xf32>
    %361 = arith.addf %356, %360 : vector<8x64xf32>
    %c21_131 = arith.constant 21 : index
    %c0_132 = arith.constant 0 : index
    %362 = vector.load %arg18[%c21_131, %c0_132] : memref<38x64xf32, #tpu.memory_space<vmem>>, vector<8x64xf32>
    %363 = vector.extract_strided_slice %256 {offsets = [21, 0], sizes = [1, 64], strides = [1, 1]} : vector<31x64xf32> to vector<1x64xf32>
    %364 = vector.broadcast %363 : vector<1x64xf32> to vector<8x64xf32>
    %365 = arith.mulf %362, %364 : vector<8x64xf32>
    %366 = arith.addf %361, %365 : vector<8x64xf32>
    %c22_133 = arith.constant 22 : index
    %c0_134 = arith.constant 0 : index
    %367 = vector.load %arg18[%c22_133, %c0_134] : memref<38x64xf32, #tpu.memory_space<vmem>>, vector<8x64xf32>
    %368 = vector.extract_strided_slice %256 {offsets = [22, 0], sizes = [1, 64], strides = [1, 1]} : vector<31x64xf32> to vector<1x64xf32>
    %369 = vector.broadcast %368 : vector<1x64xf32> to vector<8x64xf32>
    %370 = arith.mulf %367, %369 : vector<8x64xf32>
    %371 = arith.addf %366, %370 : vector<8x64xf32>
    %c23_135 = arith.constant 23 : index
    %c0_136 = arith.constant 0 : index
    %372 = vector.load %arg18[%c23_135, %c0_136] : memref<38x64xf32, #tpu.memory_space<vmem>>, vector<8x64xf32>
    %373 = vector.extract_strided_slice %256 {offsets = [23, 0], sizes = [1, 64], strides = [1, 1]} : vector<31x64xf32> to vector<1x64xf32>
    %374 = vector.broadcast %373 : vector<1x64xf32> to vector<8x64xf32>
    %375 = arith.mulf %372, %374 : vector<8x64xf32>
    %376 = arith.addf %371, %375 : vector<8x64xf32>
    %c24_137 = arith.constant 24 : index
    %c0_138 = arith.constant 0 : index
    %377 = vector.load %arg18[%c24_137, %c0_138] : memref<38x64xf32, #tpu.memory_space<vmem>>, vector<8x64xf32>
    %378 = vector.extract_strided_slice %256 {offsets = [24, 0], sizes = [1, 64], strides = [1, 1]} : vector<31x64xf32> to vector<1x64xf32>
    %379 = vector.broadcast %378 : vector<1x64xf32> to vector<8x64xf32>
    %380 = arith.mulf %377, %379 : vector<8x64xf32>
    %381 = arith.addf %376, %380 : vector<8x64xf32>
    %c25_139 = arith.constant 25 : index
    %c0_140 = arith.constant 0 : index
    %382 = vector.load %arg18[%c25_139, %c0_140] : memref<38x64xf32, #tpu.memory_space<vmem>>, vector<8x64xf32>
    %383 = vector.extract_strided_slice %256 {offsets = [25, 0], sizes = [1, 64], strides = [1, 1]} : vector<31x64xf32> to vector<1x64xf32>
    %384 = vector.broadcast %383 : vector<1x64xf32> to vector<8x64xf32>
    %385 = arith.mulf %382, %384 : vector<8x64xf32>
    %386 = arith.addf %381, %385 : vector<8x64xf32>
    %c26_141 = arith.constant 26 : index
    %c0_142 = arith.constant 0 : index
    %387 = vector.load %arg18[%c26_141, %c0_142] : memref<38x64xf32, #tpu.memory_space<vmem>>, vector<8x64xf32>
    %388 = vector.extract_strided_slice %256 {offsets = [26, 0], sizes = [1, 64], strides = [1, 1]} : vector<31x64xf32> to vector<1x64xf32>
    %389 = vector.broadcast %388 : vector<1x64xf32> to vector<8x64xf32>
    %390 = arith.mulf %387, %389 : vector<8x64xf32>
    %391 = arith.addf %386, %390 : vector<8x64xf32>
    %c27_143 = arith.constant 27 : index
    %c0_144 = arith.constant 0 : index
    %392 = vector.load %arg18[%c27_143, %c0_144] : memref<38x64xf32, #tpu.memory_space<vmem>>, vector<8x64xf32>
    %393 = vector.extract_strided_slice %256 {offsets = [27, 0], sizes = [1, 64], strides = [1, 1]} : vector<31x64xf32> to vector<1x64xf32>
    %394 = vector.broadcast %393 : vector<1x64xf32> to vector<8x64xf32>
    %395 = arith.mulf %392, %394 : vector<8x64xf32>
    %396 = arith.addf %391, %395 : vector<8x64xf32>
    %c28_145 = arith.constant 28 : index
    %c0_146 = arith.constant 0 : index
    %397 = vector.load %arg18[%c28_145, %c0_146] : memref<38x64xf32, #tpu.memory_space<vmem>>, vector<8x64xf32>
    %398 = vector.extract_strided_slice %256 {offsets = [28, 0], sizes = [1, 64], strides = [1, 1]} : vector<31x64xf32> to vector<1x64xf32>
    %399 = vector.broadcast %398 : vector<1x64xf32> to vector<8x64xf32>
    %400 = arith.mulf %397, %399 : vector<8x64xf32>
    %401 = arith.addf %396, %400 : vector<8x64xf32>
    %c29_147 = arith.constant 29 : index
    %c0_148 = arith.constant 0 : index
    %402 = vector.load %arg18[%c29_147, %c0_148] : memref<38x64xf32, #tpu.memory_space<vmem>>, vector<8x64xf32>
    %403 = vector.extract_strided_slice %256 {offsets = [29, 0], sizes = [1, 64], strides = [1, 1]} : vector<31x64xf32> to vector<1x64xf32>
    %404 = vector.broadcast %403 : vector<1x64xf32> to vector<8x64xf32>
    %405 = arith.mulf %402, %404 : vector<8x64xf32>
    %406 = arith.addf %401, %405 : vector<8x64xf32>
    %c30_149 = arith.constant 30 : index
    %c0_150 = arith.constant 0 : index
    %407 = vector.load %arg18[%c30_149, %c0_150] : memref<38x64xf32, #tpu.memory_space<vmem>>, vector<8x64xf32>
    %408 = vector.extract_strided_slice %256 {offsets = [30, 0], sizes = [1, 64], strides = [1, 1]} : vector<31x64xf32> to vector<1x64xf32>
    %409 = vector.broadcast %408 : vector<1x64xf32> to vector<8x64xf32>
    %410 = arith.mulf %407, %409 : vector<8x64xf32>
    %411 = arith.addf %406, %410 : vector<8x64xf32>
    %412 = vector.broadcast %9 : vector<8x1xf32> to vector<8x64xf32>
    %413 = arith.mulf %411, %412 : vector<8x64xf32>
    %414 = arith.truncf %243 : vector<8x64xf32> to vector<8x64xbf16>
    %415 = arith.truncf %251 : vector<8x64xf32> to vector<8x64xbf16>
    %cst_151 = arith.constant dense<0.000000e+00> : vector<8x8xf32>
    %416 = tpu.matmul %414, %415, %cst_151 {dimension_numbers = #tpu.dot_dimension_numbers<[1], [1], [0], [0], [0, 0, 1, 0], [], []>} : vector<8x64xbf16>, vector<8x64xbf16>, vector<8x8xf32> -> vector<8x8xf32>
    %417 = vector.broadcast %11 : vector<1x8xf32> to vector<8x8xf32>
    %418 = arith.addf %416, %417 : vector<8x8xf32>
    %cst_152 = arith.constant dense<0xFF800000> : vector<8xf32>
    %419 = vector.multi_reduction <maximumf>, %418, %cst_152 [1] : vector<8x8xf32> to vector<8xf32>
    %420 = vector.shape_cast %419 : vector<8xf32> to vector<8x1xf32>
    %421 = vector.broadcast %420 : vector<8x1xf32> to vector<8x8xf32>
    %422 = arith.subf %418, %421 : vector<8x8xf32>
    %423 = math.exp %422 : vector<8x8xf32>
    %cst_153 = arith.constant dense<0.000000e+00> : vector<8xf32>
    %424 = vector.multi_reduction <add>, %423, %cst_153 [1] : vector<8x8xf32> to vector<8xf32>
    %425 = vector.shape_cast %424 : vector<8xf32> to vector<8x1xf32>
    %426 = vector.broadcast %425 : vector<8x1xf32> to vector<8x8xf32>
    %427 = arith.divf %423, %426 : vector<8x8xf32>
    %428 = arith.truncf %427 : vector<8x8xf32> to vector<8x8xbf16>
    %429 = arith.truncf %235 : vector<8x64xf32> to vector<8x64xbf16>
    %cst_154 = arith.constant dense<0.000000e+00> : vector<8x64xf32>
    %430 = tpu.matmul %428, %429, %cst_154 {dimension_numbers = #tpu.dot_dimension_numbers<[1], [0], [0], [1], [0, 0, 1, 1], [], []>} : vector<8x8xbf16>, vector<8x64xbf16>, vector<8x64xf32> -> vector<8x64xf32>
    %c0_155 = arith.constant 0 : index
    %c0_156 = arith.constant 0 : index
    %431 = vector.load %arg17[%c0_155, %c0_156] : memref<8x128xf32, #tpu.memory_space<vmem>>, vector<8x128xf32>
    %432 = arith.truncf %430 : vector<8x64xf32> to vector<8x64xbf16>
    %c1_157 = arith.constant 1 : index
    %c0_158 = arith.constant 0 : index
    %c0_159 = arith.constant 0 : index
    %433 = vector.load %arg11[%c1_157, %c0_158, %c0_159] : memref<2x64x128xbf16, #tpu.memory_space<vmem>>, vector<1x64x128xbf16>
    %434 = vector.shape_cast %433 : vector<1x64x128xbf16> to vector<64x128xbf16>
    %cst_160 = arith.constant dense<0.000000e+00> : vector<8x128xf32>
    %435 = tpu.matmul %432, %434, %cst_160 {dimension_numbers = #tpu.dot_dimension_numbers<[1], [0], [0], [1], [0, 0, 1, 1], [], []>} : vector<8x64xbf16>, vector<64x128xbf16>, vector<8x128xf32> -> vector<8x128xf32>
    %436 = arith.addf %431, %435 : vector<8x128xf32>
    %c0_161 = arith.constant 0 : index
    %c0_162 = arith.constant 0 : index
    %437 = vector.load %arg17[%c0_161, %c0_162] : memref<8x128xf32, #tpu.memory_space<vmem>>, vector<8x128xf32>
    tpu.vector_store %arg17[%c0_161, %c0_162], %436 {strides = array<i32>} : memref<8x128xf32, #tpu.memory_space<vmem>>, vector<8x128xf32>,
    %438 = tpu.concatenate %201, %413 in 1 : vector<8x64xf32>, vector<8x64xf32> -> vector<8x128xf32>
    %439 = arith.truncf %438 : vector<8x128xf32> to vector<8x128xbf16>
    %c0_163 = arith.constant 0 : index
    %c0_164 = arith.constant 0 : index
    %c0_165 = arith.constant 0 : index
    %440 = vector.load %arg15[%c0_163, %c0_164, %c0_165] : memref<1x8x128xbf16, #tpu.memory_space<vmem>>, vector<1x8x128xbf16>
    %441 = vector.shape_cast %440 : vector<1x8x128xbf16> to vector<8x128xbf16>
    %442 = vector.shape_cast %439 : vector<8x128xbf16> to vector<1x8x128xbf16>
    tpu.vector_store %arg15[%c0_163, %c0_164, %c0_165], %442 {strides = array<i32>} : memref<1x8x128xbf16, #tpu.memory_space<vmem>>, vector<1x8x128xbf16>,
    %c0_i32_166 = arith.constant 0 : i32
    %443 = arith.cmpi eq, %arg1, %c0_i32_166 : i32
    %444 = arith.extui %443 : i1 to i32
    %c0_i32_167 = arith.constant 0 : i32
    %445 = arith.cmpi ne, %444, %c0_i32_167 : i32
    scf.if %445 {
      %c0_168 = arith.constant 0 : index
      %c0_169 = arith.constant 0 : index
      %446 = vector.load %arg17[%c0_168, %c0_169] : memref<8x128xf32, #tpu.memory_space<vmem>>, vector<8x128xf32>
      %447 = arith.truncf %446 : vector<8x128xf32> to vector<8x128xbf16>
      %c0_170 = arith.constant 0 : index
      %c0_171 = arith.constant 0 : index
      %c0_172 = arith.constant 0 : index
      %448 = vector.load %arg14[%c0_170, %c0_171, %c0_172] : memref<1x8x128xbf16, #tpu.memory_space<vmem>>, vector<1x8x128xbf16>
      %449 = vector.shape_cast %448 : vector<1x8x128xbf16> to vector<8x128xbf16>
      %450 = vector.shape_cast %447 : vector<8x128xbf16> to vector<1x8x128xbf16>
      tpu.vector_store %arg14[%c0_170, %c0_171, %c0_172], %450 {strides = array<i32>} : memref<1x8x128xbf16, #tpu.memory_space<vmem>>, vector<1x8x128xbf16>,
    } else {
    }
    return
  }
  func.func @transform_0(%arg0: i32, %arg1: i32) -> (i32, i32, i32) {
    %c0_i32 = arith.constant 0 : i32
    %c0_i32_0 = arith.constant 0 : i32
    %c0_i32_1 = arith.constant 0 : i32
    return %arg0, %c0_i32, %c0_i32_0 : i32, i32, i32
  }
  func.func @transform_1(%arg0: i32, %arg1: i32) -> (i32, i32) {
    %c0_i32 = arith.constant 0 : i32
    %c0_i32_0 = arith.constant 0 : i32
    %c0_i32_1 = arith.constant 0 : i32
    return %c0_i32, %c0_i32_0 : i32, i32
  }
  func.func @transform_2(%arg0: i32, %arg1: i32) -> (i32, i32) {
    %c0_i32 = arith.constant 0 : i32
    %c0_i32_0 = arith.constant 0 : i32
    %c0_i32_1 = arith.constant 0 : i32
    return %c0_i32, %c0_i32_0 : i32, i32
  }
  func.func @transform_3(%arg0: i32, %arg1: i32) -> (i32, i32, i32) {
    %c0_i32 = arith.constant 0 : i32
    %c0_i32_0 = arith.constant 0 : i32
    %c0_i32_1 = arith.constant 0 : i32
    return %arg0, %c0_i32, %c0_i32_0 : i32, i32, i32
  }
  func.func @transform_4(%arg0: i32, %arg1: i32) -> (i32, i32, i32) {
    %c0_i32 = arith.constant 0 : i32
    %c0_i32_0 = arith.constant 0 : i32
    %c0_i32_1 = arith.constant 0 : i32
    return %arg0, %c0_i32, %c0_i32_0 : i32, i32, i32
  }
  func.func @transform_5(%arg0: i32, %arg1: i32) -> (i32, i32) {
    %c0_i32 = arith.constant 0 : i32
    %c0_i32_0 = arith.constant 0 : i32
    %c0_i32_1 = arith.constant 0 : i32
    return %c0_i32, %c0_i32_0 : i32, i32
  }
  func.func @transform_6(%arg0: i32, %arg1: i32) -> (i32, i32) {
    %c0_i32 = arith.constant 0 : i32
    %c0_i32_0 = arith.constant 0 : i32
    %c0_i32_1 = arith.constant 0 : i32
    return %c0_i32, %c0_i32_0 : i32, i32
  }
  func.func @transform_7(%arg0: i32, %arg1: i32) -> (i32, i32, i32) {
    %c0_i32 = arith.constant 0 : i32
    %c0_i32_0 = arith.constant 0 : i32
    %c0_i32_1 = arith.constant 0 : i32
    return %arg1, %c0_i32, %c0_i32_0 : i32, i32, i32
  }
  func.func @transform_8(%arg0: i32, %arg1: i32) -> (i32, i32, i32) {
    %c0_i32 = arith.constant 0 : i32
    %c0_i32_0 = arith.constant 0 : i32
    %c0_i32_1 = arith.constant 0 : i32
    return %arg1, %c0_i32, %c0_i32_0 : i32, i32, i32
  }
  func.func @transform_9(%arg0: i32, %arg1: i32) -> (i32, i32, i32) {
    %c0_i32 = arith.constant 0 : i32
    %c0_i32_0 = arith.constant 0 : i32
    %c0_i32_1 = arith.constant 0 : i32
    return %arg1, %c0_i32, %c0_i32_0 : i32, i32, i32
  }
  func.func @transform_10(%arg0: i32, %arg1: i32) -> (i32, i32) {
    %c0_i32 = arith.constant 0 : i32
    %c0_i32_0 = arith.constant 0 : i32
    %c0_i32_1 = arith.constant 0 : i32
    return %c0_i32, %c0_i32_0 : i32, i32
  }
  func.func @transform_11(%arg0: i32, %arg1: i32) -> (i32, i32, i32) {
    %c0_i32 = arith.constant 0 : i32
    %c0_i32_0 = arith.constant 0 : i32
    %c0_i32_1 = arith.constant 0 : i32
    return %arg1, %c0_i32, %c0_i32_0 : i32, i32, i32
  }
  func.func @transform_12(%arg0: i32, %arg1: i32) -> (i32, i32, i32) {
    %c0_i32 = arith.constant 0 : i32
    %c0_i32_0 = arith.constant 0 : i32
    %c0_i32_1 = arith.constant 0 : i32
    return %arg0, %c0_i32, %c0_i32_0 : i32, i32, i32
  }
  func.func @transform_13(%arg0: i32, %arg1: i32) -> (i32, i32, i32) {
    %c0_i32 = arith.constant 0 : i32
    %c0_i32_0 = arith.constant 0 : i32
    return %arg0, %c0_i32, %arg1 : i32, i32, i32
  }
}

module attributes {stable_mosaic.version = 11 : i64} {
  func.func @_mlp_block_kernel(%arg0: i32, %arg1: i32, %arg2: memref<16x128xbf16, #tpu.memory_space<vmem>>, %arg3: memref<16x128xbf16, #tpu.memory_space<vmem>>, %arg4: memref<1x128xf32, #tpu.memory_space<vmem>>, %arg5: memref<1x128xf32, #tpu.memory_space<vmem>>, %arg6: memref<128x512xbf16, #tpu.memory_space<vmem>>, %arg7: memref<1x512xf32, #tpu.memory_space<vmem>>, %arg8: memref<512x128xbf16, #tpu.memory_space<vmem>>, %arg9: memref<1x128xf32, #tpu.memory_space<vmem>>, %arg10: memref<16x128xbf16, #tpu.memory_space<vmem>>, %arg11: memref<16x128xbf16, #tpu.memory_space<vmem>>, %arg12: memref<16x128xf32, #tpu.memory_space<vmem>>) attributes {dimension_semantics = [#tpu.dimension_semantics<parallel>, #tpu.dimension_semantics<arbitrary>], iteration_bounds = array<i64: 1, 1>, scalar_prefetch = 0 : i64, scratch_operands = 2 : i64, tpu.core_type = #tpu.core_type<tc>, window_params = [{transform_indices = @transform_0, window_bounds = array<i64: 16, 128>}, {transform_indices = @transform_1, window_bounds = array<i64: 16, 128>}, {pipeline_mode = #tpu.pipeline_mode<synchronous>, transform_indices = @transform_2, window_bounds = array<i64: 1, 128>}, {pipeline_mode = #tpu.pipeline_mode<synchronous>, transform_indices = @transform_3, window_bounds = array<i64: 1, 128>}, {transform_indices = @transform_4, window_bounds = array<i64: 128, 512>}, {transform_indices = @transform_5, window_bounds = array<i64: 1, 512>}, {transform_indices = @transform_6, window_bounds = array<i64: 512, 128>}, {pipeline_mode = #tpu.pipeline_mode<synchronous>, transform_indices = @transform_7, window_bounds = array<i64: 1, 128>}, {transform_indices = @transform_8, window_bounds = array<i64: 16, 128>}]} {
    %c0_i32 = arith.constant 0 : i32
    %0 = arith.cmpi eq, %arg1, %c0_i32 : i32
    %1 = arith.extui %0 : i1 to i32
    %c0_i32_0 = arith.constant 0 : i32
    %2 = arith.cmpi ne, %1, %c0_i32_0 : i32
    scf.if %2 {
      %c0_30 = arith.constant 0 : index
      %c0_31 = arith.constant 0 : index
      %58 = vector.load %arg2[%c0_30, %c0_31] : memref<16x128xbf16, #tpu.memory_space<vmem>>, vector<16x128xbf16>
      %59 = arith.extf %58 : vector<16x128xbf16> to vector<16x128xf32>
      %c0_32 = arith.constant 0 : index
      %c0_33 = arith.constant 0 : index
      %60 = vector.load %arg3[%c0_32, %c0_33] : memref<16x128xbf16, #tpu.memory_space<vmem>>, vector<16x128xbf16>
      %61 = arith.extf %60 : vector<16x128xbf16> to vector<16x128xf32>
      %62 = arith.addf %59, %61 : vector<16x128xf32>
      %cst_34 = arith.constant dense<0.000000e+00> : vector<16xf32>
      %63 = vector.multi_reduction <add>, %62, %cst_34 [1] : vector<16x128xf32> to vector<16xf32>
      %64 = vector.shape_cast %63 : vector<16xf32> to vector<16x1xf32>
      %cst_35 = arith.constant 1.280000e+02 : f32
      %65 = vector.broadcast %cst_35 : f32 to vector<16x1xf32>
      %66 = arith.divf %64, %65 : vector<16x1xf32>
      %67 = vector.broadcast %66 : vector<16x1xf32> to vector<16x128xf32>
      %68 = arith.subf %62, %67 : vector<16x128xf32>
      %69 = arith.mulf %68, %68 : vector<16x128xf32>
      %cst_36 = arith.constant dense<0.000000e+00> : vector<16xf32>
      %70 = vector.multi_reduction <add>, %69, %cst_36 [1] : vector<16x128xf32> to vector<16xf32>
      %71 = vector.shape_cast %70 : vector<16xf32> to vector<16x1xf32>
      %cst_37 = arith.constant 1.280000e+02 : f32
      %72 = vector.broadcast %cst_37 : f32 to vector<16x1xf32>
      %73 = arith.divf %71, %72 : vector<16x1xf32>
      %cst_38 = arith.constant 9.99999974E-6 : f32
      %74 = vector.broadcast %cst_38 : f32 to vector<16x1xf32>
      %75 = arith.addf %73, %74 : vector<16x1xf32>
      %76 = math.rsqrt %75 : vector<16x1xf32>
      %77 = vector.broadcast %76 : vector<16x1xf32> to vector<16x128xf32>
      %78 = arith.mulf %68, %77 : vector<16x128xf32>
      %c0_39 = arith.constant 0 : index
      %c0_40 = arith.constant 0 : index
      %79 = vector.load %arg4[%c0_39, %c0_40] : memref<1x128xf32, #tpu.memory_space<vmem>>, vector<1x128xf32>
      %80 = vector.broadcast %79 : vector<1x128xf32> to vector<16x128xf32>
      %81 = arith.mulf %78, %80 : vector<16x128xf32>
      %c0_41 = arith.constant 0 : index
      %c0_42 = arith.constant 0 : index
      %82 = vector.load %arg5[%c0_41, %c0_42] : memref<1x128xf32, #tpu.memory_space<vmem>>, vector<1x128xf32>
      %83 = vector.broadcast %82 : vector<1x128xf32> to vector<16x128xf32>
      %84 = arith.addf %81, %83 : vector<16x128xf32>
      %85 = arith.truncf %84 : vector<16x128xf32> to vector<16x128xbf16>
      %c0_43 = arith.constant 0 : index
      %c0_44 = arith.constant 0 : index
      %86 = vector.load %arg11[%c0_43, %c0_44] : memref<16x128xbf16, #tpu.memory_space<vmem>>, vector<16x128xbf16>
      tpu.vector_store %arg11[%c0_43, %c0_44], %85 {strides = array<i32>} : memref<16x128xbf16, #tpu.memory_space<vmem>>, vector<16x128xbf16>,
      %c0_45 = arith.constant 0 : index
      %c0_46 = arith.constant 0 : index
      %87 = vector.load %arg9[%c0_45, %c0_46] : memref<1x128xf32, #tpu.memory_space<vmem>>, vector<1x128xf32>
      %88 = vector.broadcast %87 : vector<1x128xf32> to vector<16x128xf32>
      %89 = arith.addf %62, %88 : vector<16x128xf32>
      %c0_47 = arith.constant 0 : index
      %c0_48 = arith.constant 0 : index
      %90 = vector.load %arg12[%c0_47, %c0_48] : memref<16x128xf32, #tpu.memory_space<vmem>>, vector<16x128xf32>
      tpu.vector_store %arg12[%c0_47, %c0_48], %89 {strides = array<i32>} : memref<16x128xf32, #tpu.memory_space<vmem>>, vector<16x128xf32>,
    } else {
    }
    %c0 = arith.constant 0 : index
    %c0_1 = arith.constant 0 : index
    %3 = vector.load %arg11[%c0, %c0_1] : memref<16x128xbf16, #tpu.memory_space<vmem>>, vector<16x128xbf16>
    %c0_2 = arith.constant 0 : index
    %c0_3 = arith.constant 0 : index
    %4 = vector.load %arg6[%c0_2, %c0_3] : memref<128x512xbf16, #tpu.memory_space<vmem>>, vector<128x512xbf16>
    %cst = arith.constant dense<0.000000e+00> : vector<16x512xf32>
    %5 = tpu.matmul %3, %4, %cst {dimension_numbers = #tpu.dot_dimension_numbers<[1], [0], [0], [1], [0, 0, 1, 1], [], []>} : vector<16x128xbf16>, vector<128x512xbf16>, vector<16x512xf32> -> vector<16x512xf32>
    %c0_4 = arith.constant 0 : index
    %c0_5 = arith.constant 0 : index
    %6 = vector.load %arg7[%c0_4, %c0_5] : memref<1x512xf32, #tpu.memory_space<vmem>>, vector<1x512xf32>
    %7 = vector.broadcast %6 : vector<1x512xf32> to vector<16x512xf32>
    %8 = arith.addf %5, %7 : vector<16x512xf32>
    %c0_6 = arith.constant 0 : index
    %c0_7 = arith.constant 0 : index
    %9 = vector.load %arg12[%c0_6, %c0_7] : memref<16x128xf32, #tpu.memory_space<vmem>>, vector<16x128xf32>
    %cst_8 = arith.constant 5.000000e-01 : f32
    %10 = vector.broadcast %cst_8 : f32 to vector<16x512xf32>
    %11 = arith.mulf %10, %8 : vector<16x512xf32>
    %cst_9 = arith.constant 0.707106769 : f32
    %12 = vector.broadcast %cst_9 : f32 to vector<16x512xf32>
    %13 = arith.mulf %8, %12 : vector<16x512xf32>
    %14 = math.absf %13 : vector<16x512xf32>
    %cst_10 = arith.constant 0.327591091 : f32
    %15 = vector.broadcast %cst_10 : f32 to vector<16x512xf32>
    %16 = arith.mulf %15, %14 : vector<16x512xf32>
    %cst_11 = arith.constant 1.000000e+00 : f32
    %17 = vector.broadcast %cst_11 : f32 to vector<16x512xf32>
    %18 = arith.addf %17, %16 : vector<16x512xf32>
    %cst_12 = arith.constant 1.000000e+00 : f32
    %19 = vector.broadcast %cst_12 : f32 to vector<16x512xf32>
    %20 = arith.divf %19, %18 : vector<16x512xf32>
    %cst_13 = arith.constant 1.06140542 : f32
    %21 = vector.broadcast %cst_13 : f32 to vector<16x512xf32>
    %22 = arith.mulf %21, %20 : vector<16x512xf32>
    %cst_14 = arith.constant -1.45315206 : f32
    %23 = vector.broadcast %cst_14 : f32 to vector<16x512xf32>
    %24 = arith.addf %22, %23 : vector<16x512xf32>
    %25 = arith.mulf %24, %20 : vector<16x512xf32>
    %cst_15 = arith.constant 1.42141378 : f32
    %26 = vector.broadcast %cst_15 : f32 to vector<16x512xf32>
    %27 = arith.addf %25, %26 : vector<16x512xf32>
    %28 = arith.mulf %27, %20 : vector<16x512xf32>
    %cst_16 = arith.constant -0.284496725 : f32
    %29 = vector.broadcast %cst_16 : f32 to vector<16x512xf32>
    %30 = arith.addf %28, %29 : vector<16x512xf32>
    %31 = arith.mulf %30, %20 : vector<16x512xf32>
    %cst_17 = arith.constant 0.254829586 : f32
    %32 = vector.broadcast %cst_17 : f32 to vector<16x512xf32>
    %33 = arith.addf %31, %32 : vector<16x512xf32>
    %34 = arith.mulf %33, %20 : vector<16x512xf32>
    %cst_18 = arith.constant 0.000000e+00 : f32
    %35 = vector.broadcast %cst_18 : f32 to vector<16x512xf32>
    %36 = arith.subf %35, %14 : vector<16x512xf32>
    %37 = arith.mulf %36, %14 : vector<16x512xf32>
    %38 = math.exp %37 : vector<16x512xf32>
    %39 = arith.mulf %34, %38 : vector<16x512xf32>
    %cst_19 = arith.constant 1.000000e+00 : f32
    %40 = vector.broadcast %cst_19 : f32 to vector<16x512xf32>
    %41 = arith.subf %40, %39 : vector<16x512xf32>
    %cst_20 = arith.constant 0.000000e+00 : f32
    %42 = vector.broadcast %cst_20 : f32 to vector<16x512xf32>
    %43 = arith.cmpf oge, %13, %42 : vector<16x512xf32>
    %cst_21 = arith.constant 0.000000e+00 : f32
    %44 = vector.broadcast %cst_21 : f32 to vector<16x512xf32>
    %45 = arith.subf %44, %41 : vector<16x512xf32>
    %46 = arith.select %43, %41, %45 : vector<16x512xi1>, vector<16x512xf32>
    %cst_22 = arith.constant 1.000000e+00 : f32
    %47 = vector.broadcast %cst_22 : f32 to vector<16x512xf32>
    %48 = arith.addf %47, %46 : vector<16x512xf32>
    %49 = arith.mulf %11, %48 : vector<16x512xf32>
    %50 = arith.truncf %49 : vector<16x512xf32> to vector<16x512xbf16>
    %c0_23 = arith.constant 0 : index
    %c0_24 = arith.constant 0 : index
    %51 = vector.load %arg8[%c0_23, %c0_24] : memref<512x128xbf16, #tpu.memory_space<vmem>>, vector<512x128xbf16>
    %cst_25 = arith.constant dense<0.000000e+00> : vector<16x128xf32>
    %52 = tpu.matmul %50, %51, %cst_25 {dimension_numbers = #tpu.dot_dimension_numbers<[1], [0], [0], [1], [0, 0, 1, 1], [], []>} : vector<16x512xbf16>, vector<512x128xbf16>, vector<16x128xf32> -> vector<16x128xf32>
    %53 = arith.addf %9, %52 : vector<16x128xf32>
    %c0_26 = arith.constant 0 : index
    %c0_27 = arith.constant 0 : index
    %54 = vector.load %arg12[%c0_26, %c0_27] : memref<16x128xf32, #tpu.memory_space<vmem>>, vector<16x128xf32>
    tpu.vector_store %arg12[%c0_26, %c0_27], %53 {strides = array<i32>} : memref<16x128xf32, #tpu.memory_space<vmem>>, vector<16x128xf32>,
    %c0_i32_28 = arith.constant 0 : i32
    %55 = arith.cmpi eq, %arg1, %c0_i32_28 : i32
    %56 = arith.extui %55 : i1 to i32
    %c0_i32_29 = arith.constant 0 : i32
    %57 = arith.cmpi ne, %56, %c0_i32_29 : i32
    scf.if %57 {
      %c0_30 = arith.constant 0 : index
      %c0_31 = arith.constant 0 : index
      %58 = vector.load %arg12[%c0_30, %c0_31] : memref<16x128xf32, #tpu.memory_space<vmem>>, vector<16x128xf32>
      %59 = arith.truncf %58 : vector<16x128xf32> to vector<16x128xbf16>
      %c0_32 = arith.constant 0 : index
      %c0_33 = arith.constant 0 : index
      %60 = vector.load %arg10[%c0_32, %c0_33] : memref<16x128xbf16, #tpu.memory_space<vmem>>, vector<16x128xbf16>
      tpu.vector_store %arg10[%c0_32, %c0_33], %59 {strides = array<i32>} : memref<16x128xbf16, #tpu.memory_space<vmem>>, vector<16x128xbf16>,
    } else {
    }
    return
  }
  func.func @transform_0(%arg0: i32, %arg1: i32) -> (i32, i32) {
    %c0_i32 = arith.constant 0 : i32
    %c0_i32_0 = arith.constant 0 : i32
    return %arg0, %c0_i32 : i32, i32
  }
  func.func @transform_1(%arg0: i32, %arg1: i32) -> (i32, i32) {
    %c0_i32 = arith.constant 0 : i32
    %c0_i32_0 = arith.constant 0 : i32
    return %arg0, %c0_i32 : i32, i32
  }
  func.func @transform_2(%arg0: i32, %arg1: i32) -> (i32, i32) {
    %c0_i32 = arith.constant 0 : i32
    %c0_i32_0 = arith.constant 0 : i32
    %c0_i32_1 = arith.constant 0 : i32
    return %c0_i32, %c0_i32_0 : i32, i32
  }
  func.func @transform_3(%arg0: i32, %arg1: i32) -> (i32, i32) {
    %c0_i32 = arith.constant 0 : i32
    %c0_i32_0 = arith.constant 0 : i32
    %c0_i32_1 = arith.constant 0 : i32
    return %c0_i32, %c0_i32_0 : i32, i32
  }
  func.func @transform_4(%arg0: i32, %arg1: i32) -> (i32, i32) {
    %c0_i32 = arith.constant 0 : i32
    %c0_i32_0 = arith.constant 0 : i32
    return %c0_i32, %arg1 : i32, i32
  }
  func.func @transform_5(%arg0: i32, %arg1: i32) -> (i32, i32) {
    %c0_i32 = arith.constant 0 : i32
    %c0_i32_0 = arith.constant 0 : i32
    return %c0_i32, %arg1 : i32, i32
  }
  func.func @transform_6(%arg0: i32, %arg1: i32) -> (i32, i32) {
    %c0_i32 = arith.constant 0 : i32
    %c0_i32_0 = arith.constant 0 : i32
    return %arg1, %c0_i32 : i32, i32
  }
  func.func @transform_7(%arg0: i32, %arg1: i32) -> (i32, i32) {
    %c0_i32 = arith.constant 0 : i32
    %c0_i32_0 = arith.constant 0 : i32
    %c0_i32_1 = arith.constant 0 : i32
    return %c0_i32, %c0_i32_0 : i32, i32
  }
  func.func @transform_8(%arg0: i32, %arg1: i32) -> (i32, i32) {
    %c0_i32 = arith.constant 0 : i32
    %c0_i32_0 = arith.constant 0 : i32
    return %arg0, %c0_i32 : i32, i32
  }
}

module attributes {stable_mosaic.version = 11 : i64} {
  func.func @_mlp_block_kernel(%arg0: i32, %arg1: i32, %arg2: memref<16x128xbf16, #tpu.memory_space<vmem>>, %arg3: memref<16x128xbf16, #tpu.memory_space<vmem>>, %arg4: memref<1x128xf32, #tpu.memory_space<vmem>>, %arg5: memref<1x128xf32, #tpu.memory_space<vmem>>, %arg6: memref<128x512xbf16, #tpu.memory_space<vmem>>, %arg7: memref<1x512xf32, #tpu.memory_space<vmem>>, %arg8: memref<512x128xbf16, #tpu.memory_space<vmem>>, %arg9: memref<1x128xf32, #tpu.memory_space<vmem>>, %arg10: memref<128x8xf32, #tpu.memory_space<vmem>>, %arg11: memref<1x8xf32, #tpu.memory_space<vmem>>, %arg12: memref<1x8xf32, #tpu.memory_space<vmem>>, %arg13: memref<16x128xbf16, #tpu.memory_space<vmem>>, %arg14: memref<16x1xi32, #tpu.memory_space<vmem>>, %arg15: memref<16x128xbf16, #tpu.memory_space<vmem>>, %arg16: memref<16x128xf32, #tpu.memory_space<vmem>>) attributes {dimension_semantics = [#tpu.dimension_semantics<parallel>, #tpu.dimension_semantics<arbitrary>], iteration_bounds = array<i64: 1, 1>, scalar_prefetch = 0 : i64, scratch_operands = 2 : i64, tpu.core_type = #tpu.core_type<tc>, window_params = [{transform_indices = @transform_0, window_bounds = array<i64: 16, 128>}, {transform_indices = @transform_1, window_bounds = array<i64: 16, 128>}, {pipeline_mode = #tpu.pipeline_mode<synchronous>, transform_indices = @transform_2, window_bounds = array<i64: 1, 128>}, {pipeline_mode = #tpu.pipeline_mode<synchronous>, transform_indices = @transform_3, window_bounds = array<i64: 1, 128>}, {transform_indices = @transform_4, window_bounds = array<i64: 128, 512>}, {transform_indices = @transform_5, window_bounds = array<i64: 1, 512>}, {transform_indices = @transform_6, window_bounds = array<i64: 512, 128>}, {pipeline_mode = #tpu.pipeline_mode<synchronous>, transform_indices = @transform_7, window_bounds = array<i64: 1, 128>}, {pipeline_mode = #tpu.pipeline_mode<synchronous>, transform_indices = @transform_8, window_bounds = array<i64: 128, 8>}, {pipeline_mode = #tpu.pipeline_mode<synchronous>, transform_indices = @transform_9, window_bounds = array<i64: 1, 8>}, {pipeline_mode = #tpu.pipeline_mode<synchronous>, transform_indices = @transform_10, window_bounds = array<i64: 1, 8>}, {transform_indices = @transform_11, window_bounds = array<i64: 16, 128>}, {transform_indices = @transform_12, window_bounds = array<i64: 16, 1>}]} {
    %c0_i32 = arith.constant 0 : i32
    %0 = arith.cmpi eq, %arg1, %c0_i32 : i32
    %1 = arith.extui %0 : i1 to i32
    %c0_i32_0 = arith.constant 0 : i32
    %2 = arith.cmpi ne, %1, %c0_i32_0 : i32
    scf.if %2 {
      %c0_30 = arith.constant 0 : index
      %c0_31 = arith.constant 0 : index
      %58 = vector.load %arg2[%c0_30, %c0_31] : memref<16x128xbf16, #tpu.memory_space<vmem>>, vector<16x128xbf16>
      %59 = arith.extf %58 : vector<16x128xbf16> to vector<16x128xf32>
      %c0_32 = arith.constant 0 : index
      %c0_33 = arith.constant 0 : index
      %60 = vector.load %arg3[%c0_32, %c0_33] : memref<16x128xbf16, #tpu.memory_space<vmem>>, vector<16x128xbf16>
      %61 = arith.extf %60 : vector<16x128xbf16> to vector<16x128xf32>
      %62 = arith.addf %59, %61 : vector<16x128xf32>
      %cst_34 = arith.constant dense<0.000000e+00> : vector<16xf32>
      %63 = vector.multi_reduction <add>, %62, %cst_34 [1] : vector<16x128xf32> to vector<16xf32>
      %64 = vector.shape_cast %63 : vector<16xf32> to vector<16x1xf32>
      %cst_35 = arith.constant 1.280000e+02 : f32
      %65 = vector.broadcast %cst_35 : f32 to vector<16x1xf32>
      %66 = arith.divf %64, %65 : vector<16x1xf32>
      %67 = vector.broadcast %66 : vector<16x1xf32> to vector<16x128xf32>
      %68 = arith.subf %62, %67 : vector<16x128xf32>
      %69 = arith.mulf %68, %68 : vector<16x128xf32>
      %cst_36 = arith.constant dense<0.000000e+00> : vector<16xf32>
      %70 = vector.multi_reduction <add>, %69, %cst_36 [1] : vector<16x128xf32> to vector<16xf32>
      %71 = vector.shape_cast %70 : vector<16xf32> to vector<16x1xf32>
      %cst_37 = arith.constant 1.280000e+02 : f32
      %72 = vector.broadcast %cst_37 : f32 to vector<16x1xf32>
      %73 = arith.divf %71, %72 : vector<16x1xf32>
      %cst_38 = arith.constant 9.99999974E-6 : f32
      %74 = vector.broadcast %cst_38 : f32 to vector<16x1xf32>
      %75 = arith.addf %73, %74 : vector<16x1xf32>
      %76 = math.rsqrt %75 : vector<16x1xf32>
      %77 = vector.broadcast %76 : vector<16x1xf32> to vector<16x128xf32>
      %78 = arith.mulf %68, %77 : vector<16x128xf32>
      %c0_39 = arith.constant 0 : index
      %c0_40 = arith.constant 0 : index
      %79 = vector.load %arg4[%c0_39, %c0_40] : memref<1x128xf32, #tpu.memory_space<vmem>>, vector<1x128xf32>
      %80 = vector.broadcast %79 : vector<1x128xf32> to vector<16x128xf32>
      %81 = arith.mulf %78, %80 : vector<16x128xf32>
      %c0_41 = arith.constant 0 : index
      %c0_42 = arith.constant 0 : index
      %82 = vector.load %arg5[%c0_41, %c0_42] : memref<1x128xf32, #tpu.memory_space<vmem>>, vector<1x128xf32>
      %83 = vector.broadcast %82 : vector<1x128xf32> to vector<16x128xf32>
      %84 = arith.addf %81, %83 : vector<16x128xf32>
      %85 = arith.truncf %84 : vector<16x128xf32> to vector<16x128xbf16>
      %c0_43 = arith.constant 0 : index
      %c0_44 = arith.constant 0 : index
      %86 = vector.load %arg15[%c0_43, %c0_44] : memref<16x128xbf16, #tpu.memory_space<vmem>>, vector<16x128xbf16>
      tpu.vector_store %arg15[%c0_43, %c0_44], %85 {strides = array<i32>} : memref<16x128xbf16, #tpu.memory_space<vmem>>, vector<16x128xbf16>,
      %c0_45 = arith.constant 0 : index
      %c0_46 = arith.constant 0 : index
      %87 = vector.load %arg9[%c0_45, %c0_46] : memref<1x128xf32, #tpu.memory_space<vmem>>, vector<1x128xf32>
      %88 = vector.broadcast %87 : vector<1x128xf32> to vector<16x128xf32>
      %89 = arith.addf %62, %88 : vector<16x128xf32>
      %c0_47 = arith.constant 0 : index
      %c0_48 = arith.constant 0 : index
      %90 = vector.load %arg16[%c0_47, %c0_48] : memref<16x128xf32, #tpu.memory_space<vmem>>, vector<16x128xf32>
      tpu.vector_store %arg16[%c0_47, %c0_48], %89 {strides = array<i32>} : memref<16x128xf32, #tpu.memory_space<vmem>>, vector<16x128xf32>,
    } else {
    }
    %c0 = arith.constant 0 : index
    %c0_1 = arith.constant 0 : index
    %3 = vector.load %arg15[%c0, %c0_1] : memref<16x128xbf16, #tpu.memory_space<vmem>>, vector<16x128xbf16>
    %c0_2 = arith.constant 0 : index
    %c0_3 = arith.constant 0 : index
    %4 = vector.load %arg6[%c0_2, %c0_3] : memref<128x512xbf16, #tpu.memory_space<vmem>>, vector<128x512xbf16>
    %cst = arith.constant dense<0.000000e+00> : vector<16x512xf32>
    %5 = tpu.matmul %3, %4, %cst {dimension_numbers = #tpu.dot_dimension_numbers<[1], [0], [0], [1], [0, 0, 1, 1], [], []>} : vector<16x128xbf16>, vector<128x512xbf16>, vector<16x512xf32> -> vector<16x512xf32>
    %c0_4 = arith.constant 0 : index
    %c0_5 = arith.constant 0 : index
    %6 = vector.load %arg7[%c0_4, %c0_5] : memref<1x512xf32, #tpu.memory_space<vmem>>, vector<1x512xf32>
    %7 = vector.broadcast %6 : vector<1x512xf32> to vector<16x512xf32>
    %8 = arith.addf %5, %7 : vector<16x512xf32>
    %c0_6 = arith.constant 0 : index
    %c0_7 = arith.constant 0 : index
    %9 = vector.load %arg16[%c0_6, %c0_7] : memref<16x128xf32, #tpu.memory_space<vmem>>, vector<16x128xf32>
    %cst_8 = arith.constant 5.000000e-01 : f32
    %10 = vector.broadcast %cst_8 : f32 to vector<16x512xf32>
    %11 = arith.mulf %10, %8 : vector<16x512xf32>
    %cst_9 = arith.constant 0.707106769 : f32
    %12 = vector.broadcast %cst_9 : f32 to vector<16x512xf32>
    %13 = arith.mulf %8, %12 : vector<16x512xf32>
    %14 = math.absf %13 : vector<16x512xf32>
    %cst_10 = arith.constant 0.327591091 : f32
    %15 = vector.broadcast %cst_10 : f32 to vector<16x512xf32>
    %16 = arith.mulf %15, %14 : vector<16x512xf32>
    %cst_11 = arith.constant 1.000000e+00 : f32
    %17 = vector.broadcast %cst_11 : f32 to vector<16x512xf32>
    %18 = arith.addf %17, %16 : vector<16x512xf32>
    %cst_12 = arith.constant 1.000000e+00 : f32
    %19 = vector.broadcast %cst_12 : f32 to vector<16x512xf32>
    %20 = arith.divf %19, %18 : vector<16x512xf32>
    %cst_13 = arith.constant 1.06140542 : f32
    %21 = vector.broadcast %cst_13 : f32 to vector<16x512xf32>
    %22 = arith.mulf %21, %20 : vector<16x512xf32>
    %cst_14 = arith.constant -1.45315206 : f32
    %23 = vector.broadcast %cst_14 : f32 to vector<16x512xf32>
    %24 = arith.addf %22, %23 : vector<16x512xf32>
    %25 = arith.mulf %24, %20 : vector<16x512xf32>
    %cst_15 = arith.constant 1.42141378 : f32
    %26 = vector.broadcast %cst_15 : f32 to vector<16x512xf32>
    %27 = arith.addf %25, %26 : vector<16x512xf32>
    %28 = arith.mulf %27, %20 : vector<16x512xf32>
    %cst_16 = arith.constant -0.284496725 : f32
    %29 = vector.broadcast %cst_16 : f32 to vector<16x512xf32>
    %30 = arith.addf %28, %29 : vector<16x512xf32>
    %31 = arith.mulf %30, %20 : vector<16x512xf32>
    %cst_17 = arith.constant 0.254829586 : f32
    %32 = vector.broadcast %cst_17 : f32 to vector<16x512xf32>
    %33 = arith.addf %31, %32 : vector<16x512xf32>
    %34 = arith.mulf %33, %20 : vector<16x512xf32>
    %cst_18 = arith.constant 0.000000e+00 : f32
    %35 = vector.broadcast %cst_18 : f32 to vector<16x512xf32>
    %36 = arith.subf %35, %14 : vector<16x512xf32>
    %37 = arith.mulf %36, %14 : vector<16x512xf32>
    %38 = math.exp %37 : vector<16x512xf32>
    %39 = arith.mulf %34, %38 : vector<16x512xf32>
    %cst_19 = arith.constant 1.000000e+00 : f32
    %40 = vector.broadcast %cst_19 : f32 to vector<16x512xf32>
    %41 = arith.subf %40, %39 : vector<16x512xf32>
    %cst_20 = arith.constant 0.000000e+00 : f32
    %42 = vector.broadcast %cst_20 : f32 to vector<16x512xf32>
    %43 = arith.cmpf oge, %13, %42 : vector<16x512xf32>
    %cst_21 = arith.constant 0.000000e+00 : f32
    %44 = vector.broadcast %cst_21 : f32 to vector<16x512xf32>
    %45 = arith.subf %44, %41 : vector<16x512xf32>
    %46 = arith.select %43, %41, %45 : vector<16x512xi1>, vector<16x512xf32>
    %cst_22 = arith.constant 1.000000e+00 : f32
    %47 = vector.broadcast %cst_22 : f32 to vector<16x512xf32>
    %48 = arith.addf %47, %46 : vector<16x512xf32>
    %49 = arith.mulf %11, %48 : vector<16x512xf32>
    %50 = arith.truncf %49 : vector<16x512xf32> to vector<16x512xbf16>
    %c0_23 = arith.constant 0 : index
    %c0_24 = arith.constant 0 : index
    %51 = vector.load %arg8[%c0_23, %c0_24] : memref<512x128xbf16, #tpu.memory_space<vmem>>, vector<512x128xbf16>
    %cst_25 = arith.constant dense<0.000000e+00> : vector<16x128xf32>
    %52 = tpu.matmul %50, %51, %cst_25 {dimension_numbers = #tpu.dot_dimension_numbers<[1], [0], [0], [1], [0, 0, 1, 1], [], []>} : vector<16x512xbf16>, vector<512x128xbf16>, vector<16x128xf32> -> vector<16x128xf32>
    %53 = arith.addf %9, %52 : vector<16x128xf32>
    %c0_26 = arith.constant 0 : index
    %c0_27 = arith.constant 0 : index
    %54 = vector.load %arg16[%c0_26, %c0_27] : memref<16x128xf32, #tpu.memory_space<vmem>>, vector<16x128xf32>
    tpu.vector_store %arg16[%c0_26, %c0_27], %53 {strides = array<i32>} : memref<16x128xf32, #tpu.memory_space<vmem>>, vector<16x128xf32>,
    %c0_i32_28 = arith.constant 0 : i32
    %55 = arith.cmpi eq, %arg1, %c0_i32_28 : i32
    %56 = arith.extui %55 : i1 to i32
    %c0_i32_29 = arith.constant 0 : i32
    %57 = arith.cmpi ne, %56, %c0_i32_29 : i32
    scf.if %57 {
      %c0_30 = arith.constant 0 : index
      %c0_31 = arith.constant 0 : index
      %58 = vector.load %arg16[%c0_30, %c0_31] : memref<16x128xf32, #tpu.memory_space<vmem>>, vector<16x128xf32>
      %59 = arith.truncf %58 : vector<16x128xf32> to vector<16x128xbf16>
      %c0_32 = arith.constant 0 : index
      %c0_33 = arith.constant 0 : index
      %60 = vector.load %arg13[%c0_32, %c0_33] : memref<16x128xbf16, #tpu.memory_space<vmem>>, vector<16x128xbf16>
      tpu.vector_store %arg13[%c0_32, %c0_33], %59 {strides = array<i32>} : memref<16x128xbf16, #tpu.memory_space<vmem>>, vector<16x128xbf16>,
      %c0_34 = arith.constant 0 : index
      %c0_35 = arith.constant 0 : index
      %61 = vector.load %arg10[%c0_34, %c0_35] : memref<128x8xf32, #tpu.memory_space<vmem>>, vector<128x8xf32>
      %cst_36 = arith.constant dense<0.000000e+00> : vector<16x8xf32>
      %62 = tpu.matmul %58, %61, %cst_36 {dimension_numbers = #tpu.dot_dimension_numbers<[1], [0], [0], [1], [0, 0, 1, 1], [], []>} : vector<16x128xf32>, vector<128x8xf32>, vector<16x8xf32> -> vector<16x8xf32>
      %c0_37 = arith.constant 0 : index
      %c0_38 = arith.constant 0 : index
      %63 = vector.load %arg11[%c0_37, %c0_38] : memref<1x8xf32, #tpu.memory_space<vmem>>, vector<1x8xf32>
      %64 = vector.broadcast %63 : vector<1x8xf32> to vector<16x8xf32>
      %65 = arith.addf %62, %64 : vector<16x8xf32>
      %66 = math.tanh %65 : vector<16x8xf32>
      %cst_39 = arith.constant 9.990000e-01 : f32
      %67 = vector.broadcast %cst_39 : f32 to vector<16x8xf32>
      %68 = arith.mulf %66, %67 : vector<16x8xf32>
      %69 = math.roundeven %68 : vector<16x8xf32>
      %cst_40 = arith.constant 1.000000e+00 : f32
      %70 = vector.broadcast %cst_40 : f32 to vector<16x8xf32>
      %71 = arith.addf %69, %70 : vector<16x8xf32>
      %c0_41 = arith.constant 0 : index
      %c0_42 = arith.constant 0 : index
      %72 = vector.load %arg12[%c0_41, %c0_42] : memref<1x8xf32, #tpu.memory_space<vmem>>, vector<1x8xf32>
      %73 = vector.broadcast %72 : vector<1x8xf32> to vector<16x8xf32>
      %74 = arith.mulf %71, %73 : vector<16x8xf32>
      %cst_43 = arith.constant dense<0.000000e+00> : vector<16xf32>
      %75 = vector.multi_reduction <add>, %74, %cst_43 [1] : vector<16x8xf32> to vector<16xf32>
      %76 = vector.shape_cast %75 : vector<16xf32> to vector<16x1xf32>
      %77 = arith.fptosi %76 : vector<16x1xf32> to vector<16x1xi32>
      %c0_44 = arith.constant 0 : index
      %c0_45 = arith.constant 0 : index
      %78 = vector.load %arg14[%c0_44, %c0_45] : memref<16x1xi32, #tpu.memory_space<vmem>>, vector<16x1xi32>
      tpu.vector_store %arg14[%c0_44, %c0_45], %77 {strides = array<i32>} : memref<16x1xi32, #tpu.memory_space<vmem>>, vector<16x1xi32>,
    } else {
    }
    return
  }
  func.func @transform_0(%arg0: i32, %arg1: i32) -> (i32, i32) {
    %c0_i32 = arith.constant 0 : i32
    %c0_i32_0 = arith.constant 0 : i32
    return %arg0, %c0_i32 : i32, i32
  }
  func.func @transform_1(%arg0: i32, %arg1: i32) -> (i32, i32) {
    %c0_i32 = arith.constant 0 : i32
    %c0_i32_0 = arith.constant 0 : i32
    return %arg0, %c0_i32 : i32, i32
  }
  func.func @transform_2(%arg0: i32, %arg1: i32) -> (i32, i32) {
    %c0_i32 = arith.constant 0 : i32
    %c0_i32_0 = arith.constant 0 : i32
    %c0_i32_1 = arith.constant 0 : i32
    return %c0_i32, %c0_i32_0 : i32, i32
  }
  func.func @transform_3(%arg0: i32, %arg1: i32) -> (i32, i32) {
    %c0_i32 = arith.constant 0 : i32
    %c0_i32_0 = arith.constant 0 : i32
    %c0_i32_1 = arith.constant 0 : i32
    return %c0_i32, %c0_i32_0 : i32, i32
  }
  func.func @transform_4(%arg0: i32, %arg1: i32) -> (i32, i32) {
    %c0_i32 = arith.constant 0 : i32
    %c0_i32_0 = arith.constant 0 : i32
    return %c0_i32, %arg1 : i32, i32
  }
  func.func @transform_5(%arg0: i32, %arg1: i32) -> (i32, i32) {
    %c0_i32 = arith.constant 0 : i32
    %c0_i32_0 = arith.constant 0 : i32
    return %c0_i32, %arg1 : i32, i32
  }
  func.func @transform_6(%arg0: i32, %arg1: i32) -> (i32, i32) {
    %c0_i32 = arith.constant 0 : i32
    %c0_i32_0 = arith.constant 0 : i32
    return %arg1, %c0_i32 : i32, i32
  }
  func.func @transform_7(%arg0: i32, %arg1: i32) -> (i32, i32) {
    %c0_i32 = arith.constant 0 : i32
    %c0_i32_0 = arith.constant 0 : i32
    %c0_i32_1 = arith.constant 0 : i32
    return %c0_i32, %c0_i32_0 : i32, i32
  }
  func.func @transform_8(%arg0: i32, %arg1: i32) -> (i32, i32) {
    %c0_i32 = arith.constant 0 : i32
    %c0_i32_0 = arith.constant 0 : i32
    %c0_i32_1 = arith.constant 0 : i32
    return %c0_i32, %c0_i32_0 : i32, i32
  }
  func.func @transform_9(%arg0: i32, %arg1: i32) -> (i32, i32) {
    %c0_i32 = arith.constant 0 : i32
    %c0_i32_0 = arith.constant 0 : i32
    %c0_i32_1 = arith.constant 0 : i32
    return %c0_i32, %c0_i32_0 : i32, i32
  }
  func.func @transform_10(%arg0: i32, %arg1: i32) -> (i32, i32) {
    %c0_i32 = arith.constant 0 : i32
    %c0_i32_0 = arith.constant 0 : i32
    %c0_i32_1 = arith.constant 0 : i32
    return %c0_i32, %c0_i32_0 : i32, i32
  }
  func.func @transform_11(%arg0: i32, %arg1: i32) -> (i32, i32) {
    %c0_i32 = arith.constant 0 : i32
    %c0_i32_0 = arith.constant 0 : i32
    return %arg0, %c0_i32 : i32, i32
  }
  func.func @transform_12(%arg0: i32, %arg1: i32) -> (i32, i32) {
    %c0_i32 = arith.constant 0 : i32
    %c0_i32_0 = arith.constant 0 : i32
    return %arg0, %c0_i32 : i32, i32
  }
}

</mosaic_0001>

<llo_original>
// kernel: s3_tokenizer_v2_forward.6
$region0: #{s3_tokenizer_v2_forward.6}
  #allocation0 [shape = 'u32[]', space=smem, size = 0x4, offset = 0x4, fixed_abs, tag = 'smem constant byte address 0x4 - core index']
  #allocation1 [shape = 'u32[144,128]{1,0:T(1,128)}', space=vmem, size = 0x12000, scoped, tag = 'internal scratch']
  %s0 = inlined_call_operand.vmem [shape: f32[2,17,16], index: 0, kind: input, shape index: {}]
  %s1 = inlined_call_operand.vmem [shape: f32[2,16,16], index: 1, kind: input, shape index: {}]
  %s2 = inlined_call_operand.vmem [shape: bf16[3,16,128], index: 2, kind: input, shape index: {}]
  %s3 = inlined_call_operand.vmem [shape: f32[1,128], index: 3, kind: input, shape index: {}]
  %s4 = inlined_call_operand.vmem [shape: bf16[2,16,128], index: 4, kind: output, shape index: {}]
  %s5 = sld [smem:[#allocation0]]
  $region49: #{s3_tokenizer_v2_forward.6} parent=0
    _
  %s7 = ssub.s32 1, %s5
  %s8 = scalar_select 0, %s7, %s5
  loop: start=0, step=1, limit=4
  $region2: #{s3_tokenizer_v2_forward.6} parent=0 // loop_pre_header
    _
  $region3: #{s3_tokenizer_v2_forward.6} parent=0 // loop_header
    %s10 = sphi 0, %s14
    %p11 = scmp.ge.s32.totalorder %s10, 4
    %s17 = sphi 0, %s29
    %s18 = sphi 0, %s25
    %s19 = sphi 0, %s17
    %s20 = sphi 0, %s18
    %s21 = sphi 0, %s19
    %s22 = sphi 0, %s20
    %s32 = sphi 0, %s34
    %s35 = sphi 0, %s32
    %s36 = sphi 0, %s35
    %s52 = sphi 0, %s36
    %s58 = sphi 0, %s60
    %s61 = sphi 0, %s58
    %s62 = sphi 0, %s61
    %s78 = sphi 0, %s62
    %s84 = sphi 0, %s86
    %s87 = sphi 0, %s84
    %s88 = sphi 0, %s87
    %s104 = sphi 0, %s88
    %s110 = sphi 0, %s112
    %s113 = sphi 0, %s110
    %s114 = sphi 0, %s113
    %s130 = sphi 0, %s114
    %s138 = sphi 0, %s140
    %s141 = sphi 0, %s138
    %s142 = sphi 0, %s141
    %s158 = sphi 0, %s142
  $region4: #{s3_tokenizer_v2_forward.6} parent=0 // loop_header_branch
    %13 = sbr.rel (%p11) target = $region8
  $region5: #{s3_tokenizer_v2_forward.6} parent=0 // loop_body
    %s15 = ssub.s32 %s10, 1
    %s16 = ssub.s32 %s10, 2
    %s23 = sadd.s32 1, %s18
    %p24 = scmp.ge.s32.totalorder %s23, 1
    %s25 = scalar_select %p24, 0, %s23
    %s26 = sadd.s32 1, %s17
    %s27 = scalar_select %p24, %s26, %s17
    %p28 = scmp.ge.s32.totalorder %s27, 2
    %s29 = scalar_select %p28, 0, %s27
    %s30 = ssub.s32 %s17, %s29
    %p31 = scmp.eq.s32.totalorder %s30, 0
    %s33 = sadd.s32 %s32, 1
    %s34 = scalar_select %p31, %s32, %s33
    %p37 = pneg %p31
    %p38 = scmp.eq.s32.totalorder %s10, 1
    %p39 = por %p37, %p38
    %p40 = scmp.ne.s32.totalorder %s32, %s35
    %p41 = scmp.eq.s32.totalorder %s10, 0
    %p42 = por %p40, %p41
    %p43 = scmp.ne.s32.totalorder %s32, %s35
    %p44 = scmp.eq.s32.totalorder %s15, 1
    %p45 = por %p43, %p44
    %p46 = scmp.ne.s32.totalorder %s35, %s36
    %p47 = scmp.eq.s32.totalorder %s15, 0
    %p48 = por %p46, %p47
    %p49 = scmp.ne.s32.totalorder %s35, %s36
    %p50 = scmp.eq.s32.totalorder %s16, 1
    %p51 = por %p49, %p50
    %p53 = scmp.ne.s32.totalorder %s36, %s52
    %p54 = scmp.eq.s32.totalorder %s16, 0
    %p55 = por %p53, %p54
    %s56 = ssub.s32 %s17, %s29
    %p57 = scmp.eq.s32.totalorder %s56, 0
    %s59 = sadd.s32 %s58, 1
    %s60 = scalar_select %p57, %s58, %s59
    %p63 = pneg %p57
    %p64 = scmp.eq.s32.totalorder %s10, 1
    %p65 = por %p63, %p64
    %p66 = scmp.ne.s32.totalorder %s58, %s61
    %p67 = scmp.eq.s32.totalorder %s10, 0
    %p68 = por %p66, %p67
    %p69 = scmp.ne.s32.totalorder %s58, %s61
    %p70 = scmp.eq.s32.totalorder %s15, 1
    %p71 = por %p69, %p70
    %p72 = scmp.ne.s32.totalorder %s61, %s62
    %p73 = scmp.eq.s32.totalorder %s15, 0
    %p74 = por %p72, %p73
    %p75 = scmp.ne.s32.totalorder %s61, %s62
    %p76 = scmp.eq.s32.totalorder %s16, 1
    %p77 = por %p75, %p76
    %p79 = scmp.ne.s32.totalorder %s62, %s78
    %p80 = scmp.eq.s32.totalorder %s16, 0
    %p81 = por %p79, %p80
    %s82 = ssub.s32 %s18, %s25
    %p83 = scmp.eq.s32.totalorder %s82, 0
    %s85 = sadd.s32 %s84, 1
    %s86 = scalar_select %p83, %s84, %s85
    %p89 = pneg %p83
    %p90 = scmp.eq.s32.totalorder %s10, 1
    %p91 = por %p89, %p90
    %p92 = scmp.ne.s32.totalorder %s84, %s87
    %p93 = scmp.eq.s32.totalorder %s10, 0
    %p94 = por %p92, %p93
    %p95 = scmp.ne.s32.totalorder %s84, %s87
    %p96 = scmp.eq.s32.totalorder %s15, 1
    %p97 = por %p95, %p96
    %p98 = scmp.ne.s32.totalorder %s87, %s88
    %p99 = scmp.eq.s32.totalorder %s15, 0
    %p100 = por %p98, %p99
    %p101 = scmp.ne.s32.totalorder %s87, %s88
    %p102 = scmp.eq.s32.totalorder %s16, 1
    %p103 = por %p101, %p102
    %p105 = scmp.ne.s32.totalorder %s88, %s104
    %p106 = scmp.eq.s32.totalorder %s16, 0
    %p107 = por %p105, %p106
    %s108 = ssub.s32 %s18, %s25
    %p109 = scmp.eq.s32.totalorder %s108, 0
    %s111 = sadd.s32 %s110, 1
    %s112 = scalar_select %p109, %s110, %s111
    %p115 = pneg %p109
    %p116 = scmp.eq.s32.totalorder %s10, 1
    %p117 = por %p115, %p116
    %p118 = scmp.ne.s32.totalorder %s110, %s113
    %p119 = scmp.eq.s32.totalorder %s10, 0
    %p120 = por %p118, %p119
    %p121 = scmp.ne.s32.totalorder %s110, %s113
    %p122 = scmp.eq.s32.totalorder %s15, 1
    %p123 = por %p121, %p122
    %p124 = scmp.ne.s32.totalorder %s113, %s114
    %p125 = scmp.eq.s32.totalorder %s15, 0
    %p126 = por %p124, %p125
    %p127 = scmp.ne.s32.totalorder %s113, %s114
    %p128 = scmp.eq.s32.totalorder %s16, 1
    %p129 = por %p127, %p128
    %p131 = scmp.ne.s32.totalorder %s114, %s130
    %p132 = scmp.eq.s32.totalorder %s16, 0
    %p133 = por %p131, %p132
    %s134 = ssub.s32 %s17, %s29
    %s135 = ssub.s32 %s18, %s25
    %s136 = sor.u32 %s134, %s135
    %p137 = scmp.eq.s32.totalorder %s136, 0
    %s139 = sadd.s32 %s138, 1
    %s140 = scalar_select %p137, %s138, %s139
    %p143 = pneg %p137
    %p144 = scmp.eq.s32.totalorder %s10, 1
    %p145 = por %p143, %p144
    %p146 = scmp.ne.s32.totalorder %s138, %s141
    %p147 = scmp.eq.s32.totalorder %s10, 0
    %p148 = por %p146, %p147
    %p149 = scmp.ne.s32.totalorder %s138, %s141
    %p150 = scmp.eq.s32.totalorder %s15, 1
    %p151 = por %p149, %p150
    %p152 = scmp.ne.s32.totalorder %s141, %s142
    %p153 = scmp.eq.s32.totalorder %s15, 0
    %p154 = por %p152, %p153
    %p155 = scmp.ne.s32.totalorder %s141, %s142
    %p156 = scmp.eq.s32.totalorder %s16, 1
    %p157 = por %p155, %p156
    %p159 = scmp.ne.s32.totalorder %s142, %s158
    %p160 = scmp.eq.s32.totalorder %s16, 0
    %p161 = por %p159, %p160
    %p162 = scmp.le.s32.totalorder 1, %s10
    %p163 = scmp.lt.s32.totalorder %s10, 3
    %p164 = pnand %p162, %p163
    %p165 = pneg %p164
    // Predicated region
    $region9: #{s3_tokenizer_v2_forward.6} parent=5 // pred_check
      _
    $region10: #{s3_tokenizer_v2_forward.6} parent=5 // pred_check_branch
      %167 = sbr.rel (%p164) target = $region12
    $region11: #{s3_tokenizer_v2_forward.6} parent=5 // pred_region
      %s168 = ssub.s32 %s10, 1
      // Predicated region
      $region13: #{s3_tokenizer_v2_forward.6} parent=11 // pred_check
        %p169 = pneg %p100
      $region14: #{s3_tokenizer_v2_forward.6} parent=11 // pred_check_branch
        %171 = sbr.rel (%p169) target = $region16
      $region15: #{s3_tokenizer_v2_forward.6} parent=11 // pred_region
        %p172 = scmp.lt.s32.totalorder %s20, 0
        %s173 = scalar_select %p172, %s20, 0
        %s174 = smul.addr %s173, 4
        %s175 = scalar_lea.vmem %s2, %s174
      $region16: #{s3_tokenizer_v2_forward.6} parent=11 // pred_fallthru
        _
      // Predicated region
      $region17: #{s3_tokenizer_v2_forward.6} parent=11 // pred_check
        %p176 = pneg %p126
      $region18: #{s3_tokenizer_v2_forward.6} parent=11 // pred_check_branch
        %178 = sbr.rel (%p176) target = $region20
      $region19: #{s3_tokenizer_v2_forward.6} parent=11 // pred_region
        %p179 = scmp.lt.s32.totalorder %s20, 0
        %s180 = scalar_select %p179, %s20, 0
        %s181 = scalar_lea.vmem %s3, %s180
      $region20: #{s3_tokenizer_v2_forward.6} parent=11 // pred_fallthru
        _
    $region12: #{s3_tokenizer_v2_forward.6} parent=5 // pred_fallthru
      _
    %p182 = scmp.lt.s32.totalorder %s10, 2
    // Predicated region
    $region21: #{s3_tokenizer_v2_forward.6} parent=5 // pred_check
      %p183 = pneg %p182
    $region22: #{s3_tokenizer_v2_forward.6} parent=5 // pred_check_branch
      %185 = sbr.rel (%p183) target = $region24
    $region23: #{s3_tokenizer_v2_forward.6} parent=5 // pred_region
      // Predicated region
      $region25: #{s3_tokenizer_v2_forward.6} parent=23 // pred_check
        %p186 = pneg %p42
      $region26: #{s3_tokenizer_v2_forward.6} parent=23 // pred_check_branch
        %188 = sbr.rel (%p186) target = $region28
      $region27: #{s3_tokenizer_v2_forward.6} parent=23 // pred_region
        %p189 = scmp.lt.s32.totalorder %s17, 1
        %s190 = scalar_select %p189, %s17, 1
        %s191 = smul.addr %s190, 3
        %s192 = smul.addr %s191, 8
        %s193 = scalar_lea.vmem %s0, %s192
      $region28: #{s3_tokenizer_v2_forward.6} parent=23 // pred_fallthru
        _
      // Predicated region
      $region29: #{s3_tokenizer_v2_forward.6} parent=23 // pred_check
        %p194 = pneg %p68
      $region30: #{s3_tokenizer_v2_forward.6} parent=23 // pred_check_branch
        %196 = sbr.rel (%p194) target = $region32
      $region31: #{s3_tokenizer_v2_forward.6} parent=23 // pred_region
        %p197 = scmp.lt.s32.totalorder %s17, 1
        %s198 = scalar_select %p197, %s17, 1
        %s199 = smul.addr %s198, 2
        %s200 = smul.addr %s199, 8
        %s201 = scalar_lea.vmem %s1, %s200
      $region32: #{s3_tokenizer_v2_forward.6} parent=23 // pred_fallthru
        _
    $region24: #{s3_tokenizer_v2_forward.6} parent=5 // pred_fallthru
      _
    %p202 = scmp.le.s32.totalorder 1, %s10
    %p203 = scmp.lt.s32.totalorder %s10, 3
    %p204 = pnand %p202, %p203
    %p205 = pneg %p204
    // Predicated region
    $region33: #{s3_tokenizer_v2_forward.6} parent=5 // pred_check
      _
    $region34: #{s3_tokenizer_v2_forward.6} parent=5 // pred_check_branch
      %207 = sbr.rel (%p204) target = $region36
    $region35: #{s3_tokenizer_v2_forward.6} parent=5 // pred_region
      %s208 = ssub.s32 %s10, 1
      %p209 = scmp.lt.s32.totalorder %s19, 1
      %s210 = scalar_select %p209, %s19, 1
      %s211 = smul.addr %s210, 3
      %s212 = smul.addr %s211, 8
      %s213 = scalar_lea.vmem %s0, %s212
      %p214 = pneg %p48
      %p215 = pneg %p45
      %p216 = scmp.lt.s32.totalorder %s19, 1
      %s217 = scalar_select %p216, %s19, 1
      %s218 = smul.addr %s217, 2
      %s219 = smul.addr %s218, 8
      %s220 = scalar_lea.vmem %s1, %s219
      %p221 = pneg %p74
      %p222 = pneg %p71
      %p223 = scmp.lt.s32.totalorder %s20, 0
      %s224 = scalar_select %p223, %s20, 0
      %s225 = smul.addr %s224, 4
      %s226 = scalar_lea.vmem %s2, %s225
      %p227 = pneg %p100
      %p228 = pneg %p97
      %p229 = scmp.lt.s32.totalorder %s20, 0
      %s230 = scalar_select %p229, %s20, 0
      %s231 = scalar_lea.vmem %s3, %s230
      %p232 = pneg %p126
      %p233 = pneg %p123
      %p234 = pneg %p154
      %p235 = pneg %p151
      %p236 = scmp.lt.s32.totalorder %s19, 1
      %s237 = scalar_select %p236, %s19, 1
      %p238 = scmp.lt.s32.totalorder %s20, 0
      %s239 = scalar_select %p238, %s20, 0
      %s240 = smul.addr %s237, 2
      %s241 = sadd.s32 %s239, %s240
      %s242 = smul.addr %s241, 4
      %s243 = scalar_lea.vmem %s4, %s242
      %p244 = scmp.lt.s32.totalorder %s19, 1
      %s245 = scalar_select %p244, %s19, 1
      %s246 = smul.addr %s245, 3
      %s247 = smul.addr %s246, 8
      %s248 = scalar_lea.vmem %s0, %s247
      %p249 = scmp.lt.s32.totalorder %s19, 1
      %s250 = scalar_select %p249, %s19, 1
      %s251 = smul.addr %s250, 2
      %s252 = smul.addr %s251, 8
      %s253 = scalar_lea.vmem %s1, %s252
      %p254 = scmp.lt.s32.totalorder %s20, 0
      %s255 = scalar_select %p254, %s20, 0
      %s256 = smul.addr %s255, 4
      %s257 = scalar_lea.vmem %s2, %s256
      %p258 = scmp.lt.s32.totalorder %s20, 0
      %s259 = scalar_select %p258, %s20, 0
      %s260 = scalar_lea.vmem %s3, %s259
      %p261 = scmp.lt.s32.totalorder %s19, 1
      %s262 = scalar_select %p261, %s19, 1
      %p263 = scmp.lt.s32.totalorder %s20, 0
      %s264 = scalar_select %p263, %s20, 0
      %s265 = smul.addr %s262, 2
      %s266 = sadd.s32 %s264, %s265
      %s267 = smul.addr %s266, 4
      %s268 = scalar_lea.vmem %s4, %s267
      %v270 = vld [vmem:[%s248] sm:$0xff]
      %v271 = vld [vmem:[%s248 + $0x8] sm:$0xff]
      %v272 = vld [vmem:[%s248 + $0x10] sm:$0x1]
      %v273 = vld [vmem:[%s253] sm:$0xff]
      %v274 = vld [vmem:[%s253 + $0x8] sm:$0xff]
      %v275 = vpack.c.bf16 %v271, %v270
      %v276 = vld [vmem:[%s257] sm:$0xf]
      %v277 = vld [vmem:[%s257 + $0x4] sm:$0xf]
      %v278 = vpack.c.bf16 %v274, %v273
      %s279 = scalar_lea.vmem %s257, 8
      %v280 = vld [vmem:[%s279] sm:$0xf]
      %v281 = vld [vmem:[%s279 + $0x4] sm:$0xf]
      %v284 = vunpack.c.l.b16 %v280
      %v285 = vunpack.c.l.b16 %v281
      %v286 = vpack.c.b16 %v285, %v284
      %vm288 = vcmask 130048
      %v290 = vsel %vm288, %v278, 0
      %292 = vmatprep.subr.bf16.mxu0 0
      %293 = vmatpush1.bf16.msra.mxu0 0
      %294 = vmatprep.subr.bf16.mxu0 0
      %295 = vmatpush1.bf16.msra.mxu0 0
      %296 = vmatprep.subr.bf16.mxu0 0
      %297 = vmatpush1.bf16.msra.mxu0 0
      %298 = vmatprep.subr.bf16.mxu0 0
      %299 = vmatpush1.bf16.msra.mxu0 0
      %300 = vmatprep.subr.bf16.mxu0 0
      %301 = vmatpush1.bf16.msra.mxu0 0
      %302 = vmatprep.subr.bf16.mxu0 0
      %303 = vmatpush1.bf16.msra.mxu0 0
      %304 = vmatprep.subr.bf16.mxu0 0
      %305 = vmatpush1.bf16.msra.mxu0 0
      %306 = vmatprep.subr.bf16.mxu0 0
      %307 = vmatpush1.bf16.msra.mxu0 %v286
      %308 = vmatprep.subr.bf16.mxu0 0
      %309 = vmatpush2.bf16.msra.mxu0 0
      %310 = vmatprep.subr.bf16.mxu0 0
      %311 = vmatpush2.bf16.msra.mxu0 0
      %312 = vmatprep.subr.bf16.mxu0 0
      %313 = vmatpush2.bf16.msra.mxu0 0
      %314 = vmatprep.subr.bf16.mxu0 0
      %315 = vmatpush2.bf16.msra.mxu0 0
      %316 = vmatprep.subr.bf16.mxu0 0
      %317 = vmatpush2.bf16.msra.mxu0 0
      %318 = vmatprep.subr.bf16.mxu0 0
      %319 = vmatpush2.bf16.msra.mxu0 0
      %320 = vmatprep.subr.bf16.mxu0 0
      %321 = vmatpush2.bf16.msra.mxu0 0
      %322 = vmatprep.subr.bf16.mxu0 0
      %323 = vmatpush2.bf16.msra.mxu0 0
      %324 = vmatprep.mubr.bf16.mxu0 0
      %325 = vmatmul.mubr.bf16.gmra.mxu0 %v290
      %v326 = vpop.f32.mrf.mxu0
      %v327 = vadd.f32 0.0, %v326
      %v328 = vpop.f32.mrf.mxu0
      %v329 = vpop.f32.mrf.mxu0
      %v330 = vadd.f32 0.0, %v329
      %v331 = vpop.f32.mrf.mxu0
      %332 = vdwg.mxu0
      %v335 = vunpack.c.l.b16 %v276
      %v336 = vunpack.c.l.b16 %v277
      %v337 = vpack.c.b16 %v336, %v335
      %v340 = vsel %vm288, %v275, 0
      %342 = vmatprep.subr.bf16.mxu0 0
      %343 = vmatpush1.bf16.msra.mxu0 0
      %344 = vmatprep.subr.bf16.mxu0 0
      %345 = vmatpush1.bf16.msra.mxu0 0
      %346 = vmatprep.subr.bf16.mxu0 0
      %347 = vmatpush1.bf16.msra.mxu0 0
      %348 = vmatprep.subr.bf16.mxu0 0
      %349 = vmatpush1.bf16.msra.mxu0 0
      %350 = vmatprep.subr.bf16.mxu0 0
      %351 = vmatpush1.bf16.msra.mxu0 0
      %352 = vmatprep.subr.bf16.mxu0 0
      %353 = vmatpush1.bf16.msra.mxu0 0
      %354 = vmatprep.subr.bf16.mxu0 0
      %355 = vmatpush1.bf16.msra.mxu0 0
      %356 = vmatprep.subr.bf16.mxu0 0
      %357 = vmatpush1.bf16.msra.mxu0 %v337
      %358 = vmatprep.subr.bf16.mxu0 0
      %359 = vmatpush2.bf16.msra.mxu0 0
      %360 = vmatprep.subr.bf16.mxu0 0
      %361 = vmatpush2.bf16.msra.mxu0 0
      %362 = vmatprep.subr.bf16.mxu0 0
      %363 = vmatpush2.bf16.msra.mxu0 0
      %364 = vmatprep.subr.bf16.mxu0 0
      %365 = vmatpush2.bf16.msra.mxu0 0
      %366 = vmatprep.subr.bf16.mxu0 0
      %367 = vmatpush2.bf16.msra.mxu0 0
      %368 = vmatprep.subr.bf16.mxu0 0
      %369 = vmatpush2.bf16.msra.mxu0 0
      %370 = vmatprep.subr.bf16.mxu0 0
      %371 = vmatpush2.bf16.msra.mxu0 0
      %372 = vmatprep.subr.bf16.mxu0 0
      %373 = vmatpush2.bf16.msra.mxu0 0
      %374 = vmatprep.mubr.bf16.mxu0 0
      %375 = vmatmul.mubr.bf16.gmra.mxu0 %v340
      %v376 = vpop.f32.mrf.mxu0
      %v377 = vadd.f32 %v327, %v376
      %v378 = vpop.f32.mrf.mxu0
      %v379 = vpop.f32.mrf.mxu0
      %v380 = vadd.f32 %v330, %v379
      %v381 = vpop.f32.mrf.mxu0
      %382 = vdwg.mxu0
      %v383 = vpack.c.bf16 %v272, %v272
      %s384 = scalar_lea.vmem %s257, 16
      %v385 = vld [vmem:[%s384] sm:$0xf]
      %v386 = vld [vmem:[%s384 + $0x4] sm:$0xf]
      %vm387 = vsmask.f32 7424
      %v388 = vshrl.u32 %v275, 16
      %v390 = vshll.u32 %v275, 16
      %v392 = vrot.slane %v390, 1
      %v393 = vor.u32 %v388, %v392
      %v395 = vshll.u32 %v383, 16
      %v397 = vrot.slane %v395, 1
      %v398 = vsel %vm387, %v393, %v397
      %v401 = vunpack.c.l.b16 %v385
      %v402 = vunpack.c.l.b16 %v386
      %v403 = vpack.c.b16 %v402, %v401
      %v406 = vsel %vm288, %v398, 0
      %408 = vmatprep.subr.bf16.mxu0 0
      %409 = vmatpush1.bf16.msra.mxu0 0
      %410 = vmatprep.subr.bf16.mxu0 0
      %411 = vmatpush1.bf16.msra.mxu0 0
      %412 = vmatprep.subr.bf16.mxu0 0
      %413 = vmatpush1.bf16.msra.mxu0 0
      %414 = vmatprep.subr.bf16.mxu0 0
      %415 = vmatpush1.bf16.msra.mxu0 0
      %416 = vmatprep.subr.bf16.mxu0 0
      %417 = vmatpush1.bf16.msra.mxu0 0
      %418 = vmatprep.subr.bf16.mxu0 0
      %419 = vmatpush1.bf16.msra.mxu0 0
      %420 = vmatprep.subr.bf16.mxu0 0
      %421 = vmatpush1.bf16.msra.mxu0 0
      %422 = vmatprep.subr.bf16.mxu0 0
      %423 = vmatpush1.bf16.msra.mxu0 %v403
      %424 = vmatprep.subr.bf16.mxu0 0
      %425 = vmatpush2.bf16.msra.mxu0 0
      %426 = vmatprep.subr.bf16.mxu0 0
      %427 = vmatpush2.bf16.msra.mxu0 0
      %428 = vmatprep.subr.bf16.mxu0 0
      %429 = vmatpush2.bf16.msra.mxu0 0
      %430 = vmatprep.subr.bf16.mxu0 0
      %431 = vmatpush2.bf16.msra.mxu0 0
      %432 = vmatprep.subr.bf16.mxu0 0
      %433 = vmatpush2.bf16.msra.mxu0 0
      %434 = vmatprep.subr.bf16.mxu0 0
      %435 = vmatpush2.bf16.msra.mxu0 0
      %436 = vmatprep.subr.bf16.mxu0 0
      %437 = vmatpush2.bf16.msra.mxu0 0
      %438 = vmatprep.subr.bf16.mxu0 0
      %439 = vmatpush2.bf16.msra.mxu0 0
      %440 = vmatprep.mubr.bf16.mxu0 0
      %441 = vmatmul.mubr.bf16.gmra.mxu0 %v406
      %v442 = vpop.f32.mrf.mxu0
      %v443 = vadd.f32 0.0, %v442
      %v444 = vpop.f32.mrf.mxu0
      %v445 = vpop.f32.mrf.mxu0
      %v446 = vadd.f32 0.0, %v445
      %v447 = vpop.f32.mrf.mxu0
      %448 = vdwg.mxu0
      %v449 = vadd.f32 %v377, %v443
      %v450 = vadd.f32 %v380, %v446
      %v451 = vld [vmem:[%s260] sm:$0x1]
      %v453 = vlaneseq
      %v454 = vshrl.u32 %v453, 7
      %v455 = vsub.s32 0, %v454
      %v456 = vrot.slane %v451, %v455
      %v458 = vadd.f32 %v449, %v456
      %v459 = vadd.f32 %v450, %v456
      %v460 = vmul.f32 %v458, 0.5
      %v461 = vmul.f32 %v459, 0.5
      %v462 = vmul.f32 %v458, 0.70710677
      %v463 = vmul.f32 %v459, 0.70710677
      %v464 = vand.u32 2147483647, %v462
      %v465 = vand.u32 2147483647, %v463
      %v466 = vmul.f32 %v464, 0.3275911
      %v467 = vmul.f32 %v465, 0.3275911
      %v468 = vadd.f32 %v466, 1.0
      %v469 = vadd.f32 %v467, 1.0
      %v470 = vrcp.pop %v468
      %v471 = vmul.f32 1.0, %v470
      %v472 = vrcp.pop %v469
      %v473 = vmul.f32 1.0, %v472
      %v474 = vmul.f32 %v471, 1.0614054
      %v475 = vmul.f32 %v473, 1.0614054
      %v476 = vadd.f32 %v474, -1.4531521
      %v477 = vadd.f32 %v475, -1.4531521
      %v478 = vmul.f32 %v476, %v471
      %v479 = vmul.f32 %v477, %v473
      %v480 = vadd.f32 %v478, 1.4214138
      %v481 = vadd.f32 %v479, 1.4214138
      %v482 = vmul.f32 %v480, %v471
      %v483 = vmul.f32 %v481, %v473
      %v484 = vadd.f32 %v482, -0.28449672
      %v485 = vadd.f32 %v483, -0.28449672
      %v486 = vmul.f32 %v484, %v471
      %v487 = vmul.f32 %v485, %v473
      %v488 = vadd.f32 %v486, 0.2548296
      %v489 = vadd.f32 %v487, 0.2548296
      %v490 = vmul.f32 %v488, %v471
      %v491 = vmul.f32 %v489, %v473
      %v492 = vsub.f32 0.0, %v464
      %v493 = vsub.f32 0.0, %v465
      %v494 = vmul.f32 %v492, %v464
      %v495 = vmul.f32 %v493, %v465
      %v496 = vmul.f32 %v494, 1.442695
      %v497 = vpow.pop %v496
      %v498 = vmul.f32 %v495, 1.442695
      %v499 = vpow.pop %v498
      %v500 = vmul.f32 %v490, %v497
      %v501 = vmul.f32 %v491, %v499
      %v502 = vsub.f32 1.0, %v500
      %v503 = vsub.f32 1.0, %v501
      %vm504 = vcmp.ge.f32.partialorder %v462, 0.0
      %vm505 = vcmp.ge.f32.partialorder %v463, 0.0
      %v506 = vsub.f32 0.0, %v502
      %v507 = vsub.f32 0.0, %v503
      %v508 = vsel %vm504, %v502, %v506
      %v509 = vsel %vm505, %v503, %v507
      %v510 = vadd.f32 %v508, 1.0
      %v511 = vadd.f32 %v509, 1.0
      %v512 = vmul.f32 %v460, %v510
      %v513 = vmul.f32 %v461, %v511
      %v514 = vpack.c.bf16 %v513, %v512
      %v516 = vunpack.c.l.b16 %v514
      %v517 = vunpack.c.h.b16 %v514
      %v518 = vpack.c.b16 %v516, %v516
      %v519 = vpack.c.b16 %v517, %v517
      %522 = vst [vmem:[%s268] sm:$0xf] %v518
      %523 = vst [vmem:[%s268 + $0x4] sm:$0xf] %v519
      %p524 = scmp.lt.s32.totalorder %s19, 1
      %s525 = scalar_select %p524, %s19, 1
      %p526 = scmp.lt.s32.totalorder %s20, 0
      %s527 = scalar_select %p526, %s20, 0
      %s528 = smul.addr %s525, 2
      %s529 = sadd.s32 %s527, %s528
      %s530 = smul.addr %s529, 4
      %s531 = scalar_lea.vmem %s4, %s530
      // Predicated region
      $region37: #{s3_tokenizer_v2_forward.6} parent=35 // pred_check
        %p532 = pneg %p151
      $region38: #{s3_tokenizer_v2_forward.6} parent=35 // pred_check_branch
        %534 = sbr.rel (%p532) target = $region40
      $region39: #{s3_tokenizer_v2_forward.6} parent=35 // pred_region
        _
      $region40: #{s3_tokenizer_v2_forward.6} parent=35 // pred_fallthru
        _
    $region36: #{s3_tokenizer_v2_forward.6} parent=5 // pred_fallthru
      _
    %p535 = scmp.le.s32.totalorder 2, %s10
    // Predicated region
    $region41: #{s3_tokenizer_v2_forward.6} parent=5 // pred_check
      %p536 = pneg %p535
    $region42: #{s3_tokenizer_v2_forward.6} parent=5 // pred_check_branch
      %538 = sbr.rel (%p536) target = $region44
    $region43: #{s3_tokenizer_v2_forward.6} parent=5 // pred_region
      %s539 = ssub.s32 %s10, 2
      // Predicated region
      $region45: #{s3_tokenizer_v2_forward.6} parent=43 // pred_check
        %p540 = pneg %p157
      $region46: #{s3_tokenizer_v2_forward.6} parent=43 // pred_check_branch
        %542 = sbr.rel (%p540) target = $region48
      $region47: #{s3_tokenizer_v2_forward.6} parent=43 // pred_region
        %p543 = scmp.lt.s32.totalorder %s21, 1
        %s544 = scalar_select %p543, %s21, 1
        %p545 = scmp.lt.s32.totalorder %s22, 0
        %s546 = scalar_select %p545, %s22, 0
        %s547 = smul.addr %s544, 2
        %s548 = sadd.s32 %s546, %s547
        %s549 = smul.addr %s548, 4
        %s550 = scalar_lea.vmem %s4, %s549
      $region48: #{s3_tokenizer_v2_forward.6} parent=43 // pred_fallthru
        _
    $region44: #{s3_tokenizer_v2_forward.6} parent=5 // pred_fallthru
      _
  $region6: #{s3_tokenizer_v2_forward.6} parent=0 // loop_footer
    %s14 = sadd.s32 1, %s10
  $region7: #{s3_tokenizer_v2_forward.6} parent=0 // loop_footer_branch
    %9 = sbr.rel target = $region3
  $region8: #{s3_tokenizer_v2_forward.6} parent=0 // loop_exit
    _

// kernel: s3_tokenizer_v2_forward.7
$region0: #{s3_tokenizer_v2_forward.7}
  #allocation0 [shape = 'u32[]', space=smem, size = 0x4, offset = 0x4, fixed_abs, tag = 'smem constant byte address 0x4 - core index']
  #allocation1 [shape = 'u32[144,128]{1,0:T(1,128)}', space=vmem, size = 0x12000, scoped, tag = 'internal scratch']
  %s0 = inlined_call_operand.vmem [shape: bf16[2,9,128], index: 0, kind: input, shape index: {}]
  %s1 = inlined_call_operand.vmem [shape: bf16[2,8,128], index: 1, kind: input, shape index: {}]
  %s2 = inlined_call_operand.vmem [shape: bf16[3,128,128], index: 2, kind: input, shape index: {}]
  %s3 = inlined_call_operand.vmem [shape: f32[1,128], index: 3, kind: input, shape index: {}]
  %s4 = inlined_call_operand.vmem [shape: bf16[2,8,128], index: 4, kind: output, shape index: {}]
  %s5 = sld [smem:[#allocation0]]
  $region49: #{s3_tokenizer_v2_forward.7} parent=0
    _
  %s7 = ssub.s32 1, %s5
  %s8 = scalar_select 0, %s7, %s5
  loop: start=0, step=1, limit=4
  $region2: #{s3_tokenizer_v2_forward.7} parent=0 // loop_pre_header
    _
  $region3: #{s3_tokenizer_v2_forward.7} parent=0 // loop_header
    %s10 = sphi 0, %s14
    %p11 = scmp.ge.s32.totalorder %s10, 4
    %s17 = sphi 0, %s29
    %s18 = sphi 0, %s25
    %s19 = sphi 0, %s17
    %s20 = sphi 0, %s18
    %s21 = sphi 0, %s19
    %s22 = sphi 0, %s20
    %s32 = sphi 0, %s34
    %s35 = sphi 0, %s32
    %s36 = sphi 0, %s35
    %s52 = sphi 0, %s36
    %s58 = sphi 0, %s60
    %s61 = sphi 0, %s58
    %s62 = sphi 0, %s61
    %s78 = sphi 0, %s62
    %s84 = sphi 0, %s86
    %s87 = sphi 0, %s84
    %s88 = sphi 0, %s87
    %s104 = sphi 0, %s88
    %s110 = sphi 0, %s112
    %s113 = sphi 0, %s110
    %s114 = sphi 0, %s113
    %s130 = sphi 0, %s114
    %s138 = sphi 0, %s140
    %s141 = sphi 0, %s138
    %s142 = sphi 0, %s141
    %s158 = sphi 0, %s142
  $region4: #{s3_tokenizer_v2_forward.7} parent=0 // loop_header_branch
    %13 = sbr.rel (%p11) target = $region8
  $region5: #{s3_tokenizer_v2_forward.7} parent=0 // loop_body
    %s15 = ssub.s32 %s10, 1
    %s16 = ssub.s32 %s10, 2
    %s23 = sadd.s32 1, %s18
    %p24 = scmp.ge.s32.totalorder %s23, 1
    %s25 = scalar_select %p24, 0, %s23
    %s26 = sadd.s32 1, %s17
    %s27 = scalar_select %p24, %s26, %s17
    %p28 = scmp.ge.s32.totalorder %s27, 2
    %s29 = scalar_select %p28, 0, %s27
    %s30 = ssub.s32 %s17, %s29
    %p31 = scmp.eq.s32.totalorder %s30, 0
    %s33 = sadd.s32 %s32, 1
    %s34 = scalar_select %p31, %s32, %s33
    %p37 = pneg %p31
    %p38 = scmp.eq.s32.totalorder %s10, 1
    %p39 = por %p37, %p38
    %p40 = scmp.ne.s32.totalorder %s32, %s35
    %p41 = scmp.eq.s32.totalorder %s10, 0
    %p42 = por %p40, %p41
    %p43 = scmp.ne.s32.totalorder %s32, %s35
    %p44 = scmp.eq.s32.totalorder %s15, 1
    %p45 = por %p43, %p44
    %p46 = scmp.ne.s32.totalorder %s35, %s36
    %p47 = scmp.eq.s32.totalorder %s15, 0
    %p48 = por %p46, %p47
    %p49 = scmp.ne.s32.totalorder %s35, %s36
    %p50 = scmp.eq.s32.totalorder %s16, 1
    %p51 = por %p49, %p50
    %p53 = scmp.ne.s32.totalorder %s36, %s52
    %p54 = scmp.eq.s32.totalorder %s16, 0
    %p55 = por %p53, %p54
    %s56 = ssub.s32 %s17, %s29
    %p57 = scmp.eq.s32.totalorder %s56, 0
    %s59 = sadd.s32 %s58, 1
    %s60 = scalar_select %p57, %s58, %s59
    %p63 = pneg %p57
    %p64 = scmp.eq.s32.totalorder %s10, 1
    %p65 = por %p63, %p64
    %p66 = scmp.ne.s32.totalorder %s58, %s61
    %p67 = scmp.eq.s32.totalorder %s10, 0
    %p68 = por %p66, %p67
    %p69 = scmp.ne.s32.totalorder %s58, %s61
    %p70 = scmp.eq.s32.totalorder %s15, 1
    %p71 = por %p69, %p70
    %p72 = scmp.ne.s32.totalorder %s61, %s62
    %p73 = scmp.eq.s32.totalorder %s15, 0
    %p74 = por %p72, %p73
    %p75 = scmp.ne.s32.totalorder %s61, %s62
    %p76 = scmp.eq.s32.totalorder %s16, 1
    %p77 = por %p75, %p76
    %p79 = scmp.ne.s32.totalorder %s62, %s78
    %p80 = scmp.eq.s32.totalorder %s16, 0
    %p81 = por %p79, %p80
    %s82 = ssub.s32 %s18, %s25
    %p83 = scmp.eq.s32.totalorder %s82, 0
    %s85 = sadd.s32 %s84, 1
    %s86 = scalar_select %p83, %s84, %s85
    %p89 = pneg %p83
    %p90 = scmp.eq.s32.totalorder %s10, 1
    %p91 = por %p89, %p90
    %p92 = scmp.ne.s32.totalorder %s84, %s87
    %p93 = scmp.eq.s32.totalorder %s10, 0
    %p94 = por %p92, %p93
    %p95 = scmp.ne.s32.totalorder %s84, %s87
    %p96 = scmp.eq.s32.totalorder %s15, 1
    %p97 = por %p95, %p96
    %p98 = scmp.ne.s32.totalorder %s87, %s88
    %p99 = scmp.eq.s32.totalorder %s15, 0
    %p100 = por %p98, %p99
    %p101 = scmp.ne.s32.totalorder %s87, %s88
    %p102 = scmp.eq.s32.totalorder %s16, 1
    %p103 = por %p101, %p102
    %p105 = scmp.ne.s32.totalorder %s88, %s104
    %p106 = scmp.eq.s32.totalorder %s16, 0
    %p107 = por %p105, %p106
    %s108 = ssub.s32 %s18, %s25
    %p109 = scmp.eq.s32.totalorder %s108, 0
    %s111 = sadd.s32 %s110, 1
    %s112 = scalar_select %p109, %s110, %s111
    %p115 = pneg %p109
    %p116 = scmp.eq.s32.totalorder %s10, 1
    %p117 = por %p115, %p116
    %p118 = scmp.ne.s32.totalorder %s110, %s113
    %p119 = scmp.eq.s32.totalorder %s10, 0
    %p120 = por %p118, %p119
    %p121 = scmp.ne.s32.totalorder %s110, %s113
    %p122 = scmp.eq.s32.totalorder %s15, 1
    %p123 = por %p121, %p122
    %p124 = scmp.ne.s32.totalorder %s113, %s114
    %p125 = scmp.eq.s32.totalorder %s15, 0
    %p126 = por %p124, %p125
    %p127 = scmp.ne.s32.totalorder %s113, %s114
    %p128 = scmp.eq.s32.totalorder %s16, 1
    %p129 = por %p127, %p128
    %p131 = scmp.ne.s32.totalorder %s114, %s130
    %p132 = scmp.eq.s32.totalorder %s16, 0
    %p133 = por %p131, %p132
    %s134 = ssub.s32 %s17, %s29
    %s135 = ssub.s32 %s18, %s25
    %s136 = sor.u32 %s134, %s135
    %p137 = scmp.eq.s32.totalorder %s136, 0
    %s139 = sadd.s32 %s138, 1
    %s140 = scalar_select %p137, %s138, %s139
    %p143 = pneg %p137
    %p144 = scmp.eq.s32.totalorder %s10, 1
    %p145 = por %p143, %p144
    %p146 = scmp.ne.s32.totalorder %s138, %s141
    %p147 = scmp.eq.s32.totalorder %s10, 0
    %p148 = por %p146, %p147
    %p149 = scmp.ne.s32.totalorder %s138, %s141
    %p150 = scmp.eq.s32.totalorder %s15, 1
    %p151 = por %p149, %p150
    %p152 = scmp.ne.s32.totalorder %s141, %s142
    %p153 = scmp.eq.s32.totalorder %s15, 0
    %p154 = por %p152, %p153
    %p155 = scmp.ne.s32.totalorder %s141, %s142
    %p156 = scmp.eq.s32.totalorder %s16, 1
    %p157 = por %p155, %p156
    %p159 = scmp.ne.s32.totalorder %s142, %s158
    %p160 = scmp.eq.s32.totalorder %s16, 0
    %p161 = por %p159, %p160
    %p162 = scmp.le.s32.totalorder 1, %s10
    %p163 = scmp.lt.s32.totalorder %s10, 3
    %p164 = pnand %p162, %p163
    %p165 = pneg %p164
    // Predicated region
    $region9: #{s3_tokenizer_v2_forward.7} parent=5 // pred_check
      _
    $region10: #{s3_tokenizer_v2_forward.7} parent=5 // pred_check_branch
      %167 = sbr.rel (%p164) target = $region12
    $region11: #{s3_tokenizer_v2_forward.7} parent=5 // pred_region
      %s168 = ssub.s32 %s10, 1
      // Predicated region
      $region13: #{s3_tokenizer_v2_forward.7} parent=11 // pred_check
        %p169 = pneg %p100
      $region14: #{s3_tokenizer_v2_forward.7} parent=11 // pred_check_branch
        %171 = sbr.rel (%p169) target = $region16
      $region15: #{s3_tokenizer_v2_forward.7} parent=11 // pred_region
        %p172 = scmp.lt.s32.totalorder %s20, 0
        %s173 = scalar_select %p172, %s20, 0
        %s174 = smul.addr %s173, 4
        %s175 = scalar_lea.vmem %s2, %s174
      $region16: #{s3_tokenizer_v2_forward.7} parent=11 // pred_fallthru
        _
      // Predicated region
      $region17: #{s3_tokenizer_v2_forward.7} parent=11 // pred_check
        %p176 = pneg %p126
      $region18: #{s3_tokenizer_v2_forward.7} parent=11 // pred_check_branch
        %178 = sbr.rel (%p176) target = $region20
      $region19: #{s3_tokenizer_v2_forward.7} parent=11 // pred_region
        %p179 = scmp.lt.s32.totalorder %s20, 0
        %s180 = scalar_select %p179, %s20, 0
        %s181 = scalar_lea.vmem %s3, %s180
      $region20: #{s3_tokenizer_v2_forward.7} parent=11 // pred_fallthru
        _
    $region12: #{s3_tokenizer_v2_forward.7} parent=5 // pred_fallthru
      _
    %p182 = scmp.lt.s32.totalorder %s10, 2
    // Predicated region
    $region21: #{s3_tokenizer_v2_forward.7} parent=5 // pred_check
      %p183 = pneg %p182
    $region22: #{s3_tokenizer_v2_forward.7} parent=5 // pred_check_branch
      %185 = sbr.rel (%p183) target = $region24
    $region23: #{s3_tokenizer_v2_forward.7} parent=5 // pred_region
      // Predicated region
      $region25: #{s3_tokenizer_v2_forward.7} parent=23 // pred_check
        %p186 = pneg %p42
      $region26: #{s3_tokenizer_v2_forward.7} parent=23 // pred_check_branch
        %188 = sbr.rel (%p186) target = $region28
      $region27: #{s3_tokenizer_v2_forward.7} parent=23 // pred_region
        %p189 = scmp.lt.s32.totalorder %s17, 1
        %s190 = scalar_select %p189, %s17, 1
        %s191 = smul.addr %s190, 2
        %s192 = smul.addr %s191, 4
        %s193 = scalar_lea.vmem %s0, %s192
      $region28: #{s3_tokenizer_v2_forward.7} parent=23 // pred_fallthru
        _
      // Predicated region
      $region29: #{s3_tokenizer_v2_forward.7} parent=23 // pred_check
        %p194 = pneg %p68
      $region30: #{s3_tokenizer_v2_forward.7} parent=23 // pred_check_branch
        %196 = sbr.rel (%p194) target = $region32
      $region31: #{s3_tokenizer_v2_forward.7} parent=23 // pred_region
        %p197 = scmp.lt.s32.totalorder %s17, 1
        %s198 = scalar_select %p197, %s17, 1
        %s199 = smul.addr %s198, 4
        %s200 = scalar_lea.vmem %s1, %s199
      $region32: #{s3_tokenizer_v2_forward.7} parent=23 // pred_fallthru
        _
    $region24: #{s3_tokenizer_v2_forward.7} parent=5 // pred_fallthru
      _
    %p201 = scmp.le.s32.totalorder 1, %s10
    %p202 = scmp.lt.s32.totalorder %s10, 3
    %p203 = pnand %p201, %p202
    %p204 = pneg %p203
    // Predicated region
    $region33: #{s3_tokenizer_v2_forward.7} parent=5 // pred_check
      _
    $region34: #{s3_tokenizer_v2_forward.7} parent=5 // pred_check_branch
      %206 = sbr.rel (%p203) target = $region36
    $region35: #{s3_tokenizer_v2_forward.7} parent=5 // pred_region
      %s207 = ssub.s32 %s10, 1
      %p208 = scmp.lt.s32.totalorder %s19, 1
      %s209 = scalar_select %p208, %s19, 1
      %s210 = smul.addr %s209, 2
      %s211 = smul.addr %s210, 4
      %s212 = scalar_lea.vmem %s0, %s211
      %p213 = pneg %p48
      %p214 = pneg %p45
      %p215 = scmp.lt.s32.totalorder %s19, 1
      %s216 = scalar_select %p215, %s19, 1
      %s217 = smul.addr %s216, 4
      %s218 = scalar_lea.vmem %s1, %s217
      %p219 = pneg %p74
      %p220 = pneg %p71
      %p221 = scmp.lt.s32.totalorder %s20, 0
      %s222 = scalar_select %p221, %s20, 0
      %s223 = smul.addr %s222, 4
      %s224 = scalar_lea.vmem %s2, %s223
      %p225 = pneg %p100
      %p226 = pneg %p97
      %p227 = scmp.lt.s32.totalorder %s20, 0
      %s228 = scalar_select %p227, %s20, 0
      %s229 = scalar_lea.vmem %s3, %s228
      %p230 = pneg %p126
      %p231 = pneg %p123
      %p232 = pneg %p154
      %p233 = pneg %p151
      %p234 = scmp.lt.s32.totalorder %s19, 1
      %s235 = scalar_select %p234, %s19, 1
      %p236 = scmp.lt.s32.totalorder %s20, 0
      %s237 = scalar_select %p236, %s20, 0
      %s238 = sadd.s32 %s237, %s235
      %s239 = smul.addr %s238, 4
      %s240 = scalar_lea.vmem %s4, %s239
      %p241 = scmp.lt.s32.totalorder %s19, 1
      %s242 = scalar_select %p241, %s19, 1
      %s243 = smul.addr %s242, 2
      %s244 = smul.addr %s243, 4
      %s245 = scalar_lea.vmem %s0, %s244
      %p246 = scmp.lt.s32.totalorder %s19, 1
      %s247 = scalar_select %p246, %s19, 1
      %s248 = smul.addr %s247, 4
      %s249 = scalar_lea.vmem %s1, %s248
      %p250 = scmp.lt.s32.totalorder %s20, 0
      %s251 = scalar_select %p250, %s20, 0
      %s252 = smul.addr %s251, 4
      %s253 = scalar_lea.vmem %s2, %s252
      %p254 = scmp.lt.s32.totalorder %s20, 0
      %s255 = scalar_select %p254, %s20, 0
      %s256 = scalar_lea.vmem %s3, %s255
      %p257 = scmp.lt.s32.totalorder %s19, 1
      %s258 = scalar_select %p257, %s19, 1
      %p259 = scmp.lt.s32.totalorder %s20, 0
      %s260 = scalar_select %p259, %s20, 0
      %s261 = sadd.s32 %s260, %s258
      %s262 = smul.addr %s261, 4
      %s263 = scalar_lea.vmem %s4, %s262
      %v265 = vld [vmem:[%s245] sm:$0xf]
      %v266 = vld [vmem:[%s245 + $0x4] sm:$0x1]
      %v267 = vld [vmem:[%s249] sm:$0xf]
      %v268 = vld [vmem:[%s253] sm:$0xf]
      %v269 = vld [vmem:[%s253 + $0x4] sm:$0xf]
      %v270 = vld [vmem:[%s253 + $0x8] sm:$0xf]
      %v271 = vld [vmem:[%s253 + $0xc] sm:$0xf]
      %v272 = vld [vmem:[%s253 + $0x10] sm:$0xf]
      %v273 = vld [vmem:[%s253 + $0x14] sm:$0xf]
      %v274 = vld [vmem:[%s253 + $0x18] sm:$0xf]
      %v275 = vld [vmem:[%s253 + $0x1c] sm:$0xf]
      %v276 = vld [vmem:[%s253 + $0x20] sm:$0xf]
      %v277 = vld [vmem:[%s253 + $0x24] sm:$0xf]
      %v278 = vld [vmem:[%s253 + $0x28] sm:$0xf]
      %v279 = vld [vmem:[%s253 + $0x2c] sm:$0xf]
      %v280 = vld [vmem:[%s253 + $0x30] sm:$0xf]
      %v281 = vld [vmem:[%s253 + $0x34] sm:$0xf]
      %v282 = vld [vmem:[%s253 + $0x38] sm:$0xf]
      %v283 = vld [vmem:[%s253 + $0x3c] sm:$0xf]
      %s284 = scalar_lea.vmem %s253, 64
      %v285 = vld [vmem:[%s284] sm:$0xf]
      %v286 = vld [vmem:[%s284 + $0x4] sm:$0xf]
      %v287 = vld [vmem:[%s284 + $0x8] sm:$0xf]
      %v288 = vld [vmem:[%s284 + $0xc] sm:$0xf]
      %v289 = vld [vmem:[%s284 + $0x10] sm:$0xf]
      %v290 = vld [vmem:[%s284 + $0x14] sm:$0xf]
      %v291 = vld [vmem:[%s284 + $0x18] sm:$0xf]
      %v292 = vld [vmem:[%s284 + $0x1c] sm:$0xf]
      %v293 = vld [vmem:[%s284 + $0x20] sm:$0xf]
      %v294 = vld [vmem:[%s284 + $0x24] sm:$0xf]
      %v295 = vld [vmem:[%s284 + $0x28] sm:$0xf]
      %v296 = vld [vmem:[%s284 + $0x2c] sm:$0xf]
      %v297 = vld [vmem:[%s284 + $0x30] sm:$0xf]
      %v298 = vld [vmem:[%s284 + $0x34] sm:$0xf]
      %v299 = vld [vmem:[%s284 + $0x38] sm:$0xf]
      %v300 = vld [vmem:[%s284 + $0x3c] sm:$0xf]
      %v317 = vunpack.c.l.b16 %v285
      %v318 = vunpack.c.l.b16 %v286
      %v319 = vunpack.c.l.b16 %v287
      %v320 = vunpack.c.l.b16 %v288
      %v321 = vunpack.c.l.b16 %v289
      %v322 = vunpack.c.l.b16 %v290
      %v323 = vunpack.c.l.b16 %v291
      %v324 = vunpack.c.l.b16 %v292
      %v325 = vunpack.c.l.b16 %v293
      %v326 = vunpack.c.l.b16 %v294
      %v327 = vunpack.c.l.b16 %v295
      %v328 = vunpack.c.l.b16 %v296
      %v329 = vunpack.c.l.b16 %v297
      %v330 = vunpack.c.l.b16 %v298
      %v331 = vunpack.c.l.b16 %v299
      %v332 = vunpack.c.l.b16 %v300
      %v333 = vpack.c.b16 %v318, %v317
      %v334 = vpack.c.b16 %v320, %v319
      %v335 = vpack.c.b16 %v322, %v321
      %v336 = vpack.c.b16 %v324, %v323
      %v337 = vpack.c.b16 %v326, %v325
      %v338 = vpack.c.b16 %v328, %v327
      %v339 = vpack.c.b16 %v330, %v329
      %v340 = vpack.c.b16 %v332, %v331
      %349 = vmatprep.subr.bf16.mxu0 0
      %350 = vmatpush1.bf16.msra.mxu0 %v340
      %351 = vmatprep.subr.bf16.mxu0 0
      %352 = vmatpush1.bf16.msra.mxu0 %v339
      %353 = vmatprep.subr.bf16.mxu0 0
      %354 = vmatpush1.bf16.msra.mxu0 %v338
      %355 = vmatprep.subr.bf16.mxu0 0
      %356 = vmatpush1.bf16.msra.mxu0 %v337
      %357 = vmatprep.subr.bf16.mxu0 0
      %358 = vmatpush1.bf16.msra.mxu0 %v336
      %359 = vmatprep.subr.bf16.mxu0 0
      %360 = vmatpush1.bf16.msra.mxu0 %v335
      %361 = vmatprep.subr.bf16.mxu0 0
      %362 = vmatpush1.bf16.msra.mxu0 %v334
      %363 = vmatprep.subr.bf16.mxu0 0
      %364 = vmatpush1.bf16.msra.mxu0 %v333
      %365 = vmatprep.subr.bf16.mxu0 0
      %366 = vmatpush2.bf16.msra.mxu0 0
      %367 = vmatprep.subr.bf16.mxu0 0
      %368 = vmatpush2.bf16.msra.mxu0 0
      %369 = vmatprep.subr.bf16.mxu0 0
      %370 = vmatpush2.bf16.msra.mxu0 0
      %371 = vmatprep.subr.bf16.mxu0 0
      %372 = vmatpush2.bf16.msra.mxu0 0
      %373 = vmatprep.subr.bf16.mxu0 0
      %374 = vmatpush2.bf16.msra.mxu0 0
      %375 = vmatprep.subr.bf16.mxu0 0
      %376 = vmatpush2.bf16.msra.mxu0 0
      %377 = vmatprep.subr.bf16.mxu0 0
      %378 = vmatpush2.bf16.msra.mxu0 0
      %379 = vmatprep.subr.bf16.mxu0 0
      %380 = vmatpush2.bf16.msra.mxu0 0
      %381 = vmatprep.mubr.bf16.mxu0 0
      %382 = vmatmul.mubr.bf16.gmra.mxu0 %v267
      %v383 = vpop.f32.mrf.mxu0
      %v384 = vadd.f32 0.0, %v383
      %v385 = vpop.f32.mrf.mxu0
      %v386 = vpop.f32.mrf.mxu0
      %v387 = vpop.f32.mrf.mxu0
      %388 = vdwg.mxu0
      %v405 = vunpack.c.l.b16 %v268
      %v406 = vunpack.c.l.b16 %v269
      %v407 = vunpack.c.l.b16 %v270
      %v408 = vunpack.c.l.b16 %v271
      %v409 = vunpack.c.l.b16 %v272
      %v410 = vunpack.c.l.b16 %v273
      %v411 = vunpack.c.l.b16 %v274
      %v412 = vunpack.c.l.b16 %v275
      %v413 = vunpack.c.l.b16 %v276
      %v414 = vunpack.c.l.b16 %v277
      %v415 = vunpack.c.l.b16 %v278
      %v416 = vunpack.c.l.b16 %v279
      %v417 = vunpack.c.l.b16 %v280
      %v418 = vunpack.c.l.b16 %v281
      %v419 = vunpack.c.l.b16 %v282
      %v420 = vunpack.c.l.b16 %v283
      %v421 = vpack.c.b16 %v406, %v405
      %v422 = vpack.c.b16 %v408, %v407
      %v423 = vpack.c.b16 %v410, %v409
      %v424 = vpack.c.b16 %v412, %v411
      %v425 = vpack.c.b16 %v414, %v413
      %v426 = vpack.c.b16 %v416, %v415
      %v427 = vpack.c.b16 %v418, %v417
      %v428 = vpack.c.b16 %v420, %v419
      %437 = vmatprep.subr.bf16.mxu0 0
      %438 = vmatpush1.bf16.msra.mxu0 %v428
      %439 = vmatprep.subr.bf16.mxu0 0
      %440 = vmatpush1.bf16.msra.mxu0 %v427
      %441 = vmatprep.subr.bf16.mxu0 0
      %442 = vmatpush1.bf16.msra.mxu0 %v426
      %443 = vmatprep.subr.bf16.mxu0 0
      %444 = vmatpush1.bf16.msra.mxu0 %v425
      %445 = vmatprep.subr.bf16.mxu0 0
      %446 = vmatpush1.bf16.msra.mxu0 %v424
      %447 = vmatprep.subr.bf16.mxu0 0
      %448 = vmatpush1.bf16.msra.mxu0 %v423
      %449 = vmatprep.subr.bf16.mxu0 0
      %450 = vmatpush1.bf16.msra.mxu0 %v422
      %451 = vmatprep.subr.bf16.mxu0 0
      %452 = vmatpush1.bf16.msra.mxu0 %v421
      %453 = vmatprep.subr.bf16.mxu0 0
      %454 = vmatpush2.bf16.msra.mxu0 0
      %455 = vmatprep.subr.bf16.mxu0 0
      %456 = vmatpush2.bf16.msra.mxu0 0
      %457 = vmatprep.subr.bf16.mxu0 0
      %458 = vmatpush2.bf16.msra.mxu0 0
      %459 = vmatprep.subr.bf16.mxu0 0
      %460 = vmatpush2.bf16.msra.mxu0 0
      %461 = vmatprep.subr.bf16.mxu0 0
      %462 = vmatpush2.bf16.msra.mxu0 0
      %463 = vmatprep.subr.bf16.mxu0 0
      %464 = vmatpush2.bf16.msra.mxu0 0
      %465 = vmatprep.subr.bf16.mxu0 0
      %466 = vmatpush2.bf16.msra.mxu0 0
      %467 = vmatprep.subr.bf16.mxu0 0
      %468 = vmatpush2.bf16.msra.mxu0 0
      %469 = vmatprep.mubr.bf16.mxu0 0
      %470 = vmatmul.mubr.bf16.gmra.mxu0 %v265
      %v471 = vpop.f32.mrf.mxu0
      %v472 = vadd.f32 %v384, %v471
      %v473 = vpop.f32.mrf.mxu0
      %v474 = vpop.f32.mrf.mxu0
      %v475 = vpop.f32.mrf.mxu0
      %476 = vdwg.mxu0
      %s477 = scalar_lea.vmem %s253, 128
      %v478 = vld [vmem:[%s477] sm:$0xf]
      %v479 = vld [vmem:[%s477 + $0x4] sm:$0xf]
      %v480 = vld [vmem:[%s477 + $0x8] sm:$0xf]
      %v481 = vld [vmem:[%s477 + $0xc] sm:$0xf]
      %v482 = vld [vmem:[%s477 + $0x10] sm:$0xf]
      %v483 = vld [vmem:[%s477 + $0x14] sm:$0xf]
      %v484 = vld [vmem:[%s477 + $0x18] sm:$0xf]
      %v485 = vld [vmem:[%s477 + $0x1c] sm:$0xf]
      %v486 = vld [vmem:[%s477 + $0x20] sm:$0xf]
      %v487 = vld [vmem:[%s477 + $0x24] sm:$0xf]
      %v488 = vld [vmem:[%s477 + $0x28] sm:$0xf]
      %v489 = vld [vmem:[%s477 + $0x2c] sm:$0xf]
      %v490 = vld [vmem:[%s477 + $0x30] sm:$0xf]
      %v491 = vld [vmem:[%s477 + $0x34] sm:$0xf]
      %v492 = vld [vmem:[%s477 + $0x38] sm:$0xf]
      %v493 = vld [vmem:[%s477 + $0x3c] sm:$0xf]
      %v496 = vunpack.c.l.b16 %v265
      %v497 = vunpack.c.l.b16 %v266
      %v498 = vpack.c.b16 %v497, %v496
      %v500 = vshrl.u32 %v498, 16
      %v502 = vshll.u32 %v498, 16
      %v504 = vrot.slane %v502, 1
      %v505 = vor.u32 %v500, %v504
      %v523 = vunpack.c.l.b16 %v478
      %v524 = vunpack.c.l.b16 %v479
      %v525 = vunpack.c.l.b16 %v480
      %v526 = vunpack.c.l.b16 %v481
      %v527 = vunpack.c.l.b16 %v482
      %v528 = vunpack.c.l.b16 %v483
      %v529 = vunpack.c.l.b16 %v484
      %v530 = vunpack.c.l.b16 %v485
      %v531 = vunpack.c.l.b16 %v486
      %v532 = vunpack.c.l.b16 %v487
      %v533 = vunpack.c.l.b16 %v488
      %v534 = vunpack.c.l.b16 %v489
      %v535 = vunpack.c.l.b16 %v490
      %v536 = vunpack.c.l.b16 %v491
      %v537 = vunpack.c.l.b16 %v492
      %v538 = vunpack.c.l.b16 %v493
      %v539 = vpack.c.b16 %v524, %v523
      %v540 = vpack.c.b16 %v526, %v525
      %v541 = vpack.c.b16 %v528, %v527
      %v542 = vpack.c.b16 %v530, %v529
      %v543 = vpack.c.b16 %v532, %v531
      %v544 = vpack.c.b16 %v534, %v533
      %v545 = vpack.c.b16 %v536, %v535
      %v546 = vpack.c.b16 %v538, %v537
      %555 = vmatprep.subr.bf16.mxu0 0
      %556 = vmatpush1.bf16.msra.mxu0 %v546
      %557 = vmatprep.subr.bf16.mxu0 0
      %558 = vmatpush1.bf16.msra.mxu0 %v545
      %559 = vmatprep.subr.bf16.mxu0 0
      %560 = vmatpush1.bf16.msra.mxu0 %v544
      %561 = vmatprep.subr.bf16.mxu0 0
      %562 = vmatpush1.bf16.msra.mxu0 %v543
      %563 = vmatprep.subr.bf16.mxu0 0
      %564 = vmatpush1.bf16.msra.mxu0 %v542
      %565 = vmatprep.subr.bf16.mxu0 0
      %566 = vmatpush1.bf16.msra.mxu0 %v541
      %567 = vmatprep.subr.bf16.mxu0 0
      %568 = vmatpush1.bf16.msra.mxu0 %v540
      %569 = vmatprep.subr.bf16.mxu0 0
      %570 = vmatpush1.bf16.msra.mxu0 %v539
      %571 = vmatprep.subr.bf16.mxu0 0
      %572 = vmatpush2.bf16.msra.mxu0 0
      %573 = vmatprep.subr.bf16.mxu0 0
      %574 = vmatpush2.bf16.msra.mxu0 0
      %575 = vmatprep.subr.bf16.mxu0 0
      %576 = vmatpush2.bf16.msra.mxu0 0
      %577 = vmatprep.subr.bf16.mxu0 0
      %578 = vmatpush2.bf16.msra.mxu0 0
      %579 = vmatprep.subr.bf16.mxu0 0
      %580 = vmatpush2.bf16.msra.mxu0 0
      %581 = vmatprep.subr.bf16.mxu0 0
      %582 = vmatpush2.bf16.msra.mxu0 0
      %583 = vmatprep.subr.bf16.mxu0 0
      %584 = vmatpush2.bf16.msra.mxu0 0
      %585 = vmatprep.subr.bf16.mxu0 0
      %586 = vmatpush2.bf16.msra.mxu0 0
      %587 = vmatprep.mubr.bf16.mxu0 0
      %588 = vmatmul.mubr.bf16.gmra.mxu0 %v505
      %v589 = vpop.f32.mrf.mxu0
      %v590 = vadd.f32 0.0, %v589
      %v591 = vpop.f32.mrf.mxu0
      %v592 = vpop.f32.mrf.mxu0
      %v593 = vpop.f32.mrf.mxu0
      %594 = vdwg.mxu0
      %v595 = vadd.f32 %v472, %v590
      %v596 = vld [vmem:[%s256] sm:$0x1]
      %v598 = vlaneseq
      %v599 = vshrl.u32 %v598, 7
      %v600 = vsub.s32 0, %v599
      %v601 = vrot.slane %v596, %v600
      %v603 = vadd.f32 %v595, %v601
      %v604 = vmul.f32 %v603, 0.5
      %v605 = vmul.f32 %v603, 0.70710677
      %v606 = vand.u32 2147483647, %v605
      %v607 = vmul.f32 %v606, 0.3275911
      %v608 = vadd.f32 %v607, 1.0
      %v609 = vrcp.pop %v608
      %v610 = vmul.f32 1.0, %v609
      %v611 = vmul.f32 %v610, 1.0614054
      %v612 = vadd.f32 %v611, -1.4531521
      %v613 = vmul.f32 %v612, %v610
      %v614 = vadd.f32 %v613, 1.4214138
      %v615 = vmul.f32 %v614, %v610
      %v616 = vadd.f32 %v615, -0.28449672
      %v617 = vmul.f32 %v616, %v610
      %v618 = vadd.f32 %v617, 0.2548296
      %v619 = vmul.f32 %v618, %v610
      %v620 = vsub.f32 0.0, %v606
      %v621 = vmul.f32 %v620, %v606
      %v622 = vmul.f32 %v621, 1.442695
      %v623 = vpow.pop %v622
      %v624 = vmul.f32 %v619, %v623
      %v625 = vsub.f32 1.0, %v624
      %vm626 = vcmp.ge.f32.partialorder %v605, 0.0
      %v627 = vsub.f32 0.0, %v625
      %v628 = vsel %vm626, %v625, %v627
      %v629 = vadd.f32 %v628, 1.0
      %v630 = vmul.f32 %v604, %v629
      %v631 = vpack.c.bf16 %v630, %v630
      %632 = vst [vmem:[%s263] sm:$0xf] %v631
      %p633 = scmp.lt.s32.totalorder %s19, 1
      %s634 = scalar_select %p633, %s19, 1
      %p635 = scmp.lt.s32.totalorder %s20, 0
      %s636 = scalar_select %p635, %s20, 0
      %s637 = sadd.s32 %s636, %s634
      %s638 = smul.addr %s637, 4
      %s639 = scalar_lea.vmem %s4, %s638
      // Predicated region
      $region37: #{s3_tokenizer_v2_forward.7} parent=35 // pred_check
        %p640 = pneg %p151
      $region38: #{s3_tokenizer_v2_forward.7} parent=35 // pred_check_branch
        %642 = sbr.rel (%p640) target = $region40
      $region39: #{s3_tokenizer_v2_forward.7} parent=35 // pred_region
        _
      $region40: #{s3_tokenizer_v2_forward.7} parent=35 // pred_fallthru
        _
    $region36: #{s3_tokenizer_v2_forward.7} parent=5 // pred_fallthru
      _
    %p643 = scmp.le.s32.totalorder 2, %s10
    // Predicated region
    $region41: #{s3_tokenizer_v2_forward.7} parent=5 // pred_check
      %p644 = pneg %p643
    $region42: #{s3_tokenizer_v2_forward.7} parent=5 // pred_check_branch
      %646 = sbr.rel (%p644) target = $region44
    $region43: #{s3_tokenizer_v2_forward.7} parent=5 // pred_region
      %s647 = ssub.s32 %s10, 2
      // Predicated region
      $region45: #{s3_tokenizer_v2_forward.7} parent=43 // pred_check
        %p648 = pneg %p157
      $region46: #{s3_tokenizer_v2_forward.7} parent=43 // pred_check_branch
        %650 = sbr.rel (%p648) target = $region48
      $region47: #{s3_tokenizer_v2_forward.7} parent=43 // pred_region
        %p651 = scmp.lt.s32.totalorder %s21, 1
        %s652 = scalar_select %p651, %s21, 1
        %p653 = scmp.lt.s32.totalorder %s22, 0
        %s654 = scalar_select %p653, %s22, 0
        %s655 = sadd.s32 %s654, %s652
        %s656 = smul.addr %s655, 4
        %s657 = scalar_lea.vmem %s4, %s656
      $region48: #{s3_tokenizer_v2_forward.7} parent=43 // pred_fallthru
        _
    $region44: #{s3_tokenizer_v2_forward.7} parent=5 // pred_fallthru
      _
  $region6: #{s3_tokenizer_v2_forward.7} parent=0 // loop_footer
    %s14 = sadd.s32 1, %s10
  $region7: #{s3_tokenizer_v2_forward.7} parent=0 // loop_footer_branch
    %9 = sbr.rel target = $region3
  $region8: #{s3_tokenizer_v2_forward.7} parent=0 // loop_exit
    _

// kernel: s3_tokenizer_v2_forward.9
$region0: #{s3_tokenizer_v2_forward.9}
  #allocation0 [shape = 'u32[]', space=smem, size = 0x4, offset = 0x4, fixed_abs, tag = 'smem constant byte address 0x4 - core index']
  #allocation1 [shape = 'u32[144,128]{1,0:T(1,128)}', space=vmem, size = 0x12000, scoped, tag = 'internal scratch']
  #allocation2 [shape = 'bf16[16,128]{1,0:T(8,128)(2,1)}', space=vmem, size = 0x1000, scoped, tag = 'scratch operand']
  #allocation3 [shape = 'f32[16,128]{1,0:T(8,128)}', space=vmem, size = 0x2000, scoped, tag = 'scratch operand']
  %s0 = inlined_call_operand.vmem [shape: bf16[16,128], index: 0, kind: input, shape index: {}]
  %s1 = inlined_call_operand.vmem [shape: bf16[16,128], index: 1, kind: input, shape index: {}]
  %s2 = inlined_call_operand.vmem [shape: f32[1,128], index: 2, kind: input, shape index: {}]
  %s3 = inlined_call_operand.vmem [shape: f32[1,128], index: 3, kind: input, shape index: {}]
  %s4 = inlined_call_operand.vmem [shape: bf16[128,512], index: 4, kind: input, shape index: {}]
  %s5 = inlined_call_operand.vmem [shape: f32[1,512], index: 5, kind: input, shape index: {}]
  %s6 = inlined_call_operand.vmem [shape: bf16[512,128], index: 6, kind: input, shape index: {}]
  %s7 = inlined_call_operand.vmem [shape: f32[1,128], index: 7, kind: input, shape index: {}]
  %s8 = inlined_call_operand.vmem [shape: bf16[16,128], index: 8, kind: output, shape index: {}]
  %s9 = sld [smem:[#allocation0]]
  $region50: #{s3_tokenizer_v2_forward.9} parent=0
    _
  %s11 = ssub.s32 1, %s9
  %s12 = scalar_select 0, %s11, %s9
  // Predicated region
  $region2: #{s3_tokenizer_v2_forward.9} parent=0 // pred_check
    _
  $region3: #{s3_tokenizer_v2_forward.9} parent=0 // pred_check_branch
    %14 = sbr.rel (0) target = $region5
  $region4: #{s3_tokenizer_v2_forward.9} parent=0 // pred_region
    _
  $region5: #{s3_tokenizer_v2_forward.9} parent=0 // pred_fallthru
    _
  // Predicated region
  $region6: #{s3_tokenizer_v2_forward.9} parent=0 // pred_check
    _
  $region7: #{s3_tokenizer_v2_forward.9} parent=0 // pred_check_branch
    %16 = sbr.rel (0) target = $region9
  $region8: #{s3_tokenizer_v2_forward.9} parent=0 // pred_region
    _
  $region9: #{s3_tokenizer_v2_forward.9} parent=0 // pred_fallthru
    _
  // Predicated region
  $region10: #{s3_tokenizer_v2_forward.9} parent=0 // pred_check
    _
  $region11: #{s3_tokenizer_v2_forward.9} parent=0 // pred_check_branch
    %18 = sbr.rel (0) target = $region13
  $region12: #{s3_tokenizer_v2_forward.9} parent=0 // pred_region
    _
  $region13: #{s3_tokenizer_v2_forward.9} parent=0 // pred_fallthru
    _
  // Predicated region
  $region14: #{s3_tokenizer_v2_forward.9} parent=0 // pred_check
    _
  $region15: #{s3_tokenizer_v2_forward.9} parent=0 // pred_check_branch
    %20 = sbr.rel (0) target = $region17
  $region16: #{s3_tokenizer_v2_forward.9} parent=0 // pred_region
    _
  $region17: #{s3_tokenizer_v2_forward.9} parent=0 // pred_fallthru
    _
  // Predicated region
  $region18: #{s3_tokenizer_v2_forward.9} parent=0 // pred_check
    _
  $region19: #{s3_tokenizer_v2_forward.9} parent=0 // pred_check_branch
    %22 = sbr.rel (0) target = $region21
  $region20: #{s3_tokenizer_v2_forward.9} parent=0 // pred_region
    _
  $region21: #{s3_tokenizer_v2_forward.9} parent=0 // pred_fallthru
    _
  // Predicated region
  $region22: #{s3_tokenizer_v2_forward.9} parent=0 // pred_check
    _
  $region23: #{s3_tokenizer_v2_forward.9} parent=0 // pred_check_branch
    %24 = sbr.rel (0) target = $region25
  $region24: #{s3_tokenizer_v2_forward.9} parent=0 // pred_region
    _
  $region25: #{s3_tokenizer_v2_forward.9} parent=0 // pred_fallthru
    _
  // Predicated region
  $region26: #{s3_tokenizer_v2_forward.9} parent=0 // pred_check
    _
  $region27: #{s3_tokenizer_v2_forward.9} parent=0 // pred_check_branch
    %26 = sbr.rel (0) target = $region29
  $region28: #{s3_tokenizer_v2_forward.9} parent=0 // pred_region
    _
  $region29: #{s3_tokenizer_v2_forward.9} parent=0 // pred_fallthru
    _
  // Predicated region
  $region30: #{s3_tokenizer_v2_forward.9} parent=0 // pred_check
    _
  $region31: #{s3_tokenizer_v2_forward.9} parent=0 // pred_check_branch
    %28 = sbr.rel (0) target = $region33
  $region32: #{s3_tokenizer_v2_forward.9} parent=0 // pred_region
    _
  $region33: #{s3_tokenizer_v2_forward.9} parent=0 // pred_fallthru
    _
  %p30 = scmp.eq.s32.totalorder 0, 0
  // Predicated region
  $region34: #{s3_tokenizer_v2_forward.9} parent=0 // pred_check
    %p31 = pneg %p30
  $region35: #{s3_tokenizer_v2_forward.9} parent=0 // pred_check_branch
    %33 = sbr.rel (%p31) target = $region37
  $region36: #{s3_tokenizer_v2_forward.9} parent=0 // pred_region
    %v34 = vld [vmem:[%s0] sm:$0xf]
    %v35 = vld [vmem:[%s0 + $0x4] sm:$0xf]
    %v36 = vunpack.c.l.bf16 %v34
    %v37 = vunpack.c.l.bf16 %v35
    %v38 = vld [vmem:[%s1] sm:$0xf]
    %v39 = vld [vmem:[%s1 + $0x4] sm:$0xf]
    %v40 = vunpack.c.l.bf16 %v38
    %v41 = vunpack.c.l.bf16 %v39
    %v42 = vadd.f32 %v36, %v40
    %v43 = vadd.f32 %v37, %v41
    %44 = vadd.xlane.f32.xlu0 %v42
    %v45 = vpop.xlane.xlu0 %44
    %46 = vadd.xlane.f32.xlu0 %v43
    %v47 = vpop.xlane.xlu0 %46
    %v48 = vrcp.pop 128.0
    %v49 = vmul.f32 %v45, %v48
    %v50 = vmul.f32 %v47, %v48
    %v51 = vsub.f32 %v42, %v49
    %v52 = vsub.f32 %v43, %v50
    %v53 = vmul.f32 %v51, %v51
    %v54 = vmul.f32 %v52, %v52
    %55 = vadd.xlane.f32.xlu0 %v53
    %v56 = vpop.xlane.xlu0 %55
    %57 = vadd.xlane.f32.xlu0 %v54
    %v58 = vpop.xlane.xlu0 %57
    %v59 = vmul.f32 %v56, %v48
    %v60 = vmul.f32 %v58, %v48
    %v61 = vadd.f32 %v59, 1e-05
    %v62 = vadd.f32 %v60, 1e-05
    %v63 = vrsqrt.pop %v61
    %v64 = vrsqrt.pop %v62
    %v65 = vmul.f32 %v51, %v63
    %v66 = vmul.f32 %v52, %v64
    %v67 = vld [vmem:[%s2] sm:$0x1]
    %v69 = vlaneseq
    %v70 = vshrl.u32 %v69, 7
    %v71 = vsub.s32 0, %v70
    %v72 = vrot.slane %v67, %v71
    %v74 = vmul.f32 %v65, %v72
    %v75 = vmul.f32 %v66, %v72
    %v76 = vld [vmem:[%s3] sm:$0x1]
    %v78 = vlaneseq
    %v79 = vshrl.u32 %v78, 7
    %v80 = vsub.s32 0, %v79
    %v81 = vrot.slane %v76, %v80
    %v83 = vadd.f32 %v74, %v81
    %v84 = vadd.f32 %v75, %v81
    %v85 = vpack.c.bf16 %v84, %v83
    %v87 = vunpack.c.l.b16 %v85
    %v88 = vunpack.c.h.b16 %v85
    %v89 = vpack.c.b16 %v87, %v87
    %v90 = vpack.c.b16 %v88, %v88
    %93 = vst [vmem:[#allocation2] sm:$0xf] %v89
    %94 = vst [vmem:[#allocation2 + $0x4] sm:$0xf] %v90
    %v95 = vld [vmem:[%s7] sm:$0x1]
    %v97 = vlaneseq
    %v98 = vshrl.u32 %v97, 7
    %v99 = vsub.s32 0, %v98
    %v100 = vrot.slane %v95, %v99
    %v102 = vadd.f32 %v42, %v100
    %v103 = vadd.f32 %v43, %v100
    %104 = vst [vmem:[#allocation3] sm:$0xff] %v102
    %105 = vst [vmem:[#allocation3 + $0x8] sm:$0xff] %v103
  $region37: #{s3_tokenizer_v2_forward.9} parent=0 // pred_fallthru
    _
  %v106 = vld [vmem:[#allocation2] sm:$0xf]
  %v107 = vld [vmem:[#allocation2 + $0x4] sm:$0xf]
  %v108 = vld [vmem:[%s4] sm:$0xff]
  %v109 = vld [vmem:[%s4 + $0x8] sm:$0xff]
  %v110 = vld [vmem:[%s4 + $0x10] sm:$0xff]
  %v111 = vld [vmem:[%s4 + $0x18] sm:$0xff]
  %v112 = vld [vmem:[%s4 + $0x20] sm:$0xff]
  %v113 = vld [vmem:[%s4 + $0x28] sm:$0xff]
  %v114 = vld [vmem:[%s4 + $0x30] sm:$0xff]
  %v115 = vld [vmem:[%s4 + $0x38] sm:$0xff]
  %v116 = vld [vmem:[%s4 + $0x40] sm:$0xff]
  %v117 = vld [vmem:[%s4 + $0x48] sm:$0xff]
  %v118 = vld [vmem:[%s4 + $0x50] sm:$0xff]
  %v119 = vld [vmem:[%s4 + $0x58] sm:$0xff]
  %v120 = vld [vmem:[%s4 + $0x60] sm:$0xff]
  %v121 = vld [vmem:[%s4 + $0x68] sm:$0xff]
  %v122 = vld [vmem:[%s4 + $0x70] sm:$0xff]
  %v123 = vld [vmem:[%s4 + $0x78] sm:$0xff]
  %v124 = vld [vmem:[%s4 + $0x80] sm:$0xff]
  %v125 = vld [vmem:[%s4 + $0x88] sm:$0xff]
  %v126 = vld [vmem:[%s4 + $0x90] sm:$0xff]
  %v127 = vld [vmem:[%s4 + $0x98] sm:$0xff]
  %v128 = vld [vmem:[%s4 + $0xa0] sm:$0xff]
  %v129 = vld [vmem:[%s4 + $0xa8] sm:$0xff]
  %v130 = vld [vmem:[%s4 + $0xb0] sm:$0xff]
  %v131 = vld [vmem:[%s4 + $0xb8] sm:$0xff]
  %v132 = vld [vmem:[%s4 + $0xc0] sm:$0xff]
  %v133 = vld [vmem:[%s4 + $0xc8] sm:$0xff]
  %v134 = vld [vmem:[%s4 + $0xd0] sm:$0xff]
  %v135 = vld [vmem:[%s4 + $0xd8] sm:$0xff]
  %v136 = vld [vmem:[%s4 + $0xe0] sm:$0xff]
  %v137 = vld [vmem:[%s4 + $0xe8] sm:$0xff]
  %v138 = vld [vmem:[%s4 + $0xf0] sm:$0xff]
  %v139 = vld [vmem:[%s4 + $0xf8] sm:$0xff]
  %v140 = vld [vmem:[%s5] sm:$0xf]
  %v142 = vlaneseq
  %v143 = vshrl.u32 %v142, 7
  %v144 = vsub.s32 0, %v143
  %v145 = vrot.slane %v140, %v144
  %v146 = vlaneseq
  %v147 = vshrl.u32 %v146, 7
  %v148 = vsub.s32 1, %v147
  %v149 = vrot.slane %v140, %v148
  %v150 = vlaneseq
  %v151 = vshrl.u32 %v150, 7
  %v152 = vsub.s32 2, %v151
  %v153 = vrot.slane %v140, %v152
  %v154 = vlaneseq
  %v155 = vshrl.u32 %v154, 7
  %v156 = vsub.s32 3, %v155
  %v157 = vrot.slane %v140, %v156
  %v164 = vunpack.c.l.b16 %v106
  %v165 = vunpack.c.l.b16 %v107
  %v166 = vpack.c.b16 %v165, %v164
  %v200 = vunpack.c.l.b16 %v108
  %v201 = vunpack.c.h.b16 %v108
  %v202 = vunpack.c.l.b16 %v109
  %v203 = vunpack.c.h.b16 %v109
  %v204 = vunpack.c.l.b16 %v110
  %v205 = vunpack.c.h.b16 %v110
  %v206 = vunpack.c.l.b16 %v111
  %v207 = vunpack.c.h.b16 %v111
  %v208 = vunpack.c.l.b16 %v112
  %v209 = vunpack.c.h.b16 %v112
  %v210 = vunpack.c.l.b16 %v113
  %v211 = vunpack.c.h.b16 %v113
  %v212 = vunpack.c.l.b16 %v114
  %v213 = vunpack.c.h.b16 %v114
  %v214 = vunpack.c.l.b16 %v115
  %v215 = vunpack.c.h.b16 %v115
  %v216 = vunpack.c.l.b16 %v116
  %v217 = vunpack.c.h.b16 %v116
  %v218 = vunpack.c.l.b16 %v117
  %v219 = vunpack.c.h.b16 %v117
  %v220 = vunpack.c.l.b16 %v118
  %v221 = vunpack.c.h.b16 %v118
  %v222 = vunpack.c.l.b16 %v119
  %v223 = vunpack.c.h.b16 %v119
  %v224 = vunpack.c.l.b16 %v120
  %v225 = vunpack.c.h.b16 %v120
  %v226 = vunpack.c.l.b16 %v121
  %v227 = vunpack.c.h.b16 %v121
  %v228 = vunpack.c.l.b16 %v122
  %v229 = vunpack.c.h.b16 %v122
  %v230 = vunpack.c.l.b16 %v123
  %v231 = vunpack.c.h.b16 %v123
  %v232 = vunpack.c.l.b16 %v124
  %v233 = vunpack.c.h.b16 %v124
  %v234 = vunpack.c.l.b16 %v125
  %v235 = vunpack.c.h.b16 %v125
  %v236 = vunpack.c.l.b16 %v126
  %v237 = vunpack.c.h.b16 %v126
  %v238 = vunpack.c.l.b16 %v127
  %v239 = vunpack.c.h.b16 %v127
  %v240 = vunpack.c.l.b16 %v128
  %v241 = vunpack.c.h.b16 %v128
  %v242 = vunpack.c.l.b16 %v129
  %v243 = vunpack.c.h.b16 %v129
  %v244 = vunpack.c.l.b16 %v130
  %v245 = vunpack.c.h.b16 %v130
  %v246 = vunpack.c.l.b16 %v131
  %v247 = vunpack.c.h.b16 %v131
  %v248 = vunpack.c.l.b16 %v132
  %v249 = vunpack.c.h.b16 %v132
  %v250 = vunpack.c.l.b16 %v133
  %v251 = vunpack.c.h.b16 %v133
  %v252 = vunpack.c.l.b16 %v134
  %v253 = vunpack.c.h.b16 %v134
  %v254 = vunpack.c.l.b16 %v135
  %v255 = vunpack.c.h.b16 %v135
  %v256 = vunpack.c.l.b16 %v136
  %v257 = vunpack.c.h.b16 %v136
  %v258 = vunpack.c.l.b16 %v137
  %v259 = vunpack.c.h.b16 %v137
  %v260 = vunpack.c.l.b16 %v138
  %v261 = vunpack.c.h.b16 %v138
  %v262 = vunpack.c.l.b16 %v139
  %v263 = vunpack.c.h.b16 %v139
  %v264 = vpack.c.b16 %v204, %v200
  %v265 = vpack.c.b16 %v205, %v201
  %v266 = vpack.c.b16 %v206, %v202
  %v267 = vpack.c.b16 %v207, %v203
  %v268 = vpack.c.b16 %v212, %v208
  %v269 = vpack.c.b16 %v213, %v209
  %v270 = vpack.c.b16 %v214, %v210
  %v271 = vpack.c.b16 %v215, %v211
  %v272 = vpack.c.b16 %v220, %v216
  %v273 = vpack.c.b16 %v221, %v217
  %v274 = vpack.c.b16 %v222, %v218
  %v275 = vpack.c.b16 %v223, %v219
  %v276 = vpack.c.b16 %v228, %v224
  %v277 = vpack.c.b16 %v229, %v225
  %v278 = vpack.c.b16 %v230, %v226
  %v279 = vpack.c.b16 %v231, %v227
  %v280 = vpack.c.b16 %v236, %v232
  %v281 = vpack.c.b16 %v237, %v233
  %v282 = vpack.c.b16 %v238, %v234
  %v283 = vpack.c.b16 %v239, %v235
  %v284 = vpack.c.b16 %v244, %v240
  %v285 = vpack.c.b16 %v245, %v241
  %v286 = vpack.c.b16 %v246, %v242
  %v287 = vpack.c.b16 %v247, %v243
  %v288 = vpack.c.b16 %v252, %v248
  %v289 = vpack.c.b16 %v253, %v249
  %v290 = vpack.c.b16 %v254, %v250
  %v291 = vpack.c.b16 %v255, %v251
  %v292 = vpack.c.b16 %v260, %v256
  %v293 = vpack.c.b16 %v261, %v257
  %v294 = vpack.c.b16 %v262, %v258
  %v295 = vpack.c.b16 %v263, %v259
  %328 = vmatprep.subr.bf16.mxu0 %v293
  %329 = vmatpush1.bf16.msra.mxu0 %v292
  %330 = vmatprep.subr.bf16.mxu0 %v289
  %331 = vmatpush1.bf16.msra.mxu0 %v288
  %332 = vmatprep.subr.bf16.mxu0 %v285
  %333 = vmatpush1.bf16.msra.mxu0 %v284
  %334 = vmatprep.subr.bf16.mxu0 %v281
  %335 = vmatpush1.bf16.msra.mxu0 %v280
  %336 = vmatprep.subr.bf16.mxu0 %v277
  %337 = vmatpush1.bf16.msra.mxu0 %v276
  %338 = vmatprep.subr.bf16.mxu0 %v273
  %339 = vmatpush1.bf16.msra.mxu0 %v272
  %340 = vmatprep.subr.bf16.mxu0 %v269
  %341 = vmatpush1.bf16.msra.mxu0 %v268
  %342 = vmatprep.subr.bf16.mxu0 %v265
  %343 = vmatpush1.bf16.msra.mxu0 %v264
  %344 = vmatprep.subr.bf16.mxu0 0
  %345 = vmatpush2.bf16.msra.mxu0 0
  %346 = vmatprep.subr.bf16.mxu0 0
  %347 = vmatpush2.bf16.msra.mxu0 0
  %348 = vmatprep.subr.bf16.mxu0 0
  %349 = vmatpush2.bf16.msra.mxu0 0
  %350 = vmatprep.subr.bf16.mxu0 0
  %351 = vmatpush2.bf16.msra.mxu0 0
  %352 = vmatprep.subr.bf16.mxu0 0
  %353 = vmatpush2.bf16.msra.mxu0 0
  %354 = vmatprep.subr.bf16.mxu0 0
  %355 = vmatpush2.bf16.msra.mxu0 0
  %356 = vmatprep.subr.bf16.mxu0 0
  %357 = vmatpush2.bf16.msra.mxu0 0
  %358 = vmatprep.subr.bf16.mxu0 0
  %359 = vmatpush2.bf16.msra.mxu0 0
  %360 = vmatprep.mubr.bf16.mxu0 0
  %361 = vmatmul.mubr.bf16.gmra.mxu0 %v166
  %v362 = vpop.f32.mrf.mxu0
  %v363 = vadd.f32 %v145, %v362
  %v364 = vpop.f32.mrf.mxu0
  %v365 = vadd.f32 %v149, %v364
  %v366 = vpop.f32.mrf.mxu0
  %v367 = vadd.f32 %v145, %v366
  %v368 = vpop.f32.mrf.mxu0
  %v369 = vadd.f32 %v149, %v368
  %370 = vdwg.mxu0
  %371 = vmatprep.subr.bf16.mxu0 %v295
  %372 = vmatpush1.bf16.msra.mxu0 %v294
  %373 = vmatprep.subr.bf16.mxu0 %v291
  %374 = vmatpush1.bf16.msra.mxu0 %v290
  %375 = vmatprep.subr.bf16.mxu0 %v287
  %376 = vmatpush1.bf16.msra.mxu0 %v286
  %377 = vmatprep.subr.bf16.mxu0 %v283
  %378 = vmatpush1.bf16.msra.mxu0 %v282
  %379 = vmatprep.subr.bf16.mxu0 %v279
  %380 = vmatpush1.bf16.msra.mxu0 %v278
  %381 = vmatprep.subr.bf16.mxu0 %v275
  %382 = vmatpush1.bf16.msra.mxu0 %v274
  %383 = vmatprep.subr.bf16.mxu0 %v271
  %384 = vmatpush1.bf16.msra.mxu0 %v270
  %385 = vmatprep.subr.bf16.mxu0 %v267
  %386 = vmatpush1.bf16.msra.mxu0 %v266
  %387 = vmatprep.subr.bf16.mxu0 0
  %388 = vmatpush2.bf16.msra.mxu0 0
  %389 = vmatprep.subr.bf16.mxu0 0
  %390 = vmatpush2.bf16.msra.mxu0 0
  %391 = vmatprep.subr.bf16.mxu0 0
  %392 = vmatpush2.bf16.msra.mxu0 0
  %393 = vmatprep.subr.bf16.mxu0 0
  %394 = vmatpush2.bf16.msra.mxu0 0
  %395 = vmatprep.subr.bf16.mxu0 0
  %396 = vmatpush2.bf16.msra.mxu0 0
  %397 = vmatprep.subr.bf16.mxu0 0
  %398 = vmatpush2.bf16.msra.mxu0 0
  %399 = vmatprep.subr.bf16.mxu0 0
  %400 = vmatpush2.bf16.msra.mxu0 0
  %401 = vmatprep.subr.bf16.mxu0 0
  %402 = vmatpush2.bf16.msra.mxu0 0
  %403 = vmatprep.mubr.bf16.mxu0 0
  %404 = vmatmul.mubr.bf16.gmra.mxu0 %v166
  %v405 = vpop.f32.mrf.mxu0
  %v406 = vadd.f32 %v153, %v405
  %v407 = vpop.f32.mrf.mxu0
  %v408 = vadd.f32 %v157, %v407
  %v409 = vpop.f32.mrf.mxu0
  %v410 = vadd.f32 %v153, %v409
  %v411 = vpop.f32.mrf.mxu0
  %v412 = vadd.f32 %v157, %v411
  %413 = vdwg.mxu0
  %v414 = vld [vmem:[#allocation3] sm:$0xff]
  %v415 = vld [vmem:[#allocation3 + $0x8] sm:$0xff]
  %v416 = vmul.f32 %v363, 0.5
  %v417 = vmul.f32 %v365, 0.5
  %v418 = vmul.f32 %v406, 0.5
  %v419 = vmul.f32 %v408, 0.5
  %v420 = vmul.f32 %v367, 0.5
  %v421 = vmul.f32 %v369, 0.5
  %v422 = vmul.f32 %v410, 0.5
  %v423 = vmul.f32 %v412, 0.5
  %v424 = vmul.f32 %v363, 0.70710677
  %v425 = vmul.f32 %v365, 0.70710677
  %v426 = vmul.f32 %v406, 0.70710677
  %v427 = vmul.f32 %v408, 0.70710677
  %v428 = vmul.f32 %v367, 0.70710677
  %v429 = vmul.f32 %v369, 0.70710677
  %v430 = vmul.f32 %v410, 0.70710677
  %v431 = vmul.f32 %v412, 0.70710677
  %v432 = vand.u32 2147483647, %v424
  %v433 = vand.u32 2147483647, %v425
  %v434 = vand.u32 2147483647, %v426
  %v435 = vand.u32 2147483647, %v427
  %v436 = vand.u32 2147483647, %v428
  %v437 = vand.u32 2147483647, %v429
  %v438 = vand.u32 2147483647, %v430
  %v439 = vand.u32 2147483647, %v431
  %v440 = vmul.f32 %v432, 0.3275911
  %v441 = vmul.f32 %v433, 0.3275911
  %v442 = vmul.f32 %v434, 0.3275911
  %v443 = vmul.f32 %v435, 0.3275911
  %v444 = vmul.f32 %v436, 0.3275911
  %v445 = vmul.f32 %v437, 0.3275911
  %v446 = vmul.f32 %v438, 0.3275911
  %v447 = vmul.f32 %v439, 0.3275911
  %v448 = vadd.f32 %v440, 1.0
  %v449 = vadd.f32 %v441, 1.0
  %v450 = vadd.f32 %v442, 1.0
  %v451 = vadd.f32 %v443, 1.0
  %v452 = vadd.f32 %v444, 1.0
  %v453 = vadd.f32 %v445, 1.0
  %v454 = vadd.f32 %v446, 1.0
  %v455 = vadd.f32 %v447, 1.0
  %v456 = vrcp.pop %v448
  %v457 = vmul.f32 1.0, %v456
  %v458 = vrcp.pop %v449
  %v459 = vmul.f32 1.0, %v458
  %v460 = vrcp.pop %v450
  %v461 = vmul.f32 1.0, %v460
  %v462 = vrcp.pop %v451
  %v463 = vmul.f32 1.0, %v462
  %v464 = vrcp.pop %v452
  %v465 = vmul.f32 1.0, %v464
  %v466 = vrcp.pop %v453
  %v467 = vmul.f32 1.0, %v466
  %v468 = vrcp.pop %v454
  %v469 = vmul.f32 1.0, %v468
  %v470 = vrcp.pop %v455
  %v471 = vmul.f32 1.0, %v470
  %v472 = vmul.f32 %v457, 1.0614054
  %v473 = vmul.f32 %v459, 1.0614054
  %v474 = vmul.f32 %v461, 1.0614054
  %v475 = vmul.f32 %v463, 1.0614054
  %v476 = vmul.f32 %v465, 1.0614054
  %v477 = vmul.f32 %v467, 1.0614054
  %v478 = vmul.f32 %v469, 1.0614054
  %v479 = vmul.f32 %v471, 1.0614054
  %v480 = vadd.f32 %v472, -1.4531521
  %v481 = vadd.f32 %v473, -1.4531521
  %v482 = vadd.f32 %v474, -1.4531521
  %v483 = vadd.f32 %v475, -1.4531521
  %v484 = vadd.f32 %v476, -1.4531521
  %v485 = vadd.f32 %v477, -1.4531521
  %v486 = vadd.f32 %v478, -1.4531521
  %v487 = vadd.f32 %v479, -1.4531521
  %v488 = vmul.f32 %v480, %v457
  %v489 = vmul.f32 %v481, %v459
  %v490 = vmul.f32 %v482, %v461
  %v491 = vmul.f32 %v483, %v463
  %v492 = vmul.f32 %v484, %v465
  %v493 = vmul.f32 %v485, %v467
  %v494 = vmul.f32 %v486, %v469
  %v495 = vmul.f32 %v487, %v471
  %v496 = vadd.f32 %v488, 1.4214138
  %v497 = vadd.f32 %v489, 1.4214138
  %v498 = vadd.f32 %v490, 1.4214138
  %v499 = vadd.f32 %v491, 1.4214138
  %v500 = vadd.f32 %v492, 1.4214138
  %v501 = vadd.f32 %v493, 1.4214138
  %v502 = vadd.f32 %v494, 1.4214138
  %v503 = vadd.f32 %v495, 1.4214138
  %v504 = vmul.f32 %v496, %v457
  %v505 = vmul.f32 %v497, %v459
  %v506 = vmul.f32 %v498, %v461
  %v507 = vmul.f32 %v499, %v463
  %v508 = vmul.f32 %v500, %v465
  %v509 = vmul.f32 %v501, %v467
  %v510 = vmul.f32 %v502, %v469
  %v511 = vmul.f32 %v503, %v471
  %v512 = vadd.f32 %v504, -0.28449672
  %v513 = vadd.f32 %v505, -0.28449672
  %v514 = vadd.f32 %v506, -0.28449672
  %v515 = vadd.f32 %v507, -0.28449672
  %v516 = vadd.f32 %v508, -0.28449672
  %v517 = vadd.f32 %v509, -0.28449672
  %v518 = vadd.f32 %v510, -0.28449672
  %v519 = vadd.f32 %v511, -0.28449672
  %v520 = vmul.f32 %v512, %v457
  %v521 = vmul.f32 %v513, %v459
  %v522 = vmul.f32 %v514, %v461
  %v523 = vmul.f32 %v515, %v463
  %v524 = vmul.f32 %v516, %v465
  %v525 = vmul.f32 %v517, %v467
  %v526 = vmul.f32 %v518, %v469
  %v527 = vmul.f32 %v519, %v471
  %v528 = vadd.f32 %v520, 0.2548296
  %v529 = vadd.f32 %v521, 0.2548296
  %v530 = vadd.f32 %v522, 0.2548296
  %v531 = vadd.f32 %v523, 0.2548296
  %v532 = vadd.f32 %v524, 0.2548296
  %v533 = vadd.f32 %v525, 0.2548296
  %v534 = vadd.f32 %v526, 0.2548296
  %v535 = vadd.f32 %v527, 0.2548296
  %v536 = vmul.f32 %v528, %v457
  %v537 = vmul.f32 %v529, %v459
  %v538 = vmul.f32 %v530, %v461
  %v539 = vmul.f32 %v531, %v463
  %v540 = vmul.f32 %v532, %v465
  %v541 = vmul.f32 %v533, %v467
  %v542 = vmul.f32 %v534, %v469
  %v543 = vmul.f32 %v535, %v471
  %v544 = vsub.f32 0.0, %v432
  %v545 = vsub.f32 0.0, %v433
  %v546 = vsub.f32 0.0, %v434
  %v547 = vsub.f32 0.0, %v435
  %v548 = vsub.f32 0.0, %v436
  %v549 = vsub.f32 0.0, %v437
  %v550 = vsub.f32 0.0, %v438
  %v551 = vsub.f32 0.0, %v439
  %v552 = vmul.f32 %v544, %v432
  %v553 = vmul.f32 %v545, %v433
  %v554 = vmul.f32 %v546, %v434
  %v555 = vmul.f32 %v547, %v435
  %v556 = vmul.f32 %v548, %v436
  %v557 = vmul.f32 %v549, %v437
  %v558 = vmul.f32 %v550, %v438
  %v559 = vmul.f32 %v551, %v439
  %v560 = vmul.f32 %v552, 1.442695
  %v561 = vpow.pop %v560
  %v562 = vmul.f32 %v553, 1.442695
  %v563 = vpow.pop %v562
  %v564 = vmul.f32 %v554, 1.442695
  %v565 = vpow.pop %v564
  %v566 = vmul.f32 %v555, 1.442695
  %v567 = vpow.pop %v566
  %v568 = vmul.f32 %v556, 1.442695
  %v569 = vpow.pop %v568
  %v570 = vmul.f32 %v557, 1.442695
  %v571 = vpow.pop %v570
  %v572 = vmul.f32 %v558, 1.442695
  %v573 = vpow.pop %v572
  %v574 = vmul.f32 %v559, 1.442695
  %v575 = vpow.pop %v574
  %v576 = vmul.f32 %v536, %v561
  %v577 = vmul.f32 %v537, %v563
  %v578 = vmul.f32 %v538, %v565
  %v579 = vmul.f32 %v539, %v567
  %v580 = vmul.f32 %v540, %v569
  %v581 = vmul.f32 %v541, %v571
  %v582 = vmul.f32 %v542, %v573
  %v583 = vmul.f32 %v543, %v575
  %v584 = vsub.f32 1.0, %v576
  %v585 = vsub.f32 1.0, %v577
  %v586 = vsub.f32 1.0, %v578
  %v587 = vsub.f32 1.0, %v579
  %v588 = vsub.f32 1.0, %v580
  %v589 = vsub.f32 1.0, %v581
  %v590 = vsub.f32 1.0, %v582
  %v591 = vsub.f32 1.0, %v583
  %vm592 = vcmp.ge.f32.partialorder %v424, 0.0
  %vm593 = vcmp.ge.f32.partialorder %v425, 0.0
  %vm594 = vcmp.ge.f32.partialorder %v426, 0.0
  %vm595 = vcmp.ge.f32.partialorder %v427, 0.0
  %vm596 = vcmp.ge.f32.partialorder %v428, 0.0
  %vm597 = vcmp.ge.f32.partialorder %v429, 0.0
  %vm598 = vcmp.ge.f32.partialorder %v430, 0.0
  %vm599 = vcmp.ge.f32.partialorder %v431, 0.0
  %v600 = vsub.f32 0.0, %v584
  %v601 = vsub.f32 0.0, %v585
  %v602 = vsub.f32 0.0, %v586
  %v603 = vsub.f32 0.0, %v587
  %v604 = vsub.f32 0.0, %v588
  %v605 = vsub.f32 0.0, %v589
  %v606 = vsub.f32 0.0, %v590
  %v607 = vsub.f32 0.0, %v591
  %v608 = vsel %vm592, %v584, %v600
  %v609 = vsel %vm593, %v585, %v601
  %v610 = vsel %vm594, %v586, %v602
  %v611 = vsel %vm595, %v587, %v603
  %v612 = vsel %vm596, %v588, %v604
  %v613 = vsel %vm597, %v589, %v605
  %v614 = vsel %vm598, %v590, %v606
  %v615 = vsel %vm599, %v591, %v607
  %v616 = vadd.f32 %v608, 1.0
  %v617 = vadd.f32 %v609, 1.0
  %v618 = vadd.f32 %v610, 1.0
  %v619 = vadd.f32 %v611, 1.0
  %v620 = vadd.f32 %v612, 1.0
  %v621 = vadd.f32 %v613, 1.0
  %v622 = vadd.f32 %v614, 1.0
  %v623 = vadd.f32 %v615, 1.0
  %v624 = vmul.f32 %v416, %v616
  %v625 = vmul.f32 %v417, %v617
  %v626 = vmul.f32 %v418, %v618
  %v627 = vmul.f32 %v419, %v619
  %v628 = vmul.f32 %v420, %v620
  %v629 = vmul.f32 %v421, %v621
  %v630 = vmul.f32 %v422, %v622
  %v631 = vmul.f32 %v423, %v623
  %v632 = vpack.c.bf16 %v628, %v624
  %v633 = vpack.c.bf16 %v629, %v625
  %v634 = vpack.c.bf16 %v630, %v626
  %v635 = vpack.c.bf16 %v631, %v627
  %v636 = vld [vmem:[%s6] sm:$0xf]
  %v637 = vld [vmem:[%s6 + $0x4] sm:$0xf]
  %v638 = vld [vmem:[%s6 + $0x8] sm:$0xf]
  %v639 = vld [vmem:[%s6 + $0xc] sm:$0xf]
  %v640 = vld [vmem:[%s6 + $0x10] sm:$0xf]
  %v641 = vld [vmem:[%s6 + $0x14] sm:$0xf]
  %v642 = vld [vmem:[%s6 + $0x18] sm:$0xf]
  %v643 = vld [vmem:[%s6 + $0x1c] sm:$0xf]
  %v644 = vld [vmem:[%s6 + $0x20] sm:$0xf]
  %v645 = vld [vmem:[%s6 + $0x24] sm:$0xf]
  %v646 = vld [vmem:[%s6 + $0x28] sm:$0xf]
  %v647 = vld [vmem:[%s6 + $0x2c] sm:$0xf]
  %v648 = vld [vmem:[%s6 + $0x30] sm:$0xf]
  %v649 = vld [vmem:[%s6 + $0x34] sm:$0xf]
  %v650 = vld [vmem:[%s6 + $0x38] sm:$0xf]
  %v651 = vld [vmem:[%s6 + $0x3c] sm:$0xf]
  %v652 = vld [vmem:[%s6 + $0x40] sm:$0xf]
  %v653 = vld [vmem:[%s6 + $0x44] sm:$0xf]
  %v654 = vld [vmem:[%s6 + $0x48] sm:$0xf]
  %v655 = vld [vmem:[%s6 + $0x4c] sm:$0xf]
  %v656 = vld [vmem:[%s6 + $0x50] sm:$0xf]
  %v657 = vld [vmem:[%s6 + $0x54] sm:$0xf]
  %v658 = vld [vmem:[%s6 + $0x58] sm:$0xf]
  %v659 = vld [vmem:[%s6 + $0x5c] sm:$0xf]
  %v660 = vld [vmem:[%s6 + $0x60] sm:$0xf]
  %v661 = vld [vmem:[%s6 + $0x64] sm:$0xf]
  %v662 = vld [vmem:[%s6 + $0x68] sm:$0xf]
  %v663 = vld [vmem:[%s6 + $0x6c] sm:$0xf]
  %v664 = vld [vmem:[%s6 + $0x70] sm:$0xf]
  %v665 = vld [vmem:[%s6 + $0x74] sm:$0xf]
  %v666 = vld [vmem:[%s6 + $0x78] sm:$0xf]
  %v667 = vld [vmem:[%s6 + $0x7c] sm:$0xf]
  %v668 = vld [vmem:[%s6 + $0x80] sm:$0xf]
  %v669 = vld [vmem:[%s6 + $0x84] sm:$0xf]
  %v670 = vld [vmem:[%s6 + $0x88] sm:$0xf]
  %v671 = vld [vmem:[%s6 + $0x8c] sm:$0xf]
  %v672 = vld [vmem:[%s6 + $0x90] sm:$0xf]
  %v673 = vld [vmem:[%s6 + $0x94] sm:$0xf]
  %v674 = vld [vmem:[%s6 + $0x98] sm:$0xf]
  %v675 = vld [vmem:[%s6 + $0x9c] sm:$0xf]
  %v676 = vld [vmem:[%s6 + $0xa0] sm:$0xf]
  %v677 = vld [vmem:[%s6 + $0xa4] sm:$0xf]
  %v678 = vld [vmem:[%s6 + $0xa8] sm:$0xf]
  %v679 = vld [vmem:[%s6 + $0xac] sm:$0xf]
  %v680 = vld [vmem:[%s6 + $0xb0] sm:$0xf]
  %v681 = vld [vmem:[%s6 + $0xb4] sm:$0xf]
  %v682 = vld [vmem:[%s6 + $0xb8] sm:$0xf]
  %v683 = vld [vmem:[%s6 + $0xbc] sm:$0xf]
  %v684 = vld [vmem:[%s6 + $0xc0] sm:$0xf]
  %v685 = vld [vmem:[%s6 + $0xc4] sm:$0xf]
  %v686 = vld [vmem:[%s6 + $0xc8] sm:$0xf]
  %v687 = vld [vmem:[%s6 + $0xcc] sm:$0xf]
  %v688 = vld [vmem:[%s6 + $0xd0] sm:$0xf]
  %v689 = vld [vmem:[%s6 + $0xd4] sm:$0xf]
  %v690 = vld [vmem:[%s6 + $0xd8] sm:$0xf]
  %v691 = vld [vmem:[%s6 + $0xdc] sm:$0xf]
  %v692 = vld [vmem:[%s6 + $0xe0] sm:$0xf]
  %v693 = vld [vmem:[%s6 + $0xe4] sm:$0xf]
  %v694 = vld [vmem:[%s6 + $0xe8] sm:$0xf]
  %v695 = vld [vmem:[%s6 + $0xec] sm:$0xf]
  %v696 = vld [vmem:[%s6 + $0xf0] sm:$0xf]
  %v697 = vld [vmem:[%s6 + $0xf4] sm:$0xf]
  %v698 = vld [vmem:[%s6 + $0xf8] sm:$0xf]
  %v699 = vld [vmem:[%s6 + $0xfc] sm:$0xf]
  %v764 = vunpack.c.l.b16 %v636
  %v765 = vunpack.c.l.b16 %v637
  %v766 = vunpack.c.l.b16 %v638
  %v767 = vunpack.c.l.b16 %v639
  %v768 = vunpack.c.l.b16 %v640
  %v769 = vunpack.c.l.b16 %v641
  %v770 = vunpack.c.l.b16 %v642
  %v771 = vunpack.c.l.b16 %v643
  %v772 = vunpack.c.l.b16 %v644
  %v773 = vunpack.c.l.b16 %v645
  %v774 = vunpack.c.l.b16 %v646
  %v775 = vunpack.c.l.b16 %v647
  %v776 = vunpack.c.l.b16 %v648
  %v777 = vunpack.c.l.b16 %v649
  %v778 = vunpack.c.l.b16 %v650
  %v779 = vunpack.c.l.b16 %v651
  %v780 = vunpack.c.l.b16 %v652
  %v781 = vunpack.c.l.b16 %v653
  %v782 = vunpack.c.l.b16 %v654
  %v783 = vunpack.c.l.b16 %v655
  %v784 = vunpack.c.l.b16 %v656
  %v785 = vunpack.c.l.b16 %v657
  %v786 = vunpack.c.l.b16 %v658
  %v787 = vunpack.c.l.b16 %v659
  %v788 = vunpack.c.l.b16 %v660
  %v789 = vunpack.c.l.b16 %v661
  %v790 = vunpack.c.l.b16 %v662
  %v791 = vunpack.c.l.b16 %v663
  %v792 = vunpack.c.l.b16 %v664
  %v793 = vunpack.c.l.b16 %v665
  %v794 = vunpack.c.l.b16 %v666
  %v795 = vunpack.c.l.b16 %v667
  %v796 = vunpack.c.l.b16 %v668
  %v797 = vunpack.c.l.b16 %v669
  %v798 = vunpack.c.l.b16 %v670
  %v799 = vunpack.c.l.b16 %v671
  %v800 = vunpack.c.l.b16 %v672
  %v801 = vunpack.c.l.b16 %v673
  %v802 = vunpack.c.l.b16 %v674
  %v803 = vunpack.c.l.b16 %v675
  %v804 = vunpack.c.l.b16 %v676
  %v805 = vunpack.c.l.b16 %v677
  %v806 = vunpack.c.l.b16 %v678
  %v807 = vunpack.c.l.b16 %v679
  %v808 = vunpack.c.l.b16 %v680
  %v809 = vunpack.c.l.b16 %v681
  %v810 = vunpack.c.l.b16 %v682
  %v811 = vunpack.c.l.b16 %v683
  %v812 = vunpack.c.l.b16 %v684
  %v813 = vunpack.c.l.b16 %v685
  %v814 = vunpack.c.l.b16 %v686
  %v815 = vunpack.c.l.b16 %v687
  %v816 = vunpack.c.l.b16 %v688
  %v817 = vunpack.c.l.b16 %v689
  %v818 = vunpack.c.l.b16 %v690
  %v819 = vunpack.c.l.b16 %v691
  %v820 = vunpack.c.l.b16 %v692
  %v821 = vunpack.c.l.b16 %v693
  %v822 = vunpack.c.l.b16 %v694
  %v823 = vunpack.c.l.b16 %v695
  %v824 = vunpack.c.l.b16 %v696
  %v825 = vunpack.c.l.b16 %v697
  %v826 = vunpack.c.l.b16 %v698
  %v827 = vunpack.c.l.b16 %v699
  %v828 = vpack.c.b16 %v765, %v764
  %v829 = vpack.c.b16 %v767, %v766
  %v830 = vpack.c.b16 %v769, %v768
  %v831 = vpack.c.b16 %v771, %v770
  %v832 = vpack.c.b16 %v773, %v772
  %v833 = vpack.c.b16 %v775, %v774
  %v834 = vpack.c.b16 %v777, %v776
  %v835 = vpack.c.b16 %v779, %v778
  %v836 = vpack.c.b16 %v781, %v780
  %v837 = vpack.c.b16 %v783, %v782
  %v838 = vpack.c.b16 %v785, %v784
  %v839 = vpack.c.b16 %v787, %v786
  %v840 = vpack.c.b16 %v789, %v788
  %v841 = vpack.c.b16 %v791, %v790
  %v842 = vpack.c.b16 %v793, %v792
  %v843 = vpack.c.b16 %v795, %v794
  %v844 = vpack.c.b16 %v797, %v796
  %v845 = vpack.c.b16 %v799, %v798
  %v846 = vpack.c.b16 %v801, %v800
  %v847 = vpack.c.b16 %v803, %v802
  %v848 = vpack.c.b16 %v805, %v804
  %v849 = vpack.c.b16 %v807, %v806
  %v850 = vpack.c.b16 %v809, %v808
  %v851 = vpack.c.b16 %v811, %v810
  %v852 = vpack.c.b16 %v813, %v812
  %v853 = vpack.c.b16 %v815, %v814
  %v854 = vpack.c.b16 %v817, %v816
  %v855 = vpack.c.b16 %v819, %v818
  %v856 = vpack.c.b16 %v821, %v820
  %v857 = vpack.c.b16 %v823, %v822
  %v858 = vpack.c.b16 %v825, %v824
  %v859 = vpack.c.b16 %v827, %v826
  %892 = vmatprep.subr.bf16.mxu0 0
  %893 = vmatpush1.bf16.msra.mxu0 %v835
  %894 = vmatprep.subr.bf16.mxu0 0
  %895 = vmatpush1.bf16.msra.mxu0 %v834
  %896 = vmatprep.subr.bf16.mxu0 0
  %897 = vmatpush1.bf16.msra.mxu0 %v833
  %898 = vmatprep.subr.bf16.mxu0 0
  %899 = vmatpush1.bf16.msra.mxu0 %v832
  %900 = vmatprep.subr.bf16.mxu0 0
  %901 = vmatpush1.bf16.msra.mxu0 %v831
  %902 = vmatprep.subr.bf16.mxu0 0
  %903 = vmatpush1.bf16.msra.mxu0 %v830
  %904 = vmatprep.subr.bf16.mxu0 0
  %905 = vmatpush1.bf16.msra.mxu0 %v829
  %906 = vmatprep.subr.bf16.mxu0 0
  %907 = vmatpush1.bf16.msra.mxu0 %v828
  %908 = vmatprep.subr.bf16.mxu0 0
  %909 = vmatpush2.bf16.msra.mxu0 %v843
  %910 = vmatprep.subr.bf16.mxu0 0
  %911 = vmatpush2.bf16.msra.mxu0 %v842
  %912 = vmatprep.subr.bf16.mxu0 0
  %913 = vmatpush2.bf16.msra.mxu0 %v841
  %914 = vmatprep.subr.bf16.mxu0 0
  %915 = vmatpush2.bf16.msra.mxu0 %v840
  %916 = vmatprep.subr.bf16.mxu0 0
  %917 = vmatpush2.bf16.msra.mxu0 %v839
  %918 = vmatprep.subr.bf16.mxu0 0
  %919 = vmatpush2.bf16.msra.mxu0 %v838
  %920 = vmatprep.subr.bf16.mxu0 0
  %921 = vmatpush2.bf16.msra.mxu0 %v837
  %922 = vmatprep.subr.bf16.mxu0 0
  %923 = vmatpush2.bf16.msra.mxu0 %v836
  %924 = vmatprep.mubr.bf16.mxu0 %v633
  %925 = vmatmul.mubr.bf16.gmra.mxu0 %v632
  %v926 = vpop.f32.mrf.mxu0
  %v927 = vadd.f32 0.0, %v926
  %v928 = vpop.f32.mrf.mxu0
  %v929 = vpop.f32.mrf.mxu0
  %v930 = vadd.f32 0.0, %v929
  %v931 = vpop.f32.mrf.mxu0
  %932 = vdwg.mxu0
  %933 = vmatprep.subr.bf16.mxu0 0
  %934 = vmatpush1.bf16.msra.mxu0 %v851
  %935 = vmatprep.subr.bf16.mxu0 0
  %936 = vmatpush1.bf16.msra.mxu0 %v850
  %937 = vmatprep.subr.bf16.mxu0 0
  %938 = vmatpush1.bf16.msra.mxu0 %v849
  %939 = vmatprep.subr.bf16.mxu0 0
  %940 = vmatpush1.bf16.msra.mxu0 %v848
  %941 = vmatprep.subr.bf16.mxu0 0
  %942 = vmatpush1.bf16.msra.mxu0 %v847
  %943 = vmatprep.subr.bf16.mxu0 0
  %944 = vmatpush1.bf16.msra.mxu0 %v846
  %945 = vmatprep.subr.bf16.mxu0 0
  %946 = vmatpush1.bf16.msra.mxu0 %v845
  %947 = vmatprep.subr.bf16.mxu0 0
  %948 = vmatpush1.bf16.msra.mxu0 %v844
  %949 = vmatprep.subr.bf16.mxu0 0
  %950 = vmatpush2.bf16.msra.mxu0 %v859
  %951 = vmatprep.subr.bf16.mxu0 0
  %952 = vmatpush2.bf16.msra.mxu0 %v858
  %953 = vmatprep.subr.bf16.mxu0 0
  %954 = vmatpush2.bf16.msra.mxu0 %v857
  %955 = vmatprep.subr.bf16.mxu0 0
  %956 = vmatpush2.bf16.msra.mxu0 %v856
  %957 = vmatprep.subr.bf16.mxu0 0
  %958 = vmatpush2.bf16.msra.mxu0 %v855
  %959 = vmatprep.subr.bf16.mxu0 0
  %960 = vmatpush2.bf16.msra.mxu0 %v854
  %961 = vmatprep.subr.bf16.mxu0 0
  %962 = vmatpush2.bf16.msra.mxu0 %v853
  %963 = vmatprep.subr.bf16.mxu0 0
  %964 = vmatpush2.bf16.msra.mxu0 %v852
  %965 = vmatprep.mubr.bf16.mxu0 %v635
  %966 = vmatmul.mubr.bf16.gmra.mxu0 %v634
  %v967 = vpop.f32.mrf.mxu0
  %v968 = vadd.f32 %v927, %v967
  %v969 = vpop.f32.mrf.mxu0
  %v970 = vpop.f32.mrf.mxu0
  %v971 = vadd.f32 %v930, %v970
  %v972 = vpop.f32.mrf.mxu0
  %973 = vdwg.mxu0
  %v974 = vadd.f32 %v414, %v968
  %v975 = vadd.f32 %v415, %v971
  %976 = vst [vmem:[#allocation3] sm:$0xff] %v974
  %977 = vst [vmem:[#allocation3 + $0x8] sm:$0xff] %v975
  // Predicated region
  $region38: #{s3_tokenizer_v2_forward.9} parent=0 // pred_check
    %p978 = pneg %p30
  $region39: #{s3_tokenizer_v2_forward.9} parent=0 // pred_check_branch
    %980 = sbr.rel (%p978) target = $region41
  $region40: #{s3_tokenizer_v2_forward.9} parent=0 // pred_region
    %v981 = vld [vmem:[#allocation3] sm:$0xff]
    %v982 = vld [vmem:[#allocation3 + $0x8] sm:$0xff]
    %v983 = vpack.c.bf16 %v982, %v981
    %v985 = vunpack.c.l.b16 %v983
    %v986 = vunpack.c.h.b16 %v983
    %v987 = vpack.c.b16 %v985, %v985
    %v988 = vpack.c.b16 %v986, %v986
    %991 = vst [vmem:[%s8] sm:$0xf] %v987
    %992 = vst [vmem:[%s8 + $0x4] sm:$0xf] %v988
  $region41: #{s3_tokenizer_v2_forward.9} parent=0 // pred_fallthru
    _
  // Predicated region
  $region42: #{s3_tokenizer_v2_forward.9} parent=0 // pred_check
    _
  $region43: #{s3_tokenizer_v2_forward.9} parent=0 // pred_check_branch
    %994 = sbr.rel (0) target = $region45
  $region44: #{s3_tokenizer_v2_forward.9} parent=0 // pred_region
    _
  $region45: #{s3_tokenizer_v2_forward.9} parent=0 // pred_fallthru
    _
  // Predicated region
  $region46: #{s3_tokenizer_v2_forward.9} parent=0 // pred_check
    _
  $region47: #{s3_tokenizer_v2_forward.9} parent=0 // pred_check_branch
    %996 = sbr.rel (0) target = $region49
  $region48: #{s3_tokenizer_v2_forward.9} parent=0 // pred_region
    _
  $region49: #{s3_tokenizer_v2_forward.9} parent=0 // pred_fallthru
    _

// kernel: s3_tokenizer_v2_forward.8
$region0: #{s3_tokenizer_v2_forward.8}
  #allocation0 [shape = 'u32[]', space=smem, size = 0x4, offset = 0x4, fixed_abs, tag = 'smem constant byte address 0x4 - core index']
  #allocation1 [shape = 'u32[144,128]{1,0:T(1,128)}', space=vmem, size = 0x12000, scoped, tag = 'internal scratch']
  #allocation2 [shape = 'bf16[8,128]{1,0:T(8,128)(2,1)}', space=vmem, size = 0x800, scoped, tag = 'scratch operand']
  #allocation3 [shape = 'f32[8,128]{1,0:T(8,128)}', space=vmem, size = 0x1000, scoped, tag = 'scratch operand']
  #allocation4 [shape = 'f32[38,64]{1,0:T(8,128)}', space=vmem, size = 0x5000, scoped, tag = 'scratch operand']
  %s0 = inlined_call_operand.vmem [shape: bf16[2,8,128], index: 0, kind: input, shape index: {}]
  %s1 = inlined_call_operand.vmem [shape: f32[8,64], index: 1, kind: input, shape index: {}]
  %s2 = inlined_call_operand.vmem [shape: f32[8,64], index: 2, kind: input, shape index: {}]
  %s3 = inlined_call_operand.vmem [shape: f32[2,1,8], index: 3, kind: input, shape index: {}]
  %s4 = inlined_call_operand.vmem [shape: f32[2,8,1], index: 4, kind: input, shape index: {}]
  %s5 = inlined_call_operand.vmem [shape: f32[1,128], index: 5, kind: input, shape index: {}]
  %s6 = inlined_call_operand.vmem [shape: f32[1,128], index: 6, kind: input, shape index: {}]
  %s7 = inlined_call_operand.vmem [shape: bf16[2,128,192], index: 7, kind: input, shape index: {}]
  %s8 = inlined_call_operand.vmem [shape: f32[2,1,192], index: 8, kind: input, shape index: {}]
  %s9 = inlined_call_operand.vmem [shape: bf16[2,64,128], index: 9, kind: input, shape index: {}]
  %s10 = inlined_call_operand.vmem [shape: f32[1,128], index: 10, kind: input, shape index: {}]
  %s11 = inlined_call_operand.vmem [shape: f32[2,31,64], index: 11, kind: input, shape index: {}]
  %s12 = inlined_call_operand.vmem [shape: bf16[2,8,128], index: 12, kind: output, shape index: {0}]
  %s13 = inlined_call_operand.vmem [shape: bf16[2,8,128], index: 13, kind: output, shape index: {1}]
  %14 = xla_tuple %s12, %s13
  %s15 = sld [smem:[#allocation0]]
  $region97: #{s3_tokenizer_v2_forward.8} parent=0
    _
  %s17 = ssub.s32 1, %s15
  %s18 = scalar_select 0, %s17, %s15
  loop: start=0, step=1, limit=4
  $region2: #{s3_tokenizer_v2_forward.8} parent=0 // loop_pre_header
    _
  $region3: #{s3_tokenizer_v2_forward.8} parent=0 // loop_header
    %s20 = sphi 0, %s24
    %p21 = scmp.ge.s32.totalorder %s20, 4
    %s27 = sphi 0, %s39
    %s28 = sphi 0, %s35
    %s29 = sphi 0, %s27
    %s30 = sphi 0, %s28
    %s31 = sphi 0, %s29
    %s32 = sphi 0, %s30
    %s42 = sphi 0, %s44
    %s45 = sphi 0, %s42
    %s46 = sphi 0, %s45
    %s62 = sphi 0, %s46
    %s66 = sphi 0, %s66
    %s68 = sphi 0, %s66
    %s69 = sphi 0, %s68
    %s83 = sphi 0, %s69
    %s87 = sphi 0, %s87
    %s89 = sphi 0, %s87
    %s90 = sphi 0, %s89
    %s104 = sphi 0, %s90
    %s110 = sphi 0, %s112
    %s113 = sphi 0, %s110
    %s114 = sphi 0, %s113
    %s130 = sphi 0, %s114
    %s136 = sphi 0, %s138
    %s139 = sphi 0, %s136
    %s140 = sphi 0, %s139
    %s156 = sphi 0, %s140
    %s160 = sphi 0, %s160
    %s162 = sphi 0, %s160
    %s163 = sphi 0, %s162
    %s177 = sphi 0, %s163
    %s181 = sphi 0, %s181
    %s183 = sphi 0, %s181
    %s184 = sphi 0, %s183
    %s198 = sphi 0, %s184
    %s204 = sphi 0, %s206
    %s207 = sphi 0, %s204
    %s208 = sphi 0, %s207
    %s224 = sphi 0, %s208
    %s230 = sphi 0, %s232
    %s233 = sphi 0, %s230
    %s234 = sphi 0, %s233
    %s250 = sphi 0, %s234
    %s256 = sphi 0, %s258
    %s259 = sphi 0, %s256
    %s260 = sphi 0, %s259
    %s276 = sphi 0, %s260
    %s280 = sphi 0, %s280
    %s282 = sphi 0, %s280
    %s283 = sphi 0, %s282
    %s297 = sphi 0, %s283
    %s303 = sphi 0, %s305
    %s306 = sphi 0, %s303
    %s307 = sphi 0, %s306
    %s323 = sphi 0, %s307
    %s329 = sphi 0, %s331
    %s332 = sphi 0, %s329
    %s333 = sphi 0, %s332
    %s349 = sphi 0, %s333
    %s357 = sphi 0, %s359
    %s360 = sphi 0, %s357
    %s361 = sphi 0, %s360
    %s377 = sphi 0, %s361
  $region4: #{s3_tokenizer_v2_forward.8} parent=0 // loop_header_branch
    %23 = sbr.rel (%p21) target = $region8
  $region5: #{s3_tokenizer_v2_forward.8} parent=0 // loop_body
    %s25 = ssub.s32 %s20, 1
    %s26 = ssub.s32 %s20, 2
    %s33 = sadd.s32 1, %s28
    %p34 = scmp.ge.s32.totalorder %s33, 1
    %s35 = scalar_select %p34, 0, %s33
    %s36 = sadd.s32 1, %s27
    %s37 = scalar_select %p34, %s36, %s27
    %p38 = scmp.ge.s32.totalorder %s37, 2
    %s39 = scalar_select %p38, 0, %s37
    %s40 = ssub.s32 %s27, %s39
    %p41 = scmp.eq.s32.totalorder %s40, 0
    %s43 = sadd.s32 %s42, 1
    %s44 = scalar_select %p41, %s42, %s43
    %p47 = pneg %p41
    %p48 = scmp.eq.s32.totalorder %s20, 1
    %p49 = por %p47, %p48
    %p50 = scmp.ne.s32.totalorder %s42, %s45
    %p51 = scmp.eq.s32.totalorder %s20, 0
    %p52 = por %p50, %p51
    %p53 = scmp.ne.s32.totalorder %s42, %s45
    %p54 = scmp.eq.s32.totalorder %s25, 1
    %p55 = por %p53, %p54
    %p56 = scmp.ne.s32.totalorder %s45, %s46
    %p57 = scmp.eq.s32.totalorder %s25, 0
    %p58 = por %p56, %p57
    %p59 = scmp.ne.s32.totalorder %s45, %s46
    %p60 = scmp.eq.s32.totalorder %s26, 1
    %p61 = por %p59, %p60
    %p63 = scmp.ne.s32.totalorder %s46, %s62
    %p64 = scmp.eq.s32.totalorder %s26, 0
    %p65 = por %p63, %p64
    %s67 = sadd.s32 %s66, 1
    %p70 = scmp.eq.s32.totalorder %s20, 1
    %p71 = scmp.ne.s32.totalorder %s66, %s68
    %p72 = scmp.eq.s32.totalorder %s20, 0
    %p73 = por %p71, %p72
    %p74 = scmp.ne.s32.totalorder %s66, %s68
    %p75 = scmp.eq.s32.totalorder %s25, 1
    %p76 = por %p74, %p75
    %p77 = scmp.ne.s32.totalorder %s68, %s69
    %p78 = scmp.eq.s32.totalorder %s25, 0
    %p79 = por %p77, %p78
    %p80 = scmp.ne.s32.totalorder %s68, %s69
    %p81 = scmp.eq.s32.totalorder %s26, 1
    %p82 = por %p80, %p81
    %p84 = scmp.ne.s32.totalorder %s69, %s83
    %p85 = scmp.eq.s32.totalorder %s26, 0
    %p86 = por %p84, %p85
    %s88 = sadd.s32 %s87, 1
    %p91 = scmp.eq.s32.totalorder %s20, 1
    %p92 = scmp.ne.s32.totalorder %s87, %s89
    %p93 = scmp.eq.s32.totalorder %s20, 0
    %p94 = por %p92, %p93
    %p95 = scmp.ne.s32.totalorder %s87, %s89
    %p96 = scmp.eq.s32.totalorder %s25, 1
    %p97 = por %p95, %p96
    %p98 = scmp.ne.s32.totalorder %s89, %s90
    %p99 = scmp.eq.s32.totalorder %s25, 0
    %p100 = por %p98, %p99
    %p101 = scmp.ne.s32.totalorder %s89, %s90
    %p102 = scmp.eq.s32.totalorder %s26, 1
    %p103 = por %p101, %p102
    %p105 = scmp.ne.s32.totalorder %s90, %s104
    %p106 = scmp.eq.s32.totalorder %s26, 0
    %p107 = por %p105, %p106
    %s108 = ssub.s32 %s27, %s39
    %p109 = scmp.eq.s32.totalorder %s108, 0
    %s111 = sadd.s32 %s110, 1
    %s112 = scalar_select %p109, %s110, %s111
    %p115 = pneg %p109
    %p116 = scmp.eq.s32.totalorder %s20, 1
    %p117 = por %p115, %p116
    %p118 = scmp.ne.s32.totalorder %s110, %s113
    %p119 = scmp.eq.s32.totalorder %s20, 0
    %p120 = por %p118, %p119
    %p121 = scmp.ne.s32.totalorder %s110, %s113
    %p122 = scmp.eq.s32.totalorder %s25, 1
    %p123 = por %p121, %p122
    %p124 = scmp.ne.s32.totalorder %s113, %s114
    %p125 = scmp.eq.s32.totalorder %s25, 0
    %p126 = por %p124, %p125
    %p127 = scmp.ne.s32.totalorder %s113, %s114
    %p128 = scmp.eq.s32.totalorder %s26, 1
    %p129 = por %p127, %p128
    %p131 = scmp.ne.s32.totalorder %s114, %s130
    %p132 = scmp.eq.s32.totalorder %s26, 0
    %p133 = por %p131, %p132
    %s134 = ssub.s32 %s27, %s39
    %p135 = scmp.eq.s32.totalorder %s134, 0
    %s137 = sadd.s32 %s136, 1
    %s138 = scalar_select %p135, %s136, %s137
    %p141 = pneg %p135
    %p142 = scmp.eq.s32.totalorder %s20, 1
    %p143 = por %p141, %p142
    %p144 = scmp.ne.s32.totalorder %s136, %s139
    %p145 = scmp.eq.s32.totalorder %s20, 0
    %p146 = por %p144, %p145
    %p147 = scmp.ne.s32.totalorder %s136, %s139
    %p148 = scmp.eq.s32.totalorder %s25, 1
    %p149 = por %p147, %p148
    %p150 = scmp.ne.s32.totalorder %s139, %s140
    %p151 = scmp.eq.s32.totalorder %s25, 0
    %p152 = por %p150, %p151
    %p153 = scmp.ne.s32.totalorder %s139, %s140
    %p154 = scmp.eq.s32.totalorder %s26, 1
    %p155 = por %p153, %p154
    %p157 = scmp.ne.s32.totalorder %s140, %s156
    %p158 = scmp.eq.s32.totalorder %s26, 0
    %p159 = por %p157, %p158
    %s161 = sadd.s32 %s160, 1
    %p164 = scmp.eq.s32.totalorder %s20, 1
    %p165 = scmp.ne.s32.totalorder %s160, %s162
    %p166 = scmp.eq.s32.totalorder %s20, 0
    %p167 = por %p165, %p166
    %p168 = scmp.ne.s32.totalorder %s160, %s162
    %p169 = scmp.eq.s32.totalorder %s25, 1
    %p170 = por %p168, %p169
    %p171 = scmp.ne.s32.totalorder %s162, %s163
    %p172 = scmp.eq.s32.totalorder %s25, 0
    %p173 = por %p171, %p172
    %p174 = scmp.ne.s32.totalorder %s162, %s163
    %p175 = scmp.eq.s32.totalorder %s26, 1
    %p176 = por %p174, %p175
    %p178 = scmp.ne.s32.totalorder %s163, %s177
    %p179 = scmp.eq.s32.totalorder %s26, 0
    %p180 = por %p178, %p179
    %s182 = sadd.s32 %s181, 1
    %p185 = scmp.eq.s32.totalorder %s20, 1
    %p186 = scmp.ne.s32.totalorder %s181, %s183
    %p187 = scmp.eq.s32.totalorder %s20, 0
    %p188 = por %p186, %p187
    %p189 = scmp.ne.s32.totalorder %s181, %s183
    %p190 = scmp.eq.s32.totalorder %s25, 1
    %p191 = por %p189, %p190
    %p192 = scmp.ne.s32.totalorder %s183, %s184
    %p193 = scmp.eq.s32.totalorder %s25, 0
    %p194 = por %p192, %p193
    %p195 = scmp.ne.s32.totalorder %s183, %s184
    %p196 = scmp.eq.s32.totalorder %s26, 1
    %p197 = por %p195, %p196
    %p199 = scmp.ne.s32.totalorder %s184, %s198
    %p200 = scmp.eq.s32.totalorder %s26, 0
    %p201 = por %p199, %p200
    %s202 = ssub.s32 %s28, %s35
    %p203 = scmp.eq.s32.totalorder %s202, 0
    %s205 = sadd.s32 %s204, 1
    %s206 = scalar_select %p203, %s204, %s205
    %p209 = pneg %p203
    %p210 = scmp.eq.s32.totalorder %s20, 1
    %p211 = por %p209, %p210
    %p212 = scmp.ne.s32.totalorder %s204, %s207
    %p213 = scmp.eq.s32.totalorder %s20, 0
    %p214 = por %p212, %p213
    %p215 = scmp.ne.s32.totalorder %s204, %s207
    %p216 = scmp.eq.s32.totalorder %s25, 1
    %p217 = por %p215, %p216
    %p218 = scmp.ne.s32.totalorder %s207, %s208
    %p219 = scmp.eq.s32.totalorder %s25, 0
    %p220 = por %p218, %p219
    %p221 = scmp.ne.s32.totalorder %s207, %s208
    %p222 = scmp.eq.s32.totalorder %s26, 1
    %p223 = por %p221, %p222
    %p225 = scmp.ne.s32.totalorder %s208, %s224
    %p226 = scmp.eq.s32.totalorder %s26, 0
    %p227 = por %p225, %p226
    %s228 = ssub.s32 %s28, %s35
    %p229 = scmp.eq.s32.totalorder %s228, 0
    %s231 = sadd.s32 %s230, 1
    %s232 = scalar_select %p229, %s230, %s231
    %p235 = pneg %p229
    %p236 = scmp.eq.s32.totalorder %s20, 1
    %p237 = por %p235, %p236
    %p238 = scmp.ne.s32.totalorder %s230, %s233
    %p239 = scmp.eq.s32.totalorder %s20, 0
    %p240 = por %p238, %p239
    %p241 = scmp.ne.s32.totalorder %s230, %s233
    %p242 = scmp.eq.s32.totalorder %s25, 1
    %p243 = por %p241, %p242
    %p244 = scmp.ne.s32.totalorder %s233, %s234
    %p245 = scmp.eq.s32.totalorder %s25, 0
    %p246 = por %p244, %p245
    %p247 = scmp.ne.s32.totalorder %s233, %s234
    %p248 = scmp.eq.s32.totalorder %s26, 1
    %p249 = por %p247, %p248
    %p251 = scmp.ne.s32.totalorder %s234, %s250
    %p252 = scmp.eq.s32.totalorder %s26, 0
    %p253 = por %p251, %p252
    %s254 = ssub.s32 %s28, %s35
    %p255 = scmp.eq.s32.totalorder %s254, 0
    %s257 = sadd.s32 %s256, 1
    %s258 = scalar_select %p255, %s256, %s257
    %p261 = pneg %p255
    %p262 = scmp.eq.s32.totalorder %s20, 1
    %p263 = por %p261, %p262
    %p264 = scmp.ne.s32.totalorder %s256, %s259
    %p265 = scmp.eq.s32.totalorder %s20, 0
    %p266 = por %p264, %p265
    %p267 = scmp.ne.s32.totalorder %s256, %s259
    %p268 = scmp.eq.s32.totalorder %s25, 1
    %p269 = por %p267, %p268
    %p270 = scmp.ne.s32.totalorder %s259, %s260
    %p271 = scmp.eq.s32.totalorder %s25, 0
    %p272 = por %p270, %p271
    %p273 = scmp.ne.s32.totalorder %s259, %s260
    %p274 = scmp.eq.s32.totalorder %s26, 1
    %p275 = por %p273, %p274
    %p277 = scmp.ne.s32.totalorder %s260, %s276
    %p278 = scmp.eq.s32.totalorder %s26, 0
    %p279 = por %p277, %p278
    %s281 = sadd.s32 %s280, 1
    %p284 = scmp.eq.s32.totalorder %s20, 1
    %p285 = scmp.ne.s32.totalorder %s280, %s282
    %p286 = scmp.eq.s32.totalorder %s20, 0
    %p287 = por %p285, %p286
    %p288 = scmp.ne.s32.totalorder %s280, %s282
    %p289 = scmp.eq.s32.totalorder %s25, 1
    %p290 = por %p288, %p289
    %p291 = scmp.ne.s32.totalorder %s282, %s283
    %p292 = scmp.eq.s32.totalorder %s25, 0
    %p293 = por %p291, %p292
    %p294 = scmp.ne.s32.totalorder %s282, %s283
    %p295 = scmp.eq.s32.totalorder %s26, 1
    %p296 = por %p294, %p295
    %p298 = scmp.ne.s32.totalorder %s283, %s297
    %p299 = scmp.eq.s32.totalorder %s26, 0
    %p300 = por %p298, %p299
    %s301 = ssub.s32 %s28, %s35
    %p302 = scmp.eq.s32.totalorder %s301, 0
    %s304 = sadd.s32 %s303, 1
    %s305 = scalar_select %p302, %s303, %s304
    %p308 = pneg %p302
    %p309 = scmp.eq.s32.totalorder %s20, 1
    %p310 = por %p308, %p309
    %p311 = scmp.ne.s32.totalorder %s303, %s306
    %p312 = scmp.eq.s32.totalorder %s20, 0
    %p313 = por %p311, %p312
    %p314 = scmp.ne.s32.totalorder %s303, %s306
    %p315 = scmp.eq.s32.totalorder %s25, 1
    %p316 = por %p314, %p315
    %p317 = scmp.ne.s32.totalorder %s306, %s307
    %p318 = scmp.eq.s32.totalorder %s25, 0
    %p319 = por %p317, %p318
    %p320 = scmp.ne.s32.totalorder %s306, %s307
    %p321 = scmp.eq.s32.totalorder %s26, 1
    %p322 = por %p320, %p321
    %p324 = scmp.ne.s32.totalorder %s307, %s323
    %p325 = scmp.eq.s32.totalorder %s26, 0
    %p326 = por %p324, %p325
    %s327 = ssub.s32 %s27, %s39
    %p328 = scmp.eq.s32.totalorder %s327, 0
    %s330 = sadd.s32 %s329, 1
    %s331 = scalar_select %p328, %s329, %s330
    %p334 = pneg %p328
    %p335 = scmp.eq.s32.totalorder %s20, 1
    %p336 = por %p334, %p335
    %p337 = scmp.ne.s32.totalorder %s329, %s332
    %p338 = scmp.eq.s32.totalorder %s20, 0
    %p339 = por %p337, %p338
    %p340 = scmp.ne.s32.totalorder %s329, %s332
    %p341 = scmp.eq.s32.totalorder %s25, 1
    %p342 = por %p340, %p341
    %p343 = scmp.ne.s32.totalorder %s332, %s333
    %p344 = scmp.eq.s32.totalorder %s25, 0
    %p345 = por %p343, %p344
    %p346 = scmp.ne.s32.totalorder %s332, %s333
    %p347 = scmp.eq.s32.totalorder %s26, 1
    %p348 = por %p346, %p347
    %p350 = scmp.ne.s32.totalorder %s333, %s349
    %p351 = scmp.eq.s32.totalorder %s26, 0
    %p352 = por %p350, %p351
    %s353 = ssub.s32 %s27, %s39
    %s354 = ssub.s32 %s28, %s35
    %s355 = sor.u32 %s353, %s354
    %p356 = scmp.eq.s32.totalorder %s355, 0
    %s358 = sadd.s32 %s357, 1
    %s359 = scalar_select %p356, %s357, %s358
    %p362 = pneg %p356
    %p363 = scmp.eq.s32.totalorder %s20, 1
    %p364 = por %p362, %p363
    %p365 = scmp.ne.s32.totalorder %s357, %s360
    %p366 = scmp.eq.s32.totalorder %s20, 0
    %p367 = por %p365, %p366
    %p368 = scmp.ne.s32.totalorder %s357, %s360
    %p369 = scmp.eq.s32.totalorder %s25, 1
    %p370 = por %p368, %p369
    %p371 = scmp.ne.s32.totalorder %s360, %s361
    %p372 = scmp.eq.s32.totalorder %s25, 0
    %p373 = por %p371, %p372
    %p374 = scmp.ne.s32.totalorder %s360, %s361
    %p375 = scmp.eq.s32.totalorder %s26, 1
    %p376 = por %p374, %p375
    %p378 = scmp.ne.s32.totalorder %s361, %s377
    %p379 = scmp.eq.s32.totalorder %s26, 0
    %p380 = por %p378, %p379
    %p381 = scmp.le.s32.totalorder 1, %s20
    %p382 = scmp.lt.s32.totalorder %s20, 3
    %p383 = pnand %p381, %p382
    %p384 = pneg %p383
    // Predicated region
    $region9: #{s3_tokenizer_v2_forward.8} parent=5 // pred_check
      _
    $region10: #{s3_tokenizer_v2_forward.8} parent=5 // pred_check_branch
      %386 = sbr.rel (%p383) target = $region12
    $region11: #{s3_tokenizer_v2_forward.8} parent=5 // pred_region
      %s387 = ssub.s32 %s20, 1
      // Predicated region
      $region13: #{s3_tokenizer_v2_forward.8} parent=11 // pred_check
        %p388 = pneg %p79
      $region14: #{s3_tokenizer_v2_forward.8} parent=11 // pred_check_branch
        %390 = sbr.rel (%p388) target = $region16
      $region15: #{s3_tokenizer_v2_forward.8} parent=11 // pred_region
        _
      $region16: #{s3_tokenizer_v2_forward.8} parent=11 // pred_fallthru
        _
      // Predicated region
      $region17: #{s3_tokenizer_v2_forward.8} parent=11 // pred_check
        %p391 = pneg %p100
      $region18: #{s3_tokenizer_v2_forward.8} parent=11 // pred_check_branch
        %393 = sbr.rel (%p391) target = $region20
      $region19: #{s3_tokenizer_v2_forward.8} parent=11 // pred_region
        _
      $region20: #{s3_tokenizer_v2_forward.8} parent=11 // pred_fallthru
        _
      // Predicated region
      $region21: #{s3_tokenizer_v2_forward.8} parent=11 // pred_check
        %p394 = pneg %p173
      $region22: #{s3_tokenizer_v2_forward.8} parent=11 // pred_check_branch
        %396 = sbr.rel (%p394) target = $region24
      $region23: #{s3_tokenizer_v2_forward.8} parent=11 // pred_region
        _
      $region24: #{s3_tokenizer_v2_forward.8} parent=11 // pred_fallthru
        _
      // Predicated region
      $region25: #{s3_tokenizer_v2_forward.8} parent=11 // pred_check
        %p397 = pneg %p194
      $region26: #{s3_tokenizer_v2_forward.8} parent=11 // pred_check_branch
        %399 = sbr.rel (%p397) target = $region28
      $region27: #{s3_tokenizer_v2_forward.8} parent=11 // pred_region
        _
      $region28: #{s3_tokenizer_v2_forward.8} parent=11 // pred_fallthru
        _
      // Predicated region
      $region29: #{s3_tokenizer_v2_forward.8} parent=11 // pred_check
        %p400 = pneg %p220
      $region30: #{s3_tokenizer_v2_forward.8} parent=11 // pred_check_branch
        %402 = sbr.rel (%p400) target = $region32
      $region31: #{s3_tokenizer_v2_forward.8} parent=11 // pred_region
        %s403 = smul.u32 2, %s30
        %p404 = scmp.lt.s32.totalorder %s403, 1
        %s405 = scalar_select %p404, %s403, 1
        %s406 = smul.addr %s405, 32
        %s407 = smul.addr %s406, 4
        %s408 = scalar_lea.vmem %s7, %s407
        %s409 = smul.u32 2, %s30
      $region32: #{s3_tokenizer_v2_forward.8} parent=11 // pred_fallthru
        _
      // Predicated region
      $region33: #{s3_tokenizer_v2_forward.8} parent=11 // pred_check
        %p410 = pneg %p246
      $region34: #{s3_tokenizer_v2_forward.8} parent=11 // pred_check_branch
        %412 = sbr.rel (%p410) target = $region36
      $region35: #{s3_tokenizer_v2_forward.8} parent=11 // pred_region
        %s413 = smul.u32 2, %s30
        %p414 = scmp.lt.s32.totalorder %s413, 1
        %s415 = scalar_select %p414, %s413, 1
        %s416 = smul.addr %s415, 2
        %s417 = scalar_lea.vmem %s8, %s416
        %s418 = smul.u32 2, %s30
      $region36: #{s3_tokenizer_v2_forward.8} parent=11 // pred_fallthru
        _
      // Predicated region
      $region37: #{s3_tokenizer_v2_forward.8} parent=11 // pred_check
        %p419 = pneg %p272
      $region38: #{s3_tokenizer_v2_forward.8} parent=11 // pred_check_branch
        %421 = sbr.rel (%p419) target = $region40
      $region39: #{s3_tokenizer_v2_forward.8} parent=11 // pred_region
        %s422 = smul.u32 2, %s30
        %p423 = scmp.lt.s32.totalorder %s422, 1
        %s424 = scalar_select %p423, %s422, 1
        %s425 = smul.addr %s424, 8
        %s426 = smul.addr %s425, 4
        %s427 = scalar_lea.vmem %s9, %s426
        %s428 = smul.u32 2, %s30
      $region40: #{s3_tokenizer_v2_forward.8} parent=11 // pred_fallthru
        _
      // Predicated region
      $region41: #{s3_tokenizer_v2_forward.8} parent=11 // pred_check
        %p429 = pneg %p293
      $region42: #{s3_tokenizer_v2_forward.8} parent=11 // pred_check_branch
        %431 = sbr.rel (%p429) target = $region44
      $region43: #{s3_tokenizer_v2_forward.8} parent=11 // pred_region
        _
      $region44: #{s3_tokenizer_v2_forward.8} parent=11 // pred_fallthru
        _
      // Predicated region
      $region45: #{s3_tokenizer_v2_forward.8} parent=11 // pred_check
        %p432 = pneg %p319
      $region46: #{s3_tokenizer_v2_forward.8} parent=11 // pred_check_branch
        %434 = sbr.rel (%p432) target = $region48
      $region47: #{s3_tokenizer_v2_forward.8} parent=11 // pred_region
        %s435 = smul.u32 2, %s30
        %p436 = scmp.lt.s32.totalorder %s435, 1
        %s437 = scalar_select %p436, %s435, 1
        %s438 = smul.addr %s437, 4
        %s439 = smul.addr %s438, 8
        %s440 = scalar_lea.vmem %s11, %s439
        %s441 = smul.u32 2, %s30
      $region48: #{s3_tokenizer_v2_forward.8} parent=11 // pred_fallthru
        _
    $region12: #{s3_tokenizer_v2_forward.8} parent=5 // pred_fallthru
      _
    %p442 = scmp.lt.s32.totalorder %s20, 2
    // Predicated region
    $region49: #{s3_tokenizer_v2_forward.8} parent=5 // pred_check
      %p443 = pneg %p442
    $region50: #{s3_tokenizer_v2_forward.8} parent=5 // pred_check_branch
      %445 = sbr.rel (%p443) target = $region52
    $region51: #{s3_tokenizer_v2_forward.8} parent=5 // pred_region
      // Predicated region
      $region53: #{s3_tokenizer_v2_forward.8} parent=51 // pred_check
        %p446 = pneg %p52
      $region54: #{s3_tokenizer_v2_forward.8} parent=51 // pred_check_branch
        %448 = sbr.rel (%p446) target = $region56
      $region55: #{s3_tokenizer_v2_forward.8} parent=51 // pred_region
        %p449 = scmp.lt.s32.totalorder %s27, 1
        %s450 = scalar_select %p449, %s27, 1
        %s451 = smul.addr %s450, 4
        %s452 = scalar_lea.vmem %s0, %s451
      $region56: #{s3_tokenizer_v2_forward.8} parent=51 // pred_fallthru
        _
      // Predicated region
      $region57: #{s3_tokenizer_v2_forward.8} parent=51 // pred_check
        %p453 = pneg %p120
      $region58: #{s3_tokenizer_v2_forward.8} parent=51 // pred_check_branch
        %455 = sbr.rel (%p453) target = $region60
      $region59: #{s3_tokenizer_v2_forward.8} parent=51 // pred_region
        %p456 = scmp.lt.s32.totalorder %s27, 1
        %s457 = scalar_select %p456, %s27, 1
        %s458 = scalar_lea.vmem %s3, %s457
      $region60: #{s3_tokenizer_v2_forward.8} parent=51 // pred_fallthru
        _
      // Predicated region
      $region61: #{s3_tokenizer_v2_forward.8} parent=51 // pred_check
        %p459 = pneg %p146
      $region62: #{s3_tokenizer_v2_forward.8} parent=51 // pred_check_branch
        %461 = sbr.rel (%p459) target = $region64
      $region63: #{s3_tokenizer_v2_forward.8} parent=51 // pred_region
        %p462 = scmp.lt.s32.totalorder %s27, 1
        %s463 = scalar_select %p462, %s27, 1
        %s464 = smul.addr %s463, 8
        %s465 = scalar_lea.vmem %s4, %s464
      $region64: #{s3_tokenizer_v2_forward.8} parent=51 // pred_fallthru
        _
    $region52: #{s3_tokenizer_v2_forward.8} parent=5 // pred_fallthru
      _
    %p466 = scmp.le.s32.totalorder 1, %s20
    %p467 = scmp.lt.s32.totalorder %s20, 3
    %p468 = pnand %p466, %p467
    %p469 = pneg %p468
    // Predicated region
    $region65: #{s3_tokenizer_v2_forward.8} parent=5 // pred_check
      _
    $region66: #{s3_tokenizer_v2_forward.8} parent=5 // pred_check_branch
      %471 = sbr.rel (%p468) target = $region68
    $region67: #{s3_tokenizer_v2_forward.8} parent=5 // pred_region
      %s472 = ssub.s32 %s20, 1
      %p473 = scmp.lt.s32.totalorder %s29, 1
      %s474 = scalar_select %p473, %s29, 1
      %s475 = smul.addr %s474, 4
      %s476 = scalar_lea.vmem %s0, %s475
      %p477 = pneg %p58
      %p478 = pneg %p55
      %p479 = pneg %p79
      %p480 = pneg %p76
      %p481 = pneg %p100
      %p482 = pneg %p97
      %p483 = scmp.lt.s32.totalorder %s29, 1
      %s484 = scalar_select %p483, %s29, 1
      %s485 = scalar_lea.vmem %s3, %s484
      %p486 = pneg %p126
      %p487 = pneg %p123
      %p488 = scmp.lt.s32.totalorder %s29, 1
      %s489 = scalar_select %p488, %s29, 1
      %s490 = smul.addr %s489, 8
      %s491 = scalar_lea.vmem %s4, %s490
      %p492 = pneg %p152
      %p493 = pneg %p149
      %p494 = pneg %p173
      %p495 = pneg %p170
      %p496 = pneg %p194
      %p497 = pneg %p191
      %s498 = smul.u32 2, %s30
      %p499 = scmp.lt.s32.totalorder %s498, 1
      %s500 = scalar_select %p499, %s498, 1
      %s501 = smul.addr %s500, 32
      %s502 = smul.addr %s501, 4
      %s503 = scalar_lea.vmem %s7, %s502
      %p504 = pneg %p220
      %p505 = pneg %p217
      %s506 = smul.u32 2, %s30
      %p507 = scmp.lt.s32.totalorder %s506, 1
      %s508 = scalar_select %p507, %s506, 1
      %s509 = smul.addr %s508, 2
      %s510 = scalar_lea.vmem %s8, %s509
      %p511 = pneg %p246
      %p512 = pneg %p243
      %s513 = smul.u32 2, %s30
      %p514 = scmp.lt.s32.totalorder %s513, 1
      %s515 = scalar_select %p514, %s513, 1
      %s516 = smul.addr %s515, 8
      %s517 = smul.addr %s516, 4
      %s518 = scalar_lea.vmem %s9, %s517
      %p519 = pneg %p272
      %p520 = pneg %p269
      %p521 = pneg %p293
      %p522 = pneg %p290
      %s523 = smul.u32 2, %s30
      %p524 = scmp.lt.s32.totalorder %s523, 1
      %s525 = scalar_select %p524, %s523, 1
      %s526 = smul.addr %s525, 4
      %s527 = smul.addr %s526, 8
      %s528 = scalar_lea.vmem %s11, %s527
      %p529 = pneg %p319
      %p530 = pneg %p316
      %p531 = pneg %p345
      %p532 = pneg %p342
      %p533 = scmp.lt.s32.totalorder %s29, 1
      %s534 = scalar_select %p533, %s29, 1
      %s535 = smul.addr %s534, 4
      %s536 = scalar_lea.vmem %s12, %s535
      %p537 = pneg %p373
      %p538 = pneg %p370
      %p539 = scmp.lt.s32.totalorder %s29, 1
      %s540 = scalar_select %p539, %s29, 1
      %p541 = scmp.lt.s32.totalorder %s30, 0
      %s542 = scalar_select %p541, %s30, 0
      %s543 = sadd.s32 %s542, %s540
      %s544 = smul.addr %s543, 4
      %s545 = scalar_lea.vmem %s13, %s544
      %p546 = scmp.lt.s32.totalorder %s29, 1
      %s547 = scalar_select %p546, %s29, 1
      %s548 = smul.addr %s547, 4
      %s549 = scalar_lea.vmem %s0, %s548
      %p550 = scmp.lt.s32.totalorder %s29, 1
      %s551 = scalar_select %p550, %s29, 1
      %s552 = scalar_lea.vmem %s3, %s551
      %p553 = scmp.lt.s32.totalorder %s29, 1
      %s554 = scalar_select %p553, %s29, 1
      %s555 = smul.addr %s554, 8
      %s556 = scalar_lea.vmem %s4, %s555
      %s557 = smul.u32 2, %s30
      %p558 = scmp.lt.s32.totalorder %s557, 1
      %s559 = scalar_select %p558, %s557, 1
      %s560 = smul.addr %s559, 32
      %s561 = smul.addr %s560, 4
      %s562 = scalar_lea.vmem %s7, %s561
      %s563 = smul.u32 2, %s30
      %s564 = smul.u32 2, %s30
      %p565 = scmp.lt.s32.totalorder %s564, 1
      %s566 = scalar_select %p565, %s564, 1
      %s567 = smul.addr %s566, 2
      %s568 = scalar_lea.vmem %s8, %s567
      %s569 = smul.u32 2, %s30
      %s570 = smul.u32 2, %s30
      %p571 = scmp.lt.s32.totalorder %s570, 1
      %s572 = scalar_select %p571, %s570, 1
      %s573 = smul.addr %s572, 8
      %s574 = smul.addr %s573, 4
      %s575 = scalar_lea.vmem %s9, %s574
      %s576 = smul.u32 2, %s30
      %s577 = smul.u32 2, %s30
      %p578 = scmp.lt.s32.totalorder %s577, 1
      %s579 = scalar_select %p578, %s577, 1
      %s580 = smul.addr %s579, 4
      %s581 = smul.addr %s580, 8
      %s582 = scalar_lea.vmem %s11, %s581
      %s583 = smul.u32 2, %s30
      %p584 = scmp.lt.s32.totalorder %s29, 1
      %s585 = scalar_select %p584, %s29, 1
      %s586 = smul.addr %s585, 4
      %s587 = scalar_lea.vmem %s12, %s586
      %p588 = scmp.lt.s32.totalorder %s29, 1
      %s589 = scalar_select %p588, %s29, 1
      %p590 = scmp.lt.s32.totalorder %s30, 0
      %s591 = scalar_select %p590, %s30, 0
      %s592 = sadd.s32 %s591, %s589
      %s593 = smul.addr %s592, 4
      %s594 = scalar_lea.vmem %s13, %s593
      %p596 = scmp.eq.s32.totalorder %s30, 0
      // Predicated region
      $region69: #{s3_tokenizer_v2_forward.8} parent=67 // pred_check
        %p597 = pneg %p596
      $region70: #{s3_tokenizer_v2_forward.8} parent=67 // pred_check_branch
        %599 = sbr.rel (%p597) target = $region72
      $region71: #{s3_tokenizer_v2_forward.8} parent=67 // pred_region
        %v600 = vld [vmem:[%s549] sm:$0xf]
        %v601 = vunpack.c.l.bf16 %v600
        %602 = vadd.xlane.f32.xlu0 %v601
        %v603 = vpop.xlane.xlu0 %602
        %v604 = vrcp.pop 128.0
        %v605 = vmul.f32 %v603, %v604
        %v606 = vsub.f32 %v601, %v605
        %v607 = vmul.f32 %v606, %v606
        %608 = vadd.xlane.f32.xlu0 %v607
        %v609 = vpop.xlane.xlu0 %608
        %v610 = vmul.f32 %v609, %v604
        %v611 = vadd.f32 %v610, 1e-06
        %v612 = vrsqrt.pop %v611
        %v613 = vmul.f32 %v606, %v612
        %v614 = vld [vmem:[%s5] sm:$0x1]
        %v616 = vlaneseq
        %v617 = vshrl.u32 %v616, 7
        %v618 = vsub.s32 0, %v617
        %v619 = vrot.slane %v614, %v618
        %v621 = vmul.f32 %v613, %v619
        %v622 = vld [vmem:[%s6] sm:$0x1]
        %v624 = vlaneseq
        %v625 = vshrl.u32 %v624, 7
        %v626 = vsub.s32 0, %v625
        %v627 = vrot.slane %v622, %v626
        %v629 = vadd.f32 %v621, %v627
        %v630 = vpack.c.bf16 %v629, %v629
        %631 = vst [vmem:[#allocation2] sm:$0xf] %v630
        %v632 = vld [vmem:[%s10] sm:$0x1]
        %v634 = vlaneseq
        %v635 = vshrl.u32 %v634, 7
        %v636 = vsub.s32 0, %v635
        %v637 = vrot.slane %v632, %v636
        %v639 = vadd.f32 %v601, %v637
        %640 = vst [vmem:[#allocation3] sm:$0xff] %v639
      $region72: #{s3_tokenizer_v2_forward.8} parent=67 // pred_fallthru
        _
      %vm641 = vcmask 523264
      %642 = vst.msk [vmem:[#allocation4] sm:$0xff] %vm641, 0.0
      %vm643 = vcmask 522240
      %644 = vst.msk [vmem:[#allocation4 + $0x8] sm:$0x7f] %vm643, 0.0
      %645 = vst.msk [vmem:[#allocation4 + $0x17] sm:$0xff] %vm641, 0.0
      %646 = vst.msk [vmem:[#allocation4 + $0x1f] sm:$0x7f] %vm643, 0.0
      %v647 = vld [vmem:[#allocation2] sm:$0xf]
      %v648 = vld [vmem:[%s556] sm:$0xff]
      %v649 = vld [vmem:[%s552] sm:$0x1]
      %v650 = vld [vmem:[%s1] sm:$0xff]
      %v651 = vld [vmem:[%s2] sm:$0xff]
      %v652 = vld [vmem:[%s562] sm:$0xff]
      %v653 = vld [vmem:[%s562 + $0x8] sm:$0xff]
      %v654 = vld [vmem:[%s562 + $0x10] sm:$0xff]
      %v655 = vld [vmem:[%s562 + $0x18] sm:$0xff]
      %v656 = vld [vmem:[%s562 + $0x20] sm:$0xff]
      %v657 = vld [vmem:[%s562 + $0x28] sm:$0xff]
      %v658 = vld [vmem:[%s562 + $0x30] sm:$0xff]
      %v659 = vld [vmem:[%s562 + $0x38] sm:$0xff]
      %v660 = vld [vmem:[%s562 + $0x40] sm:$0xff]
      %v661 = vld [vmem:[%s562 + $0x48] sm:$0xff]
      %v662 = vld [vmem:[%s562 + $0x50] sm:$0xff]
      %v663 = vld [vmem:[%s562 + $0x58] sm:$0xff]
      %v664 = vld [vmem:[%s562 + $0x60] sm:$0xff]
      %v665 = vld [vmem:[%s562 + $0x68] sm:$0xff]
      %v666 = vld [vmem:[%s562 + $0x70] sm:$0xff]
      %v667 = vld [vmem:[%s562 + $0x78] sm:$0xff]
      %v668 = vld [vmem:[%s568] sm:$0x3]
      %v670 = vlaneseq
      %v671 = vshrl.u32 %v670, 7
      %v672 = vsub.s32 0, %v671
      %v673 = vrot.slane %v668, %v672
      %v674 = vlaneseq
      %v675 = vshrl.u32 %v674, 7
      %v676 = vsub.s32 1, %v675
      %v677 = vrot.slane %v668, %v676
      %v696 = vunpack.c.l.b16 %v652
      %v697 = vunpack.c.h.b16 %v652
      %v698 = vunpack.c.l.b16 %v653
      %v699 = vunpack.c.h.b16 %v653
      %v700 = vunpack.c.l.b16 %v654
      %v701 = vunpack.c.h.b16 %v654
      %v702 = vunpack.c.l.b16 %v655
      %v703 = vunpack.c.h.b16 %v655
      %v704 = vunpack.c.l.b16 %v656
      %v705 = vunpack.c.h.b16 %v656
      %v706 = vunpack.c.l.b16 %v657
      %v707 = vunpack.c.h.b16 %v657
      %v708 = vunpack.c.l.b16 %v658
      %v709 = vunpack.c.h.b16 %v658
      %v710 = vunpack.c.l.b16 %v659
      %v711 = vunpack.c.h.b16 %v659
      %v712 = vunpack.c.l.b16 %v660
      %v713 = vunpack.c.h.b16 %v660
      %v714 = vunpack.c.l.b16 %v661
      %v715 = vunpack.c.h.b16 %v661
      %v716 = vunpack.c.l.b16 %v662
      %v717 = vunpack.c.h.b16 %v662
      %v718 = vunpack.c.l.b16 %v663
      %v719 = vunpack.c.h.b16 %v663
      %v720 = vunpack.c.l.b16 %v664
      %v721 = vunpack.c.h.b16 %v664
      %v722 = vunpack.c.l.b16 %v665
      %v723 = vunpack.c.h.b16 %v665
      %v724 = vunpack.c.l.b16 %v666
      %v725 = vunpack.c.h.b16 %v666
      %v726 = vunpack.c.l.b16 %v667
      %v727 = vunpack.c.h.b16 %v667
      %v728 = vpack.c.b16 %v698, %v696
      %v729 = vpack.c.b16 %v699, %v697
      %v730 = vpack.c.b16 %v702, %v700
      %v731 = vpack.c.b16 %v703, %v701
      %v732 = vpack.c.b16 %v706, %v704
      %v733 = vpack.c.b16 %v707, %v705
      %v734 = vpack.c.b16 %v710, %v708
      %v735 = vpack.c.b16 %v711, %v709
      %v736 = vpack.c.b16 %v714, %v712
      %v737 = vpack.c.b16 %v715, %v713
      %v738 = vpack.c.b16 %v718, %v716
      %v739 = vpack.c.b16 %v719, %v717
      %v740 = vpack.c.b16 %v722, %v720
      %v741 = vpack.c.b16 %v723, %v721
      %v742 = vpack.c.b16 %v726, %v724
      %v743 = vpack.c.b16 %v727, %v725
      %760 = vmatprep.subr.bf16.mxu0 %v743
      %761 = vmatpush1.bf16.msra.mxu0 %v742
      %762 = vmatprep.subr.bf16.mxu0 %v741
      %763 = vmatpush1.bf16.msra.mxu0 %v740
      %764 = vmatprep.subr.bf16.mxu0 %v739
      %765 = vmatpush1.bf16.msra.mxu0 %v738
      %766 = vmatprep.subr.bf16.mxu0 %v737
      %767 = vmatpush1.bf16.msra.mxu0 %v736
      %768 = vmatprep.subr.bf16.mxu0 %v735
      %769 = vmatpush1.bf16.msra.mxu0 %v734
      %770 = vmatprep.subr.bf16.mxu0 %v733
      %771 = vmatpush1.bf16.msra.mxu0 %v732
      %772 = vmatprep.subr.bf16.mxu0 %v731
      %773 = vmatpush1.bf16.msra.mxu0 %v730
      %774 = vmatprep.subr.bf16.mxu0 %v729
      %775 = vmatpush1.bf16.msra.mxu0 %v728
      %776 = vmatprep.subr.bf16.mxu0 0
      %777 = vmatpush2.bf16.msra.mxu0 0
      %778 = vmatprep.subr.bf16.mxu0 0
      %779 = vmatpush2.bf16.msra.mxu0 0
      %780 = vmatprep.subr.bf16.mxu0 0
      %781 = vmatpush2.bf16.msra.mxu0 0
      %782 = vmatprep.subr.bf16.mxu0 0
      %783 = vmatpush2.bf16.msra.mxu0 0
      %784 = vmatprep.subr.bf16.mxu0 0
      %785 = vmatpush2.bf16.msra.mxu0 0
      %786 = vmatprep.subr.bf16.mxu0 0
      %787 = vmatpush2.bf16.msra.mxu0 0
      %788 = vmatprep.subr.bf16.mxu0 0
      %789 = vmatpush2.bf16.msra.mxu0 0
      %790 = vmatprep.subr.bf16.mxu0 0
      %791 = vmatpush2.bf16.msra.mxu0 0
      %792 = vmatprep.mubr.bf16.mxu0 0
      %793 = vmatmul.mubr.bf16.gmra.mxu0 %v647
      %v794 = vpop.f32.mrf.mxu0
      %v795 = vadd.f32 %v673, %v794
      %v796 = vpop.f32.mrf.mxu0
      %v797 = vadd.f32 %v677, %v796
      %v798 = vpop.f32.mrf.mxu0
      %v799 = vpop.f32.mrf.mxu0
      %800 = vdwg.mxu0
      %v801 = vsub.f32 0.0, %v795
      %803 = vrot.lane.b32.xlu0 %v801, 96
      %v804 = vpop.permute.xlu0 %803
      %807 = vrot.lane.b32.xlu0 %v795, 32
      %v808 = vpop.permute.xlu0 %807
      %vm810 = vcmask 261120
      %v811 = vsel %vm810, %v804, %v808
      %v812 = vmul.f32 %v795, %v650
      %v813 = vmul.f32 %v811, %v651
      %v814 = vadd.f32 %v812, %v813
      %815 = vrot.lane.b32.xlu0 %v801, 32
      %v816 = vpop.permute.xlu0 %815
      %818 = vrot.lane.b32.xlu0 %v795, 96
      %v819 = vpop.permute.xlu0 %818
      %v821 = vsel %vm810, %v816, %v819
      %823 = vrot.lane.b32.xlu0 %v650, 64
      %v824 = vpop.permute.xlu0 %823
      %v826 = vmul.f32 %v795, %v824
      %v827 = vmul.f32 %v821, %v651
      %829 = vrot.lane.b32.xlu0 %v827, 64
      %v830 = vpop.permute.xlu0 %829
      %v832 = vadd.f32 %v826, %v830
      %834 = vset.pattern.permute.xlu0 0
      %835 = vperm.xlu0 %834, %v648
      %v836 = vpop.permute.xlu0 %835
      %v838 = vmul.f32 %v797, %v836
      %839 = vst.msk [vmem:[#allocation4 + $0xf] sm:$0xff] %vm641, %v838
      %v840 = vld [vmem:[%s582] sm:$0xff]
      %v841 = vld [vmem:[%s582 + $0x8] sm:$0xff]
      %v842 = vld [vmem:[%s582 + $0x10] sm:$0xff]
      %v843 = vld [vmem:[%s582 + $0x18] sm:$0x7f]
      %v844 = vld [vmem:[#allocation4] sm:$0xff]
      %v845 = vlaneseq
      %v846 = vshrl.u32 %v845, 7
      %v847 = vsub.s32 0, %v846
      %v848 = vrot.slane %v840, %v847
      %v849 = vmul.f32 %v844, %v848
      %v850 = vadd.f32 %v838, %v849
      %v851 = vld [vmem:[#allocation4 + $0x1] sm:$0xff]
      %v852 = vlaneseq
      %v853 = vshrl.u32 %v852, 7
      %v854 = vsub.s32 1, %v853
      %v855 = vrot.slane %v840, %v854
      %v856 = vmul.f32 %v851, %v855
      %v857 = vadd.f32 %v850, %v856
      %v858 = vld [vmem:[#allocation4 + $0x2] sm:$0xff]
      %v859 = vlaneseq
      %v860 = vshrl.u32 %v859, 7
      %v861 = vsub.s32 2, %v860
      %v862 = vrot.slane %v840, %v861
      %v863 = vmul.f32 %v858, %v862
      %v864 = vadd.f32 %v857, %v863
      %v865 = vld [vmem:[#allocation4 + $0x3] sm:$0xff]
      %v866 = vlaneseq
      %v867 = vshrl.u32 %v866, 7
      %v868 = vsub.s32 3, %v867
      %v869 = vrot.slane %v840, %v868
      %v870 = vmul.f32 %v865, %v869
      %v871 = vadd.f32 %v864, %v870
      %v872 = vld [vmem:[#allocation4 + $0x4] sm:$0xff]
      %v873 = vlaneseq
      %v874 = vshrl.u32 %v873, 7
      %v875 = vsub.s32 4, %v874
      %v876 = vrot.slane %v840, %v875
      %v877 = vmul.f32 %v872, %v876
      %v878 = vadd.f32 %v871, %v877
      %v879 = vld [vmem:[#allocation4 + $0x5] sm:$0xff]
      %v880 = vlaneseq
      %v881 = vshrl.u32 %v880, 7
      %v882 = vsub.s32 5, %v881
      %v883 = vrot.slane %v840, %v882
      %v884 = vmul.f32 %v879, %v883
      %v885 = vadd.f32 %v878, %v884
      %v886 = vld [vmem:[#allocation4 + $0x6] sm:$0xff]
      %v887 = vlaneseq
      %v888 = vshrl.u32 %v887, 7
      %v889 = vsub.s32 6, %v888
      %v890 = vrot.slane %v840, %v889
      %v891 = vmul.f32 %v886, %v890
      %v892 = vadd.f32 %v885, %v891
      %v893 = vld [vmem:[#allocation4 + $0x7] sm:$0xff]
      %v894 = vlaneseq
      %v895 = vshrl.u32 %v894, 7
      %v896 = vsub.s32 7, %v895
      %v897 = vrot.slane %v840, %v896
      %v898 = vmul.f32 %v893, %v897
      %v899 = vadd.f32 %v892, %v898
      %v900 = vld [vmem:[#allocation4 + $0x8] sm:$0xff]
      %v901 = vlaneseq
      %v902 = vshrl.u32 %v901, 7
      %v903 = vsub.s32 0, %v902
      %v904 = vrot.slane %v841, %v903
      %v905 = vmul.f32 %v900, %v904
      %v906 = vadd.f32 %v899, %v905
      %v907 = vld [vmem:[#allocation4 + $0x9] sm:$0xff]
      %v908 = vlaneseq
      %v909 = vshrl.u32 %v908, 7
      %v910 = vsub.s32 1, %v909
      %v911 = vrot.slane %v841, %v910
      %v912 = vmul.f32 %v907, %v911
      %v913 = vadd.f32 %v906, %v912
      %v914 = vld [vmem:[#allocation4 + $0xa] sm:$0xff]
      %v915 = vlaneseq
      %v916 = vshrl.u32 %v915, 7
      %v917 = vsub.s32 2, %v916
      %v918 = vrot.slane %v841, %v917
      %v919 = vmul.f32 %v914, %v918
      %v920 = vadd.f32 %v913, %v919
      %v921 = vld [vmem:[#allocation4 + $0xb] sm:$0xff]
      %v922 = vlaneseq
      %v923 = vshrl.u32 %v922, 7
      %v924 = vsub.s32 3, %v923
      %v925 = vrot.slane %v841, %v924
      %v926 = vmul.f32 %v921, %v925
      %v927 = vadd.f32 %v920, %v926
      %v928 = vld [vmem:[#allocation4 + $0xc] sm:$0xff]
      %v929 = vlaneseq
      %v930 = vshrl.u32 %v929, 7
      %v931 = vsub.s32 4, %v930
      %v932 = vrot.slane %v841, %v931
      %v933 = vmul.f32 %v928, %v932
      %v934 = vadd.f32 %v927, %v933
      %v935 = vld [vmem:[#allocation4 + $0xd] sm:$0xff]
      %v936 = vlaneseq
      %v937 = vshrl.u32 %v936, 7
      %v938 = vsub.s32 5, %v937
      %v939 = vrot.slane %v841, %v938
      %v940 = vmul.f32 %v935, %v939
      %v941 = vadd.f32 %v934, %v940
      %v942 = vld [vmem:[#allocation4 + $0xe] sm:$0xff]
      %v943 = vlaneseq
      %v944 = vshrl.u32 %v943, 7
      %v945 = vsub.s32 6, %v944
      %v946 = vrot.slane %v841, %v945
      %v947 = vmul.f32 %v942, %v946
      %v948 = vadd.f32 %v941, %v947
      %v949 = vld [vmem:[#allocation4 + $0xf] sm:$0xff]
      %v950 = vlaneseq
      %v951 = vshrl.u32 %v950, 7
      %v952 = vsub.s32 7, %v951
      %v953 = vrot.slane %v841, %v952
      %v954 = vmul.f32 %v949, %v953
      %v955 = vadd.f32 %v948, %v954
      %v956 = vld [vmem:[#allocation4 + $0x10] sm:$0xff]
      %v957 = vlaneseq
      %v958 = vshrl.u32 %v957, 7
      %v959 = vsub.s32 0, %v958
      %v960 = vrot.slane %v842, %v959
      %v961 = vmul.f32 %v956, %v960
      %v962 = vadd.f32 %v955, %v961
      %v963 = vld [vmem:[#allocation4 + $0x11] sm:$0xff]
      %v964 = vlaneseq
      %v965 = vshrl.u32 %v964, 7
      %v966 = vsub.s32 1, %v965
      %v967 = vrot.slane %v842, %v966
      %v968 = vmul.f32 %v963, %v967
      %v969 = vadd.f32 %v962, %v968
      %v970 = vld [vmem:[#allocation4 + $0x12] sm:$0xff]
      %v971 = vlaneseq
      %v972 = vshrl.u32 %v971, 7
      %v973 = vsub.s32 2, %v972
      %v974 = vrot.slane %v842, %v973
      %v975 = vmul.f32 %v970, %v974
      %v976 = vadd.f32 %v969, %v975
      %v977 = vld [vmem:[#allocation4 + $0x13] sm:$0xff]
      %v978 = vlaneseq
      %v979 = vshrl.u32 %v978, 7
      %v980 = vsub.s32 3, %v979
      %v981 = vrot.slane %v842, %v980
      %v982 = vmul.f32 %v977, %v981
      %v983 = vadd.f32 %v976, %v982
      %v984 = vld [vmem:[#allocation4 + $0x14] sm:$0xff]
      %v985 = vlaneseq
      %v986 = vshrl.u32 %v985, 7
      %v987 = vsub.s32 4, %v986
      %v988 = vrot.slane %v842, %v987
      %v989 = vmul.f32 %v984, %v988
      %v990 = vadd.f32 %v983, %v989
      %v991 = vld [vmem:[#allocation4 + $0x15] sm:$0xff]
      %v992 = vlaneseq
      %v993 = vshrl.u32 %v992, 7
      %v994 = vsub.s32 5, %v993
      %v995 = vrot.slane %v842, %v994
      %v996 = vmul.f32 %v991, %v995
      %v997 = vadd.f32 %v990, %v996
      %v998 = vld [vmem:[#allocation4 + $0x16] sm:$0xff]
      %v999 = vlaneseq
      %v1000 = vshrl.u32 %v999, 7
      %v1001 = vsub.s32 6, %v1000
      %v1002 = vrot.slane %v842, %v1001
      %v1003 = vmul.f32 %v998, %v1002
      %v1004 = vadd.f32 %v997, %v1003
      %v1005 = vld [vmem:[#allocation4 + $0x17] sm:$0xff]
      %v1006 = vlaneseq
      %v1007 = vshrl.u32 %v1006, 7
      %v1008 = vsub.s32 7, %v1007
      %v1009 = vrot.slane %v842, %v1008
      %v1010 = vmul.f32 %v1005, %v1009
      %v1011 = vadd.f32 %v1004, %v1010
      %v1012 = vld [vmem:[#allocation4 + $0x18] sm:$0xff]
      %v1013 = vlaneseq
      %v1014 = vshrl.u32 %v1013, 7
      %v1015 = vsub.s32 0, %v1014
      %v1016 = vrot.slane %v843, %v1015
      %v1017 = vmul.f32 %v1012, %v1016
      %v1018 = vadd.f32 %v1011, %v1017
      %v1019 = vld [vmem:[#allocation4 + $0x19] sm:$0xff]
      %v1020 = vlaneseq
      %v1021 = vshrl.u32 %v1020, 7
      %v1022 = vsub.s32 1, %v1021
      %v1023 = vrot.slane %v843, %v1022
      %v1024 = vmul.f32 %v1019, %v1023
      %v1025 = vadd.f32 %v1018, %v1024
      %v1026 = vld [vmem:[#allocation4 + $0x1a] sm:$0xff]
      %v1027 = vlaneseq
      %v1028 = vshrl.u32 %v1027, 7
      %v1029 = vsub.s32 2, %v1028
      %v1030 = vrot.slane %v843, %v1029
      %v1031 = vmul.f32 %v1026, %v1030
      %v1032 = vadd.f32 %v1025, %v1031
      %v1033 = vld [vmem:[#allocation4 + $0x1b] sm:$0xff]
      %v1034 = vlaneseq
      %v1035 = vshrl.u32 %v1034, 7
      %v1036 = vsub.s32 3, %v1035
      %v1037 = vrot.slane %v843, %v1036
      %v1038 = vmul.f32 %v1033, %v1037
      %v1039 = vadd.f32 %v1032, %v1038
      %v1040 = vld [vmem:[#allocation4 + $0x1c] sm:$0xff]
      %v1041 = vlaneseq
      %v1042 = vshrl.u32 %v1041, 7
      %v1043 = vsub.s32 4, %v1042
      %v1044 = vrot.slane %v843, %v1043
      %v1045 = vmul.f32 %v1040, %v1044
      %v1046 = vadd.f32 %v1039, %v1045
      %v1047 = vld [vmem:[#allocation4 + $0x1d] sm:$0xff]
      %v1048 = vlaneseq
      %v1049 = vshrl.u32 %v1048, 7
      %v1050 = vsub.s32 5, %v1049
      %v1051 = vrot.slane %v843, %v1050
      %v1052 = vmul.f32 %v1047, %v1051
      %v1053 = vadd.f32 %v1046, %v1052
      %v1054 = vld [vmem:[#allocation4 + $0x1e] sm:$0xff]
      %v1055 = vlaneseq
      %v1056 = vshrl.u32 %v1055, 7
      %v1057 = vsub.s32 6, %v1056
      %v1058 = vrot.slane %v843, %v1057
      %v1059 = vmul.f32 %v1054, %v1058
      %v1060 = vadd.f32 %v1053, %v1059
      %v1061 = vmul.f32 %v1060, %v836
      %v1062 = vpack.c.bf16 %v814, %v814
      %v1063 = vpack.c.bf16 %v832, %v832
      %v1065 = vlaneseq
      %v1066 = vshrl.u32 %v1065, 7
      %v1067 = vsub.s32 0, %v1066
      %v1068 = vrot.slane %v649, %v1067
      %1071 = vrot.lane.b32.xlu0 %v1063, 64
      %v1072 = vpop.permute.xlu0 %1071
      %v1074 = vsel %vm641, %v1062, 0
      %v1077 = vsel %vm641, %v1072, 0
      %1079 = vmatprep.subr.bf16.mxu0 0
      %1080 = vmatpush1.bf16.xpose.msra.mxu0 0
      %1081 = vmatprep.subr.bf16.mxu0 0
      %1082 = vmatpush1.bf16.xpose.msra.mxu0 0
      %1083 = vmatprep.subr.bf16.mxu0 0
      %1084 = vmatpush1.bf16.xpose.msra.mxu0 0
      %1085 = vmatprep.subr.bf16.mxu0 0
      %1086 = vmatpush1.bf16.xpose.msra.mxu0 0
      %1087 = vmatprep.subr.bf16.mxu0 0
      %1088 = vmatpush1.bf16.xpose.msra.mxu0 0
      %1089 = vmatprep.subr.bf16.mxu0 0
      %1090 = vmatpush1.bf16.xpose.msra.mxu0 0
      %1091 = vmatprep.subr.bf16.mxu0 0
      %1092 = vmatpush1.bf16.xpose.msra.mxu0 0
      %1093 = vmatprep.subr.bf16.mxu0 0
      %1094 = vmatpush1.bf16.xpose.msra.mxu0 %v1077
      %1095 = vmatprep.subr.bf16.mxu0 0
      %1096 = vmatpush2.bf16.xpose.msra.mxu0 0
      %1097 = vmatprep.subr.bf16.mxu0 0
      %1098 = vmatpush2.bf16.xpose.msra.mxu0 0
      %1099 = vmatprep.subr.bf16.mxu0 0
      %1100 = vmatpush2.bf16.xpose.msra.mxu0 0
      %1101 = vmatprep.subr.bf16.mxu0 0
      %1102 = vmatpush2.bf16.xpose.msra.mxu0 0
      %1103 = vmatprep.subr.bf16.mxu0 0
      %1104 = vmatpush2.bf16.xpose.msra.mxu0 0
      %1105 = vmatprep.subr.bf16.mxu0 0
      %1106 = vmatpush2.bf16.xpose.msra.mxu0 0
      %1107 = vmatprep.subr.bf16.mxu0 0
      %1108 = vmatpush2.bf16.xpose.msra.mxu0 0
      %1109 = vmatprep.subr.bf16.mxu0 0
      %1110 = vmatpush2.bf16.xpose.msra.mxu0 0
      %1111 = vmatprep.mubr.bf16.mxu0 0
      %1112 = vmatmul.mubr.bf16.gmra.mxu0 %v1074
      %v1113 = vpop.f32.mrf.mxu0
      %v1114 = vadd.f32 %v1068, %v1113
      %v1115 = vpop.f32.mrf.mxu0
      %v1116 = vpop.f32.mrf.mxu0
      %v1117 = vpop.f32.mrf.mxu0
      %1118 = vdwg.mxu0
      %vm1119 = vcmask 64512
      %v1120 = vsel %vm1119, %v1114, -inf
      %1121 = vmax.xlane.f32.xlu0 %v1120
      %v1122 = vpop.xlane.xlu0 %1121
      %v1123 = vsub.f32 %v1114, %v1122
      %v1124 = vmul.f32 %v1123, 1.442695
      %v1125 = vpow.pop %v1124
      %v1126 = vsel %vm1119, %v1125, 0.0
      %1127 = vadd.xlane.f32.xlu0 %v1126
      %v1128 = vpop.xlane.xlu0 %1127
      %v1129 = vrcp.pop %v1128
      %v1130 = vmul.f32 %v1125, %v1129
      %v1131 = vpack.c.bf16 %v1130, %v1130
      %v1132 = vpack.c.bf16 %v797, %v797
      %v1134 = vsel %vm1119, %v1131, 0
      %vm1136 = vcmask 1043456
      %v1138 = vsel %vm1136, %v1132, 0
      %1140 = vmatprep.subr.bf16.mxu0 0
      %1141 = vmatpush1.bf16.msra.mxu0 0
      %1142 = vmatprep.subr.bf16.mxu0 0
      %1143 = vmatpush1.bf16.msra.mxu0 0
      %1144 = vmatprep.subr.bf16.mxu0 0
      %1145 = vmatpush1.bf16.msra.mxu0 0
      %1146 = vmatprep.subr.bf16.mxu0 0
      %1147 = vmatpush1.bf16.msra.mxu0 0
      %1148 = vmatprep.subr.bf16.mxu0 0
      %1149 = vmatpush1.bf16.msra.mxu0 0
      %1150 = vmatprep.subr.bf16.mxu0 0
      %1151 = vmatpush1.bf16.msra.mxu0 0
      %1152 = vmatprep.subr.bf16.mxu0 0
      %1153 = vmatpush1.bf16.msra.mxu0 0
      %1154 = vmatprep.subr.bf16.mxu0 0
      %1155 = vmatpush1.bf16.msra.mxu0 %v1138
      %1156 = vmatprep.subr.bf16.mxu0 0
      %1157 = vmatpush2.bf16.msra.mxu0 0
      %1158 = vmatprep.subr.bf16.mxu0 0
      %1159 = vmatpush2.bf16.msra.mxu0 0
      %1160 = vmatprep.subr.bf16.mxu0 0
      %1161 = vmatpush2.bf16.msra.mxu0 0
      %1162 = vmatprep.subr.bf16.mxu0 0
      %1163 = vmatpush2.bf16.msra.mxu0 0
      %1164 = vmatprep.subr.bf16.mxu0 0
      %1165 = vmatpush2.bf16.msra.mxu0 0
      %1166 = vmatprep.subr.bf16.mxu0 0
      %1167 = vmatpush2.bf16.msra.mxu0 0
      %1168 = vmatprep.subr.bf16.mxu0 0
      %1169 = vmatpush2.bf16.msra.mxu0 0
      %1170 = vmatprep.subr.bf16.mxu0 0
      %1171 = vmatpush2.bf16.msra.mxu0 0
      %1172 = vmatprep.mubr.bf16.mxu0 0
      %1173 = vmatmul.mubr.bf16.gmra.mxu0 %v1134
      %v1174 = vpop.f32.mrf.mxu0
      %v1175 = vadd.f32 0.0, %v1174
      %v1176 = vpop.f32.mrf.mxu0
      %v1177 = vpop.f32.mrf.mxu0
      %v1178 = vpop.f32.mrf.mxu0
      %1179 = vdwg.mxu0
      %v1180 = vld [vmem:[#allocation3] sm:$0xff]
      %v1181 = vpack.c.bf16 %v1175, %v1175
      %v1182 = vld [vmem:[%s575] sm:$0xf]
      %v1183 = vld [vmem:[%s575 + $0x4] sm:$0xf]
      %v1184 = vld [vmem:[%s575 + $0x8] sm:$0xf]
      %v1185 = vld [vmem:[%s575 + $0xc] sm:$0xf]
      %v1186 = vld [vmem:[%s575 + $0x10] sm:$0xf]
      %v1187 = vld [vmem:[%s575 + $0x14] sm:$0xf]
      %v1188 = vld [vmem:[%s575 + $0x18] sm:$0xf]
      %v1189 = vld [vmem:[%s575 + $0x1c] sm:$0xf]
      %v1198 = vunpack.c.l.b16 %v1182
      %v1199 = vunpack.c.l.b16 %v1183
      %v1200 = vunpack.c.l.b16 %v1184
      %v1201 = vunpack.c.l.b16 %v1185
      %v1202 = vunpack.c.l.b16 %v1186
      %v1203 = vunpack.c.l.b16 %v1187
      %v1204 = vunpack.c.l.b16 %v1188
      %v1205 = vunpack.c.l.b16 %v1189
      %v1206 = vpack.c.b16 %v1199, %v1198
      %v1207 = vpack.c.b16 %v1201, %v1200
      %v1208 = vpack.c.b16 %v1203, %v1202
      %v1209 = vpack.c.b16 %v1205, %v1204
      %v1215 = vsel %vm641, %v1181, 0
      %1217 = vmatprep.subr.bf16.mxu0 0
      %1218 = vmatpush1.bf16.msra.mxu0 0
      %1219 = vmatprep.subr.bf16.mxu0 0
      %1220 = vmatpush1.bf16.msra.mxu0 0
      %1221 = vmatprep.subr.bf16.mxu0 0
      %1222 = vmatpush1.bf16.msra.mxu0 0
      %1223 = vmatprep.subr.bf16.mxu0 0
      %1224 = vmatpush1.bf16.msra.mxu0 0
      %1225 = vmatprep.subr.bf16.mxu0 0
      %1226 = vmatpush1.bf16.msra.mxu0 %v1209
      %1227 = vmatprep.subr.bf16.mxu0 0
      %1228 = vmatpush1.bf16.msra.mxu0 %v1208
      %1229 = vmatprep.subr.bf16.mxu0 0
      %1230 = vmatpush1.bf16.msra.mxu0 %v1207
      %1231 = vmatprep.subr.bf16.mxu0 0
      %1232 = vmatpush1.bf16.msra.mxu0 %v1206
      %1233 = vmatprep.subr.bf16.mxu0 0
      %1234 = vmatpush2.bf16.msra.mxu0 0
      %1235 = vmatprep.subr.bf16.mxu0 0
      %1236 = vmatpush2.bf16.msra.mxu0 0
      %1237 = vmatprep.subr.bf16.mxu0 0
      %1238 = vmatpush2.bf16.msra.mxu0 0
      %1239 = vmatprep.subr.bf16.mxu0 0
      %1240 = vmatpush2.bf16.msra.mxu0 0
      %1241 = vmatprep.subr.bf16.mxu0 0
      %1242 = vmatpush2.bf16.msra.mxu0 0
      %1243 = vmatprep.subr.bf16.mxu0 0
      %1244 = vmatpush2.bf16.msra.mxu0 0
      %1245 = vmatprep.subr.bf16.mxu0 0
      %1246 = vmatpush2.bf16.msra.mxu0 0
      %1247 = vmatprep.subr.bf16.mxu0 0
      %1248 = vmatpush2.bf16.msra.mxu0 0
      %1249 = vmatprep.mubr.bf16.mxu0 0
      %1250 = vmatmul.mubr.bf16.gmra.mxu0 %v1215
      %v1251 = vpop.f32.mrf.mxu0
      %v1252 = vadd.f32 0.0, %v1251
      %v1253 = vpop.f32.mrf.mxu0
      %v1254 = vpop.f32.mrf.mxu0
      %v1255 = vpop.f32.mrf.mxu0
      %1256 = vdwg.mxu0
      %v1257 = vadd.f32 %v1180, %v1252
      %1258 = vst [vmem:[#allocation3] sm:$0xff] %v1257
      %s1259 = scalar_lea.vmem %s562, 128
      %v1260 = vld [vmem:[%s1259] sm:$0xff]
      %v1261 = vld [vmem:[%s1259 + $0x8] sm:$0xff]
      %v1262 = vld [vmem:[%s1259 + $0x10] sm:$0xff]
      %v1263 = vld [vmem:[%s1259 + $0x18] sm:$0xff]
      %v1264 = vld [vmem:[%s1259 + $0x20] sm:$0xff]
      %v1265 = vld [vmem:[%s1259 + $0x28] sm:$0xff]
      %v1266 = vld [vmem:[%s1259 + $0x30] sm:$0xff]
      %v1267 = vld [vmem:[%s1259 + $0x38] sm:$0xff]
      %v1268 = vld [vmem:[%s1259 + $0x40] sm:$0xff]
      %v1269 = vld [vmem:[%s1259 + $0x48] sm:$0xff]
      %v1270 = vld [vmem:[%s1259 + $0x50] sm:$0xff]
      %v1271 = vld [vmem:[%s1259 + $0x58] sm:$0xff]
      %v1272 = vld [vmem:[%s1259 + $0x60] sm:$0xff]
      %v1273 = vld [vmem:[%s1259 + $0x68] sm:$0xff]
      %v1274 = vld [vmem:[%s1259 + $0x70] sm:$0xff]
      %v1275 = vld [vmem:[%s1259 + $0x78] sm:$0xff]
      %s1276 = scalar_lea.vmem %s568, 2
      %v1277 = vld [vmem:[%s1276] sm:$0x3]
      %v1279 = vlaneseq
      %v1280 = vshrl.u32 %v1279, 7
      %v1281 = vsub.s32 0, %v1280
      %v1282 = vrot.slane %v1277, %v1281
      %v1283 = vlaneseq
      %v1284 = vshrl.u32 %v1283, 7
      %v1285 = vsub.s32 1, %v1284
      %v1286 = vrot.slane %v1277, %v1285
      %v1305 = vunpack.c.l.b16 %v1260
      %v1306 = vunpack.c.h.b16 %v1260
      %v1307 = vunpack.c.l.b16 %v1261
      %v1308 = vunpack.c.h.b16 %v1261
      %v1309 = vunpack.c.l.b16 %v1262
      %v1310 = vunpack.c.h.b16 %v1262
      %v1311 = vunpack.c.l.b16 %v1263
      %v1312 = vunpack.c.h.b16 %v1263
      %v1313 = vunpack.c.l.b16 %v1264
      %v1314 = vunpack.c.h.b16 %v1264
      %v1315 = vunpack.c.l.b16 %v1265
      %v1316 = vunpack.c.h.b16 %v1265
      %v1317 = vunpack.c.l.b16 %v1266
      %v1318 = vunpack.c.h.b16 %v1266
      %v1319 = vunpack.c.l.b16 %v1267
      %v1320 = vunpack.c.h.b16 %v1267
      %v1321 = vunpack.c.l.b16 %v1268
      %v1322 = vunpack.c.h.b16 %v1268
      %v1323 = vunpack.c.l.b16 %v1269
      %v1324 = vunpack.c.h.b16 %v1269
      %v1325 = vunpack.c.l.b16 %v1270
      %v1326 = vunpack.c.h.b16 %v1270
      %v1327 = vunpack.c.l.b16 %v1271
      %v1328 = vunpack.c.h.b16 %v1271
      %v1329 = vunpack.c.l.b16 %v1272
      %v1330 = vunpack.c.h.b16 %v1272
      %v1331 = vunpack.c.l.b16 %v1273
      %v1332 = vunpack.c.h.b16 %v1273
      %v1333 = vunpack.c.l.b16 %v1274
      %v1334 = vunpack.c.h.b16 %v1274
      %v1335 = vunpack.c.l.b16 %v1275
      %v1336 = vunpack.c.h.b16 %v1275
      %v1337 = vpack.c.b16 %v1307, %v1305
      %v1338 = vpack.c.b16 %v1308, %v1306
      %v1339 = vpack.c.b16 %v1311, %v1309
      %v1340 = vpack.c.b16 %v1312, %v1310
      %v1341 = vpack.c.b16 %v1315, %v1313
      %v1342 = vpack.c.b16 %v1316, %v1314
      %v1343 = vpack.c.b16 %v1319, %v1317
      %v1344 = vpack.c.b16 %v1320, %v1318
      %v1345 = vpack.c.b16 %v1323, %v1321
      %v1346 = vpack.c.b16 %v1324, %v1322
      %v1347 = vpack.c.b16 %v1327, %v1325
      %v1348 = vpack.c.b16 %v1328, %v1326
      %v1349 = vpack.c.b16 %v1331, %v1329
      %v1350 = vpack.c.b16 %v1332, %v1330
      %v1351 = vpack.c.b16 %v1335, %v1333
      %v1352 = vpack.c.b16 %v1336, %v1334
      %1369 = vmatprep.subr.bf16.mxu0 %v1352
      %1370 = vmatpush1.bf16.msra.mxu0 %v1351
      %1371 = vmatprep.subr.bf16.mxu0 %v1350
      %1372 = vmatpush1.bf16.msra.mxu0 %v1349
      %1373 = vmatprep.subr.bf16.mxu0 %v1348
      %1374 = vmatpush1.bf16.msra.mxu0 %v1347
      %1375 = vmatprep.subr.bf16.mxu0 %v1346
      %1376 = vmatpush1.bf16.msra.mxu0 %v1345
      %1377 = vmatprep.subr.bf16.mxu0 %v1344
      %1378 = vmatpush1.bf16.msra.mxu0 %v1343
      %1379 = vmatprep.subr.bf16.mxu0 %v1342
      %1380 = vmatpush1.bf16.msra.mxu0 %v1341
      %1381 = vmatprep.subr.bf16.mxu0 %v1340
      %1382 = vmatpush1.bf16.msra.mxu0 %v1339
      %1383 = vmatprep.subr.bf16.mxu0 %v1338
      %1384 = vmatpush1.bf16.msra.mxu0 %v1337
      %1385 = vmatprep.subr.bf16.mxu0 0
      %1386 = vmatpush2.bf16.msra.mxu0 0
      %1387 = vmatprep.subr.bf16.mxu0 0
      %1388 = vmatpush2.bf16.msra.mxu0 0
      %1389 = vmatprep.subr.bf16.mxu0 0
      %1390 = vmatpush2.bf16.msra.mxu0 0
      %1391 = vmatprep.subr.bf16.mxu0 0
      %1392 = vmatpush2.bf16.msra.mxu0 0
      %1393 = vmatprep.subr.bf16.mxu0 0
      %1394 = vmatpush2.bf16.msra.mxu0 0
      %1395 = vmatprep.subr.bf16.mxu0 0
      %1396 = vmatpush2.bf16.msra.mxu0 0
      %1397 = vmatprep.subr.bf16.mxu0 0
      %1398 = vmatpush2.bf16.msra.mxu0 0
      %1399 = vmatprep.subr.bf16.mxu0 0
      %1400 = vmatpush2.bf16.msra.mxu0 0
      %1401 = vmatprep.mubr.bf16.mxu0 0
      %1402 = vmatmul.mubr.bf16.gmra.mxu0 %v647
      %v1403 = vpop.f32.mrf.mxu0
      %v1404 = vadd.f32 %v1282, %v1403
      %v1405 = vpop.f32.mrf.mxu0
      %v1406 = vadd.f32 %v1286, %v1405
      %v1407 = vpop.f32.mrf.mxu0
      %v1408 = vpop.f32.mrf.mxu0
      %1409 = vdwg.mxu0
      %v1410 = vsub.f32 0.0, %v1404
      %1412 = vrot.lane.b32.xlu0 %v1410, 96
      %v1413 = vpop.permute.xlu0 %1412
      %1416 = vrot.lane.b32.xlu0 %v1404, 32
      %v1417 = vpop.permute.xlu0 %1416
      %v1419 = vsel %vm810, %v1413, %v1417
      %v1420 = vmul.f32 %v1404, %v650
      %v1421 = vmul.f32 %v1419, %v651
      %v1422 = vadd.f32 %v1420, %v1421
      %1423 = vrot.lane.b32.xlu0 %v1410, 32
      %v1424 = vpop.permute.xlu0 %1423
      %1426 = vrot.lane.b32.xlu0 %v1404, 96
      %v1427 = vpop.permute.xlu0 %1426
      %v1429 = vsel %vm810, %v1424, %v1427
      %v1430 = vmul.f32 %v1404, %v824
      %v1431 = vmul.f32 %v1429, %v651
      %1433 = vrot.lane.b32.xlu0 %v1431, 64
      %v1434 = vpop.permute.xlu0 %1433
      %v1436 = vadd.f32 %v1430, %v1434
      %v1437 = vmul.f32 %v1406, %v836
      %1438 = vst.msk [vmem:[#allocation4 + $0xf] sm:$0xff] %vm641, %v1437
      %s1439 = scalar_lea.vmem %s582, 32
      %v1440 = vld [vmem:[%s1439] sm:$0xff]
      %v1441 = vld [vmem:[%s1439 + $0x8] sm:$0xff]
      %v1442 = vld [vmem:[%s1439 + $0x10] sm:$0xff]
      %v1443 = vld [vmem:[%s1439 + $0x18] sm:$0x7f]
      %v1444 = vld [vmem:[#allocation4] sm:$0xff]
      %v1445 = vlaneseq
      %v1446 = vshrl.u32 %v1445, 7
      %v1447 = vsub.s32 0, %v1446
      %v1448 = vrot.slane %v1440, %v1447
      %v1449 = vmul.f32 %v1444, %v1448
      %v1450 = vadd.f32 %v1437, %v1449
      %v1451 = vld [vmem:[#allocation4 + $0x1] sm:$0xff]
      %v1452 = vlaneseq
      %v1453 = vshrl.u32 %v1452, 7
      %v1454 = vsub.s32 1, %v1453
      %v1455 = vrot.slane %v1440, %v1454
      %v1456 = vmul.f32 %v1451, %v1455
      %v1457 = vadd.f32 %v1450, %v1456
      %v1458 = vld [vmem:[#allocation4 + $0x2] sm:$0xff]
      %v1459 = vlaneseq
      %v1460 = vshrl.u32 %v1459, 7
      %v1461 = vsub.s32 2, %v1460
      %v1462 = vrot.slane %v1440, %v1461
      %v1463 = vmul.f32 %v1458, %v1462
      %v1464 = vadd.f32 %v1457, %v1463
      %v1465 = vld [vmem:[#allocation4 + $0x3] sm:$0xff]
      %v1466 = vlaneseq
      %v1467 = vshrl.u32 %v1466, 7
      %v1468 = vsub.s32 3, %v1467
      %v1469 = vrot.slane %v1440, %v1468
      %v1470 = vmul.f32 %v1465, %v1469
      %v1471 = vadd.f32 %v1464, %v1470
      %v1472 = vld [vmem:[#allocation4 + $0x4] sm:$0xff]
      %v1473 = vlaneseq
      %v1474 = vshrl.u32 %v1473, 7
      %v1475 = vsub.s32 4, %v1474
      %v1476 = vrot.slane %v1440, %v1475
      %v1477 = vmul.f32 %v1472, %v1476
      %v1478 = vadd.f32 %v1471, %v1477
      %v1479 = vld [vmem:[#allocation4 + $0x5] sm:$0xff]
      %v1480 = vlaneseq
      %v1481 = vshrl.u32 %v1480, 7
      %v1482 = vsub.s32 5, %v1481
      %v1483 = vrot.slane %v1440, %v1482
      %v1484 = vmul.f32 %v1479, %v1483
      %v1485 = vadd.f32 %v1478, %v1484
      %v1486 = vld [vmem:[#allocation4 + $0x6] sm:$0xff]
      %v1487 = vlaneseq
      %v1488 = vshrl.u32 %v1487, 7
      %v1489 = vsub.s32 6, %v1488
      %v1490 = vrot.slane %v1440, %v1489
      %v1491 = vmul.f32 %v1486, %v1490
      %v1492 = vadd.f32 %v1485, %v1491
      %v1493 = vld [vmem:[#allocation4 + $0x7] sm:$0xff]
      %v1494 = vlaneseq
      %v1495 = vshrl.u32 %v1494, 7
      %v1496 = vsub.s32 7, %v1495
      %v1497 = vrot.slane %v1440, %v1496
      %v1498 = vmul.f32 %v1493, %v1497
      %v1499 = vadd.f32 %v1492, %v1498
      %v1500 = vld [vmem:[#allocation4 + $0x8] sm:$0xff]
      %v1501 = vlaneseq
      %v1502 = vshrl.u32 %v1501, 7
      %v1503 = vsub.s32 0, %v1502
      %v1504 = vrot.slane %v1441, %v1503
      %v1505 = vmul.f32 %v1500, %v1504
      %v1506 = vadd.f32 %v1499, %v1505
      %v1507 = vld [vmem:[#allocation4 + $0x9] sm:$0xff]
      %v1508 = vlaneseq
      %v1509 = vshrl.u32 %v1508, 7
      %v1510 = vsub.s32 1, %v1509
      %v1511 = vrot.slane %v1441, %v1510
      %v1512 = vmul.f32 %v1507, %v1511
      %v1513 = vadd.f32 %v1506, %v1512
      %v1514 = vld [vmem:[#allocation4 + $0xa] sm:$0xff]
      %v1515 = vlaneseq
      %v1516 = vshrl.u32 %v1515, 7
      %v1517 = vsub.s32 2, %v1516
      %v1518 = vrot.slane %v1441, %v1517
      %v1519 = vmul.f32 %v1514, %v1518
      %v1520 = vadd.f32 %v1513, %v1519
      %v1521 = vld [vmem:[#allocation4 + $0xb] sm:$0xff]
      %v1522 = vlaneseq
      %v1523 = vshrl.u32 %v1522, 7
      %v1524 = vsub.s32 3, %v1523
      %v1525 = vrot.slane %v1441, %v1524
      %v1526 = vmul.f32 %v1521, %v1525
      %v1527 = vadd.f32 %v1520, %v1526
      %v1528 = vld [vmem:[#allocation4 + $0xc] sm:$0xff]
      %v1529 = vlaneseq
      %v1530 = vshrl.u32 %v1529, 7
      %v1531 = vsub.s32 4, %v1530
      %v1532 = vrot.slane %v1441, %v1531
      %v1533 = vmul.f32 %v1528, %v1532
      %v1534 = vadd.f32 %v1527, %v1533
      %v1535 = vld [vmem:[#allocation4 + $0xd] sm:$0xff]
      %v1536 = vlaneseq
      %v1537 = vshrl.u32 %v1536, 7
      %v1538 = vsub.s32 5, %v1537
      %v1539 = vrot.slane %v1441, %v1538
      %v1540 = vmul.f32 %v1535, %v1539
      %v1541 = vadd.f32 %v1534, %v1540
      %v1542 = vld [vmem:[#allocation4 + $0xe] sm:$0xff]
      %v1543 = vlaneseq
      %v1544 = vshrl.u32 %v1543, 7
      %v1545 = vsub.s32 6, %v1544
      %v1546 = vrot.slane %v1441, %v1545
      %v1547 = vmul.f32 %v1542, %v1546
      %v1548 = vadd.f32 %v1541, %v1547
      %v1549 = vld [vmem:[#allocation4 + $0xf] sm:$0xff]
      %v1550 = vlaneseq
      %v1551 = vshrl.u32 %v1550, 7
      %v1552 = vsub.s32 7, %v1551
      %v1553 = vrot.slane %v1441, %v1552
      %v1554 = vmul.f32 %v1549, %v1553
      %v1555 = vadd.f32 %v1548, %v1554
      %v1556 = vld [vmem:[#allocation4 + $0x10] sm:$0xff]
      %v1557 = vlaneseq
      %v1558 = vshrl.u32 %v1557, 7
      %v1559 = vsub.s32 0, %v1558
      %v1560 = vrot.slane %v1442, %v1559
      %v1561 = vmul.f32 %v1556, %v1560
      %v1562 = vadd.f32 %v1555, %v1561
      %v1563 = vld [vmem:[#allocation4 + $0x11] sm:$0xff]
      %v1564 = vlaneseq
      %v1565 = vshrl.u32 %v1564, 7
      %v1566 = vsub.s32 1, %v1565
      %v1567 = vrot.slane %v1442, %v1566
      %v1568 = vmul.f32 %v1563, %v1567
      %v1569 = vadd.f32 %v1562, %v1568
      %v1570 = vld [vmem:[#allocation4 + $0x12] sm:$0xff]
      %v1571 = vlaneseq
      %v1572 = vshrl.u32 %v1571, 7
      %v1573 = vsub.s32 2, %v1572
      %v1574 = vrot.slane %v1442, %v1573
      %v1575 = vmul.f32 %v1570, %v1574
      %v1576 = vadd.f32 %v1569, %v1575
      %v1577 = vld [vmem:[#allocation4 + $0x13] sm:$0xff]
      %v1578 = vlaneseq
      %v1579 = vshrl.u32 %v1578, 7
      %v1580 = vsub.s32 3, %v1579
      %v1581 = vrot.slane %v1442, %v1580
      %v1582 = vmul.f32 %v1577, %v1581
      %v1583 = vadd.f32 %v1576, %v1582
      %v1584 = vld [vmem:[#allocation4 + $0x14] sm:$0xff]
      %v1585 = vlaneseq
      %v1586 = vshrl.u32 %v1585, 7
      %v1587 = vsub.s32 4, %v1586
      %v1588 = vrot.slane %v1442, %v1587
      %v1589 = vmul.f32 %v1584, %v1588
      %v1590 = vadd.f32 %v1583, %v1589
      %v1591 = vld [vmem:[#allocation4 + $0x15] sm:$0xff]
      %v1592 = vlaneseq
      %v1593 = vshrl.u32 %v1592, 7
      %v1594 = vsub.s32 5, %v1593
      %v1595 = vrot.slane %v1442, %v1594
      %v1596 = vmul.f32 %v1591, %v1595
      %v1597 = vadd.f32 %v1590, %v1596
      %v1598 = vld [vmem:[#allocation4 + $0x16] sm:$0xff]
      %v1599 = vlaneseq
      %v1600 = vshrl.u32 %v1599, 7
      %v1601 = vsub.s32 6, %v1600
      %v1602 = vrot.slane %v1442, %v1601
      %v1603 = vmul.f32 %v1598, %v1602
      %v1604 = vadd.f32 %v1597, %v1603
      %v1605 = vld [vmem:[#allocation4 + $0x17] sm:$0xff]
      %v1606 = vlaneseq
      %v1607 = vshrl.u32 %v1606, 7
      %v1608 = vsub.s32 7, %v1607
      %v1609 = vrot.slane %v1442, %v1608
      %v1610 = vmul.f32 %v1605, %v1609
      %v1611 = vadd.f32 %v1604, %v1610
      %v1612 = vld [vmem:[#allocation4 + $0x18] sm:$0xff]
      %v1613 = vlaneseq
      %v1614 = vshrl.u32 %v1613, 7
      %v1615 = vsub.s32 0, %v1614
      %v1616 = vrot.slane %v1443, %v1615
      %v1617 = vmul.f32 %v1612, %v1616
      %v1618 = vadd.f32 %v1611, %v1617
      %v1619 = vld [vmem:[#allocation4 + $0x19] sm:$0xff]
      %v1620 = vlaneseq
      %v1621 = vshrl.u32 %v1620, 7
      %v1622 = vsub.s32 1, %v1621
      %v1623 = vrot.slane %v1443, %v1622
      %v1624 = vmul.f32 %v1619, %v1623
      %v1625 = vadd.f32 %v1618, %v1624
      %v1626 = vld [vmem:[#allocation4 + $0x1a] sm:$0xff]
      %v1627 = vlaneseq
      %v1628 = vshrl.u32 %v1627, 7
      %v1629 = vsub.s32 2, %v1628
      %v1630 = vrot.slane %v1443, %v1629
      %v1631 = vmul.f32 %v1626, %v1630
      %v1632 = vadd.f32 %v1625, %v1631
      %v1633 = vld [vmem:[#allocation4 + $0x1b] sm:$0xff]
      %v1634 = vlaneseq
      %v1635 = vshrl.u32 %v1634, 7
      %v1636 = vsub.s32 3, %v1635
      %v1637 = vrot.slane %v1443, %v1636
      %v1638 = vmul.f32 %v1633, %v1637
      %v1639 = vadd.f32 %v1632, %v1638
      %v1640 = vld [vmem:[#allocation4 + $0x1c] sm:$0xff]
      %v1641 = vlaneseq
      %v1642 = vshrl.u32 %v1641, 7
      %v1643 = vsub.s32 4, %v1642
      %v1644 = vrot.slane %v1443, %v1643
      %v1645 = vmul.f32 %v1640, %v1644
      %v1646 = vadd.f32 %v1639, %v1645
      %v1647 = vld [vmem:[#allocation4 + $0x1d] sm:$0xff]
      %v1648 = vlaneseq
      %v1649 = vshrl.u32 %v1648, 7
      %v1650 = vsub.s32 5, %v1649
      %v1651 = vrot.slane %v1443, %v1650
      %v1652 = vmul.f32 %v1647, %v1651
      %v1653 = vadd.f32 %v1646, %v1652
      %v1654 = vld [vmem:[#allocation4 + $0x1e] sm:$0xff]
      %v1655 = vlaneseq
      %v1656 = vshrl.u32 %v1655, 7
      %v1657 = vsub.s32 6, %v1656
      %v1658 = vrot.slane %v1443, %v1657
      %v1659 = vmul.f32 %v1654, %v1658
      %v1660 = vadd.f32 %v1653, %v1659
      %v1661 = vmul.f32 %v1660, %v836
      %v1662 = vpack.c.bf16 %v1422, %v1422
      %v1663 = vpack.c.bf16 %v1436, %v1436
      %1665 = vrot.lane.b32.xlu0 %v1663, 64
      %v1666 = vpop.permute.xlu0 %1665
      %v1668 = vsel %vm641, %v1662, 0
      %v1671 = vsel %vm641, %v1666, 0
      %1673 = vmatprep.subr.bf16.mxu0 0
      %1674 = vmatpush1.bf16.xpose.msra.mxu0 0
      %1675 = vmatprep.subr.bf16.mxu0 0
      %1676 = vmatpush1.bf16.xpose.msra.mxu0 0
      %1677 = vmatprep.subr.bf16.mxu0 0
      %1678 = vmatpush1.bf16.xpose.msra.mxu0 0
      %1679 = vmatprep.subr.bf16.mxu0 0
      %1680 = vmatpush1.bf16.xpose.msra.mxu0 0
      %1681 = vmatprep.subr.bf16.mxu0 0
      %1682 = vmatpush1.bf16.xpose.msra.mxu0 0
      %1683 = vmatprep.subr.bf16.mxu0 0
      %1684 = vmatpush1.bf16.xpose.msra.mxu0 0
      %1685 = vmatprep.subr.bf16.mxu0 0
      %1686 = vmatpush1.bf16.xpose.msra.mxu0 0
      %1687 = vmatprep.subr.bf16.mxu0 0
      %1688 = vmatpush1.bf16.xpose.msra.mxu0 %v1671
      %1689 = vmatprep.subr.bf16.mxu0 0
      %1690 = vmatpush2.bf16.xpose.msra.mxu0 0
      %1691 = vmatprep.subr.bf16.mxu0 0
      %1692 = vmatpush2.bf16.xpose.msra.mxu0 0
      %1693 = vmatprep.subr.bf16.mxu0 0
      %1694 = vmatpush2.bf16.xpose.msra.mxu0 0
      %1695 = vmatprep.subr.bf16.mxu0 0
      %1696 = vmatpush2.bf16.xpose.msra.mxu0 0
      %1697 = vmatprep.subr.bf16.mxu0 0
      %1698 = vmatpush2.bf16.xpose.msra.mxu0 0
      %1699 = vmatprep.subr.bf16.mxu0 0
      %1700 = vmatpush2.bf16.xpose.msra.mxu0 0
      %1701 = vmatprep.subr.bf16.mxu0 0
      %1702 = vmatpush2.bf16.xpose.msra.mxu0 0
      %1703 = vmatprep.subr.bf16.mxu0 0
      %1704 = vmatpush2.bf16.xpose.msra.mxu0 0
      %1705 = vmatprep.mubr.bf16.mxu0 0
      %1706 = vmatmul.mubr.bf16.gmra.mxu0 %v1668
      %v1707 = vpop.f32.mrf.mxu0
      %v1708 = vadd.f32 %v1068, %v1707
      %v1709 = vpop.f32.mrf.mxu0
      %v1710 = vpop.f32.mrf.mxu0
      %v1711 = vpop.f32.mrf.mxu0
      %1712 = vdwg.mxu0
      %v1713 = vsel %vm1119, %v1708, -inf
      %1714 = vmax.xlane.f32.xlu0 %v1713
      %v1715 = vpop.xlane.xlu0 %1714
      %v1716 = vsub.f32 %v1708, %v1715
      %v1717 = vmul.f32 %v1716, 1.442695
      %v1718 = vpow.pop %v1717
      %v1719 = vsel %vm1119, %v1718, 0.0
      %1720 = vadd.xlane.f32.xlu0 %v1719
      %v1721 = vpop.xlane.xlu0 %1720
      %v1722 = vrcp.pop %v1721
      %v1723 = vmul.f32 %v1718, %v1722
      %v1724 = vpack.c.bf16 %v1723, %v1723
      %v1725 = vpack.c.bf16 %v1406, %v1406
      %v1727 = vsel %vm1119, %v1724, 0
      %v1730 = vsel %vm1136, %v1725, 0
      %1732 = vmatprep.subr.bf16.mxu0 0
      %1733 = vmatpush1.bf16.msra.mxu0 0
      %1734 = vmatprep.subr.bf16.mxu0 0
      %1735 = vmatpush1.bf16.msra.mxu0 0
      %1736 = vmatprep.subr.bf16.mxu0 0
      %1737 = vmatpush1.bf16.msra.mxu0 0
      %1738 = vmatprep.subr.bf16.mxu0 0
      %1739 = vmatpush1.bf16.msra.mxu0 0
      %1740 = vmatprep.subr.bf16.mxu0 0
      %1741 = vmatpush1.bf16.msra.mxu0 0
      %1742 = vmatprep.subr.bf16.mxu0 0
      %1743 = vmatpush1.bf16.msra.mxu0 0
      %1744 = vmatprep.subr.bf16.mxu0 0
      %1745 = vmatpush1.bf16.msra.mxu0 0
      %1746 = vmatprep.subr.bf16.mxu0 0
      %1747 = vmatpush1.bf16.msra.mxu0 %v1730
      %1748 = vmatprep.subr.bf16.mxu0 0
      %1749 = vmatpush2.bf16.msra.mxu0 0
      %1750 = vmatprep.subr.bf16.mxu0 0
      %1751 = vmatpush2.bf16.msra.mxu0 0
      %1752 = vmatprep.subr.bf16.mxu0 0
      %1753 = vmatpush2.bf16.msra.mxu0 0
      %1754 = vmatprep.subr.bf16.mxu0 0
      %1755 = vmatpush2.bf16.msra.mxu0 0
      %1756 = vmatprep.subr.bf16.mxu0 0
      %1757 = vmatpush2.bf16.msra.mxu0 0
      %1758 = vmatprep.subr.bf16.mxu0 0
      %1759 = vmatpush2.bf16.msra.mxu0 0
      %1760 = vmatprep.subr.bf16.mxu0 0
      %1761 = vmatpush2.bf16.msra.mxu0 0
      %1762 = vmatprep.subr.bf16.mxu0 0
      %1763 = vmatpush2.bf16.msra.mxu0 0
      %1764 = vmatprep.mubr.bf16.mxu0 0
      %1765 = vmatmul.mubr.bf16.gmra.mxu0 %v1727
      %v1766 = vpop.f32.mrf.mxu0
      %v1767 = vadd.f32 0.0, %v1766
      %v1768 = vpop.f32.mrf.mxu0
      %v1769 = vpop.f32.mrf.mxu0
      %v1770 = vpop.f32.mrf.mxu0
      %1771 = vdwg.mxu0
      %v1772 = vld [vmem:[#allocation3] sm:$0xff]
      %v1773 = vpack.c.bf16 %v1767, %v1767
      %s1774 = scalar_lea.vmem %s575, 32
      %v1775 = vld [vmem:[%s1774] sm:$0xf]
      %v1776 = vld [vmem:[%s1774 + $0x4] sm:$0xf]
      %v1777 = vld [vmem:[%s1774 + $0x8] sm:$0xf]
      %v1778 = vld [vmem:[%s1774 + $0xc] sm:$0xf]
      %v1779 = vld [vmem:[%s1774 + $0x10] sm:$0xf]
      %v1780 = vld [vmem:[%s1774 + $0x14] sm:$0xf]
      %v1781 = vld [vmem:[%s1774 + $0x18] sm:$0xf]
      %v1782 = vld [vmem:[%s1774 + $0x1c] sm:$0xf]
      %v1791 = vunpack.c.l.b16 %v1775
      %v1792 = vunpack.c.l.b16 %v1776
      %v1793 = vunpack.c.l.b16 %v1777
      %v1794 = vunpack.c.l.b16 %v1778
      %v1795 = vunpack.c.l.b16 %v1779
      %v1796 = vunpack.c.l.b16 %v1780
      %v1797 = vunpack.c.l.b16 %v1781
      %v1798 = vunpack.c.l.b16 %v1782
      %v1799 = vpack.c.b16 %v1792, %v1791
      %v1800 = vpack.c.b16 %v1794, %v1793
      %v1801 = vpack.c.b16 %v1796, %v1795
      %v1802 = vpack.c.b16 %v1798, %v1797
      %v1808 = vsel %vm641, %v1773, 0
      %1810 = vmatprep.subr.bf16.mxu0 0
      %1811 = vmatpush1.bf16.msra.mxu0 0
      %1812 = vmatprep.subr.bf16.mxu0 0
      %1813 = vmatpush1.bf16.msra.mxu0 0
      %1814 = vmatprep.subr.bf16.mxu0 0
      %1815 = vmatpush1.bf16.msra.mxu0 0
      %1816 = vmatprep.subr.bf16.mxu0 0
      %1817 = vmatpush1.bf16.msra.mxu0 0
      %1818 = vmatprep.subr.bf16.mxu0 0
      %1819 = vmatpush1.bf16.msra.mxu0 %v1802
      %1820 = vmatprep.subr.bf16.mxu0 0
      %1821 = vmatpush1.bf16.msra.mxu0 %v1801
      %1822 = vmatprep.subr.bf16.mxu0 0
      %1823 = vmatpush1.bf16.msra.mxu0 %v1800
      %1824 = vmatprep.subr.bf16.mxu0 0
      %1825 = vmatpush1.bf16.msra.mxu0 %v1799
      %1826 = vmatprep.subr.bf16.mxu0 0
      %1827 = vmatpush2.bf16.msra.mxu0 0
      %1828 = vmatprep.subr.bf16.mxu0 0
      %1829 = vmatpush2.bf16.msra.mxu0 0
      %1830 = vmatprep.subr.bf16.mxu0 0
      %1831 = vmatpush2.bf16.msra.mxu0 0
      %1832 = vmatprep.subr.bf16.mxu0 0
      %1833 = vmatpush2.bf16.msra.mxu0 0
      %1834 = vmatprep.subr.bf16.mxu0 0
      %1835 = vmatpush2.bf16.msra.mxu0 0
      %1836 = vmatprep.subr.bf16.mxu0 0
      %1837 = vmatpush2.bf16.msra.mxu0 0
      %1838 = vmatprep.subr.bf16.mxu0 0
      %1839 = vmatpush2.bf16.msra.mxu0 0
      %1840 = vmatprep.subr.bf16.mxu0 0
      %1841 = vmatpush2.bf16.msra.mxu0 0
      %1842 = vmatprep.mubr.bf16.mxu0 0
      %1843 = vmatmul.mubr.bf16.gmra.mxu0 %v1808
      %v1844 = vpop.f32.mrf.mxu0
      %v1845 = vadd.f32 0.0, %v1844
      %v1846 = vpop.f32.mrf.mxu0
      %v1847 = vpop.f32.mrf.mxu0
      %v1848 = vpop.f32.mrf.mxu0
      %1849 = vdwg.mxu0
      %v1850 = vadd.f32 %v1772, %v1845
      %1851 = vst [vmem:[#allocation3] sm:$0xff] %v1850
      %1853 = vrot.lane.b32.xlu0 %v1661, 64
      %v1854 = vpop.permute.xlu0 %1853
      %v1856 = vsel %vm641, %v1061, %v1854
      %v1857 = vpack.c.bf16 %v1856, %v1856
      %1858 = vst [vmem:[%s594] sm:$0xf] %v1857
      // Predicated region
      $region73: #{s3_tokenizer_v2_forward.8} parent=67 // pred_check
        %p1859 = pneg %p596
      $region74: #{s3_tokenizer_v2_forward.8} parent=67 // pred_check_branch
        %1861 = sbr.rel (%p1859) target = $region76
      $region75: #{s3_tokenizer_v2_forward.8} parent=67 // pred_region
        %v1862 = vld [vmem:[#allocation3] sm:$0xff]
        %v1863 = vpack.c.bf16 %v1862, %v1862
        %1864 = vst [vmem:[%s587] sm:$0xf] %v1863
      $region76: #{s3_tokenizer_v2_forward.8} parent=67 // pred_fallthru
        _
      %p1865 = scmp.lt.s32.totalorder %s29, 1
      %s1866 = scalar_select %p1865, %s29, 1
      %s1867 = smul.addr %s1866, 4
      %s1868 = scalar_lea.vmem %s12, %s1867
      %p1869 = scmp.lt.s32.totalorder %s29, 1
      %s1870 = scalar_select %p1869, %s29, 1
      %p1871 = scmp.lt.s32.totalorder %s30, 0
      %s1872 = scalar_select %p1871, %s30, 0
      %s1873 = sadd.s32 %s1872, %s1870
      %s1874 = smul.addr %s1873, 4
      %s1875 = scalar_lea.vmem %s13, %s1874
      // Predicated region
      $region77: #{s3_tokenizer_v2_forward.8} parent=67 // pred_check
        %p1876 = pneg %p342
      $region78: #{s3_tokenizer_v2_forward.8} parent=67 // pred_check_branch
        %1878 = sbr.rel (%p1876) target = $region80
      $region79: #{s3_tokenizer_v2_forward.8} parent=67 // pred_region
        _
      $region80: #{s3_tokenizer_v2_forward.8} parent=67 // pred_fallthru
        _
      // Predicated region
      $region81: #{s3_tokenizer_v2_forward.8} parent=67 // pred_check
        %p1879 = pneg %p370
      $region82: #{s3_tokenizer_v2_forward.8} parent=67 // pred_check_branch
        %1881 = sbr.rel (%p1879) target = $region84
      $region83: #{s3_tokenizer_v2_forward.8} parent=67 // pred_region
        _
      $region84: #{s3_tokenizer_v2_forward.8} parent=67 // pred_fallthru
        _
    $region68: #{s3_tokenizer_v2_forward.8} parent=5 // pred_fallthru
      _
    %p1882 = scmp.le.s32.totalorder 2, %s20
    // Predicated region
    $region85: #{s3_tokenizer_v2_forward.8} parent=5 // pred_check
      %p1883 = pneg %p1882
    $region86: #{s3_tokenizer_v2_forward.8} parent=5 // pred_check_branch
      %1885 = sbr.rel (%p1883) target = $region88
    $region87: #{s3_tokenizer_v2_forward.8} parent=5 // pred_region
      %s1886 = ssub.s32 %s20, 2
      // Predicated region
      $region89: #{s3_tokenizer_v2_forward.8} parent=87 // pred_check
        %p1887 = pneg %p348
      $region90: #{s3_tokenizer_v2_forward.8} parent=87 // pred_check_branch
        %1889 = sbr.rel (%p1887) target = $region92
      $region91: #{s3_tokenizer_v2_forward.8} parent=87 // pred_region
        %p1890 = scmp.lt.s32.totalorder %s31, 1
        %s1891 = scalar_select %p1890, %s31, 1
        %s1892 = smul.addr %s1891, 4
        %s1893 = scalar_lea.vmem %s12, %s1892
      $region92: #{s3_tokenizer_v2_forward.8} parent=87 // pred_fallthru
        _
      // Predicated region
      $region93: #{s3_tokenizer_v2_forward.8} parent=87 // pred_check
        %p1894 = pneg %p376
      $region94: #{s3_tokenizer_v2_forward.8} parent=87 // pred_check_branch
        %1896 = sbr.rel (%p1894) target = $region96
      $region95: #{s3_tokenizer_v2_forward.8} parent=87 // pred_region
        %p1897 = scmp.lt.s32.totalorder %s31, 1
        %s1898 = scalar_select %p1897, %s31, 1
        %p1899 = scmp.lt.s32.totalorder %s32, 0
        %s1900 = scalar_select %p1899, %s32, 0
        %s1901 = sadd.s32 %s1900, %s1898
        %s1902 = smul.addr %s1901, 4
        %s1903 = scalar_lea.vmem %s13, %s1902
      $region96: #{s3_tokenizer_v2_forward.8} parent=87 // pred_fallthru
        _
    $region88: #{s3_tokenizer_v2_forward.8} parent=5 // pred_fallthru
      _
  $region6: #{s3_tokenizer_v2_forward.8} parent=0 // loop_footer
    %s24 = sadd.s32 1, %s20
  $region7: #{s3_tokenizer_v2_forward.8} parent=0 // loop_footer_branch
    %19 = sbr.rel target = $region3
  $region8: #{s3_tokenizer_v2_forward.8} parent=0 // loop_exit
    _

// kernel: s3_tokenizer_v2_forward.11
$region0: #{s3_tokenizer_v2_forward.11}
  #allocation0 [shape = 'u32[]', space=smem, size = 0x4, offset = 0x4, fixed_abs, tag = 'smem constant byte address 0x4 - core index']
  #allocation1 [shape = 'u32[144,128]{1,0:T(1,128)}', space=vmem, size = 0x12000, scoped, tag = 'internal scratch']
  #allocation2 [shape = 'bf16[16,128]{1,0:T(8,128)(2,1)}', space=vmem, size = 0x1000, scoped, tag = 'scratch operand']
  #allocation3 [shape = 'f32[16,128]{1,0:T(8,128)}', space=vmem, size = 0x2000, scoped, tag = 'scratch operand']
  %s0 = inlined_call_operand.vmem [shape: bf16[16,128], index: 0, kind: input, shape index: {}]
  %s1 = inlined_call_operand.vmem [shape: bf16[16,128], index: 1, kind: input, shape index: {}]
  %s2 = inlined_call_operand.vmem [shape: f32[1,128], index: 2, kind: input, shape index: {}]
  %s3 = inlined_call_operand.vmem [shape: f32[1,128], index: 3, kind: input, shape index: {}]
  %s4 = inlined_call_operand.vmem [shape: bf16[128,512], index: 4, kind: input, shape index: {}]
  %s5 = inlined_call_operand.vmem [shape: f32[1,512], index: 5, kind: input, shape index: {}]
  %s6 = inlined_call_operand.vmem [shape: bf16[512,128], index: 6, kind: input, shape index: {}]
  %s7 = inlined_call_operand.vmem [shape: f32[1,128], index: 7, kind: input, shape index: {}]
  %s8 = inlined_call_operand.vmem [shape: f32[128,8], index: 8, kind: input, shape index: {}]
  %s9 = inlined_call_operand.vmem [shape: f32[1,8], index: 9, kind: input, shape index: {}]
  %s10 = inlined_call_operand.vmem [shape: f32[1,8], index: 10, kind: input, shape index: {}]
  %s11 = inlined_call_operand.hbm [shape: bf16[16,128], index: 11, kind: output, shape index: {0}]
  %s12 = inlined_call_operand.vmem [shape: s32[16,1], index: 12, kind: output, shape index: {1}]
  %13 = xla_tuple %s11, %s12
  %s14 = sld [smem:[#allocation0]]
  $region70: #{s3_tokenizer_v2_forward.11} parent=0
    _
  %s16 = ssub.s32 1, %s14
  %s17 = scalar_select 0, %s16, %s14
  $region1: #{s3_tokenizer_v2_forward.11} parent=0
    #allocation4 [shape = 'u8[4096]{0}', space=vmem, size = 0x1000, scoped, tag = 'output window, operand 0, single buffered']
    #allocation5 [shape = 's32[1]{0}', space=sflag, size = 0x4, scoped, tag = 'scoped memory for s3_tokenizer_v2_forward.11']
    %18 = vsyncpa [#allocation5], 0
    // Predicated region
    $region2: #{s3_tokenizer_v2_forward.11} parent=1 // pred_check
      _
    $region3: #{s3_tokenizer_v2_forward.11} parent=1 // pred_check_branch
      %20 = sbr.rel (0) target = $region5
    $region4: #{s3_tokenizer_v2_forward.11} parent=1 // pred_region
      _
    $region5: #{s3_tokenizer_v2_forward.11} parent=1 // pred_fallthru
      _
    // Predicated region
    $region6: #{s3_tokenizer_v2_forward.11} parent=1 // pred_check
      _
    $region7: #{s3_tokenizer_v2_forward.11} parent=1 // pred_check_branch
      %22 = sbr.rel (0) target = $region9
    $region8: #{s3_tokenizer_v2_forward.11} parent=1 // pred_region
      _
    $region9: #{s3_tokenizer_v2_forward.11} parent=1 // pred_fallthru
      _
    // Predicated region
    $region10: #{s3_tokenizer_v2_forward.11} parent=1 // pred_check
      _
    $region11: #{s3_tokenizer_v2_forward.11} parent=1 // pred_check_branch
      %24 = sbr.rel (0) target = $region13
    $region12: #{s3_tokenizer_v2_forward.11} parent=1 // pred_region
      _
    $region13: #{s3_tokenizer_v2_forward.11} parent=1 // pred_fallthru
      _
    // Predicated region
    $region14: #{s3_tokenizer_v2_forward.11} parent=1 // pred_check
      _
    $region15: #{s3_tokenizer_v2_forward.11} parent=1 // pred_check_branch
      %26 = sbr.rel (0) target = $region17
    $region16: #{s3_tokenizer_v2_forward.11} parent=1 // pred_region
      _
    $region17: #{s3_tokenizer_v2_forward.11} parent=1 // pred_fallthru
      _
    // Predicated region
    $region18: #{s3_tokenizer_v2_forward.11} parent=1 // pred_check
      _
    $region19: #{s3_tokenizer_v2_forward.11} parent=1 // pred_check_branch
      %28 = sbr.rel (0) target = $region21
    $region20: #{s3_tokenizer_v2_forward.11} parent=1 // pred_region
      _
    $region21: #{s3_tokenizer_v2_forward.11} parent=1 // pred_fallthru
      _
    // Predicated region
    $region22: #{s3_tokenizer_v2_forward.11} parent=1 // pred_check
      _
    $region23: #{s3_tokenizer_v2_forward.11} parent=1 // pred_check_branch
      %30 = sbr.rel (0) target = $region25
    $region24: #{s3_tokenizer_v2_forward.11} parent=1 // pred_region
      _
    $region25: #{s3_tokenizer_v2_forward.11} parent=1 // pred_fallthru
      _
    // Predicated region
    $region26: #{s3_tokenizer_v2_forward.11} parent=1 // pred_check
      _
    $region27: #{s3_tokenizer_v2_forward.11} parent=1 // pred_check_branch
      %32 = sbr.rel (0) target = $region29
    $region28: #{s3_tokenizer_v2_forward.11} parent=1 // pred_region
      _
    $region29: #{s3_tokenizer_v2_forward.11} parent=1 // pred_fallthru
      _
    // Predicated region
    $region30: #{s3_tokenizer_v2_forward.11} parent=1 // pred_check
      _
    $region31: #{s3_tokenizer_v2_forward.11} parent=1 // pred_check_branch
      %34 = sbr.rel (0) target = $region33
    $region32: #{s3_tokenizer_v2_forward.11} parent=1 // pred_region
      _
    $region33: #{s3_tokenizer_v2_forward.11} parent=1 // pred_fallthru
      _
    // Predicated region
    $region34: #{s3_tokenizer_v2_forward.11} parent=1 // pred_check
      _
    $region35: #{s3_tokenizer_v2_forward.11} parent=1 // pred_check_branch
      %36 = sbr.rel (0) target = $region37
    $region36: #{s3_tokenizer_v2_forward.11} parent=1 // pred_region
      _
    $region37: #{s3_tokenizer_v2_forward.11} parent=1 // pred_fallthru
      _
    // Predicated region
    $region38: #{s3_tokenizer_v2_forward.11} parent=1 // pred_check
      _
    $region39: #{s3_tokenizer_v2_forward.11} parent=1 // pred_check_branch
      %38 = sbr.rel (0) target = $region41
    $region40: #{s3_tokenizer_v2_forward.11} parent=1 // pred_region
      _
    $region41: #{s3_tokenizer_v2_forward.11} parent=1 // pred_fallthru
      _
    // Predicated region
    $region42: #{s3_tokenizer_v2_forward.11} parent=1 // pred_check
      _
    $region43: #{s3_tokenizer_v2_forward.11} parent=1 // pred_check_branch
      %40 = sbr.rel (0) target = $region45
    $region44: #{s3_tokenizer_v2_forward.11} parent=1 // pred_region
      _
    $region45: #{s3_tokenizer_v2_forward.11} parent=1 // pred_fallthru
      _
    %p42 = scmp.eq.s32.totalorder 0, 0
    // Predicated region
    $region46: #{s3_tokenizer_v2_forward.11} parent=1 // pred_check
      %p43 = pneg %p42
    $region47: #{s3_tokenizer_v2_forward.11} parent=1 // pred_check_branch
      %45 = sbr.rel (%p43) target = $region49
    $region48: #{s3_tokenizer_v2_forward.11} parent=1 // pred_region
      %v46 = vld [vmem:[%s0] sm:$0xf]
      %v47 = vld [vmem:[%s0 + $0x4] sm:$0xf]
      %v48 = vunpack.c.l.bf16 %v46
      %v49 = vunpack.c.l.bf16 %v47
      %v50 = vld [vmem:[%s1] sm:$0xf]
      %v51 = vld [vmem:[%s1 + $0x4] sm:$0xf]
      %v52 = vunpack.c.l.bf16 %v50
      %v53 = vunpack.c.l.bf16 %v51
      %v54 = vadd.f32 %v48, %v52
      %v55 = vadd.f32 %v49, %v53
      %56 = vadd.xlane.f32.xlu0 %v54
      %v57 = vpop.xlane.xlu0 %56
      %58 = vadd.xlane.f32.xlu0 %v55
      %v59 = vpop.xlane.xlu0 %58
      %v60 = vrcp.pop 128.0
      %v61 = vmul.f32 %v57, %v60
      %v62 = vmul.f32 %v59, %v60
      %v63 = vsub.f32 %v54, %v61
      %v64 = vsub.f32 %v55, %v62
      %v65 = vmul.f32 %v63, %v63
      %v66 = vmul.f32 %v64, %v64
      %67 = vadd.xlane.f32.xlu0 %v65
      %v68 = vpop.xlane.xlu0 %67
      %69 = vadd.xlane.f32.xlu0 %v66
      %v70 = vpop.xlane.xlu0 %69
      %v71 = vmul.f32 %v68, %v60
      %v72 = vmul.f32 %v70, %v60
      %v73 = vadd.f32 %v71, 1e-05
      %v74 = vadd.f32 %v72, 1e-05
      %v75 = vrsqrt.pop %v73
      %v76 = vrsqrt.pop %v74
      %v77 = vmul.f32 %v63, %v75
      %v78 = vmul.f32 %v64, %v76
      %v79 = vld [vmem:[%s2] sm:$0x1]
      %v81 = vlaneseq
      %v82 = vshrl.u32 %v81, 7
      %v83 = vsub.s32 0, %v82
      %v84 = vrot.slane %v79, %v83
      %v86 = vmul.f32 %v77, %v84
      %v87 = vmul.f32 %v78, %v84
      %v88 = vld [vmem:[%s3] sm:$0x1]
      %v90 = vlaneseq
      %v91 = vshrl.u32 %v90, 7
      %v92 = vsub.s32 0, %v91
      %v93 = vrot.slane %v88, %v92
      %v95 = vadd.f32 %v86, %v93
      %v96 = vadd.f32 %v87, %v93
      %v97 = vpack.c.bf16 %v96, %v95
      %v99 = vunpack.c.l.b16 %v97
      %v100 = vunpack.c.h.b16 %v97
      %v101 = vpack.c.b16 %v99, %v99
      %v102 = vpack.c.b16 %v100, %v100
      %105 = vst [vmem:[#allocation2] sm:$0xf] %v101
      %106 = vst [vmem:[#allocation2 + $0x4] sm:$0xf] %v102
      %v107 = vld [vmem:[%s7] sm:$0x1]
      %v109 = vlaneseq
      %v110 = vshrl.u32 %v109, 7
      %v111 = vsub.s32 0, %v110
      %v112 = vrot.slane %v107, %v111
      %v114 = vadd.f32 %v54, %v112
      %v115 = vadd.f32 %v55, %v112
      %116 = vst [vmem:[#allocation3] sm:$0xff] %v114
      %117 = vst [vmem:[#allocation3 + $0x8] sm:$0xff] %v115
    $region49: #{s3_tokenizer_v2_forward.11} parent=1 // pred_fallthru
      _
    %v118 = vld [vmem:[#allocation2] sm:$0xf]
    %v119 = vld [vmem:[#allocation2 + $0x4] sm:$0xf]
    %v120 = vld [vmem:[%s4] sm:$0xff]
    %v121 = vld [vmem:[%s4 + $0x8] sm:$0xff]
    %v122 = vld [vmem:[%s4 + $0x10] sm:$0xff]
    %v123 = vld [vmem:[%s4 + $0x18] sm:$0xff]
    %v124 = vld [vmem:[%s4 + $0x20] sm:$0xff]
    %v125 = vld [vmem:[%s4 + $0x28] sm:$0xff]
    %v126 = vld [vmem:[%s4 + $0x30] sm:$0xff]
    %v127 = vld [vmem:[%s4 + $0x38] sm:$0xff]
    %v128 = vld [vmem:[%s4 + $0x40] sm:$0xff]
    %v129 = vld [vmem:[%s4 + $0x48] sm:$0xff]
    %v130 = vld [vmem:[%s4 + $0x50] sm:$0xff]
    %v131 = vld [vmem:[%s4 + $0x58] sm:$0xff]
    %v132 = vld [vmem:[%s4 + $0x60] sm:$0xff]
    %v133 = vld [vmem:[%s4 + $0x68] sm:$0xff]
    %v134 = vld [vmem:[%s4 + $0x70] sm:$0xff]
    %v135 = vld [vmem:[%s4 + $0x78] sm:$0xff]
    %v136 = vld [vmem:[%s4 + $0x80] sm:$0xff]
    %v137 = vld [vmem:[%s4 + $0x88] sm:$0xff]
    %v138 = vld [vmem:[%s4 + $0x90] sm:$0xff]
    %v139 = vld [vmem:[%s4 + $0x98] sm:$0xff]
    %v140 = vld [vmem:[%s4 + $0xa0] sm:$0xff]
    %v141 = vld [vmem:[%s4 + $0xa8] sm:$0xff]
    %v142 = vld [vmem:[%s4 + $0xb0] sm:$0xff]
    %v143 = vld [vmem:[%s4 + $0xb8] sm:$0xff]
    %v144 = vld [vmem:[%s4 + $0xc0] sm:$0xff]
    %v145 = vld [vmem:[%s4 + $0xc8] sm:$0xff]
    %v146 = vld [vmem:[%s4 + $0xd0] sm:$0xff]
    %v147 = vld [vmem:[%s4 + $0xd8] sm:$0xff]
    %v148 = vld [vmem:[%s4 + $0xe0] sm:$0xff]
    %v149 = vld [vmem:[%s4 + $0xe8] sm:$0xff]
    %v150 = vld [vmem:[%s4 + $0xf0] sm:$0xff]
    %v151 = vld [vmem:[%s4 + $0xf8] sm:$0xff]
    %v152 = vld [vmem:[%s5] sm:$0xf]
    %v154 = vlaneseq
    %v155 = vshrl.u32 %v154, 7
    %v156 = vsub.s32 0, %v155
    %v157 = vrot.slane %v152, %v156
    %v158 = vlaneseq
    %v159 = vshrl.u32 %v158, 7
    %v160 = vsub.s32 1, %v159
    %v161 = vrot.slane %v152, %v160
    %v162 = vlaneseq
    %v163 = vshrl.u32 %v162, 7
    %v164 = vsub.s32 2, %v163
    %v165 = vrot.slane %v152, %v164
    %v166 = vlaneseq
    %v167 = vshrl.u32 %v166, 7
    %v168 = vsub.s32 3, %v167
    %v169 = vrot.slane %v152, %v168
    %v176 = vunpack.c.l.b16 %v118
    %v177 = vunpack.c.l.b16 %v119
    %v178 = vpack.c.b16 %v177, %v176
    %v212 = vunpack.c.l.b16 %v120
    %v213 = vunpack.c.h.b16 %v120
    %v214 = vunpack.c.l.b16 %v121
    %v215 = vunpack.c.h.b16 %v121
    %v216 = vunpack.c.l.b16 %v122
    %v217 = vunpack.c.h.b16 %v122
    %v218 = vunpack.c.l.b16 %v123
    %v219 = vunpack.c.h.b16 %v123
    %v220 = vunpack.c.l.b16 %v124
    %v221 = vunpack.c.h.b16 %v124
    %v222 = vunpack.c.l.b16 %v125
    %v223 = vunpack.c.h.b16 %v125
    %v224 = vunpack.c.l.b16 %v126
    %v225 = vunpack.c.h.b16 %v126
    %v226 = vunpack.c.l.b16 %v127
    %v227 = vunpack.c.h.b16 %v127
    %v228 = vunpack.c.l.b16 %v128
    %v229 = vunpack.c.h.b16 %v128
    %v230 = vunpack.c.l.b16 %v129
    %v231 = vunpack.c.h.b16 %v129
    %v232 = vunpack.c.l.b16 %v130
    %v233 = vunpack.c.h.b16 %v130
    %v234 = vunpack.c.l.b16 %v131
    %v235 = vunpack.c.h.b16 %v131
    %v236 = vunpack.c.l.b16 %v132
    %v237 = vunpack.c.h.b16 %v132
    %v238 = vunpack.c.l.b16 %v133
    %v239 = vunpack.c.h.b16 %v133
    %v240 = vunpack.c.l.b16 %v134
    %v241 = vunpack.c.h.b16 %v134
    %v242 = vunpack.c.l.b16 %v135
    %v243 = vunpack.c.h.b16 %v135
    %v244 = vunpack.c.l.b16 %v136
    %v245 = vunpack.c.h.b16 %v136
    %v246 = vunpack.c.l.b16 %v137
    %v247 = vunpack.c.h.b16 %v137
    %v248 = vunpack.c.l.b16 %v138
    %v249 = vunpack.c.h.b16 %v138
    %v250 = vunpack.c.l.b16 %v139
    %v251 = vunpack.c.h.b16 %v139
    %v252 = vunpack.c.l.b16 %v140
    %v253 = vunpack.c.h.b16 %v140
    %v254 = vunpack.c.l.b16 %v141
    %v255 = vunpack.c.h.b16 %v141
    %v256 = vunpack.c.l.b16 %v142
    %v257 = vunpack.c.h.b16 %v142
    %v258 = vunpack.c.l.b16 %v143
    %v259 = vunpack.c.h.b16 %v143
    %v260 = vunpack.c.l.b16 %v144
    %v261 = vunpack.c.h.b16 %v144
    %v262 = vunpack.c.l.b16 %v145
    %v263 = vunpack.c.h.b16 %v145
    %v264 = vunpack.c.l.b16 %v146
    %v265 = vunpack.c.h.b16 %v146
    %v266 = vunpack.c.l.b16 %v147
    %v267 = vunpack.c.h.b16 %v147
    %v268 = vunpack.c.l.b16 %v148
    %v269 = vunpack.c.h.b16 %v148
    %v270 = vunpack.c.l.b16 %v149
    %v271 = vunpack.c.h.b16 %v149
    %v272 = vunpack.c.l.b16 %v150
    %v273 = vunpack.c.h.b16 %v150
    %v274 = vunpack.c.l.b16 %v151
    %v275 = vunpack.c.h.b16 %v151
    %v276 = vpack.c.b16 %v216, %v212
    %v277 = vpack.c.b16 %v217, %v213
    %v278 = vpack.c.b16 %v218, %v214
    %v279 = vpack.c.b16 %v219, %v215
    %v280 = vpack.c.b16 %v224, %v220
    %v281 = vpack.c.b16 %v225, %v221
    %v282 = vpack.c.b16 %v226, %v222
    %v283 = vpack.c.b16 %v227, %v223
    %v284 = vpack.c.b16 %v232, %v228
    %v285 = vpack.c.b16 %v233, %v229
    %v286 = vpack.c.b16 %v234, %v230
    %v287 = vpack.c.b16 %v235, %v231
    %v288 = vpack.c.b16 %v240, %v236
    %v289 = vpack.c.b16 %v241, %v237
    %v290 = vpack.c.b16 %v242, %v238
    %v291 = vpack.c.b16 %v243, %v239
    %v292 = vpack.c.b16 %v248, %v244
    %v293 = vpack.c.b16 %v249, %v245
    %v294 = vpack.c.b16 %v250, %v246
    %v295 = vpack.c.b16 %v251, %v247
    %v296 = vpack.c.b16 %v256, %v252
    %v297 = vpack.c.b16 %v257, %v253
    %v298 = vpack.c.b16 %v258, %v254
    %v299 = vpack.c.b16 %v259, %v255
    %v300 = vpack.c.b16 %v264, %v260
    %v301 = vpack.c.b16 %v265, %v261
    %v302 = vpack.c.b16 %v266, %v262
    %v303 = vpack.c.b16 %v267, %v263
    %v304 = vpack.c.b16 %v272, %v268
    %v305 = vpack.c.b16 %v273, %v269
    %v306 = vpack.c.b16 %v274, %v270
    %v307 = vpack.c.b16 %v275, %v271
    %340 = vmatprep.subr.bf16.mxu0 %v305
    %341 = vmatpush1.bf16.msra.mxu0 %v304
    %342 = vmatprep.subr.bf16.mxu0 %v301
    %343 = vmatpush1.bf16.msra.mxu0 %v300
    %344 = vmatprep.subr.bf16.mxu0 %v297
    %345 = vmatpush1.bf16.msra.mxu0 %v296
    %346 = vmatprep.subr.bf16.mxu0 %v293
    %347 = vmatpush1.bf16.msra.mxu0 %v292
    %348 = vmatprep.subr.bf16.mxu0 %v289
    %349 = vmatpush1.bf16.msra.mxu0 %v288
    %350 = vmatprep.subr.bf16.mxu0 %v285
    %351 = vmatpush1.bf16.msra.mxu0 %v284
    %352 = vmatprep.subr.bf16.mxu0 %v281
    %353 = vmatpush1.bf16.msra.mxu0 %v280
    %354 = vmatprep.subr.bf16.mxu0 %v277
    %355 = vmatpush1.bf16.msra.mxu0 %v276
    %356 = vmatprep.subr.bf16.mxu0 0
    %357 = vmatpush2.bf16.msra.mxu0 0
    %358 = vmatprep.subr.bf16.mxu0 0
    %359 = vmatpush2.bf16.msra.mxu0 0
    %360 = vmatprep.subr.bf16.mxu0 0
    %361 = vmatpush2.bf16.msra.mxu0 0
    %362 = vmatprep.subr.bf16.mxu0 0
    %363 = vmatpush2.bf16.msra.mxu0 0
    %364 = vmatprep.subr.bf16.mxu0 0
    %365 = vmatpush2.bf16.msra.mxu0 0
    %366 = vmatprep.subr.bf16.mxu0 0
    %367 = vmatpush2.bf16.msra.mxu0 0
    %368 = vmatprep.subr.bf16.mxu0 0
    %369 = vmatpush2.bf16.msra.mxu0 0
    %370 = vmatprep.subr.bf16.mxu0 0
    %371 = vmatpush2.bf16.msra.mxu0 0
    %372 = vmatprep.mubr.bf16.mxu0 0
    %373 = vmatmul.mubr.bf16.gmra.mxu0 %v178
    %v374 = vpop.f32.mrf.mxu0
    %v375 = vadd.f32 %v157, %v374
    %v376 = vpop.f32.mrf.mxu0
    %v377 = vadd.f32 %v161, %v376
    %v378 = vpop.f32.mrf.mxu0
    %v379 = vadd.f32 %v157, %v378
    %v380 = vpop.f32.mrf.mxu0
    %v381 = vadd.f32 %v161, %v380
    %382 = vdwg.mxu0
    %383 = vmatprep.subr.bf16.mxu0 %v307
    %384 = vmatpush1.bf16.msra.mxu0 %v306
    %385 = vmatprep.subr.bf16.mxu0 %v303
    %386 = vmatpush1.bf16.msra.mxu0 %v302
    %387 = vmatprep.subr.bf16.mxu0 %v299
    %388 = vmatpush1.bf16.msra.mxu0 %v298
    %389 = vmatprep.subr.bf16.mxu0 %v295
    %390 = vmatpush1.bf16.msra.mxu0 %v294
    %391 = vmatprep.subr.bf16.mxu0 %v291
    %392 = vmatpush1.bf16.msra.mxu0 %v290
    %393 = vmatprep.subr.bf16.mxu0 %v287
    %394 = vmatpush1.bf16.msra.mxu0 %v286
    %395 = vmatprep.subr.bf16.mxu0 %v283
    %396 = vmatpush1.bf16.msra.mxu0 %v282
    %397 = vmatprep.subr.bf16.mxu0 %v279
    %398 = vmatpush1.bf16.msra.mxu0 %v278
    %399 = vmatprep.subr.bf16.mxu0 0
    %400 = vmatpush2.bf16.msra.mxu0 0
    %401 = vmatprep.subr.bf16.mxu0 0
    %402 = vmatpush2.bf16.msra.mxu0 0
    %403 = vmatprep.subr.bf16.mxu0 0
    %404 = vmatpush2.bf16.msra.mxu0 0
    %405 = vmatprep.subr.bf16.mxu0 0
    %406 = vmatpush2.bf16.msra.mxu0 0
    %407 = vmatprep.subr.bf16.mxu0 0
    %408 = vmatpush2.bf16.msra.mxu0 0
    %409 = vmatprep.subr.bf16.mxu0 0
    %410 = vmatpush2.bf16.msra.mxu0 0
    %411 = vmatprep.subr.bf16.mxu0 0
    %412 = vmatpush2.bf16.msra.mxu0 0
    %413 = vmatprep.subr.bf16.mxu0 0
    %414 = vmatpush2.bf16.msra.mxu0 0
    %415 = vmatprep.mubr.bf16.mxu0 0
    %416 = vmatmul.mubr.bf16.gmra.mxu0 %v178
    %v417 = vpop.f32.mrf.mxu0
    %v418 = vadd.f32 %v165, %v417
    %v419 = vpop.f32.mrf.mxu0
    %v420 = vadd.f32 %v169, %v419
    %v421 = vpop.f32.mrf.mxu0
    %v422 = vadd.f32 %v165, %v421
    %v423 = vpop.f32.mrf.mxu0
    %v424 = vadd.f32 %v169, %v423
    %425 = vdwg.mxu0
    %v426 = vld [vmem:[#allocation3] sm:$0xff]
    %v427 = vld [vmem:[#allocation3 + $0x8] sm:$0xff]
    %v428 = vmul.f32 %v375, 0.5
    %v429 = vmul.f32 %v377, 0.5
    %v430 = vmul.f32 %v418, 0.5
    %v431 = vmul.f32 %v420, 0.5
    %v432 = vmul.f32 %v379, 0.5
    %v433 = vmul.f32 %v381, 0.5
    %v434 = vmul.f32 %v422, 0.5
    %v435 = vmul.f32 %v424, 0.5
    %v436 = vmul.f32 %v375, 0.70710677
    %v437 = vmul.f32 %v377, 0.70710677
    %v438 = vmul.f32 %v418, 0.70710677
    %v439 = vmul.f32 %v420, 0.70710677
    %v440 = vmul.f32 %v379, 0.70710677
    %v441 = vmul.f32 %v381, 0.70710677
    %v442 = vmul.f32 %v422, 0.70710677
    %v443 = vmul.f32 %v424, 0.70710677
    %v444 = vand.u32 2147483647, %v436
    %v445 = vand.u32 2147483647, %v437
    %v446 = vand.u32 2147483647, %v438
    %v447 = vand.u32 2147483647, %v439
    %v448 = vand.u32 2147483647, %v440
    %v449 = vand.u32 2147483647, %v441
    %v450 = vand.u32 2147483647, %v442
    %v451 = vand.u32 2147483647, %v443
    %v452 = vmul.f32 %v444, 0.3275911
    %v453 = vmul.f32 %v445, 0.3275911
    %v454 = vmul.f32 %v446, 0.3275911
    %v455 = vmul.f32 %v447, 0.3275911
    %v456 = vmul.f32 %v448, 0.3275911
    %v457 = vmul.f32 %v449, 0.3275911
    %v458 = vmul.f32 %v450, 0.3275911
    %v459 = vmul.f32 %v451, 0.3275911
    %v460 = vadd.f32 %v452, 1.0
    %v461 = vadd.f32 %v453, 1.0
    %v462 = vadd.f32 %v454, 1.0
    %v463 = vadd.f32 %v455, 1.0
    %v464 = vadd.f32 %v456, 1.0
    %v465 = vadd.f32 %v457, 1.0
    %v466 = vadd.f32 %v458, 1.0
    %v467 = vadd.f32 %v459, 1.0
    %v468 = vrcp.pop %v460
    %v469 = vmul.f32 1.0, %v468
    %v470 = vrcp.pop %v461
    %v471 = vmul.f32 1.0, %v470
    %v472 = vrcp.pop %v462
    %v473 = vmul.f32 1.0, %v472
    %v474 = vrcp.pop %v463
    %v475 = vmul.f32 1.0, %v474
    %v476 = vrcp.pop %v464
    %v477 = vmul.f32 1.0, %v476
    %v478 = vrcp.pop %v465
    %v479 = vmul.f32 1.0, %v478
    %v480 = vrcp.pop %v466
    %v481 = vmul.f32 1.0, %v480
    %v482 = vrcp.pop %v467
    %v483 = vmul.f32 1.0, %v482
    %v484 = vmul.f32 %v469, 1.0614054
    %v485 = vmul.f32 %v471, 1.0614054
    %v486 = vmul.f32 %v473, 1.0614054
    %v487 = vmul.f32 %v475, 1.0614054
    %v488 = vmul.f32 %v477, 1.0614054
    %v489 = vmul.f32 %v479, 1.0614054
    %v490 = vmul.f32 %v481, 1.0614054
    %v491 = vmul.f32 %v483, 1.0614054
    %v492 = vadd.f32 %v484, -1.4531521
    %v493 = vadd.f32 %v485, -1.4531521
    %v494 = vadd.f32 %v486, -1.4531521
    %v495 = vadd.f32 %v487, -1.4531521
    %v496 = vadd.f32 %v488, -1.4531521
    %v497 = vadd.f32 %v489, -1.4531521
    %v498 = vadd.f32 %v490, -1.4531521
    %v499 = vadd.f32 %v491, -1.4531521
    %v500 = vmul.f32 %v492, %v469
    %v501 = vmul.f32 %v493, %v471
    %v502 = vmul.f32 %v494, %v473
    %v503 = vmul.f32 %v495, %v475
    %v504 = vmul.f32 %v496, %v477
    %v505 = vmul.f32 %v497, %v479
    %v506 = vmul.f32 %v498, %v481
    %v507 = vmul.f32 %v499, %v483
    %v508 = vadd.f32 %v500, 1.4214138
    %v509 = vadd.f32 %v501, 1.4214138
    %v510 = vadd.f32 %v502, 1.4214138
    %v511 = vadd.f32 %v503, 1.4214138
    %v512 = vadd.f32 %v504, 1.4214138
    %v513 = vadd.f32 %v505, 1.4214138
    %v514 = vadd.f32 %v506, 1.4214138
    %v515 = vadd.f32 %v507, 1.4214138
    %v516 = vmul.f32 %v508, %v469
    %v517 = vmul.f32 %v509, %v471
    %v518 = vmul.f32 %v510, %v473
    %v519 = vmul.f32 %v511, %v475
    %v520 = vmul.f32 %v512, %v477
    %v521 = vmul.f32 %v513, %v479
    %v522 = vmul.f32 %v514, %v481
    %v523 = vmul.f32 %v515, %v483
    %v524 = vadd.f32 %v516, -0.28449672
    %v525 = vadd.f32 %v517, -0.28449672
    %v526 = vadd.f32 %v518, -0.28449672
    %v527 = vadd.f32 %v519, -0.28449672
    %v528 = vadd.f32 %v520, -0.28449672
    %v529 = vadd.f32 %v521, -0.28449672
    %v530 = vadd.f32 %v522, -0.28449672
    %v531 = vadd.f32 %v523, -0.28449672
    %v532 = vmul.f32 %v524, %v469
    %v533 = vmul.f32 %v525, %v471
    %v534 = vmul.f32 %v526, %v473
    %v535 = vmul.f32 %v527, %v475
    %v536 = vmul.f32 %v528, %v477
    %v537 = vmul.f32 %v529, %v479
    %v538 = vmul.f32 %v530, %v481
    %v539 = vmul.f32 %v531, %v483
    %v540 = vadd.f32 %v532, 0.2548296
    %v541 = vadd.f32 %v533, 0.2548296
    %v542 = vadd.f32 %v534, 0.2548296
    %v543 = vadd.f32 %v535, 0.2548296
    %v544 = vadd.f32 %v536, 0.2548296
    %v545 = vadd.f32 %v537, 0.2548296
    %v546 = vadd.f32 %v538, 0.2548296
    %v547 = vadd.f32 %v539, 0.2548296
    %v548 = vmul.f32 %v540, %v469
    %v549 = vmul.f32 %v541, %v471
    %v550 = vmul.f32 %v542, %v473
    %v551 = vmul.f32 %v543, %v475
    %v552 = vmul.f32 %v544, %v477
    %v553 = vmul.f32 %v545, %v479
    %v554 = vmul.f32 %v546, %v481
    %v555 = vmul.f32 %v547, %v483
    %v556 = vsub.f32 0.0, %v444
    %v557 = vsub.f32 0.0, %v445
    %v558 = vsub.f32 0.0, %v446
    %v559 = vsub.f32 0.0, %v447
    %v560 = vsub.f32 0.0, %v448
    %v561 = vsub.f32 0.0, %v449
    %v562 = vsub.f32 0.0, %v450
    %v563 = vsub.f32 0.0, %v451
    %v564 = vmul.f32 %v556, %v444
    %v565 = vmul.f32 %v557, %v445
    %v566 = vmul.f32 %v558, %v446
    %v567 = vmul.f32 %v559, %v447
    %v568 = vmul.f32 %v560, %v448
    %v569 = vmul.f32 %v561, %v449
    %v570 = vmul.f32 %v562, %v450
    %v571 = vmul.f32 %v563, %v451
    %v572 = vmul.f32 %v564, 1.442695
    %v573 = vpow.pop %v572
    %v574 = vmul.f32 %v565, 1.442695
    %v575 = vpow.pop %v574
    %v576 = vmul.f32 %v566, 1.442695
    %v577 = vpow.pop %v576
    %v578 = vmul.f32 %v567, 1.442695
    %v579 = vpow.pop %v578
    %v580 = vmul.f32 %v568, 1.442695
    %v581 = vpow.pop %v580
    %v582 = vmul.f32 %v569, 1.442695
    %v583 = vpow.pop %v582
    %v584 = vmul.f32 %v570, 1.442695
    %v585 = vpow.pop %v584
    %v586 = vmul.f32 %v571, 1.442695
    %v587 = vpow.pop %v586
    %v588 = vmul.f32 %v548, %v573
    %v589 = vmul.f32 %v549, %v575
    %v590 = vmul.f32 %v550, %v577
    %v591 = vmul.f32 %v551, %v579
    %v592 = vmul.f32 %v552, %v581
    %v593 = vmul.f32 %v553, %v583
    %v594 = vmul.f32 %v554, %v585
    %v595 = vmul.f32 %v555, %v587
    %v596 = vsub.f32 1.0, %v588
    %v597 = vsub.f32 1.0, %v589
    %v598 = vsub.f32 1.0, %v590
    %v599 = vsub.f32 1.0, %v591
    %v600 = vsub.f32 1.0, %v592
    %v601 = vsub.f32 1.0, %v593
    %v602 = vsub.f32 1.0, %v594
    %v603 = vsub.f32 1.0, %v595
    %vm604 = vcmp.ge.f32.partialorder %v436, 0.0
    %vm605 = vcmp.ge.f32.partialorder %v437, 0.0
    %vm606 = vcmp.ge.f32.partialorder %v438, 0.0
    %vm607 = vcmp.ge.f32.partialorder %v439, 0.0
    %vm608 = vcmp.ge.f32.partialorder %v440, 0.0
    %vm609 = vcmp.ge.f32.partialorder %v441, 0.0
    %vm610 = vcmp.ge.f32.partialorder %v442, 0.0
    %vm611 = vcmp.ge.f32.partialorder %v443, 0.0
    %v612 = vsub.f32 0.0, %v596
    %v613 = vsub.f32 0.0, %v597
    %v614 = vsub.f32 0.0, %v598
    %v615 = vsub.f32 0.0, %v599
    %v616 = vsub.f32 0.0, %v600
    %v617 = vsub.f32 0.0, %v601
    %v618 = vsub.f32 0.0, %v602
    %v619 = vsub.f32 0.0, %v603
    %v620 = vsel %vm604, %v596, %v612
    %v621 = vsel %vm605, %v597, %v613
    %v622 = vsel %vm606, %v598, %v614
    %v623 = vsel %vm607, %v599, %v615
    %v624 = vsel %vm608, %v600, %v616
    %v625 = vsel %vm609, %v601, %v617
    %v626 = vsel %vm610, %v602, %v618
    %v627 = vsel %vm611, %v603, %v619
    %v628 = vadd.f32 %v620, 1.0
    %v629 = vadd.f32 %v621, 1.0
    %v630 = vadd.f32 %v622, 1.0
    %v631 = vadd.f32 %v623, 1.0
    %v632 = vadd.f32 %v624, 1.0
    %v633 = vadd.f32 %v625, 1.0
    %v634 = vadd.f32 %v626, 1.0
    %v635 = vadd.f32 %v627, 1.0
    %v636 = vmul.f32 %v428, %v628
    %v637 = vmul.f32 %v429, %v629
    %v638 = vmul.f32 %v430, %v630
    %v639 = vmul.f32 %v431, %v631
    %v640 = vmul.f32 %v432, %v632
    %v641 = vmul.f32 %v433, %v633
    %v642 = vmul.f32 %v434, %v634
    %v643 = vmul.f32 %v435, %v635
    %v644 = vpack.c.bf16 %v640, %v636
    %v645 = vpack.c.bf16 %v641, %v637
    %v646 = vpack.c.bf16 %v642, %v638
    %v647 = vpack.c.bf16 %v643, %v639
    %v648 = vld [vmem:[%s6] sm:$0xf]
    %v649 = vld [vmem:[%s6 + $0x4] sm:$0xf]
    %v650 = vld [vmem:[%s6 + $0x8] sm:$0xf]
    %v651 = vld [vmem:[%s6 + $0xc] sm:$0xf]
    %v652 = vld [vmem:[%s6 + $0x10] sm:$0xf]
    %v653 = vld [vmem:[%s6 + $0x14] sm:$0xf]
    %v654 = vld [vmem:[%s6 + $0x18] sm:$0xf]
    %v655 = vld [vmem:[%s6 + $0x1c] sm:$0xf]
    %v656 = vld [vmem:[%s6 + $0x20] sm:$0xf]
    %v657 = vld [vmem:[%s6 + $0x24] sm:$0xf]
    %v658 = vld [vmem:[%s6 + $0x28] sm:$0xf]
    %v659 = vld [vmem:[%s6 + $0x2c] sm:$0xf]
    %v660 = vld [vmem:[%s6 + $0x30] sm:$0xf]
    %v661 = vld [vmem:[%s6 + $0x34] sm:$0xf]
    %v662 = vld [vmem:[%s6 + $0x38] sm:$0xf]
    %v663 = vld [vmem:[%s6 + $0x3c] sm:$0xf]
    %v664 = vld [vmem:[%s6 + $0x40] sm:$0xf]
    %v665 = vld [vmem:[%s6 + $0x44] sm:$0xf]
    %v666 = vld [vmem:[%s6 + $0x48] sm:$0xf]
    %v667 = vld [vmem:[%s6 + $0x4c] sm:$0xf]
    %v668 = vld [vmem:[%s6 + $0x50] sm:$0xf]
    %v669 = vld [vmem:[%s6 + $0x54] sm:$0xf]
    %v670 = vld [vmem:[%s6 + $0x58] sm:$0xf]
    %v671 = vld [vmem:[%s6 + $0x5c] sm:$0xf]
    %v672 = vld [vmem:[%s6 + $0x60] sm:$0xf]
    %v673 = vld [vmem:[%s6 + $0x64] sm:$0xf]
    %v674 = vld [vmem:[%s6 + $0x68] sm:$0xf]
    %v675 = vld [vmem:[%s6 + $0x6c] sm:$0xf]
    %v676 = vld [vmem:[%s6 + $0x70] sm:$0xf]
    %v677 = vld [vmem:[%s6 + $0x74] sm:$0xf]
    %v678 = vld [vmem:[%s6 + $0x78] sm:$0xf]
    %v679 = vld [vmem:[%s6 + $0x7c] sm:$0xf]
    %v680 = vld [vmem:[%s6 + $0x80] sm:$0xf]
    %v681 = vld [vmem:[%s6 + $0x84] sm:$0xf]
    %v682 = vld [vmem:[%s6 + $0x88] sm:$0xf]
    %v683 = vld [vmem:[%s6 + $0x8c] sm:$0xf]
    %v684 = vld [vmem:[%s6 + $0x90] sm:$0xf]
    %v685 = vld [vmem:[%s6 + $0x94] sm:$0xf]
    %v686 = vld [vmem:[%s6 + $0x98] sm:$0xf]
    %v687 = vld [vmem:[%s6 + $0x9c] sm:$0xf]
    %v688 = vld [vmem:[%s6 + $0xa0] sm:$0xf]
    %v689 = vld [vmem:[%s6 + $0xa4] sm:$0xf]
    %v690 = vld [vmem:[%s6 + $0xa8] sm:$0xf]
    %v691 = vld [vmem:[%s6 + $0xac] sm:$0xf]
    %v692 = vld [vmem:[%s6 + $0xb0] sm:$0xf]
    %v693 = vld [vmem:[%s6 + $0xb4] sm:$0xf]
    %v694 = vld [vmem:[%s6 + $0xb8] sm:$0xf]
    %v695 = vld [vmem:[%s6 + $0xbc] sm:$0xf]
    %v696 = vld [vmem:[%s6 + $0xc0] sm:$0xf]
    %v697 = vld [vmem:[%s6 + $0xc4] sm:$0xf]
    %v698 = vld [vmem:[%s6 + $0xc8] sm:$0xf]
    %v699 = vld [vmem:[%s6 + $0xcc] sm:$0xf]
    %v700 = vld [vmem:[%s6 + $0xd0] sm:$0xf]
    %v701 = vld [vmem:[%s6 + $0xd4] sm:$0xf]
    %v702 = vld [vmem:[%s6 + $0xd8] sm:$0xf]
    %v703 = vld [vmem:[%s6 + $0xdc] sm:$0xf]
    %v704 = vld [vmem:[%s6 + $0xe0] sm:$0xf]
    %v705 = vld [vmem:[%s6 + $0xe4] sm:$0xf]
    %v706 = vld [vmem:[%s6 + $0xe8] sm:$0xf]
    %v707 = vld [vmem:[%s6 + $0xec] sm:$0xf]
    %v708 = vld [vmem:[%s6 + $0xf0] sm:$0xf]
    %v709 = vld [vmem:[%s6 + $0xf4] sm:$0xf]
    %v710 = vld [vmem:[%s6 + $0xf8] sm:$0xf]
    %v711 = vld [vmem:[%s6 + $0xfc] sm:$0xf]
    %v776 = vunpack.c.l.b16 %v648
    %v777 = vunpack.c.l.b16 %v649
    %v778 = vunpack.c.l.b16 %v650
    %v779 = vunpack.c.l.b16 %v651
    %v780 = vunpack.c.l.b16 %v652
    %v781 = vunpack.c.l.b16 %v653
    %v782 = vunpack.c.l.b16 %v654
    %v783 = vunpack.c.l.b16 %v655
    %v784 = vunpack.c.l.b16 %v656
    %v785 = vunpack.c.l.b16 %v657
    %v786 = vunpack.c.l.b16 %v658
    %v787 = vunpack.c.l.b16 %v659
    %v788 = vunpack.c.l.b16 %v660
    %v789 = vunpack.c.l.b16 %v661
    %v790 = vunpack.c.l.b16 %v662
    %v791 = vunpack.c.l.b16 %v663
    %v792 = vunpack.c.l.b16 %v664
    %v793 = vunpack.c.l.b16 %v665
    %v794 = vunpack.c.l.b16 %v666
    %v795 = vunpack.c.l.b16 %v667
    %v796 = vunpack.c.l.b16 %v668
    %v797 = vunpack.c.l.b16 %v669
    %v798 = vunpack.c.l.b16 %v670
    %v799 = vunpack.c.l.b16 %v671
    %v800 = vunpack.c.l.b16 %v672
    %v801 = vunpack.c.l.b16 %v673
    %v802 = vunpack.c.l.b16 %v674
    %v803 = vunpack.c.l.b16 %v675
    %v804 = vunpack.c.l.b16 %v676
    %v805 = vunpack.c.l.b16 %v677
    %v806 = vunpack.c.l.b16 %v678
    %v807 = vunpack.c.l.b16 %v679
    %v808 = vunpack.c.l.b16 %v680
    %v809 = vunpack.c.l.b16 %v681
    %v810 = vunpack.c.l.b16 %v682
    %v811 = vunpack.c.l.b16 %v683
    %v812 = vunpack.c.l.b16 %v684
    %v813 = vunpack.c.l.b16 %v685
    %v814 = vunpack.c.l.b16 %v686
    %v815 = vunpack.c.l.b16 %v687
    %v816 = vunpack.c.l.b16 %v688
    %v817 = vunpack.c.l.b16 %v689
    %v818 = vunpack.c.l.b16 %v690
    %v819 = vunpack.c.l.b16 %v691
    %v820 = vunpack.c.l.b16 %v692
    %v821 = vunpack.c.l.b16 %v693
    %v822 = vunpack.c.l.b16 %v694
    %v823 = vunpack.c.l.b16 %v695
    %v824 = vunpack.c.l.b16 %v696
    %v825 = vunpack.c.l.b16 %v697
    %v826 = vunpack.c.l.b16 %v698
    %v827 = vunpack.c.l.b16 %v699
    %v828 = vunpack.c.l.b16 %v700
    %v829 = vunpack.c.l.b16 %v701
    %v830 = vunpack.c.l.b16 %v702
    %v831 = vunpack.c.l.b16 %v703
    %v832 = vunpack.c.l.b16 %v704
    %v833 = vunpack.c.l.b16 %v705
    %v834 = vunpack.c.l.b16 %v706
    %v835 = vunpack.c.l.b16 %v707
    %v836 = vunpack.c.l.b16 %v708
    %v837 = vunpack.c.l.b16 %v709
    %v838 = vunpack.c.l.b16 %v710
    %v839 = vunpack.c.l.b16 %v711
    %v840 = vpack.c.b16 %v777, %v776
    %v841 = vpack.c.b16 %v779, %v778
    %v842 = vpack.c.b16 %v781, %v780
    %v843 = vpack.c.b16 %v783, %v782
    %v844 = vpack.c.b16 %v785, %v784
    %v845 = vpack.c.b16 %v787, %v786
    %v846 = vpack.c.b16 %v789, %v788
    %v847 = vpack.c.b16 %v791, %v790
    %v848 = vpack.c.b16 %v793, %v792
    %v849 = vpack.c.b16 %v795, %v794
    %v850 = vpack.c.b16 %v797, %v796
    %v851 = vpack.c.b16 %v799, %v798
    %v852 = vpack.c.b16 %v801, %v800
    %v853 = vpack.c.b16 %v803, %v802
    %v854 = vpack.c.b16 %v805, %v804
    %v855 = vpack.c.b16 %v807, %v806
    %v856 = vpack.c.b16 %v809, %v808
    %v857 = vpack.c.b16 %v811, %v810
    %v858 = vpack.c.b16 %v813, %v812
    %v859 = vpack.c.b16 %v815, %v814
    %v860 = vpack.c.b16 %v817, %v816
    %v861 = vpack.c.b16 %v819, %v818
    %v862 = vpack.c.b16 %v821, %v820
    %v863 = vpack.c.b16 %v823, %v822
    %v864 = vpack.c.b16 %v825, %v824
    %v865 = vpack.c.b16 %v827, %v826
    %v866 = vpack.c.b16 %v829, %v828
    %v867 = vpack.c.b16 %v831, %v830
    %v868 = vpack.c.b16 %v833, %v832
    %v869 = vpack.c.b16 %v835, %v834
    %v870 = vpack.c.b16 %v837, %v836
    %v871 = vpack.c.b16 %v839, %v838
    %904 = vmatprep.subr.bf16.mxu0 0
    %905 = vmatpush1.bf16.msra.mxu0 %v847
    %906 = vmatprep.subr.bf16.mxu0 0
    %907 = vmatpush1.bf16.msra.mxu0 %v846
    %908 = vmatprep.subr.bf16.mxu0 0
    %909 = vmatpush1.bf16.msra.mxu0 %v845
    %910 = vmatprep.subr.bf16.mxu0 0
    %911 = vmatpush1.bf16.msra.mxu0 %v844
    %912 = vmatprep.subr.bf16.mxu0 0
    %913 = vmatpush1.bf16.msra.mxu0 %v843
    %914 = vmatprep.subr.bf16.mxu0 0
    %915 = vmatpush1.bf16.msra.mxu0 %v842
    %916 = vmatprep.subr.bf16.mxu0 0
    %917 = vmatpush1.bf16.msra.mxu0 %v841
    %918 = vmatprep.subr.bf16.mxu0 0
    %919 = vmatpush1.bf16.msra.mxu0 %v840
    %920 = vmatprep.subr.bf16.mxu0 0
    %921 = vmatpush2.bf16.msra.mxu0 %v855
    %922 = vmatprep.subr.bf16.mxu0 0
    %923 = vmatpush2.bf16.msra.mxu0 %v854
    %924 = vmatprep.subr.bf16.mxu0 0
    %925 = vmatpush2.bf16.msra.mxu0 %v853
    %926 = vmatprep.subr.bf16.mxu0 0
    %927 = vmatpush2.bf16.msra.mxu0 %v852
    %928 = vmatprep.subr.bf16.mxu0 0
    %929 = vmatpush2.bf16.msra.mxu0 %v851
    %930 = vmatprep.subr.bf16.mxu0 0
    %931 = vmatpush2.bf16.msra.mxu0 %v850
    %932 = vmatprep.subr.bf16.mxu0 0
    %933 = vmatpush2.bf16.msra.mxu0 %v849
    %934 = vmatprep.subr.bf16.mxu0 0
    %935 = vmatpush2.bf16.msra.mxu0 %v848
    %936 = vmatprep.mubr.bf16.mxu0 %v645
    %937 = vmatmul.mubr.bf16.gmra.mxu0 %v644
    %v938 = vpop.f32.mrf.mxu0
    %v939 = vadd.f32 0.0, %v938
    %v940 = vpop.f32.mrf.mxu0
    %v941 = vpop.f32.mrf.mxu0
    %v942 = vadd.f32 0.0, %v941
    %v943 = vpop.f32.mrf.mxu0
    %944 = vdwg.mxu0
    %945 = vmatprep.subr.bf16.mxu0 0
    %946 = vmatpush1.bf16.msra.mxu0 %v863
    %947 = vmatprep.subr.bf16.mxu0 0
    %948 = vmatpush1.bf16.msra.mxu0 %v862
    %949 = vmatprep.subr.bf16.mxu0 0
    %950 = vmatpush1.bf16.msra.mxu0 %v861
    %951 = vmatprep.subr.bf16.mxu0 0
    %952 = vmatpush1.bf16.msra.mxu0 %v860
    %953 = vmatprep.subr.bf16.mxu0 0
    %954 = vmatpush1.bf16.msra.mxu0 %v859
    %955 = vmatprep.subr.bf16.mxu0 0
    %956 = vmatpush1.bf16.msra.mxu0 %v858
    %957 = vmatprep.subr.bf16.mxu0 0
    %958 = vmatpush1.bf16.msra.mxu0 %v857
    %959 = vmatprep.subr.bf16.mxu0 0
    %960 = vmatpush1.bf16.msra.mxu0 %v856
    %961 = vmatprep.subr.bf16.mxu0 0
    %962 = vmatpush2.bf16.msra.mxu0 %v871
    %963 = vmatprep.subr.bf16.mxu0 0
    %964 = vmatpush2.bf16.msra.mxu0 %v870
    %965 = vmatprep.subr.bf16.mxu0 0
    %966 = vmatpush2.bf16.msra.mxu0 %v869
    %967 = vmatprep.subr.bf16.mxu0 0
    %968 = vmatpush2.bf16.msra.mxu0 %v868
    %969 = vmatprep.subr.bf16.mxu0 0
    %970 = vmatpush2.bf16.msra.mxu0 %v867
    %971 = vmatprep.subr.bf16.mxu0 0
    %972 = vmatpush2.bf16.msra.mxu0 %v866
    %973 = vmatprep.subr.bf16.mxu0 0
    %974 = vmatpush2.bf16.msra.mxu0 %v865
    %975 = vmatprep.subr.bf16.mxu0 0
    %976 = vmatpush2.bf16.msra.mxu0 %v864
    %977 = vmatprep.mubr.bf16.mxu0 %v647
    %978 = vmatmul.mubr.bf16.gmra.mxu0 %v646
    %v979 = vpop.f32.mrf.mxu0
    %v980 = vadd.f32 %v939, %v979
    %v981 = vpop.f32.mrf.mxu0
    %v982 = vpop.f32.mrf.mxu0
    %v983 = vadd.f32 %v942, %v982
    %v984 = vpop.f32.mrf.mxu0
    %985 = vdwg.mxu0
    %v986 = vadd.f32 %v426, %v980
    %v987 = vadd.f32 %v427, %v983
    %988 = vst [vmem:[#allocation3] sm:$0xff] %v986
    %989 = vst [vmem:[#allocation3 + $0x8] sm:$0xff] %v987
    // Predicated region
    $region50: #{s3_tokenizer_v2_forward.11} parent=1 // pred_check
      %p990 = pneg %p42
    $region51: #{s3_tokenizer_v2_forward.11} parent=1 // pred_check_branch
      %992 = sbr.rel (%p990) target = $region53
    $region52: #{s3_tokenizer_v2_forward.11} parent=1 // pred_region
      %v993 = vld [vmem:[#allocation3] sm:$0xff]
      %v994 = vld [vmem:[#allocation3 + $0x8] sm:$0xff]
      %v995 = vpack.c.bf16 %v994, %v993
      %v997 = vunpack.c.l.b16 %v995
      %v998 = vunpack.c.h.b16 %v995
      %v999 = vpack.c.b16 %v997, %v997
      %v1000 = vpack.c.b16 %v998, %v998
      %1003 = vst [vmem:[#allocation4] sm:$0xf] %v999
      %1004 = vst [vmem:[#allocation4 + $0x4] sm:$0xf] %v1000
      %v1005 = vld [vmem:[%s8] sm:$0xff]
      %v1006 = vld [vmem:[%s8 + $0x8] sm:$0xff]
      %v1007 = vld [vmem:[%s8 + $0x10] sm:$0xff]
      %v1008 = vld [vmem:[%s8 + $0x18] sm:$0xff]
      %v1009 = vld [vmem:[%s8 + $0x20] sm:$0xff]
      %v1010 = vld [vmem:[%s8 + $0x28] sm:$0xff]
      %v1011 = vld [vmem:[%s8 + $0x30] sm:$0xff]
      %v1012 = vld [vmem:[%s8 + $0x38] sm:$0xff]
      %v1013 = vld [vmem:[%s8 + $0x40] sm:$0xff]
      %v1014 = vld [vmem:[%s8 + $0x48] sm:$0xff]
      %v1015 = vld [vmem:[%s8 + $0x50] sm:$0xff]
      %v1016 = vld [vmem:[%s8 + $0x58] sm:$0xff]
      %v1017 = vld [vmem:[%s8 + $0x60] sm:$0xff]
      %v1018 = vld [vmem:[%s8 + $0x68] sm:$0xff]
      %v1019 = vld [vmem:[%s8 + $0x70] sm:$0xff]
      %v1020 = vld [vmem:[%s8 + $0x78] sm:$0xff]
      %v1021 = vld [vmem:[%s9] sm:$0x1]
      %v1023 = vlaneseq
      %v1024 = vshrl.u32 %v1023, 7
      %v1025 = vsub.s32 0, %v1024
      %v1026 = vrot.slane %v1021, %v1025
      %1028 = vmatprep.subr.mxu0 0.0
      %1029 = vmatpush1.msra.mxu0 %v1020
      %1030 = vmatprep.subr.mxu0 0.0
      %1031 = vmatpush1.msra.mxu0 %v1019
      %1032 = vmatprep.subr.mxu0 0.0
      %1033 = vmatpush1.msra.mxu0 %v1018
      %1034 = vmatprep.subr.mxu0 0.0
      %1035 = vmatpush1.msra.mxu0 %v1017
      %1036 = vmatprep.subr.mxu0 0.0
      %1037 = vmatpush1.msra.mxu0 %v1016
      %1038 = vmatprep.subr.mxu0 0.0
      %1039 = vmatpush1.msra.mxu0 %v1015
      %1040 = vmatprep.subr.mxu0 0.0
      %1041 = vmatpush1.msra.mxu0 %v1014
      %1042 = vmatprep.subr.mxu0 0.0
      %1043 = vmatpush1.msra.mxu0 %v1013
      %1044 = vmatprep.subr.mxu0 0.0
      %1045 = vmatpush1.msra.mxu0 %v1012
      %1046 = vmatprep.subr.mxu0 0.0
      %1047 = vmatpush1.msra.mxu0 %v1011
      %1048 = vmatprep.subr.mxu0 0.0
      %1049 = vmatpush1.msra.mxu0 %v1010
      %1050 = vmatprep.subr.mxu0 0.0
      %1051 = vmatpush1.msra.mxu0 %v1009
      %1052 = vmatprep.subr.mxu0 0.0
      %1053 = vmatpush1.msra.mxu0 %v1008
      %1054 = vmatprep.subr.mxu0 0.0
      %1055 = vmatpush1.msra.mxu0 %v1007
      %1056 = vmatprep.subr.mxu0 0.0
      %1057 = vmatpush1.msra.mxu0 %v1006
      %1058 = vmatprep.subr.mxu0 0.0
      %1059 = vmatpush1.msra.mxu0 %v1005
      %1060 = vmatprep.subr.mxu0 0.0
      %1061 = vmatpush2.msra.mxu0 0.0
      %1062 = vmatprep.subr.mxu0 0.0
      %1063 = vmatpush2.msra.mxu0 0.0
      %1064 = vmatprep.subr.mxu0 0.0
      %1065 = vmatpush2.msra.mxu0 0.0
      %1066 = vmatprep.subr.mxu0 0.0
      %1067 = vmatpush2.msra.mxu0 0.0
      %1068 = vmatprep.subr.mxu0 0.0
      %1069 = vmatpush2.msra.mxu0 0.0
      %1070 = vmatprep.subr.mxu0 0.0
      %1071 = vmatpush2.msra.mxu0 0.0
      %1072 = vmatprep.subr.mxu0 0.0
      %1073 = vmatpush2.msra.mxu0 0.0
      %1074 = vmatprep.subr.mxu0 0.0
      %1075 = vmatpush2.msra.mxu0 0.0
      %1076 = vmatprep.subr.mxu0 0.0
      %1077 = vmatpush2.msra.mxu0 0.0
      %1078 = vmatprep.subr.mxu0 0.0
      %1079 = vmatpush2.msra.mxu0 0.0
      %1080 = vmatprep.subr.mxu0 0.0
      %1081 = vmatpush2.msra.mxu0 0.0
      %1082 = vmatprep.subr.mxu0 0.0
      %1083 = vmatpush2.msra.mxu0 0.0
      %1084 = vmatprep.subr.mxu0 0.0
      %1085 = vmatpush2.msra.mxu0 0.0
      %1086 = vmatprep.subr.mxu0 0.0
      %1087 = vmatpush2.msra.mxu0 0.0
      %1088 = vmatprep.subr.mxu0 0.0
      %1089 = vmatpush2.msra.mxu0 0.0
      %1090 = vmatprep.subr.mxu0 0.0
      %1091 = vmatpush2.msra.mxu0 0.0
      %1092 = vmatprep.mubr.f32.mxu0 0.0
      %1093 = vmatmul.mubr.f32.gmra.mxu0 %v993
      %v1094 = vpop.f32.mrf.mxu0
      %v1095 = vadd.f32 %v1026, %v1094
      %v1096 = vpop.f32.mrf.mxu0
      %1097 = vmatprep.mubr.f32.mxu0 0.0
      %1098 = vmatmul.mubr.f32.gmra.mxu0 %v994
      %v1099 = vpop.f32.mrf.mxu0
      %v1100 = vadd.f32 %v1026, %v1099
      %v1101 = vpop.f32.mrf.mxu0
      %1102 = vdwg.mxu0
      %v1103 = vtanh.pop %v1095
      %v1104 = vtanh.pop %v1100
      %v1105 = vmul.f32 %v1103, 0.999
      %v1106 = vmul.f32 %v1104, 0.999
      %v1107 = vround.ne.pseudo %v1105
      %v1108 = vround.ne.pseudo %v1106
      %v1109 = vadd.f32 %v1107, 1.0
      %v1110 = vadd.f32 %v1108, 1.0
      %v1111 = vld [vmem:[%s10] sm:$0x1]
      %v1113 = vlaneseq
      %v1114 = vshrl.u32 %v1113, 7
      %v1115 = vsub.s32 0, %v1114
      %v1116 = vrot.slane %v1111, %v1115
      %v1118 = vmul.f32 %v1109, %v1116
      %v1119 = vmul.f32 %v1110, %v1116
      %vm1120 = vcmask 64512
      %v1121 = vsel %vm1120, %v1118, 0.0
      %1122 = vadd.xlane.f32.xlu0 %v1121
      %v1123 = vpop.xlane.xlu0 %1122
      %v1124 = vsel %vm1120, %v1119, 0.0
      %1125 = vadd.xlane.f32.xlu0 %v1124
      %v1126 = vpop.xlane.xlu0 %1125
      %v1127 = vcvt.f32.s32.to.zero.pseudo %v1123
      %v1128 = vcvt.f32.s32.to.zero.pseudo %v1126
      %vm1129 = vcmask 7168
      %1130 = vst.msk [vmem:[%s12] sm:$0xff] %vm1129, %v1127
      %1131 = vst.msk [vmem:[%s12 + $0x8] sm:$0xff] %vm1129, %v1128
    $region53: #{s3_tokenizer_v2_forward.11} parent=1 // pred_fallthru
      _
    // Predicated region
    $region54: #{s3_tokenizer_v2_forward.11} parent=1 // pred_check
      _
    $region55: #{s3_tokenizer_v2_forward.11} parent=1 // pred_check_branch
      %1133 = sbr.rel (0) target = $region57
    $region56: #{s3_tokenizer_v2_forward.11} parent=1 // pred_region
      %s1135 = ssub.s32 128, 128
      %1136 = vsyncadd [#allocation5], %s1135
      %s1137 = sshll.u32 [#allocation4], 4
      %s1138 = int_to_ptr.vmem [resolvable:$true] %s1137
      %1143 = dma.vmem_to_hbm [thread:$0]  %s1138, 128, %s11, [#allocation5], 64, 64, 4
    $region57: #{s3_tokenizer_v2_forward.11} parent=1 // pred_fallthru
      _
    // Predicated region
    $region58: #{s3_tokenizer_v2_forward.11} parent=1 // pred_check
      _
    $region59: #{s3_tokenizer_v2_forward.11} parent=1 // pred_check_branch
      %1145 = sbr.rel (0) target = $region61
    $region60: #{s3_tokenizer_v2_forward.11} parent=1 // pred_region
      _
    $region61: #{s3_tokenizer_v2_forward.11} parent=1 // pred_fallthru
      _
    // Predicated region
    $region62: #{s3_tokenizer_v2_forward.11} parent=1 // pred_check
      _
    $region63: #{s3_tokenizer_v2_forward.11} parent=1 // pred_check_branch
      %1147 = sbr.rel (0) target = $region65
    $region64: #{s3_tokenizer_v2_forward.11} parent=1 // pred_region
      %1148 = dma.done [#allocation5], 128
    $region65: #{s3_tokenizer_v2_forward.11} parent=1 // pred_fallthru
      _
    // Predicated region
    $region66: #{s3_tokenizer_v2_forward.11} parent=1 // pred_check
      _
    $region67: #{s3_tokenizer_v2_forward.11} parent=1 // pred_check_branch
      %1150 = sbr.rel (0) target = $region69
    $region68: #{s3_tokenizer_v2_forward.11} parent=1 // pred_region
      _
    $region69: #{s3_tokenizer_v2_forward.11} parent=1 // pred_fallthru
      _
    %1151 = vsyncpa [#allocation5], 1

</llo_original>
